<compile_context>
chip_gen: v7x
topology: tpu7x:2x2x1
jax: 0.10.0
libtpu: 0.0.40
codegen_flags: <defaults>
</compile_context>

<pallas_src>
import functools

import jax
import jax.numpy as jnp
import numpy as np
from jax import lax
from jax.experimental import pallas as pl
from jax.experimental.pallas import tpu as pltpu

# ----------------------- module hyper-parameters (small) -----------------------
INPUT_DIM = 32
OUTPUT_DIM = 32            # must equal INPUT_DIM for the residual connections
HEAD_DIM = 16
N_HEADS = INPUT_DIM // HEAD_DIM
WINDOW = 4
HIDDEN = 4 * INPUT_DIM
SCALE = HEAD_DIM ** (-0.5)
LN_EPS = 1e-5
NEG = -1e30                # additive "-inf": window blocking + SW shift mask


# ------------------------------- Pallas kernel --------------------------------
def swin_fused_kernel(x_ref, perm_ref, wqkv_ref, bqkv_ref, wo_ref, bias_ref,
                      w1_ref, bm1_ref, w2_ref, vec_ref, o_ref, *, n_heads, eps):
    """Whole SwinBlock: perm -> Block('W') -> perm -> Block('SW') -> perm."""

    def layer_norm(x, g, b):
        mu = jnp.mean(x, axis=-1, keepdims=True)
        xc = x - mu
        var = jnp.mean(xc * xc, axis=-1, keepdims=True)
        return xc * lax.rsqrt(var + eps) * g + b

    def block(x, blk):
        # ------------------------------ LN1 -----------------------------------
        h = layer_norm(x, vec_ref[6 * blk + 0], vec_ref[6 * blk + 1])   # (N, C)
        # -------- W-MSA: static head loop, flat M=N matmuls, dense bias --------
        attn = None
        for hh in range(n_heads):
            q = jnp.dot(h, wqkv_ref[(blk * 3 + 0) * n_heads + hh],
                        preferred_element_type=jnp.float32) \
                + bqkv_ref[(blk * 3 + 0) * n_heads + hh]                # (N, D), scale folded
            k = jnp.dot(h, wqkv_ref[(blk * 3 + 1) * n_heads + hh],
                        preferred_element_type=jnp.float32) \
                + bqkv_ref[(blk * 3 + 1) * n_heads + hh]
            v = jnp.dot(h, wqkv_ref[(blk * 3 + 2) * n_heads + hh],
                        preferred_element_type=jnp.float32) \
                + bqkv_ref[(blk * 3 + 2) * n_heads + hh]
            # dense (N, N) scores + block-diagonal bias (window structure,
            # rel-pos and SW shift mask folded in on the host)
            s = jnp.einsum('pd,qd->pq', q, k, preferred_element_type=jnp.float32)
            s = s + bias_ref[blk * n_heads + hh]
            s = s - jnp.max(s, axis=-1, keepdims=True)
            p = jnp.exp(s)                                              # off-window -> exactly 0
            p = p * pl.reciprocal(jnp.sum(p, axis=-1, keepdims=True), approx=True)
            o = jnp.dot(p, v, preferred_element_type=jnp.float32)       # (N, D)
            # per-head output projection; summing over heads == concat + Linear
            proj = jnp.dot(o, wo_ref[blk * n_heads + hh],
                           preferred_element_type=jnp.float32)          # (N, C)
            attn = proj if attn is None else attn + proj
        x = x + attn + vec_ref[6 * blk + 4]                             # residual 1 (+ bout)
        # ---------------------------- LN2 + MLP ---------------------------------
        h2 = layer_norm(x, vec_ref[6 * blk + 2], vec_ref[6 * blk + 3])
        m = jnp.dot(h2, w1_ref[blk], preferred_element_type=jnp.float32) + bm1_ref[blk]
        # TODO(synk): torch.nn.GELU is erf-exact; tanh approximation used for
        # guaranteed Mosaic lowering (max abs deviation ~3e-4, inside tolerance).
        m = 0.5 * m * (1.0 + jnp.tanh(0.7978845608028654 * (m + 0.044715 * m * m * m)))
        y = jnp.dot(m, w2_ref[blk], preferred_element_type=jnp.float32) + vec_ref[6 * blk + 5]
        return x + y                                                    # residual 2

    x = x_ref[...]                                                      # (N, C), spatial order
    # spatial order -> 'W' window order (one-hot permutation matmul, exact)
    x = jnp.dot(perm_ref[0], x, preferred_element_type=jnp.float32)
    x = block(x, 0)                                                     # block_1, type 'W'
    # 'W' window order -> 'SW' (cyclically shifted) window order
    x = jnp.dot(perm_ref[1], x, preferred_element_type=jnp.float32)
    x = block(x, 1)                                                     # block_2, type 'SW'
    # 'SW' window order -> spatial order
    o_ref[...] = jnp.dot(perm_ref[2], x,
                         preferred_element_type=jnp.float32).astype(o_ref.dtype)


# --------------------------- one-time host-side prep ---------------------------
def relative_embedding(rel_params, ws):
    # rel_params: (n_heads, 2*ws-1, 2*ws-1) -> (n_heads, ws*ws, ws*ws)
    cord = np.array([[i, j] for i in range(ws) for j in range(ws)])
    relation = cord[:, None, :] - cord[None, :, :] + ws - 1
    return rel_params[:, relation[:, :, 0], relation[:, :, 1]]


def generate_mask_add(hw, ww, p, shift, shifted):
    nw, npx = hw * ww, p * p
    if not shifted:
        return np.zeros((nw, npx, npx), np.float32)
    m = np.zeros((hw, ww, p, p, p, p), dtype=bool)
    s = p - shift
    m[-1, :, :s, :, s:, :] = True
    m[-1, :, s:, :, :s, :] = True
    m[:, -1, :, :s, :, s:] = True
    m[:, -1, :, s:, :, :s] = True
    m = m.reshape(nw, npx, npx)
    return np.where(m, NEG, 0.0).astype(np.float32)


def _window_token_maps(B, Hs, Ws, ws, shift):
    """Spatial-row index of every windowed token for the un-shifted ('W') and
    cyclically shifted ('SW') window partitions.  Token order: (b, window, pos)."""
    hw, ww = Hs // ws, Ws // ws
    n = B * Hs * Ws
    sp_w = np.zeros(n, np.int64)
    sp_sw = np.zeros(n, np.int64)
    i = 0
    for b in range(B):
        for wh in range(hw):
            for wc in range(ww):
                for ph in range(ws):
                    for pw in range(ws):
                        h, w = wh * ws + ph, wc * ws + pw
                        sp_w[i] = b * Hs * Ws + h * Ws + w
                        sp_sw[i] = (b * Hs * Ws + ((h + shift) % Hs) * Ws
                                    + ((w + shift) % Ws))
                        i += 1
    return sp_w, sp_sw


def prepare_params(params, B, Hs, Ws):
    """One-time prep (pure numpy, NOT traced into the jitted forward):
    per-head weight split, attention-scale folding into Wq/bq, window + rel-pos +
    shift-mask dense bias, token permutation matrices, operand packing."""
    C, D, H, OUT, ws = INPUT_DIM, HEAD_DIM, N_HEADS, OUTPUT_DIM, WINDOW
    shift = ws // 2
    hw, ww = Hs // ws, Ws // ws
    nw, npx = hw * ww, ws * ws
    nwb = B * nw
    n = nwb * npx

    def prep_block(prm, shifted):
        wqkv = np.asarray(prm["wqkv"], np.float32)                     # (C, 3C)
        bqkv = np.asarray(prm["bqkv"], np.float32)                     # (3C,)

        def head_w(lo, scale):                                         # (H, C, D)
            return wqkv[:, lo:lo + C].reshape(C, H, D).transpose(1, 0, 2) * scale

        def head_b(lo, scale):                                         # (H, 1, D)
            return bqkv[lo:lo + C].reshape(H, 1, D) * scale

        w_qkv = np.concatenate([head_w(0, SCALE), head_w(C, 1.0), head_w(2 * C, 1.0)])
        b_qkv = np.concatenate([head_b(0, SCALE), head_b(C, 1.0), head_b(2 * C, 1.0)])
        wo = np.asarray(prm["wout"], np.float32).reshape(H, D, OUT)    # (H, D, OUT)

        rel = relative_embedding(np.asarray(prm["rel"], np.float32), ws)   # (H, NP, NP)
        mask = generate_mask_add(hw, ww, ws, shift, shifted)               # (NW, NP, NP)
        bias = np.full((H, n, n), NEG, np.float32)   # block-diagonal dense attention bias
        for g in range(nwb):
            sl = slice(g * npx, (g + 1) * npx)
            bias[:, sl, sl] = rel + mask[g % nw][None]

        vecs = np.stack([np.asarray(prm[k], np.float32)
                         for k in ("g1", "b1", "g2", "b2", "bout", "bm2")])[:, None, :]
        return (w_qkv, b_qkv, wo, bias,
                np.asarray(prm["w1"], np.float32),
                np.asarray(prm["bm1"], np.float32)[None, :],
                np.asarray(prm["w2"], np.float32),
                vecs)

    blk = [prep_block(params["block1"], shifted=False),
           prep_block(params["block2"], shifted=True)]
    cat = lambda i: jnp.asarray(np.concatenate([blk[0][i], blk[1][i]], axis=0))
    stk = lambda i: jnp.asarray(np.stack([blk[0][i], blk[1][i]], axis=0))

    # one-hot permutation matrices: spatial <-> 'W' window order <-> 'SW' order
    sp_w, sp_sw = _window_token_maps(B, Hs, Ws, ws, shift)
    inv_w = np.empty(n, np.int64);  inv_w[sp_w] = np.arange(n)
    inv_sw = np.empty(n, np.int64); inv_sw[sp_sw] = np.arange(n)
    perms = np.zeros((3, n, n), np.float32)
    perms[0, np.arange(n), sp_w] = 1.0                  # spatial    -> 'W'  order
    perms[1, np.arange(n), inv_w[sp_sw]] = 1.0          # 'W' order  -> 'SW' order
    perms[2, np.arange(n), inv_sw] = 1.0                # 'SW' order -> spatial

    return {"perms": jnp.asarray(perms),
            "wqkv": cat(0),        # (2*3*H, C, D)  q-scale folded in
            "bqkv": cat(1),        # (2*3*H, 1, D)
            "wo":   cat(2),        # (2*H, D, C)
            "bias": cat(3),        # (2*H, N, N)    window + rel-pos (+ SW mask)
            "w1":   stk(4),        # (2, C, 4C)
            "bm1":  stk(5),        # (2, 1, 4C)
            "w2":   stk(6),        # (2, 4C, C)
            "vecs": cat(7)}        # (2*6, 1, C)    [g1,b1,g2,b2,bout,bm2] per block


# ------------------------------ fused forward ----------------------------------
def swin_block_forward(x_bchw, prep):
    """SwinBlock.forward: (B, C, H, W) -> (B, C, H, W).  H, W > window (no pad branch)."""
    B, C, Hs, Ws = x_bchw.shape
    n = B * Hs * Ws
    x = jnp.transpose(x_bchw, (0, 2, 3, 1)).reshape(n, C)           # b c h w -> (b h w) c

    kernel = functools.partial(swin_fused_kernel, n_heads=N_HEADS, eps=LN_EPS)
    operands = (x, prep["perms"], prep["wqkv"], prep["bqkv"], prep["wo"],
                prep["bias"], prep["w1"], prep["bm1"], prep["w2"], prep["vecs"])

    def full(shape):
        nd = len(shape)
        return pl.BlockSpec(shape, lambda i: (0,) * nd)

    out = pl.pallas_call(
        kernel,
        out_shape=jax.ShapeDtypeStruct((n, C), jnp.float32),
        grid_spec=pltpu.PrefetchScalarGridSpec(
            num_scalar_prefetch=0,
            grid=(1,),                                   # whole batch in one invocation
            in_specs=[full(a.shape) for a in operands],
            out_specs=pl.BlockSpec((n, C), lambda i: (0, 0)),
        ),
        compiler_params=pltpu.CompilerParams(dimension_semantics=("arbitrary",)),
    )(*operands)
    return jnp.transpose(out.reshape(B, Hs, Ws, C), (0, 3, 1, 2))   # (b h w) c -> b c h w


# --------------------------- pure-JAX reference check ---------------------------
def window_partition(x, ws):
    B, H, W, C = x.shape
    hw, ww = H // ws, W // ws
    x = x.reshape(B, hw, ws, ww, ws, C).transpose(0, 1, 3, 2, 4, 5)
    return x.reshape(B, hw * ww, ws * ws, C), hw, ww


def window_reverse(xw, ws, hw, ww):
    B, NW, NP, C = xw.shape
    x = xw.reshape(B, hw, ww, ws, ws, C).transpose(0, 1, 3, 2, 4, 5)
    return x.reshape(B, hw * ws, ww * ws, C)


def layer_norm_ref(x, g, b):
    mu = jnp.mean(x, axis=-1, keepdims=True)
    xc = x - mu
    var = jnp.mean(xc * xc, axis=-1, keepdims=True)
    return xc * lax.rsqrt(var + LN_EPS) * g + b


def wmsa_ref(x, prm, shifted):
    shift = WINDOW // 2
    if shifted:
        x = jnp.roll(x, shift=(-shift, -shift), axis=(1, 2))
    xw, hw, ww = window_partition(x, WINDOW)
    B, NW, NP, C = xw.shape
    qkv = xw @ prm["wqkv"] + prm["bqkv"]
    qkv = qkv.reshape(B, NW, NP, 3 * N_HEADS, HEAD_DIM).transpose(3, 0, 1, 2, 4)
    q, k, v = qkv[:N_HEADS], qkv[N_HEADS:2 * N_HEADS], qkv[2 * N_HEADS:]
    sim = jnp.einsum('hbwpc,hbwqc->hbwpq', q, k) * SCALE
    sim = sim + relative_embedding(prm["rel"], WINDOW)[:, None, None]
    mask = jnp.asarray(generate_mask_add(hw, ww, WINDOW, shift, shifted))
    sim = sim + mask[None, None]
    probs = jax.nn.softmax(sim, axis=-1)
    out = jnp.einsum('hbwpq,hbwqc->hbwpc', probs, v)
    out = out.transpose(1, 2, 3, 0, 4).reshape(B, NW, NP, C)
    out = out @ prm["wout"] + prm["bout"]
    out = window_reverse(out, WINDOW, hw, ww)
    if shifted:
        out = jnp.roll(out, shift=(shift, shift), axis=(1, 2))
    return out


def block_ref(x, prm, shifted):
    x = x + wmsa_ref(layer_norm_ref(x, prm["g1"], prm["b1"]), prm, shifted)
    h = layer_norm_ref(x, prm["g2"], prm["b2"])
    m = jax.nn.gelu(h @ prm["w1"] + prm["bm1"], approximate=False)
    return x + (m @ prm["w2"] + prm["bm2"])


def swin_block_ref(x_bchw, params):
    x = jnp.transpose(x_bchw, (0, 2, 3, 1))
    x = block_ref(x, params["block1"], shifted=False)
    x = block_ref(x, params["block2"], shifted=True)
    return jnp.transpose(x, (0, 3, 1, 2))


# ------------------------------------- main -------------------------------------
if __name__ == "__main__":
    key = jax.random.PRNGKey(0)
    keys = jax.random.split(key, 27)

    B, Hs, Ws = 2, 8, 8                      # 2x2 windows of size 4x4, no padding branch
    x = jax.random.normal(keys[0], (B, INPUT_DIM, Hs, Ws), dtype=jnp.float32)

    def make_block_params(ks):
        C, HID = INPUT_DIM, HIDDEN
        return {
            "wqkv": jax.random.normal(ks[0], (C, 3 * C), jnp.float32) * 0.02,
            "bqkv": jax.random.normal(ks[1], (3 * C,), jnp.float32) * 0.02,
            "wout": jax.random.normal(ks[2], (C, OUTPUT_DIM), jnp.float32) * 0.02,
            "bout": jax.random.normal(ks[3], (OUTPUT_DIM,), jnp.float32) * 0.02,
            # trunc_normal(std=0.02) approximated deterministically with normal*0.02
            "rel": jax.random.normal(ks[4], (N_HEADS, 2 * WINDOW - 1, 2 * WINDOW - 1),
                                     jnp.float32) * 0.02,
            "g1": 1.0 + 0.1 * jax.random.normal(ks[5], (C,), jnp.float32),
            "b1": 0.1 * jax.random.normal(ks[6], (C,), jnp.float32),
            "g2": 1.0 + 0.1 * jax.random.normal(ks[7], (C,), jnp.float32),
            "b2": 0.1 * jax.random.normal(ks[8], (C,), jnp.float32),
            "w1": jax.random.normal(ks[9], (C, HID), jnp.float32) * 0.02,
            "bm1": jax.random.normal(ks[10], (HID,), jnp.float32) * 0.02,
            "w2": jax.random.normal(ks[11], (HID, OUTPUT_DIM), jnp.float32) * 0.02,
            "bm2": jax.random.normal(ks[12], (OUTPUT_DIM,), jnp.float32) * 0.02,
        }

    params = {
        "block1": make_block_params(keys[1:14]),
        "block2": make_block_params(keys[14:27]),
    }

    # One-time host prep (hoisted out of the jitted hot path).
    prep = prepare_params(params, B, Hs, Ws)

    # DropPath(drop_path=0.0) == Identity (inference configuration).
    fwd = jax.jit(swin_block_forward)
    out = jax.block_until_ready(fwd(x, prep))
    ref = jax.block_until_ready(swin_block_ref(x, params))

    assert out.shape == (B, INPUT_DIM, Hs, Ws), out.shape
    np.testing.assert_allclose(np.asarray(out), np.asarray(ref), rtol=2e-3, atol=2e-3)
    print("KERNEL_OK")
</pallas_src>

<mosaic_0001>
module attributes {stable_mosaic.version = 11 : i64} {
  func.func @swin_fused_kernel(%arg0: i32, %arg1: memref<128x32xf32, #tpu.memory_space<vmem>>, %arg2: memref<3x128x128xf32, #tpu.memory_space<vmem>>, %arg3: memref<12x32x16xf32, #tpu.memory_space<vmem>>, %arg4: memref<12x1x16xf32, #tpu.memory_space<vmem>>, %arg5: memref<4x16x32xf32, #tpu.memory_space<vmem>>, %arg6: memref<4x128x128xf32, #tpu.memory_space<vmem>>, %arg7: memref<2x32x128xf32, #tpu.memory_space<vmem>>, %arg8: memref<2x1x128xf32, #tpu.memory_space<vmem>>, %arg9: memref<2x128x32xf32, #tpu.memory_space<vmem>>, %arg10: memref<12x1x32xf32, #tpu.memory_space<vmem>>, %arg11: memref<128x32xf32, #tpu.memory_space<vmem>>) attributes {dimension_semantics = [#tpu.dimension_semantics<arbitrary>], iteration_bounds = array<i64: 1>, scalar_prefetch = 0 : i64, scratch_operands = 0 : i64, tpu.core_type = #tpu.core_type<tc>, window_params = [{pipeline_mode = #tpu.pipeline_mode<synchronous>, transform_indices = @transform_0, window_bounds = array<i64: 128, 32>}, {pipeline_mode = #tpu.pipeline_mode<synchronous>, transform_indices = @transform_1, window_bounds = array<i64: 3, 128, 128>}, {pipeline_mode = #tpu.pipeline_mode<synchronous>, transform_indices = @transform_2, window_bounds = array<i64: 12, 32, 16>}, {pipeline_mode = #tpu.pipeline_mode<synchronous>, transform_indices = @transform_3, window_bounds = array<i64: 12, 1, 16>}, {pipeline_mode = #tpu.pipeline_mode<synchronous>, transform_indices = @transform_4, window_bounds = array<i64: 4, 16, 32>}, {pipeline_mode = #tpu.pipeline_mode<synchronous>, transform_indices = @transform_5, window_bounds = array<i64: 4, 128, 128>}, {pipeline_mode = #tpu.pipeline_mode<synchronous>, transform_indices = @transform_6, window_bounds = array<i64: 2, 32, 128>}, {pipeline_mode = #tpu.pipeline_mode<synchronous>, transform_indices = @transform_7, window_bounds = array<i64: 2, 1, 128>}, {pipeline_mode = #tpu.pipeline_mode<synchronous>, transform_indices = @transform_8, window_bounds = array<i64: 2, 128, 32>}, {pipeline_mode = #tpu.pipeline_mode<synchronous>, transform_indices = @transform_9, window_bounds = array<i64: 12, 1, 32>}, {pipeline_mode = #tpu.pipeline_mode<synchronous>, transform_indices = @transform_10, window_bounds = array<i64: 128, 32>}]} {
    %c0 = arith.constant 0 : index
    %c0_0 = arith.constant 0 : index
    %0 = vector.load %arg1[%c0, %c0_0] : memref<128x32xf32, #tpu.memory_space<vmem>>, vector<128x32xf32>
    %c0_1 = arith.constant 0 : index
    %c0_2 = arith.constant 0 : index
    %c0_3 = arith.constant 0 : index
    %1 = vector.load %arg2[%c0_1, %c0_2, %c0_3] : memref<3x128x128xf32, #tpu.memory_space<vmem>>, vector<1x128x128xf32>
    %2 = vector.shape_cast %1 : vector<1x128x128xf32> to vector<128x128xf32>
    %cst = arith.constant dense<0.000000e+00> : vector<128x32xf32>
    %3 = tpu.matmul %2, %0, %cst {dimension_numbers = #tpu.dot_dimension_numbers<[1], [0], [0], [1], [0, 0, 1, 1], [], []>} : vector<128x128xf32>, vector<128x32xf32>, vector<128x32xf32> -> vector<128x32xf32>
    %c0_4 = arith.constant 0 : index
    %c0_5 = arith.constant 0 : index
    %c0_6 = arith.constant 0 : index
    %4 = vector.load %arg10[%c0_4, %c0_5, %c0_6] : memref<12x1x32xf32, #tpu.memory_space<vmem>>, vector<1x1x32xf32>
    %5 = vector.shape_cast %4 : vector<1x1x32xf32> to vector<1x32xf32>
    %c1 = arith.constant 1 : index
    %c0_7 = arith.constant 0 : index
    %c0_8 = arith.constant 0 : index
    %6 = vector.load %arg10[%c1, %c0_7, %c0_8] : memref<12x1x32xf32, #tpu.memory_space<vmem>>, vector<1x1x32xf32>
    %7 = vector.shape_cast %6 : vector<1x1x32xf32> to vector<1x32xf32>
    %cst_9 = arith.constant dense<0.000000e+00> : vector<128xf32>
    %8 = vector.multi_reduction <add>, %3, %cst_9 [1] : vector<128x32xf32> to vector<128xf32>
    %9 = vector.shape_cast %8 : vector<128xf32> to vector<128x1xf32>
    %cst_10 = arith.constant 3.200000e+01 : f32
    %10 = vector.broadcast %cst_10 : f32 to vector<128x1xf32>
    %11 = arith.divf %9, %10 : vector<128x1xf32>
    %12 = vector.broadcast %11 : vector<128x1xf32> to vector<128x32xf32>
    %13 = arith.subf %3, %12 : vector<128x32xf32>
    %14 = arith.mulf %13, %13 : vector<128x32xf32>
    %cst_11 = arith.constant dense<0.000000e+00> : vector<128xf32>
    %15 = vector.multi_reduction <add>, %14, %cst_11 [1] : vector<128x32xf32> to vector<128xf32>
    %16 = vector.shape_cast %15 : vector<128xf32> to vector<128x1xf32>
    %cst_12 = arith.constant 3.200000e+01 : f32
    %17 = vector.broadcast %cst_12 : f32 to vector<128x1xf32>
    %18 = arith.divf %16, %17 : vector<128x1xf32>
    %cst_13 = arith.constant 9.99999974E-6 : f32
    %19 = vector.broadcast %cst_13 : f32 to vector<128x1xf32>
    %20 = arith.addf %18, %19 : vector<128x1xf32>
    %21 = math.rsqrt %20 : vector<128x1xf32>
    %22 = vector.broadcast %21 : vector<128x1xf32> to vector<128x32xf32>
    %23 = arith.mulf %13, %22 : vector<128x32xf32>
    %24 = vector.broadcast %5 : vector<1x32xf32> to vector<128x32xf32>
    %25 = arith.mulf %23, %24 : vector<128x32xf32>
    %26 = vector.broadcast %7 : vector<1x32xf32> to vector<128x32xf32>
    %27 = arith.addf %25, %26 : vector<128x32xf32>
    %c0_14 = arith.constant 0 : index
    %c0_15 = arith.constant 0 : index
    %c0_16 = arith.constant 0 : index
    %28 = vector.load %arg3[%c0_14, %c0_15, %c0_16] : memref<12x32x16xf32, #tpu.memory_space<vmem>>, vector<1x32x16xf32>
    %29 = vector.shape_cast %28 : vector<1x32x16xf32> to vector<32x16xf32>
    %cst_17 = arith.constant dense<0.000000e+00> : vector<128x16xf32>
    %30 = tpu.matmul %27, %29, %cst_17 {dimension_numbers = #tpu.dot_dimension_numbers<[1], [0], [0], [1], [0, 0, 1, 1], [], []>} : vector<128x32xf32>, vector<32x16xf32>, vector<128x16xf32> -> vector<128x16xf32>
    %c0_18 = arith.constant 0 : index
    %c0_19 = arith.constant 0 : index
    %c0_20 = arith.constant 0 : index
    %31 = vector.load %arg4[%c0_18, %c0_19, %c0_20] : memref<12x1x16xf32, #tpu.memory_space<vmem>>, vector<1x1x16xf32>
    %32 = vector.shape_cast %31 : vector<1x1x16xf32> to vector<1x16xf32>
    %33 = vector.broadcast %32 : vector<1x16xf32> to vector<128x16xf32>
    %34 = arith.addf %30, %33 : vector<128x16xf32>
    %c2 = arith.constant 2 : index
    %c0_21 = arith.constant 0 : index
    %c0_22 = arith.constant 0 : index
    %35 = vector.load %arg3[%c2, %c0_21, %c0_22] : memref<12x32x16xf32, #tpu.memory_space<vmem>>, vector<1x32x16xf32>
    %36 = vector.shape_cast %35 : vector<1x32x16xf32> to vector<32x16xf32>
    %cst_23 = arith.constant dense<0.000000e+00> : vector<128x16xf32>
    %37 = tpu.matmul %27, %36, %cst_23 {dimension_numbers = #tpu.dot_dimension_numbers<[1], [0], [0], [1], [0, 0, 1, 1], [], []>} : vector<128x32xf32>, vector<32x16xf32>, vector<128x16xf32> -> vector<128x16xf32>
    %c2_24 = arith.constant 2 : index
    %c0_25 = arith.constant 0 : index
    %c0_26 = arith.constant 0 : index
    %38 = vector.load %arg4[%c2_24, %c0_25, %c0_26] : memref<12x1x16xf32, #tpu.memory_space<vmem>>, vector<1x1x16xf32>
    %39 = vector.shape_cast %38 : vector<1x1x16xf32> to vector<1x16xf32>
    %40 = vector.broadcast %39 : vector<1x16xf32> to vector<128x16xf32>
    %41 = arith.addf %37, %40 : vector<128x16xf32>
    %c4 = arith.constant 4 : index
    %c0_27 = arith.constant 0 : index
    %c0_28 = arith.constant 0 : index
    %42 = vector.load %arg3[%c4, %c0_27, %c0_28] : memref<12x32x16xf32, #tpu.memory_space<vmem>>, vector<1x32x16xf32>
    %43 = vector.shape_cast %42 : vector<1x32x16xf32> to vector<32x16xf32>
    %cst_29 = arith.constant dense<0.000000e+00> : vector<128x16xf32>
    %44 = tpu.matmul %27, %43, %cst_29 {dimension_numbers = #tpu.dot_dimension_numbers<[1], [0], [0], [1], [0, 0, 1, 1], [], []>} : vector<128x32xf32>, vector<32x16xf32>, vector<128x16xf32> -> vector<128x16xf32>
    %c4_30 = arith.constant 4 : index
    %c0_31 = arith.constant 0 : index
    %c0_32 = arith.constant 0 : index
    %45 = vector.load %arg4[%c4_30, %c0_31, %c0_32] : memref<12x1x16xf32, #tpu.memory_space<vmem>>, vector<1x1x16xf32>
    %46 = vector.shape_cast %45 : vector<1x1x16xf32> to vector<1x16xf32>
    %47 = vector.broadcast %46 : vector<1x16xf32> to vector<128x16xf32>
    %48 = arith.addf %44, %47 : vector<128x16xf32>
    "tpu.trace_start"() <{level = 10 : i32, message = "pd,qd->pq"}> : () -> ()
    %cst_33 = arith.constant dense<0.000000e+00> : vector<128x128xf32>
    %49 = tpu.matmul %34, %41, %cst_33 {dimension_numbers = #tpu.dot_dimension_numbers<[1], [1], [0], [0], [0, 0, 1, 0], [], []>} : vector<128x16xf32>, vector<128x16xf32>, vector<128x128xf32> -> vector<128x128xf32>
    "tpu.trace_stop"() : () -> ()
    %c0_34 = arith.constant 0 : index
    %c0_35 = arith.constant 0 : index
    %c0_36 = arith.constant 0 : index
    %50 = vector.load %arg6[%c0_34, %c0_35, %c0_36] : memref<4x128x128xf32, #tpu.memory_space<vmem>>, vector<1x128x128xf32>
    %51 = vector.shape_cast %50 : vector<1x128x128xf32> to vector<128x128xf32>
    %52 = arith.addf %49, %51 : vector<128x128xf32>
    %cst_37 = arith.constant dense<0xFF800000> : vector<128xf32>
    %53 = vector.multi_reduction <maximumf>, %52, %cst_37 [1] : vector<128x128xf32> to vector<128xf32>
    %54 = vector.shape_cast %53 : vector<128xf32> to vector<128x1xf32>
    %55 = vector.broadcast %54 : vector<128x1xf32> to vector<128x128xf32>
    %56 = arith.subf %52, %55 : vector<128x128xf32>
    %57 = math.exp %56 : vector<128x128xf32>
    %cst_38 = arith.constant dense<0.000000e+00> : vector<128xf32>
    %58 = vector.multi_reduction <add>, %57, %cst_38 [1] : vector<128x128xf32> to vector<128xf32>
    %59 = vector.shape_cast %58 : vector<128xf32> to vector<128x1xf32>
    %60 = tpu.reciprocal %59 {approx = true} : vector<128x1xf32> -> vector<128x1xf32>
    %61 = vector.broadcast %60 : vector<128x1xf32> to vector<128x128xf32>
    %62 = arith.mulf %57, %61 : vector<128x128xf32>
    %cst_39 = arith.constant dense<0.000000e+00> : vector<128x16xf32>
    %63 = tpu.matmul %62, %48, %cst_39 {dimension_numbers = #tpu.dot_dimension_numbers<[1], [0], [0], [1], [0, 0, 1, 1], [], []>} : vector<128x128xf32>, vector<128x16xf32>, vector<128x16xf32> -> vector<128x16xf32>
    %c0_40 = arith.constant 0 : index
    %c0_41 = arith.constant 0 : index
    %c0_42 = arith.constant 0 : index
    %64 = vector.load %arg5[%c0_40, %c0_41, %c0_42] : memref<4x16x32xf32, #tpu.memory_space<vmem>>, vector<1x16x32xf32>
    %65 = vector.shape_cast %64 : vector<1x16x32xf32> to vector<16x32xf32>
    %cst_43 = arith.constant dense<0.000000e+00> : vector<128x32xf32>
    %66 = tpu.matmul %63, %65, %cst_43 {dimension_numbers = #tpu.dot_dimension_numbers<[1], [0], [0], [1], [0, 0, 1, 1], [], []>} : vector<128x16xf32>, vector<16x32xf32>, vector<128x32xf32> -> vector<128x32xf32>
    %c1_44 = arith.constant 1 : index
    %c0_45 = arith.constant 0 : index
    %c0_46 = arith.constant 0 : index
    %67 = vector.load %arg3[%c1_44, %c0_45, %c0_46] : memref<12x32x16xf32, #tpu.memory_space<vmem>>, vector<1x32x16xf32>
    %68 = vector.shape_cast %67 : vector<1x32x16xf32> to vector<32x16xf32>
    %cst_47 = arith.constant dense<0.000000e+00> : vector<128x16xf32>
    %69 = tpu.matmul %27, %68, %cst_47 {dimension_numbers = #tpu.dot_dimension_numbers<[1], [0], [0], [1], [0, 0, 1, 1], [], []>} : vector<128x32xf32>, vector<32x16xf32>, vector<128x16xf32> -> vector<128x16xf32>
    %c1_48 = arith.constant 1 : index
    %c0_49 = arith.constant 0 : index
    %c0_50 = arith.constant 0 : index
    %70 = vector.load %arg4[%c1_48, %c0_49, %c0_50] : memref<12x1x16xf32, #tpu.memory_space<vmem>>, vector<1x1x16xf32>
    %71 = vector.shape_cast %70 : vector<1x1x16xf32> to vector<1x16xf32>
    %72 = vector.broadcast %71 : vector<1x16xf32> to vector<128x16xf32>
    %73 = arith.addf %69, %72 : vector<128x16xf32>
    %c3 = arith.constant 3 : index
    %c0_51 = arith.constant 0 : index
    %c0_52 = arith.constant 0 : index
    %74 = vector.load %arg3[%c3, %c0_51, %c0_52] : memref<12x32x16xf32, #tpu.memory_space<vmem>>, vector<1x32x16xf32>
    %75 = vector.shape_cast %74 : vector<1x32x16xf32> to vector<32x16xf32>
    %cst_53 = arith.constant dense<0.000000e+00> : vector<128x16xf32>
    %76 = tpu.matmul %27, %75, %cst_53 {dimension_numbers = #tpu.dot_dimension_numbers<[1], [0], [0], [1], [0, 0, 1, 1], [], []>} : vector<128x32xf32>, vector<32x16xf32>, vector<128x16xf32> -> vector<128x16xf32>
    %c3_54 = arith.constant 3 : index
    %c0_55 = arith.constant 0 : index
    %c0_56 = arith.constant 0 : index
    %77 = vector.load %arg4[%c3_54, %c0_55, %c0_56] : memref<12x1x16xf32, #tpu.memory_space<vmem>>, vector<1x1x16xf32>
    %78 = vector.shape_cast %77 : vector<1x1x16xf32> to vector<1x16xf32>
    %79 = vector.broadcast %78 : vector<1x16xf32> to vector<128x16xf32>
    %80 = arith.addf %76, %79 : vector<128x16xf32>
    %c5 = arith.constant 5 : index
    %c0_57 = arith.constant 0 : index
    %c0_58 = arith.constant 0 : index
    %81 = vector.load %arg3[%c5, %c0_57, %c0_58] : memref<12x32x16xf32, #tpu.memory_space<vmem>>, vector<1x32x16xf32>
    %82 = vector.shape_cast %81 : vector<1x32x16xf32> to vector<32x16xf32>
    %cst_59 = arith.constant dense<0.000000e+00> : vector<128x16xf32>
    %83 = tpu.matmul %27, %82, %cst_59 {dimension_numbers = #tpu.dot_dimension_numbers<[1], [0], [0], [1], [0, 0, 1, 1], [], []>} : vector<128x32xf32>, vector<32x16xf32>, vector<128x16xf32> -> vector<128x16xf32>
    %c5_60 = arith.constant 5 : index
    %c0_61 = arith.constant 0 : index
    %c0_62 = arith.constant 0 : index
    %84 = vector.load %arg4[%c5_60, %c0_61, %c0_62] : memref<12x1x16xf32, #tpu.memory_space<vmem>>, vector<1x1x16xf32>
    %85 = vector.shape_cast %84 : vector<1x1x16xf32> to vector<1x16xf32>
    %86 = vector.broadcast %85 : vector<1x16xf32> to vector<128x16xf32>
    %87 = arith.addf %83, %86 : vector<128x16xf32>
    "tpu.trace_start"() <{level = 10 : i32, message = "pd,qd->pq"}> : () -> ()
    %cst_63 = arith.constant dense<0.000000e+00> : vector<128x128xf32>
    %88 = tpu.matmul %73, %80, %cst_63 {dimension_numbers = #tpu.dot_dimension_numbers<[1], [1], [0], [0], [0, 0, 1, 0], [], []>} : vector<128x16xf32>, vector<128x16xf32>, vector<128x128xf32> -> vector<128x128xf32>
    "tpu.trace_stop"() : () -> ()
    %c1_64 = arith.constant 1 : index
    %c0_65 = arith.constant 0 : index
    %c0_66 = arith.constant 0 : index
    %89 = vector.load %arg6[%c1_64, %c0_65, %c0_66] : memref<4x128x128xf32, #tpu.memory_space<vmem>>, vector<1x128x128xf32>
    %90 = vector.shape_cast %89 : vector<1x128x128xf32> to vector<128x128xf32>
    %91 = arith.addf %88, %90 : vector<128x128xf32>
    %cst_67 = arith.constant dense<0xFF800000> : vector<128xf32>
    %92 = vector.multi_reduction <maximumf>, %91, %cst_67 [1] : vector<128x128xf32> to vector<128xf32>
    %93 = vector.shape_cast %92 : vector<128xf32> to vector<128x1xf32>
    %94 = vector.broadcast %93 : vector<128x1xf32> to vector<128x128xf32>
    %95 = arith.subf %91, %94 : vector<128x128xf32>
    %96 = math.exp %95 : vector<128x128xf32>
    %cst_68 = arith.constant dense<0.000000e+00> : vector<128xf32>
    %97 = vector.multi_reduction <add>, %96, %cst_68 [1] : vector<128x128xf32> to vector<128xf32>
    %98 = vector.shape_cast %97 : vector<128xf32> to vector<128x1xf32>
    %99 = tpu.reciprocal %98 {approx = true} : vector<128x1xf32> -> vector<128x1xf32>
    %100 = vector.broadcast %99 : vector<128x1xf32> to vector<128x128xf32>
    %101 = arith.mulf %96, %100 : vector<128x128xf32>
    %cst_69 = arith.constant dense<0.000000e+00> : vector<128x16xf32>
    %102 = tpu.matmul %101, %87, %cst_69 {dimension_numbers = #tpu.dot_dimension_numbers<[1], [0], [0], [1], [0, 0, 1, 1], [], []>} : vector<128x128xf32>, vector<128x16xf32>, vector<128x16xf32> -> vector<128x16xf32>
    %c1_70 = arith.constant 1 : index
    %c0_71 = arith.constant 0 : index
    %c0_72 = arith.constant 0 : index
    %103 = vector.load %arg5[%c1_70, %c0_71, %c0_72] : memref<4x16x32xf32, #tpu.memory_space<vmem>>, vector<1x16x32xf32>
    %104 = vector.shape_cast %103 : vector<1x16x32xf32> to vector<16x32xf32>
    %cst_73 = arith.constant dense<0.000000e+00> : vector<128x32xf32>
    %105 = tpu.matmul %102, %104, %cst_73 {dimension_numbers = #tpu.dot_dimension_numbers<[1], [0], [0], [1], [0, 0, 1, 1], [], []>} : vector<128x16xf32>, vector<16x32xf32>, vector<128x32xf32> -> vector<128x32xf32>
    %106 = arith.addf %66, %105 : vector<128x32xf32>
    %107 = arith.addf %3, %106 : vector<128x32xf32>
    %c4_74 = arith.constant 4 : index
    %c0_75 = arith.constant 0 : index
    %c0_76 = arith.constant 0 : index
    %108 = vector.load %arg10[%c4_74, %c0_75, %c0_76] : memref<12x1x32xf32, #tpu.memory_space<vmem>>, vector<1x1x32xf32>
    %109 = vector.shape_cast %108 : vector<1x1x32xf32> to vector<1x32xf32>
    %110 = vector.broadcast %109 : vector<1x32xf32> to vector<128x32xf32>
    %111 = arith.addf %107, %110 : vector<128x32xf32>
    %c2_77 = arith.constant 2 : index
    %c0_78 = arith.constant 0 : index
    %c0_79 = arith.constant 0 : index
    %112 = vector.load %arg10[%c2_77, %c0_78, %c0_79] : memref<12x1x32xf32, #tpu.memory_space<vmem>>, vector<1x1x32xf32>
    %113 = vector.shape_cast %112 : vector<1x1x32xf32> to vector<1x32xf32>
    %c3_80 = arith.constant 3 : index
    %c0_81 = arith.constant 0 : index
    %c0_82 = arith.constant 0 : index
    %114 = vector.load %arg10[%c3_80, %c0_81, %c0_82] : memref<12x1x32xf32, #tpu.memory_space<vmem>>, vector<1x1x32xf32>
    %115 = vector.shape_cast %114 : vector<1x1x32xf32> to vector<1x32xf32>
    %cst_83 = arith.constant dense<0.000000e+00> : vector<128xf32>
    %116 = vector.multi_reduction <add>, %111, %cst_83 [1] : vector<128x32xf32> to vector<128xf32>
    %117 = vector.shape_cast %116 : vector<128xf32> to vector<128x1xf32>
    %cst_84 = arith.constant 3.200000e+01 : f32
    %118 = vector.broadcast %cst_84 : f32 to vector<128x1xf32>
    %119 = arith.divf %117, %118 : vector<128x1xf32>
    %120 = vector.broadcast %119 : vector<128x1xf32> to vector<128x32xf32>
    %121 = arith.subf %111, %120 : vector<128x32xf32>
    %122 = arith.mulf %121, %121 : vector<128x32xf32>
    %cst_85 = arith.constant dense<0.000000e+00> : vector<128xf32>
    %123 = vector.multi_reduction <add>, %122, %cst_85 [1] : vector<128x32xf32> to vector<128xf32>
    %124 = vector.shape_cast %123 : vector<128xf32> to vector<128x1xf32>
    %cst_86 = arith.constant 3.200000e+01 : f32
    %125 = vector.broadcast %cst_86 : f32 to vector<128x1xf32>
    %126 = arith.divf %124, %125 : vector<128x1xf32>
    %cst_87 = arith.constant 9.99999974E-6 : f32
    %127 = vector.broadcast %cst_87 : f32 to vector<128x1xf32>
    %128 = arith.addf %126, %127 : vector<128x1xf32>
    %129 = math.rsqrt %128 : vector<128x1xf32>
    %130 = vector.broadcast %129 : vector<128x1xf32> to vector<128x32xf32>
    %131 = arith.mulf %121, %130 : vector<128x32xf32>
    %132 = vector.broadcast %113 : vector<1x32xf32> to vector<128x32xf32>
    %133 = arith.mulf %131, %132 : vector<128x32xf32>
    %134 = vector.broadcast %115 : vector<1x32xf32> to vector<128x32xf32>
    %135 = arith.addf %133, %134 : vector<128x32xf32>
    %c0_88 = arith.constant 0 : index
    %c0_89 = arith.constant 0 : index
    %c0_90 = arith.constant 0 : index
    %136 = vector.load %arg7[%c0_88, %c0_89, %c0_90] : memref<2x32x128xf32, #tpu.memory_space<vmem>>, vector<1x32x128xf32>
    %137 = vector.shape_cast %136 : vector<1x32x128xf32> to vector<32x128xf32>
    %cst_91 = arith.constant dense<0.000000e+00> : vector<128x128xf32>
    %138 = tpu.matmul %135, %137, %cst_91 {dimension_numbers = #tpu.dot_dimension_numbers<[1], [0], [0], [1], [0, 0, 1, 1], [], []>} : vector<128x32xf32>, vector<32x128xf32>, vector<128x128xf32> -> vector<128x128xf32>
    %c0_92 = arith.constant 0 : index
    %c0_93 = arith.constant 0 : index
    %c0_94 = arith.constant 0 : index
    %139 = vector.load %arg8[%c0_92, %c0_93, %c0_94] : memref<2x1x128xf32, #tpu.memory_space<vmem>>, vector<1x1x128xf32>
    %140 = vector.shape_cast %139 : vector<1x1x128xf32> to vector<1x128xf32>
    %141 = vector.broadcast %140 : vector<1x128xf32> to vector<128x128xf32>
    %142 = arith.addf %138, %141 : vector<128x128xf32>
    %cst_95 = arith.constant 5.000000e-01 : f32
    %143 = vector.broadcast %cst_95 : f32 to vector<128x128xf32>
    %144 = arith.mulf %143, %142 : vector<128x128xf32>
    %cst_96 = arith.constant 4.471500e-02 : f32
    %145 = vector.broadcast %cst_96 : f32 to vector<128x128xf32>
    %146 = arith.mulf %145, %142 : vector<128x128xf32>
    %147 = arith.mulf %146, %142 : vector<128x128xf32>
    %148 = arith.mulf %147, %142 : vector<128x128xf32>
    %149 = arith.addf %142, %148 : vector<128x128xf32>
    %cst_97 = arith.constant 0.797884583 : f32
    %150 = vector.broadcast %cst_97 : f32 to vector<128x128xf32>
    %151 = arith.mulf %150, %149 : vector<128x128xf32>
    %152 = math.tanh %151 : vector<128x128xf32>
    %cst_98 = arith.constant 1.000000e+00 : f32
    %153 = vector.broadcast %cst_98 : f32 to vector<128x128xf32>
    %154 = arith.addf %153, %152 : vector<128x128xf32>
    %155 = arith.mulf %144, %154 : vector<128x128xf32>
    %c0_99 = arith.constant 0 : index
    %c0_100 = arith.constant 0 : index
    %c0_101 = arith.constant 0 : index
    %156 = vector.load %arg9[%c0_99, %c0_100, %c0_101] : memref<2x128x32xf32, #tpu.memory_space<vmem>>, vector<1x128x32xf32>
    %157 = vector.shape_cast %156 : vector<1x128x32xf32> to vector<128x32xf32>
    %cst_102 = arith.constant dense<0.000000e+00> : vector<128x32xf32>
    %158 = tpu.matmul %155, %157, %cst_102 {dimension_numbers = #tpu.dot_dimension_numbers<[1], [0], [0], [1], [0, 0, 1, 1], [], []>} : vector<128x128xf32>, vector<128x32xf32>, vector<128x32xf32> -> vector<128x32xf32>
    %c5_103 = arith.constant 5 : index
    %c0_104 = arith.constant 0 : index
    %c0_105 = arith.constant 0 : index
    %159 = vector.load %arg10[%c5_103, %c0_104, %c0_105] : memref<12x1x32xf32, #tpu.memory_space<vmem>>, vector<1x1x32xf32>
    %160 = vector.shape_cast %159 : vector<1x1x32xf32> to vector<1x32xf32>
    %161 = vector.broadcast %160 : vector<1x32xf32> to vector<128x32xf32>
    %162 = arith.addf %158, %161 : vector<128x32xf32>
    %163 = arith.addf %111, %162 : vector<128x32xf32>
    %c1_106 = arith.constant 1 : index
    %c0_107 = arith.constant 0 : index
    %c0_108 = arith.constant 0 : index
    %164 = vector.load %arg2[%c1_106, %c0_107, %c0_108] : memref<3x128x128xf32, #tpu.memory_space<vmem>>, vector<1x128x128xf32>
    %165 = vector.shape_cast %164 : vector<1x128x128xf32> to vector<128x128xf32>
    %cst_109 = arith.constant dense<0.000000e+00> : vector<128x32xf32>
    %166 = tpu.matmul %165, %163, %cst_109 {dimension_numbers = #tpu.dot_dimension_numbers<[1], [0], [0], [1], [0, 0, 1, 1], [], []>} : vector<128x128xf32>, vector<128x32xf32>, vector<128x32xf32> -> vector<128x32xf32>
    %c6 = arith.constant 6 : index
    %c0_110 = arith.constant 0 : index
    %c0_111 = arith.constant 0 : index
    %167 = vector.load %arg10[%c6, %c0_110, %c0_111] : memref<12x1x32xf32, #tpu.memory_space<vmem>>, vector<1x1x32xf32>
    %168 = vector.shape_cast %167 : vector<1x1x32xf32> to vector<1x32xf32>
    %c7 = arith.constant 7 : index
    %c0_112 = arith.constant 0 : index
    %c0_113 = arith.constant 0 : index
    %169 = vector.load %arg10[%c7, %c0_112, %c0_113] : memref<12x1x32xf32, #tpu.memory_space<vmem>>, vector<1x1x32xf32>
    %170 = vector.shape_cast %169 : vector<1x1x32xf32> to vector<1x32xf32>
    %cst_114 = arith.constant dense<0.000000e+00> : vector<128xf32>
    %171 = vector.multi_reduction <add>, %166, %cst_114 [1] : vector<128x32xf32> to vector<128xf32>
    %172 = vector.shape_cast %171 : vector<128xf32> to vector<128x1xf32>
    %cst_115 = arith.constant 3.200000e+01 : f32
    %173 = vector.broadcast %cst_115 : f32 to vector<128x1xf32>
    %174 = arith.divf %172, %173 : vector<128x1xf32>
    %175 = vector.broadcast %174 : vector<128x1xf32> to vector<128x32xf32>
    %176 = arith.subf %166, %175 : vector<128x32xf32>
    %177 = arith.mulf %176, %176 : vector<128x32xf32>
    %cst_116 = arith.constant dense<0.000000e+00> : vector<128xf32>
    %178 = vector.multi_reduction <add>, %177, %cst_116 [1] : vector<128x32xf32> to vector<128xf32>
    %179 = vector.shape_cast %178 : vector<128xf32> to vector<128x1xf32>
    %cst_117 = arith.constant 3.200000e+01 : f32
    %180 = vector.broadcast %cst_117 : f32 to vector<128x1xf32>
    %181 = arith.divf %179, %180 : vector<128x1xf32>
    %cst_118 = arith.constant 9.99999974E-6 : f32
    %182 = vector.broadcast %cst_118 : f32 to vector<128x1xf32>
    %183 = arith.addf %181, %182 : vector<128x1xf32>
    %184 = math.rsqrt %183 : vector<128x1xf32>
    %185 = vector.broadcast %184 : vector<128x1xf32> to vector<128x32xf32>
    %186 = arith.mulf %176, %185 : vector<128x32xf32>
    %187 = vector.broadcast %168 : vector<1x32xf32> to vector<128x32xf32>
    %188 = arith.mulf %186, %187 : vector<128x32xf32>
    %189 = vector.broadcast %170 : vector<1x32xf32> to vector<128x32xf32>
    %190 = arith.addf %188, %189 : vector<128x32xf32>
    %c6_119 = arith.constant 6 : index
    %c0_120 = arith.constant 0 : index
    %c0_121 = arith.constant 0 : index
    %191 = vector.load %arg3[%c6_119, %c0_120, %c0_121] : memref<12x32x16xf32, #tpu.memory_space<vmem>>, vector<1x32x16xf32>
    %192 = vector.shape_cast %191 : vector<1x32x16xf32> to vector<32x16xf32>
    %cst_122 = arith.constant dense<0.000000e+00> : vector<128x16xf32>
    %193 = tpu.matmul %190, %192, %cst_122 {dimension_numbers = #tpu.dot_dimension_numbers<[1], [0], [0], [1], [0, 0, 1, 1], [], []>} : vector<128x32xf32>, vector<32x16xf32>, vector<128x16xf32> -> vector<128x16xf32>
    %c6_123 = arith.constant 6 : index
    %c0_124 = arith.constant 0 : index
    %c0_125 = arith.constant 0 : index
    %194 = vector.load %arg4[%c6_123, %c0_124, %c0_125] : memref<12x1x16xf32, #tpu.memory_space<vmem>>, vector<1x1x16xf32>
    %195 = vector.shape_cast %194 : vector<1x1x16xf32> to vector<1x16xf32>
    %196 = vector.broadcast %195 : vector<1x16xf32> to vector<128x16xf32>
    %197 = arith.addf %193, %196 : vector<128x16xf32>
    %c8 = arith.constant 8 : index
    %c0_126 = arith.constant 0 : index
    %c0_127 = arith.constant 0 : index
    %198 = vector.load %arg3[%c8, %c0_126, %c0_127] : memref<12x32x16xf32, #tpu.memory_space<vmem>>, vector<1x32x16xf32>
    %199 = vector.shape_cast %198 : vector<1x32x16xf32> to vector<32x16xf32>
    %cst_128 = arith.constant dense<0.000000e+00> : vector<128x16xf32>
    %200 = tpu.matmul %190, %199, %cst_128 {dimension_numbers = #tpu.dot_dimension_numbers<[1], [0], [0], [1], [0, 0, 1, 1], [], []>} : vector<128x32xf32>, vector<32x16xf32>, vector<128x16xf32> -> vector<128x16xf32>
    %c8_129 = arith.constant 8 : index
    %c0_130 = arith.constant 0 : index
    %c0_131 = arith.constant 0 : index
    %201 = vector.load %arg4[%c8_129, %c0_130, %c0_131] : memref<12x1x16xf32, #tpu.memory_space<vmem>>, vector<1x1x16xf32>
    %202 = vector.shape_cast %201 : vector<1x1x16xf32> to vector<1x16xf32>
    %203 = vector.broadcast %202 : vector<1x16xf32> to vector<128x16xf32>
    %204 = arith.addf %200, %203 : vector<128x16xf32>
    %c10 = arith.constant 10 : index
    %c0_132 = arith.constant 0 : index
    %c0_133 = arith.constant 0 : index
    %205 = vector.load %arg3[%c10, %c0_132, %c0_133] : memref<12x32x16xf32, #tpu.memory_space<vmem>>, vector<1x32x16xf32>
    %206 = vector.shape_cast %205 : vector<1x32x16xf32> to vector<32x16xf32>
    %cst_134 = arith.constant dense<0.000000e+00> : vector<128x16xf32>
    %207 = tpu.matmul %190, %206, %cst_134 {dimension_numbers = #tpu.dot_dimension_numbers<[1], [0], [0], [1], [0, 0, 1, 1], [], []>} : vector<128x32xf32>, vector<32x16xf32>, vector<128x16xf32> -> vector<128x16xf32>
    %c10_135 = arith.constant 10 : index
    %c0_136 = arith.constant 0 : index
    %c0_137 = arith.constant 0 : index
    %208 = vector.load %arg4[%c10_135, %c0_136, %c0_137] : memref<12x1x16xf32, #tpu.memory_space<vmem>>, vector<1x1x16xf32>
    %209 = vector.shape_cast %208 : vector<1x1x16xf32> to vector<1x16xf32>
    %210 = vector.broadcast %209 : vector<1x16xf32> to vector<128x16xf32>
    %211 = arith.addf %207, %210 : vector<128x16xf32>
    "tpu.trace_start"() <{level = 10 : i32, message = "pd,qd->pq"}> : () -> ()
    %cst_138 = arith.constant dense<0.000000e+00> : vector<128x128xf32>
    %212 = tpu.matmul %197, %204, %cst_138 {dimension_numbers = #tpu.dot_dimension_numbers<[1], [1], [0], [0], [0, 0, 1, 0], [], []>} : vector<128x16xf32>, vector<128x16xf32>, vector<128x128xf32> -> vector<128x128xf32>
    "tpu.trace_stop"() : () -> ()
    %c2_139 = arith.constant 2 : index
    %c0_140 = arith.constant 0 : index
    %c0_141 = arith.constant 0 : index
    %213 = vector.load %arg6[%c2_139, %c0_140, %c0_141] : memref<4x128x128xf32, #tpu.memory_space<vmem>>, vector<1x128x128xf32>
    %214 = vector.shape_cast %213 : vector<1x128x128xf32> to vector<128x128xf32>
    %215 = arith.addf %212, %214 : vector<128x128xf32>
    %cst_142 = arith.constant dense<0xFF800000> : vector<128xf32>
    %216 = vector.multi_reduction <maximumf>, %215, %cst_142 [1] : vector<128x128xf32> to vector<128xf32>
    %217 = vector.shape_cast %216 : vector<128xf32> to vector<128x1xf32>
    %218 = vector.broadcast %217 : vector<128x1xf32> to vector<128x128xf32>
    %219 = arith.subf %215, %218 : vector<128x128xf32>
    %220 = math.exp %219 : vector<128x128xf32>
    %cst_143 = arith.constant dense<0.000000e+00> : vector<128xf32>
    %221 = vector.multi_reduction <add>, %220, %cst_143 [1] : vector<128x128xf32> to vector<128xf32>
    %222 = vector.shape_cast %221 : vector<128xf32> to vector<128x1xf32>
    %223 = tpu.reciprocal %222 {approx = true} : vector<128x1xf32> -> vector<128x1xf32>
    %224 = vector.broadcast %223 : vector<128x1xf32> to vector<128x128xf32>
    %225 = arith.mulf %220, %224 : vector<128x128xf32>
    %cst_144 = arith.constant dense<0.000000e+00> : vector<128x16xf32>
    %226 = tpu.matmul %225, %211, %cst_144 {dimension_numbers = #tpu.dot_dimension_numbers<[1], [0], [0], [1], [0, 0, 1, 1], [], []>} : vector<128x128xf32>, vector<128x16xf32>, vector<128x16xf32> -> vector<128x16xf32>
    %c2_145 = arith.constant 2 : index
    %c0_146 = arith.constant 0 : index
    %c0_147 = arith.constant 0 : index
    %227 = vector.load %arg5[%c2_145, %c0_146, %c0_147] : memref<4x16x32xf32, #tpu.memory_space<vmem>>, vector<1x16x32xf32>
    %228 = vector.shape_cast %227 : vector<1x16x32xf32> to vector<16x32xf32>
    %cst_148 = arith.constant dense<0.000000e+00> : vector<128x32xf32>
    %229 = tpu.matmul %226, %228, %cst_148 {dimension_numbers = #tpu.dot_dimension_numbers<[1], [0], [0], [1], [0, 0, 1, 1], [], []>} : vector<128x16xf32>, vector<16x32xf32>, vector<128x32xf32> -> vector<128x32xf32>
    %c7_149 = arith.constant 7 : index
    %c0_150 = arith.constant 0 : index
    %c0_151 = arith.constant 0 : index
    %230 = vector.load %arg3[%c7_149, %c0_150, %c0_151] : memref<12x32x16xf32, #tpu.memory_space<vmem>>, vector<1x32x16xf32>
    %231 = vector.shape_cast %230 : vector<1x32x16xf32> to vector<32x16xf32>
    %cst_152 = arith.constant dense<0.000000e+00> : vector<128x16xf32>
    %232 = tpu.matmul %190, %231, %cst_152 {dimension_numbers = #tpu.dot_dimension_numbers<[1], [0], [0], [1], [0, 0, 1, 1], [], []>} : vector<128x32xf32>, vector<32x16xf32>, vector<128x16xf32> -> vector<128x16xf32>
    %c7_153 = arith.constant 7 : index
    %c0_154 = arith.constant 0 : index
    %c0_155 = arith.constant 0 : index
    %233 = vector.load %arg4[%c7_153, %c0_154, %c0_155] : memref<12x1x16xf32, #tpu.memory_space<vmem>>, vector<1x1x16xf32>
    %234 = vector.shape_cast %233 : vector<1x1x16xf32> to vector<1x16xf32>
    %235 = vector.broadcast %234 : vector<1x16xf32> to vector<128x16xf32>
    %236 = arith.addf %232, %235 : vector<128x16xf32>
    %c9 = arith.constant 9 : index
    %c0_156 = arith.constant 0 : index
    %c0_157 = arith.constant 0 : index
    %237 = vector.load %arg3[%c9, %c0_156, %c0_157] : memref<12x32x16xf32, #tpu.memory_space<vmem>>, vector<1x32x16xf32>
    %238 = vector.shape_cast %237 : vector<1x32x16xf32> to vector<32x16xf32>
    %cst_158 = arith.constant dense<0.000000e+00> : vector<128x16xf32>
    %239 = tpu.matmul %190, %238, %cst_158 {dimension_numbers = #tpu.dot_dimension_numbers<[1], [0], [0], [1], [0, 0, 1, 1], [], []>} : vector<128x32xf32>, vector<32x16xf32>, vector<128x16xf32> -> vector<128x16xf32>
    %c9_159 = arith.constant 9 : index
    %c0_160 = arith.constant 0 : index
    %c0_161 = arith.constant 0 : index
    %240 = vector.load %arg4[%c9_159, %c0_160, %c0_161] : memref<12x1x16xf32, #tpu.memory_space<vmem>>, vector<1x1x16xf32>
    %241 = vector.shape_cast %240 : vector<1x1x16xf32> to vector<1x16xf32>
    %242 = vector.broadcast %241 : vector<1x16xf32> to vector<128x16xf32>
    %243 = arith.addf %239, %242 : vector<128x16xf32>
    %c11 = arith.constant 11 : index
    %c0_162 = arith.constant 0 : index
    %c0_163 = arith.constant 0 : index
    %244 = vector.load %arg3[%c11, %c0_162, %c0_163] : memref<12x32x16xf32, #tpu.memory_space<vmem>>, vector<1x32x16xf32>
    %245 = vector.shape_cast %244 : vector<1x32x16xf32> to vector<32x16xf32>
    %cst_164 = arith.constant dense<0.000000e+00> : vector<128x16xf32>
    %246 = tpu.matmul %190, %245, %cst_164 {dimension_numbers = #tpu.dot_dimension_numbers<[1], [0], [0], [1], [0, 0, 1, 1], [], []>} : vector<128x32xf32>, vector<32x16xf32>, vector<128x16xf32> -> vector<128x16xf32>
    %c11_165 = arith.constant 11 : index
    %c0_166 = arith.constant 0 : index
    %c0_167 = arith.constant 0 : index
    %247 = vector.load %arg4[%c11_165, %c0_166, %c0_167] : memref<12x1x16xf32, #tpu.memory_space<vmem>>, vector<1x1x16xf32>
    %248 = vector.shape_cast %247 : vector<1x1x16xf32> to vector<1x16xf32>
    %249 = vector.broadcast %248 : vector<1x16xf32> to vector<128x16xf32>
    %250 = arith.addf %246, %249 : vector<128x16xf32>
    "tpu.trace_start"() <{level = 10 : i32, message = "pd,qd->pq"}> : () -> ()
    %cst_168 = arith.constant dense<0.000000e+00> : vector<128x128xf32>
    %251 = tpu.matmul %236, %243, %cst_168 {dimension_numbers = #tpu.dot_dimension_numbers<[1], [1], [0], [0], [0, 0, 1, 0], [], []>} : vector<128x16xf32>, vector<128x16xf32>, vector<128x128xf32> -> vector<128x128xf32>
    "tpu.trace_stop"() : () -> ()
    %c3_169 = arith.constant 3 : index
    %c0_170 = arith.constant 0 : index
    %c0_171 = arith.constant 0 : index
    %252 = vector.load %arg6[%c3_169, %c0_170, %c0_171] : memref<4x128x128xf32, #tpu.memory_space<vmem>>, vector<1x128x128xf32>
    %253 = vector.shape_cast %252 : vector<1x128x128xf32> to vector<128x128xf32>
    %254 = arith.addf %251, %253 : vector<128x128xf32>
    %cst_172 = arith.constant dense<0xFF800000> : vector<128xf32>
    %255 = vector.multi_reduction <maximumf>, %254, %cst_172 [1] : vector<128x128xf32> to vector<128xf32>
    %256 = vector.shape_cast %255 : vector<128xf32> to vector<128x1xf32>
    %257 = vector.broadcast %256 : vector<128x1xf32> to vector<128x128xf32>
    %258 = arith.subf %254, %257 : vector<128x128xf32>
    %259 = math.exp %258 : vector<128x128xf32>
    %cst_173 = arith.constant dense<0.000000e+00> : vector<128xf32>
    %260 = vector.multi_reduction <add>, %259, %cst_173 [1] : vector<128x128xf32> to vector<128xf32>
    %261 = vector.shape_cast %260 : vector<128xf32> to vector<128x1xf32>
    %262 = tpu.reciprocal %261 {approx = true} : vector<128x1xf32> -> vector<128x1xf32>
    %263 = vector.broadcast %262 : vector<128x1xf32> to vector<128x128xf32>
    %264 = arith.mulf %259, %263 : vector<128x128xf32>
    %cst_174 = arith.constant dense<0.000000e+00> : vector<128x16xf32>
    %265 = tpu.matmul %264, %250, %cst_174 {dimension_numbers = #tpu.dot_dimension_numbers<[1], [0], [0], [1], [0, 0, 1, 1], [], []>} : vector<128x128xf32>, vector<128x16xf32>, vector<128x16xf32> -> vector<128x16xf32>
    %c3_175 = arith.constant 3 : index
    %c0_176 = arith.constant 0 : index
    %c0_177 = arith.constant 0 : index
    %266 = vector.load %arg5[%c3_175, %c0_176, %c0_177] : memref<4x16x32xf32, #tpu.memory_space<vmem>>, vector<1x16x32xf32>
    %267 = vector.shape_cast %266 : vector<1x16x32xf32> to vector<16x32xf32>
    %cst_178 = arith.constant dense<0.000000e+00> : vector<128x32xf32>
    %268 = tpu.matmul %265, %267, %cst_178 {dimension_numbers = #tpu.dot_dimension_numbers<[1], [0], [0], [1], [0, 0, 1, 1], [], []>} : vector<128x16xf32>, vector<16x32xf32>, vector<128x32xf32> -> vector<128x32xf32>
    %269 = arith.addf %229, %268 : vector<128x32xf32>
    %270 = arith.addf %166, %269 : vector<128x32xf32>
    %c10_179 = arith.constant 10 : index
    %c0_180 = arith.constant 0 : index
    %c0_181 = arith.constant 0 : index
    %271 = vector.load %arg10[%c10_179, %c0_180, %c0_181] : memref<12x1x32xf32, #tpu.memory_space<vmem>>, vector<1x1x32xf32>
    %272 = vector.shape_cast %271 : vector<1x1x32xf32> to vector<1x32xf32>
    %273 = vector.broadcast %272 : vector<1x32xf32> to vector<128x32xf32>
    %274 = arith.addf %270, %273 : vector<128x32xf32>
    %c8_182 = arith.constant 8 : index
    %c0_183 = arith.constant 0 : index
    %c0_184 = arith.constant 0 : index
    %275 = vector.load %arg10[%c8_182, %c0_183, %c0_184] : memref<12x1x32xf32, #tpu.memory_space<vmem>>, vector<1x1x32xf32>
    %276 = vector.shape_cast %275 : vector<1x1x32xf32> to vector<1x32xf32>
    %c9_185 = arith.constant 9 : index
    %c0_186 = arith.constant 0 : index
    %c0_187 = arith.constant 0 : index
    %277 = vector.load %arg10[%c9_185, %c0_186, %c0_187] : memref<12x1x32xf32, #tpu.memory_space<vmem>>, vector<1x1x32xf32>
    %278 = vector.shape_cast %277 : vector<1x1x32xf32> to vector<1x32xf32>
    %cst_188 = arith.constant dense<0.000000e+00> : vector<128xf32>
    %279 = vector.multi_reduction <add>, %274, %cst_188 [1] : vector<128x32xf32> to vector<128xf32>
    %280 = vector.shape_cast %279 : vector<128xf32> to vector<128x1xf32>
    %cst_189 = arith.constant 3.200000e+01 : f32
    %281 = vector.broadcast %cst_189 : f32 to vector<128x1xf32>
    %282 = arith.divf %280, %281 : vector<128x1xf32>
    %283 = vector.broadcast %282 : vector<128x1xf32> to vector<128x32xf32>
    %284 = arith.subf %274, %283 : vector<128x32xf32>
    %285 = arith.mulf %284, %284 : vector<128x32xf32>
    %cst_190 = arith.constant dense<0.000000e+00> : vector<128xf32>
    %286 = vector.multi_reduction <add>, %285, %cst_190 [1] : vector<128x32xf32> to vector<128xf32>
    %287 = vector.shape_cast %286 : vector<128xf32> to vector<128x1xf32>
    %cst_191 = arith.constant 3.200000e+01 : f32
    %288 = vector.broadcast %cst_191 : f32 to vector<128x1xf32>
    %289 = arith.divf %287, %288 : vector<128x1xf32>
    %cst_192 = arith.constant 9.99999974E-6 : f32
    %290 = vector.broadcast %cst_192 : f32 to vector<128x1xf32>
    %291 = arith.addf %289, %290 : vector<128x1xf32>
    %292 = math.rsqrt %291 : vector<128x1xf32>
    %293 = vector.broadcast %292 : vector<128x1xf32> to vector<128x32xf32>
    %294 = arith.mulf %284, %293 : vector<128x32xf32>
    %295 = vector.broadcast %276 : vector<1x32xf32> to vector<128x32xf32>
    %296 = arith.mulf %294, %295 : vector<128x32xf32>
    %297 = vector.broadcast %278 : vector<1x32xf32> to vector<128x32xf32>
    %298 = arith.addf %296, %297 : vector<128x32xf32>
    %c1_193 = arith.constant 1 : index
    %c0_194 = arith.constant 0 : index
    %c0_195 = arith.constant 0 : index
    %299 = vector.load %arg7[%c1_193, %c0_194, %c0_195] : memref<2x32x128xf32, #tpu.memory_space<vmem>>, vector<1x32x128xf32>
    %300 = vector.shape_cast %299 : vector<1x32x128xf32> to vector<32x128xf32>
    %cst_196 = arith.constant dense<0.000000e+00> : vector<128x128xf32>
    %301 = tpu.matmul %298, %300, %cst_196 {dimension_numbers = #tpu.dot_dimension_numbers<[1], [0], [0], [1], [0, 0, 1, 1], [], []>} : vector<128x32xf32>, vector<32x128xf32>, vector<128x128xf32> -> vector<128x128xf32>
    %c1_197 = arith.constant 1 : index
    %c0_198 = arith.constant 0 : index
    %c0_199 = arith.constant 0 : index
    %302 = vector.load %arg8[%c1_197, %c0_198, %c0_199] : memref<2x1x128xf32, #tpu.memory_space<vmem>>, vector<1x1x128xf32>
    %303 = vector.shape_cast %302 : vector<1x1x128xf32> to vector<1x128xf32>
    %304 = vector.broadcast %303 : vector<1x128xf32> to vector<128x128xf32>
    %305 = arith.addf %301, %304 : vector<128x128xf32>
    %cst_200 = arith.constant 5.000000e-01 : f32
    %306 = vector.broadcast %cst_200 : f32 to vector<128x128xf32>
    %307 = arith.mulf %306, %305 : vector<128x128xf32>
    %cst_201 = arith.constant 4.471500e-02 : f32
    %308 = vector.broadcast %cst_201 : f32 to vector<128x128xf32>
    %309 = arith.mulf %308, %305 : vector<128x128xf32>
    %310 = arith.mulf %309, %305 : vector<128x128xf32>
    %311 = arith.mulf %310, %305 : vector<128x128xf32>
    %312 = arith.addf %305, %311 : vector<128x128xf32>
    %cst_202 = arith.constant 0.797884583 : f32
    %313 = vector.broadcast %cst_202 : f32 to vector<128x128xf32>
    %314 = arith.mulf %313, %312 : vector<128x128xf32>
    %315 = math.tanh %314 : vector<128x128xf32>
    %cst_203 = arith.constant 1.000000e+00 : f32
    %316 = vector.broadcast %cst_203 : f32 to vector<128x128xf32>
    %317 = arith.addf %316, %315 : vector<128x128xf32>
    %318 = arith.mulf %307, %317 : vector<128x128xf32>
    %c1_204 = arith.constant 1 : index
    %c0_205 = arith.constant 0 : index
    %c0_206 = arith.constant 0 : index
    %319 = vector.load %arg9[%c1_204, %c0_205, %c0_206] : memref<2x128x32xf32, #tpu.memory_space<vmem>>, vector<1x128x32xf32>
    %320 = vector.shape_cast %319 : vector<1x128x32xf32> to vector<128x32xf32>
    %cst_207 = arith.constant dense<0.000000e+00> : vector<128x32xf32>
    %321 = tpu.matmul %318, %320, %cst_207 {dimension_numbers = #tpu.dot_dimension_numbers<[1], [0], [0], [1], [0, 0, 1, 1], [], []>} : vector<128x128xf32>, vector<128x32xf32>, vector<128x32xf32> -> vector<128x32xf32>
    %c11_208 = arith.constant 11 : index
    %c0_209 = arith.constant 0 : index
    %c0_210 = arith.constant 0 : index
    %322 = vector.load %arg10[%c11_208, %c0_209, %c0_210] : memref<12x1x32xf32, #tpu.memory_space<vmem>>, vector<1x1x32xf32>
    %323 = vector.shape_cast %322 : vector<1x1x32xf32> to vector<1x32xf32>
    %324 = vector.broadcast %323 : vector<1x32xf32> to vector<128x32xf32>
    %325 = arith.addf %321, %324 : vector<128x32xf32>
    %326 = arith.addf %274, %325 : vector<128x32xf32>
    %c2_211 = arith.constant 2 : index
    %c0_212 = arith.constant 0 : index
    %c0_213 = arith.constant 0 : index
    %327 = vector.load %arg2[%c2_211, %c0_212, %c0_213] : memref<3x128x128xf32, #tpu.memory_space<vmem>>, vector<1x128x128xf32>
    %328 = vector.shape_cast %327 : vector<1x128x128xf32> to vector<128x128xf32>
    %cst_214 = arith.constant dense<0.000000e+00> : vector<128x32xf32>
    %329 = tpu.matmul %328, %326, %cst_214 {dimension_numbers = #tpu.dot_dimension_numbers<[1], [0], [0], [1], [0, 0, 1, 1], [], []>} : vector<128x128xf32>, vector<128x32xf32>, vector<128x32xf32> -> vector<128x32xf32>
    %c0_215 = arith.constant 0 : index
    %c0_216 = arith.constant 0 : index
    %330 = vector.load %arg11[%c0_215, %c0_216] : memref<128x32xf32, #tpu.memory_space<vmem>>, vector<128x32xf32>
    tpu.vector_store %arg11[%c0_215, %c0_216], %329 {strides = array<i32>} : memref<128x32xf32, #tpu.memory_space<vmem>>, vector<128x32xf32>,
    return
  }
  func.func @transform_0(%arg0: i32) -> (i32, i32) {
    %c0_i32 = arith.constant 0 : i32
    %c0_i32_0 = arith.constant 0 : i32
    %c0_i32_1 = arith.constant 0 : i32
    return %c0_i32, %c0_i32_0 : i32, i32
  }
  func.func @transform_1(%arg0: i32) -> (i32, i32, i32) {
    %c0_i32 = arith.constant 0 : i32
    %c0_i32_0 = arith.constant 0 : i32
    %c0_i32_1 = arith.constant 0 : i32
    %c0_i32_2 = arith.constant 0 : i32
    return %c0_i32, %c0_i32_0, %c0_i32_1 : i32, i32, i32
  }
  func.func @transform_2(%arg0: i32) -> (i32, i32, i32) {
    %c0_i32 = arith.constant 0 : i32
    %c0_i32_0 = arith.constant 0 : i32
    %c0_i32_1 = arith.constant 0 : i32
    %c0_i32_2 = arith.constant 0 : i32
    return %c0_i32, %c0_i32_0, %c0_i32_1 : i32, i32, i32
  }
  func.func @transform_3(%arg0: i32) -> (i32, i32, i32) {
    %c0_i32 = arith.constant 0 : i32
    %c0_i32_0 = arith.constant 0 : i32
    %c0_i32_1 = arith.constant 0 : i32
    %c0_i32_2 = arith.constant 0 : i32
    return %c0_i32, %c0_i32_0, %c0_i32_1 : i32, i32, i32
  }
  func.func @transform_4(%arg0: i32) -> (i32, i32, i32) {
    %c0_i32 = arith.constant 0 : i32
    %c0_i32_0 = arith.constant 0 : i32
    %c0_i32_1 = arith.constant 0 : i32
    %c0_i32_2 = arith.constant 0 : i32
    return %c0_i32, %c0_i32_0, %c0_i32_1 : i32, i32, i32
  }
  func.func @transform_5(%arg0: i32) -> (i32, i32, i32) {
    %c0_i32 = arith.constant 0 : i32
    %c0_i32_0 = arith.constant 0 : i32
    %c0_i32_1 = arith.constant 0 : i32
    %c0_i32_2 = arith.constant 0 : i32
    return %c0_i32, %c0_i32_0, %c0_i32_1 : i32, i32, i32
  }
  func.func @transform_6(%arg0: i32) -> (i32, i32, i32) {
    %c0_i32 = arith.constant 0 : i32
    %c0_i32_0 = arith.constant 0 : i32
    %c0_i32_1 = arith.constant 0 : i32
    %c0_i32_2 = arith.constant 0 : i32
    return %c0_i32, %c0_i32_0, %c0_i32_1 : i32, i32, i32
  }
  func.func @transform_7(%arg0: i32) -> (i32, i32, i32) {
    %c0_i32 = arith.constant 0 : i32
    %c0_i32_0 = arith.constant 0 : i32
    %c0_i32_1 = arith.constant 0 : i32
    %c0_i32_2 = arith.constant 0 : i32
    return %c0_i32, %c0_i32_0, %c0_i32_1 : i32, i32, i32
  }
  func.func @transform_8(%arg0: i32) -> (i32, i32, i32) {
    %c0_i32 = arith.constant 0 : i32
    %c0_i32_0 = arith.constant 0 : i32
    %c0_i32_1 = arith.constant 0 : i32
    %c0_i32_2 = arith.constant 0 : i32
    return %c0_i32, %c0_i32_0, %c0_i32_1 : i32, i32, i32
  }
  func.func @transform_9(%arg0: i32) -> (i32, i32, i32) {
    %c0_i32 = arith.constant 0 : i32
    %c0_i32_0 = arith.constant 0 : i32
    %c0_i32_1 = arith.constant 0 : i32
    %c0_i32_2 = arith.constant 0 : i32
    return %c0_i32, %c0_i32_0, %c0_i32_1 : i32, i32, i32
  }
  func.func @transform_10(%arg0: i32) -> (i32, i32) {
    %c0_i32 = arith.constant 0 : i32
    %c0_i32_0 = arith.constant 0 : i32
    %c0_i32_1 = arith.constant 0 : i32
    return %c0_i32, %c0_i32_0 : i32, i32
  }
}

</mosaic_0001>

<llo_original>
// kernel: swin_block_forward.1
$region0: #{swin_block_forward.1}
  #allocation0 [shape = 'u32[]', space=smem, size = 0x4, offset = 0x4, fixed_abs, tag = 'smem constant byte address 0x4 - core index']
  #allocation1 [shape = 'u32[144,128]{1,0:T(1,128)}', space=vmem, size = 0x12000, scoped, tag = 'internal scratch']
  %s0 = inlined_call_operand.hbm [shape: f32[128,32], index: 0, kind: input, shape index: {}]
  %s1 = inlined_call_operand.vmem [shape: f32[3,128,128], index: 1, kind: input, shape index: {}]
  %s2 = inlined_call_operand.vmem [shape: f32[12,32,16], index: 2, kind: input, shape index: {}]
  %s3 = inlined_call_operand.hbm [shape: f32[12,1,16], index: 3, kind: input, shape index: {}]
  %s4 = inlined_call_operand.hbm [shape: f32[4,16,32], index: 4, kind: input, shape index: {}]
  %s5 = inlined_call_operand.vmem [shape: f32[4,128,128], index: 5, kind: input, shape index: {}]
  %s6 = inlined_call_operand.hbm [shape: f32[2,32,128], index: 6, kind: input, shape index: {}]
  %s7 = inlined_call_operand.vmem [shape: f32[2,1,128], index: 7, kind: input, shape index: {}]
  %s8 = inlined_call_operand.vmem [shape: f32[2,128,32], index: 8, kind: input, shape index: {}]
  %s9 = inlined_call_operand.vmem [shape: f32[12,1,32], index: 9, kind: input, shape index: {}]
  %s10 = inlined_call_operand.hbm [shape: f32[128,32], index: 10, kind: output, shape index: {}]
  %s11 = sld [smem:[#allocation0]]
  $region66: #{swin_block_forward.1} parent=0
    _
  %s13 = ssub.s32 1, %s11
  %s14 = scalar_select 0, %s13, %s11
  $region1: #{swin_block_forward.1} parent=0
    #allocation2 [shape = 'u8[65536]{0}', space=vmem, size = 0x10000, scoped, tag = 'input window, operand 0, single buffered']
    #allocation3 [shape = 's32[1]{0}', space=sflag, size = 0x4, scoped, tag = 'scoped memory for swin_block_forward.1']
    #allocation4 [shape = 's32[1]{0}', space=sflag, size = 0x4, scoped, tag = 'scoped memory for swin_block_forward.1']
    #allocation5 [shape = 'u8[6144]{0}', space=vmem, size = 0x1800, scoped, tag = 'input window, operand 3, single buffered']
    #allocation6 [shape = 's32[1]{0}', space=sflag, size = 0x4, scoped, tag = 'scoped memory for swin_block_forward.1']
    #allocation7 [shape = 'u8[32768]{0}', space=vmem, size = 0x8000, scoped, tag = 'input window, operand 4, single buffered']
    #allocation8 [shape = 'u8[32768]{0}', space=vmem, size = 0x8000, scoped, tag = 'input window, operand 6, single buffered']
    #allocation9 [shape = 's32[1]{0}', space=sflag, size = 0x4, scoped, tag = 'scoped memory for swin_block_forward.1']
    #allocation10 [shape = 'u8[65536]{0}', space=vmem, size = 0x10000, scoped, tag = 'output window, operand 0, single buffered']
    %15 = vsyncpa [#allocation3], 0
    %16 = vsyncpa [#allocation6], 0
    %17 = vsyncpa [#allocation9], 0
    %18 = vsyncpa [#allocation4], 0
    // Predicated region
    $region2: #{swin_block_forward.1} parent=1 // pred_check
      _
    $region3: #{swin_block_forward.1} parent=1 // pred_check_branch
      %20 = sbr.rel (0) target = $region5
    $region4: #{swin_block_forward.1} parent=1 // pred_region
      %s22 = ssub.s32 2048, 2048
      %23 = vsyncadd [#allocation3], %s22
      %s24 = sshll.u32 [#allocation2], 4
      %s25 = int_to_ptr.vmem [resolvable:$true] %s24
      %30 = dma.hbm_to_vmem [thread:$0]  %s0, 2048, %s25, [#allocation3], 128, 128, 8
    $region5: #{swin_block_forward.1} parent=1 // pred_fallthru
      _
    // Predicated region
    $region6: #{swin_block_forward.1} parent=1 // pred_check
      _
    $region7: #{swin_block_forward.1} parent=1 // pred_check_branch
      %32 = sbr.rel (0) target = $region9
    $region8: #{swin_block_forward.1} parent=1 // pred_region
      _
    $region9: #{swin_block_forward.1} parent=1 // pred_fallthru
      _
    // Predicated region
    $region10: #{swin_block_forward.1} parent=1 // pred_check
      _
    $region11: #{swin_block_forward.1} parent=1 // pred_check_branch
      %34 = sbr.rel (0) target = $region13
    $region12: #{swin_block_forward.1} parent=1 // pred_region
      _
    $region13: #{swin_block_forward.1} parent=1 // pred_fallthru
      _
    // Predicated region
    $region14: #{swin_block_forward.1} parent=1 // pred_check
      _
    $region15: #{swin_block_forward.1} parent=1 // pred_check_branch
      %36 = sbr.rel (0) target = $region17
    $region16: #{swin_block_forward.1} parent=1 // pred_region
      %s38 = ssub.s32 192, 192
      %39 = vsyncadd [#allocation6], %s38
      %s40 = sshll.u32 [#allocation5], 4
      %s41 = int_to_ptr.vmem [resolvable:$true] %s40
      %46 = dma.hbm_to_vmem [thread:$0]  %s3, 192, %s41, [#allocation6], 16, 16, 1
    $region17: #{swin_block_forward.1} parent=1 // pred_fallthru
      _
    // Predicated region
    $region18: #{swin_block_forward.1} parent=1 // pred_check
      _
    $region19: #{swin_block_forward.1} parent=1 // pred_check_branch
      %48 = sbr.rel (0) target = $region21
    $region20: #{swin_block_forward.1} parent=1 // pred_region
      %s50 = ssub.s32 1024, 1024
      %51 = vsyncadd [#allocation6], %s50
      %s52 = sshll.u32 [#allocation7], 4
      %s53 = int_to_ptr.vmem [resolvable:$true] %s52
      %58 = dma.hbm_to_vmem [thread:$0]  %s4, 1024, %s53, [#allocation6], 128, 128, 8
    $region21: #{swin_block_forward.1} parent=1 // pred_fallthru
      _
    // Predicated region
    $region22: #{swin_block_forward.1} parent=1 // pred_check
      _
    $region23: #{swin_block_forward.1} parent=1 // pred_check_branch
      %60 = sbr.rel (0) target = $region25
    $region24: #{swin_block_forward.1} parent=1 // pred_region
      _
    $region25: #{swin_block_forward.1} parent=1 // pred_fallthru
      _
    // Predicated region
    $region26: #{swin_block_forward.1} parent=1 // pred_check
      _
    $region27: #{swin_block_forward.1} parent=1 // pred_check_branch
      %62 = sbr.rel (0) target = $region29
    $region28: #{swin_block_forward.1} parent=1 // pred_region
      %s64 = ssub.s32 1024, 1024
      %65 = vsyncadd [#allocation9], %s64
      %s66 = sshll.u32 [#allocation8], 4
      %s67 = int_to_ptr.vmem [resolvable:$true] %s66
      %72 = dma.hbm_to_vmem [thread:$0]  %s6, 1024, %s67, [#allocation9], 128, 128, 8
    $region29: #{swin_block_forward.1} parent=1 // pred_fallthru
      _
    // Predicated region
    $region30: #{swin_block_forward.1} parent=1 // pred_check
      _
    $region31: #{swin_block_forward.1} parent=1 // pred_check_branch
      %74 = sbr.rel (0) target = $region33
    $region32: #{swin_block_forward.1} parent=1 // pred_region
      _
    $region33: #{swin_block_forward.1} parent=1 // pred_fallthru
      _
    // Predicated region
    $region34: #{swin_block_forward.1} parent=1 // pred_check
      _
    $region35: #{swin_block_forward.1} parent=1 // pred_check_branch
      %76 = sbr.rel (0) target = $region37
    $region36: #{swin_block_forward.1} parent=1 // pred_region
      _
    $region37: #{swin_block_forward.1} parent=1 // pred_fallthru
      _
    // Predicated region
    $region38: #{swin_block_forward.1} parent=1 // pred_check
      _
    $region39: #{swin_block_forward.1} parent=1 // pred_check_branch
      %78 = sbr.rel (0) target = $region41
    $region40: #{swin_block_forward.1} parent=1 // pred_region
      _
    $region41: #{swin_block_forward.1} parent=1 // pred_fallthru
      _
    // Predicated region
    $region42: #{swin_block_forward.1} parent=1 // pred_check
      _
    $region43: #{swin_block_forward.1} parent=1 // pred_check_branch
      %80 = sbr.rel (0) target = $region45
    $region44: #{swin_block_forward.1} parent=1 // pred_region
      %81 = dma.done [#allocation3], 2048
    $region45: #{swin_block_forward.1} parent=1 // pred_fallthru
      _
    // Predicated region
    $region46: #{swin_block_forward.1} parent=1 // pred_check
      _
    $region47: #{swin_block_forward.1} parent=1 // pred_check_branch
      %83 = sbr.rel (0) target = $region49
    $region48: #{swin_block_forward.1} parent=1 // pred_region
      %84 = dma.done [#allocation6], 192
    $region49: #{swin_block_forward.1} parent=1 // pred_fallthru
      _
    // Predicated region
    $region50: #{swin_block_forward.1} parent=1 // pred_check
      _
    $region51: #{swin_block_forward.1} parent=1 // pred_check_branch
      %86 = sbr.rel (0) target = $region53
    $region52: #{swin_block_forward.1} parent=1 // pred_region
      %87 = dma.done [#allocation6], 1024
    $region53: #{swin_block_forward.1} parent=1 // pred_fallthru
      _
    // Predicated region
    $region54: #{swin_block_forward.1} parent=1 // pred_check
      _
    $region55: #{swin_block_forward.1} parent=1 // pred_check_branch
      %89 = sbr.rel (0) target = $region57
    $region56: #{swin_block_forward.1} parent=1 // pred_region
      %90 = dma.done [#allocation9], 1024
    $region57: #{swin_block_forward.1} parent=1 // pred_fallthru
      _
    %v91 = vld [vmem:[#allocation2] sm:$0xff]
    %v92 = vld [vmem:[#allocation2 + $0x8] sm:$0xff]
    %v93 = vld [vmem:[#allocation2 + $0x10] sm:$0xff]
    %v94 = vld [vmem:[#allocation2 + $0x18] sm:$0xff]
    %v95 = vld [vmem:[#allocation2 + $0x20] sm:$0xff]
    %v96 = vld [vmem:[#allocation2 + $0x28] sm:$0xff]
    %v97 = vld [vmem:[#allocation2 + $0x30] sm:$0xff]
    %v98 = vld [vmem:[#allocation2 + $0x38] sm:$0xff]
    %v99 = vld [vmem:[#allocation2 + $0x40] sm:$0xff]
    %v100 = vld [vmem:[#allocation2 + $0x48] sm:$0xff]
    %v101 = vld [vmem:[#allocation2 + $0x50] sm:$0xff]
    %v102 = vld [vmem:[#allocation2 + $0x58] sm:$0xff]
    %v103 = vld [vmem:[#allocation2 + $0x60] sm:$0xff]
    %v104 = vld [vmem:[#allocation2 + $0x68] sm:$0xff]
    %v105 = vld [vmem:[#allocation2 + $0x70] sm:$0xff]
    %v106 = vld [vmem:[#allocation2 + $0x78] sm:$0xff]
    %v107 = vld [vmem:[%s1] sm:$0xff]
    %v108 = vld [vmem:[%s1 + $0x8] sm:$0xff]
    %v109 = vld [vmem:[%s1 + $0x10] sm:$0xff]
    %v110 = vld [vmem:[%s1 + $0x18] sm:$0xff]
    %v111 = vld [vmem:[%s1 + $0x20] sm:$0xff]
    %v112 = vld [vmem:[%s1 + $0x28] sm:$0xff]
    %v113 = vld [vmem:[%s1 + $0x30] sm:$0xff]
    %v114 = vld [vmem:[%s1 + $0x38] sm:$0xff]
    %v115 = vld [vmem:[%s1 + $0x40] sm:$0xff]
    %v116 = vld [vmem:[%s1 + $0x48] sm:$0xff]
    %v117 = vld [vmem:[%s1 + $0x50] sm:$0xff]
    %v118 = vld [vmem:[%s1 + $0x58] sm:$0xff]
    %v119 = vld [vmem:[%s1 + $0x60] sm:$0xff]
    %v120 = vld [vmem:[%s1 + $0x68] sm:$0xff]
    %v121 = vld [vmem:[%s1 + $0x70] sm:$0xff]
    %v122 = vld [vmem:[%s1 + $0x78] sm:$0xff]
    %123 = vmatprep.subr.mxu0 0.0
    %124 = vmatpush1.msra.mxu0 %v91
    %125 = vmatprep.subr.mxu0 0.0
    %126 = vmatpush1.msra.mxu0 %v92
    %127 = vmatprep.subr.mxu0 0.0
    %128 = vmatpush1.msra.mxu0 %v93
    %129 = vmatprep.subr.mxu0 0.0
    %130 = vmatpush1.msra.mxu0 %v94
    %131 = vmatprep.subr.mxu0 0.0
    %132 = vmatpush1.msra.mxu0 %v95
    %133 = vmatprep.subr.mxu0 0.0
    %134 = vmatpush1.msra.mxu0 %v96
    %135 = vmatprep.subr.mxu0 0.0
    %136 = vmatpush1.msra.mxu0 %v97
    %137 = vmatprep.subr.mxu0 0.0
    %138 = vmatpush1.msra.mxu0 %v98
    %139 = vmatprep.subr.mxu0 0.0
    %140 = vmatpush1.msra.mxu0 %v99
    %141 = vmatprep.subr.mxu0 0.0
    %142 = vmatpush1.msra.mxu0 %v100
    %143 = vmatprep.subr.mxu0 0.0
    %144 = vmatpush1.msra.mxu0 %v101
    %145 = vmatprep.subr.mxu0 0.0
    %146 = vmatpush1.msra.mxu0 %v102
    %147 = vmatprep.subr.mxu0 0.0
    %148 = vmatpush1.msra.mxu0 %v103
    %149 = vmatprep.subr.mxu0 0.0
    %150 = vmatpush1.msra.mxu0 %v104
    %151 = vmatprep.subr.mxu0 0.0
    %152 = vmatpush1.msra.mxu0 %v105
    %153 = vmatprep.subr.mxu0 0.0
    %154 = vmatpush1.msra.mxu0 %v106
    %155 = vmatprep.subr.mxu0 0.0
    %156 = vmatpush1.msra.mxu0 0.0
    %157 = vmatprep.subr.mxu0 0.0
    %158 = vmatpush1.msra.mxu0 0.0
    %159 = vmatprep.subr.mxu0 0.0
    %160 = vmatpush1.msra.mxu0 0.0
    %161 = vmatprep.subr.mxu0 0.0
    %162 = vmatpush1.msra.mxu0 0.0
    %163 = vmatprep.subr.mxu0 0.0
    %164 = vmatpush1.msra.mxu0 0.0
    %165 = vmatprep.subr.mxu0 0.0
    %166 = vmatpush1.msra.mxu0 0.0
    %167 = vmatprep.subr.mxu0 0.0
    %168 = vmatpush1.msra.mxu0 0.0
    %169 = vmatprep.subr.mxu0 0.0
    %170 = vmatpush1.msra.mxu0 0.0
    %171 = vmatprep.subr.mxu0 0.0
    %172 = vmatpush1.msra.mxu0 0.0
    %173 = vmatprep.subr.mxu0 0.0
    %174 = vmatpush1.msra.mxu0 0.0
    %175 = vmatprep.subr.mxu0 0.0
    %176 = vmatpush1.msra.mxu0 0.0
    %177 = vmatprep.subr.mxu0 0.0
    %178 = vmatpush1.msra.mxu0 0.0
    %179 = vmatprep.subr.mxu0 0.0
    %180 = vmatpush1.msra.mxu0 0.0
    %181 = vmatprep.subr.mxu0 0.0
    %182 = vmatpush1.msra.mxu0 0.0
    %183 = vmatprep.subr.mxu0 0.0
    %184 = vmatpush1.msra.mxu0 0.0
    %185 = vmatprep.subr.mxu0 0.0
    %186 = vmatpush1.msra.mxu0 0.0
    %187 = vmatprep.mubr.f32.mxu0 0.0
    %188 = vmatmul.mubr.f32.gmra.mrb[0].mxu0 %v107
    %v189 = vpop.f32.mrb[0].mxu0
    %v190 = vadd.f32 0.0, %v189
    %v191 = vpop.f32.mrb[0].mxu0
    %192 = vmatprep.mubr.f32.mxu0 0.0
    %193 = vmatmul.mubr.f32.gmra.mrb[0].mxu0 %v108
    %v194 = vpop.f32.mrb[0].mxu0
    %v195 = vadd.f32 0.0, %v194
    %v196 = vpop.f32.mrb[0].mxu0
    %197 = vmatprep.mubr.f32.mxu0 0.0
    %198 = vmatmul.mubr.f32.gmra.mrb[0].mxu0 %v109
    %v199 = vpop.f32.mrb[0].mxu0
    %v200 = vadd.f32 0.0, %v199
    %v201 = vpop.f32.mrb[0].mxu0
    %202 = vmatprep.mubr.f32.mxu0 0.0
    %203 = vmatmul.mubr.f32.gmra.mrb[0].mxu0 %v110
    %v204 = vpop.f32.mrb[0].mxu0
    %v205 = vadd.f32 0.0, %v204
    %v206 = vpop.f32.mrb[0].mxu0
    %207 = vmatprep.mubr.f32.mxu0 0.0
    %208 = vmatmul.mubr.f32.gmra.mrb[0].mxu0 %v111
    %v209 = vpop.f32.mrb[0].mxu0
    %v210 = vadd.f32 0.0, %v209
    %v211 = vpop.f32.mrb[0].mxu0
    %212 = vmatprep.mubr.f32.mxu0 0.0
    %213 = vmatmul.mubr.f32.gmra.mrb[0].mxu0 %v112
    %v214 = vpop.f32.mrb[0].mxu0
    %v215 = vadd.f32 0.0, %v214
    %v216 = vpop.f32.mrb[0].mxu0
    %217 = vmatprep.mubr.f32.mxu0 0.0
    %218 = vmatmul.mubr.f32.gmra.mrb[0].mxu0 %v113
    %v219 = vpop.f32.mrb[0].mxu0
    %v220 = vadd.f32 0.0, %v219
    %v221 = vpop.f32.mrb[0].mxu0
    %222 = vmatprep.mubr.f32.mxu0 0.0
    %223 = vmatmul.mubr.f32.gmra.mrb[0].mxu0 %v114
    %v224 = vpop.f32.mrb[0].mxu0
    %v225 = vadd.f32 0.0, %v224
    %v226 = vpop.f32.mrb[0].mxu0
    %227 = vmatprep.mubr.f32.mxu0 0.0
    %228 = vmatmul.mubr.f32.gmra.mrb[0].mxu0 %v115
    %v229 = vpop.f32.mrb[0].mxu0
    %v230 = vadd.f32 0.0, %v229
    %v231 = vpop.f32.mrb[0].mxu0
    %232 = vmatprep.mubr.f32.mxu0 0.0
    %233 = vmatmul.mubr.f32.gmra.mrb[0].mxu0 %v116
    %v234 = vpop.f32.mrb[0].mxu0
    %v235 = vadd.f32 0.0, %v234
    %v236 = vpop.f32.mrb[0].mxu0
    %237 = vmatprep.mubr.f32.mxu0 0.0
    %238 = vmatmul.mubr.f32.gmra.mrb[0].mxu0 %v117
    %v239 = vpop.f32.mrb[0].mxu0
    %v240 = vadd.f32 0.0, %v239
    %v241 = vpop.f32.mrb[0].mxu0
    %242 = vmatprep.mubr.f32.mxu0 0.0
    %243 = vmatmul.mubr.f32.gmra.mrb[0].mxu0 %v118
    %v244 = vpop.f32.mrb[0].mxu0
    %v245 = vadd.f32 0.0, %v244
    %v246 = vpop.f32.mrb[0].mxu0
    %247 = vmatprep.mubr.f32.mxu0 0.0
    %248 = vmatmul.mubr.f32.gmra.mrb[0].mxu0 %v119
    %v249 = vpop.f32.mrb[0].mxu0
    %v250 = vadd.f32 0.0, %v249
    %v251 = vpop.f32.mrb[0].mxu0
    %252 = vmatprep.mubr.f32.mxu0 0.0
    %253 = vmatmul.mubr.f32.gmra.mrb[0].mxu0 %v120
    %v254 = vpop.f32.mrb[0].mxu0
    %v255 = vadd.f32 0.0, %v254
    %v256 = vpop.f32.mrb[0].mxu0
    %257 = vmatprep.mubr.f32.mxu0 0.0
    %258 = vmatmul.mubr.f32.gmra.mrb[0].mxu0 %v121
    %v259 = vpop.f32.mrb[0].mxu0
    %v260 = vadd.f32 0.0, %v259
    %v261 = vpop.f32.mrb[0].mxu0
    %262 = vmatprep.mubr.f32.mxu0 0.0
    %263 = vmatmul.mubr.f32.gmra.mrb[0].mxu0 %v122
    %v264 = vpop.f32.mrb[0].mxu0
    %v265 = vadd.f32 0.0, %v264
    %v266 = vpop.f32.mrb[0].mxu0
    %267 = vdwg.mxu0
    %v268 = vld [vmem:[%s9] sm:$0x1]
    %s269 = scalar_lea.vmem %s9, 1
    %v270 = vld [vmem:[%s269] sm:$0x1]
    %vm271 = vcmask 261120
    %v272 = vsel %vm271, %v190, 0.0
    %273 = vadd.xlane.f32.xlu0 %v272
    %v274 = vpop.xlane.xlu0 %273
    %v275 = vsel %vm271, %v195, 0.0
    %276 = vadd.xlane.f32.xlu0 %v275
    %v277 = vpop.xlane.xlu0 %276
    %v278 = vsel %vm271, %v200, 0.0
    %279 = vadd.xlane.f32.xlu0 %v278
    %v280 = vpop.xlane.xlu0 %279
    %v281 = vsel %vm271, %v205, 0.0
    %282 = vadd.xlane.f32.xlu0 %v281
    %v283 = vpop.xlane.xlu0 %282
    %v284 = vsel %vm271, %v210, 0.0
    %285 = vadd.xlane.f32.xlu0 %v284
    %v286 = vpop.xlane.xlu0 %285
    %v287 = vsel %vm271, %v215, 0.0
    %288 = vadd.xlane.f32.xlu0 %v287
    %v289 = vpop.xlane.xlu0 %288
    %v290 = vsel %vm271, %v220, 0.0
    %291 = vadd.xlane.f32.xlu0 %v290
    %v292 = vpop.xlane.xlu0 %291
    %v293 = vsel %vm271, %v225, 0.0
    %294 = vadd.xlane.f32.xlu0 %v293
    %v295 = vpop.xlane.xlu0 %294
    %v296 = vsel %vm271, %v230, 0.0
    %297 = vadd.xlane.f32.xlu0 %v296
    %v298 = vpop.xlane.xlu0 %297
    %v299 = vsel %vm271, %v235, 0.0
    %300 = vadd.xlane.f32.xlu0 %v299
    %v301 = vpop.xlane.xlu0 %300
    %v302 = vsel %vm271, %v240, 0.0
    %303 = vadd.xlane.f32.xlu0 %v302
    %v304 = vpop.xlane.xlu0 %303
    %v305 = vsel %vm271, %v245, 0.0
    %306 = vadd.xlane.f32.xlu0 %v305
    %v307 = vpop.xlane.xlu0 %306
    %v308 = vsel %vm271, %v250, 0.0
    %309 = vadd.xlane.f32.xlu0 %v308
    %v310 = vpop.xlane.xlu0 %309
    %v311 = vsel %vm271, %v255, 0.0
    %312 = vadd.xlane.f32.xlu0 %v311
    %v313 = vpop.xlane.xlu0 %312
    %v314 = vsel %vm271, %v260, 0.0
    %315 = vadd.xlane.f32.xlu0 %v314
    %v316 = vpop.xlane.xlu0 %315
    %v317 = vsel %vm271, %v265, 0.0
    %318 = vadd.xlane.f32.xlu0 %v317
    %v319 = vpop.xlane.xlu0 %318
    %v320 = vrcp.pop 32.0
    %v321 = vmul.f32 %v274, %v320
    %v322 = vmul.f32 %v277, %v320
    %v323 = vmul.f32 %v280, %v320
    %v324 = vmul.f32 %v283, %v320
    %v325 = vmul.f32 %v286, %v320
    %v326 = vmul.f32 %v289, %v320
    %v327 = vmul.f32 %v292, %v320
    %v328 = vmul.f32 %v295, %v320
    %v329 = vmul.f32 %v298, %v320
    %v330 = vmul.f32 %v301, %v320
    %v331 = vmul.f32 %v304, %v320
    %v332 = vmul.f32 %v307, %v320
    %v333 = vmul.f32 %v310, %v320
    %v334 = vmul.f32 %v313, %v320
    %v335 = vmul.f32 %v316, %v320
    %v336 = vmul.f32 %v319, %v320
    %v337 = vsub.f32 %v190, %v321
    %v338 = vsub.f32 %v195, %v322
    %v339 = vsub.f32 %v200, %v323
    %v340 = vsub.f32 %v205, %v324
    %v341 = vsub.f32 %v210, %v325
    %v342 = vsub.f32 %v215, %v326
    %v343 = vsub.f32 %v220, %v327
    %v344 = vsub.f32 %v225, %v328
    %v345 = vsub.f32 %v230, %v329
    %v346 = vsub.f32 %v235, %v330
    %v347 = vsub.f32 %v240, %v331
    %v348 = vsub.f32 %v245, %v332
    %v349 = vsub.f32 %v250, %v333
    %v350 = vsub.f32 %v255, %v334
    %v351 = vsub.f32 %v260, %v335
    %v352 = vsub.f32 %v265, %v336
    %v353 = vmul.f32 %v337, %v337
    %v354 = vmul.f32 %v338, %v338
    %v355 = vmul.f32 %v339, %v339
    %v356 = vmul.f32 %v340, %v340
    %v357 = vmul.f32 %v341, %v341
    %v358 = vmul.f32 %v342, %v342
    %v359 = vmul.f32 %v343, %v343
    %v360 = vmul.f32 %v344, %v344
    %v361 = vmul.f32 %v345, %v345
    %v362 = vmul.f32 %v346, %v346
    %v363 = vmul.f32 %v347, %v347
    %v364 = vmul.f32 %v348, %v348
    %v365 = vmul.f32 %v349, %v349
    %v366 = vmul.f32 %v350, %v350
    %v367 = vmul.f32 %v351, %v351
    %v368 = vmul.f32 %v352, %v352
    %v369 = vsel %vm271, %v353, 0.0
    %370 = vadd.xlane.f32.xlu0 %v369
    %v371 = vpop.xlane.xlu0 %370
    %v372 = vsel %vm271, %v354, 0.0
    %373 = vadd.xlane.f32.xlu0 %v372
    %v374 = vpop.xlane.xlu0 %373
    %v375 = vsel %vm271, %v355, 0.0
    %376 = vadd.xlane.f32.xlu0 %v375
    %v377 = vpop.xlane.xlu0 %376
    %v378 = vsel %vm271, %v356, 0.0
    %379 = vadd.xlane.f32.xlu0 %v378
    %v380 = vpop.xlane.xlu0 %379
    %v381 = vsel %vm271, %v357, 0.0
    %382 = vadd.xlane.f32.xlu0 %v381
    %v383 = vpop.xlane.xlu0 %382
    %v384 = vsel %vm271, %v358, 0.0
    %385 = vadd.xlane.f32.xlu0 %v384
    %v386 = vpop.xlane.xlu0 %385
    %v387 = vsel %vm271, %v359, 0.0
    %388 = vadd.xlane.f32.xlu0 %v387
    %v389 = vpop.xlane.xlu0 %388
    %v390 = vsel %vm271, %v360, 0.0
    %391 = vadd.xlane.f32.xlu0 %v390
    %v392 = vpop.xlane.xlu0 %391
    %v393 = vsel %vm271, %v361, 0.0
    %394 = vadd.xlane.f32.xlu0 %v393
    %v395 = vpop.xlane.xlu0 %394
    %v396 = vsel %vm271, %v362, 0.0
    %397 = vadd.xlane.f32.xlu0 %v396
    %v398 = vpop.xlane.xlu0 %397
    %v399 = vsel %vm271, %v363, 0.0
    %400 = vadd.xlane.f32.xlu0 %v399
    %v401 = vpop.xlane.xlu0 %400
    %v402 = vsel %vm271, %v364, 0.0
    %403 = vadd.xlane.f32.xlu0 %v402
    %v404 = vpop.xlane.xlu0 %403
    %v405 = vsel %vm271, %v365, 0.0
    %406 = vadd.xlane.f32.xlu0 %v405
    %v407 = vpop.xlane.xlu0 %406
    %v408 = vsel %vm271, %v366, 0.0
    %409 = vadd.xlane.f32.xlu0 %v408
    %v410 = vpop.xlane.xlu0 %409
    %v411 = vsel %vm271, %v367, 0.0
    %412 = vadd.xlane.f32.xlu0 %v411
    %v413 = vpop.xlane.xlu0 %412
    %v414 = vsel %vm271, %v368, 0.0
    %415 = vadd.xlane.f32.xlu0 %v414
    %v416 = vpop.xlane.xlu0 %415
    %v417 = vmul.f32 %v371, %v320
    %v418 = vmul.f32 %v374, %v320
    %v419 = vmul.f32 %v377, %v320
    %v420 = vmul.f32 %v380, %v320
    %v421 = vmul.f32 %v383, %v320
    %v422 = vmul.f32 %v386, %v320
    %v423 = vmul.f32 %v389, %v320
    %v424 = vmul.f32 %v392, %v320
    %v425 = vmul.f32 %v395, %v320
    %v426 = vmul.f32 %v398, %v320
    %v427 = vmul.f32 %v401, %v320
    %v428 = vmul.f32 %v404, %v320
    %v429 = vmul.f32 %v407, %v320
    %v430 = vmul.f32 %v410, %v320
    %v431 = vmul.f32 %v413, %v320
    %v432 = vmul.f32 %v416, %v320
    %v433 = vadd.f32 %v417, 1e-05
    %v434 = vadd.f32 %v418, 1e-05
    %v435 = vadd.f32 %v419, 1e-05
    %v436 = vadd.f32 %v420, 1e-05
    %v437 = vadd.f32 %v421, 1e-05
    %v438 = vadd.f32 %v422, 1e-05
    %v439 = vadd.f32 %v423, 1e-05
    %v440 = vadd.f32 %v424, 1e-05
    %v441 = vadd.f32 %v425, 1e-05
    %v442 = vadd.f32 %v426, 1e-05
    %v443 = vadd.f32 %v427, 1e-05
    %v444 = vadd.f32 %v428, 1e-05
    %v445 = vadd.f32 %v429, 1e-05
    %v446 = vadd.f32 %v430, 1e-05
    %v447 = vadd.f32 %v431, 1e-05
    %v448 = vadd.f32 %v432, 1e-05
    %v449 = vrsqrt.pop %v433
    %v450 = vrsqrt.pop %v434
    %v451 = vrsqrt.pop %v435
    %v452 = vrsqrt.pop %v436
    %v453 = vrsqrt.pop %v437
    %v454 = vrsqrt.pop %v438
    %v455 = vrsqrt.pop %v439
    %v456 = vrsqrt.pop %v440
    %v457 = vrsqrt.pop %v441
    %v458 = vrsqrt.pop %v442
    %v459 = vrsqrt.pop %v443
    %v460 = vrsqrt.pop %v444
    %v461 = vrsqrt.pop %v445
    %v462 = vrsqrt.pop %v446
    %v463 = vrsqrt.pop %v447
    %v464 = vrsqrt.pop %v448
    %v465 = vmul.f32 %v337, %v449
    %v466 = vmul.f32 %v338, %v450
    %v467 = vmul.f32 %v339, %v451
    %v468 = vmul.f32 %v340, %v452
    %v469 = vmul.f32 %v341, %v453
    %v470 = vmul.f32 %v342, %v454
    %v471 = vmul.f32 %v343, %v455
    %v472 = vmul.f32 %v344, %v456
    %v473 = vmul.f32 %v345, %v457
    %v474 = vmul.f32 %v346, %v458
    %v475 = vmul.f32 %v347, %v459
    %v476 = vmul.f32 %v348, %v460
    %v477 = vmul.f32 %v349, %v461
    %v478 = vmul.f32 %v350, %v462
    %v479 = vmul.f32 %v351, %v463
    %v480 = vmul.f32 %v352, %v464
    %v482 = vlaneseq
    %v483 = vshrl.u32 %v482, 7
    %v484 = vsub.s32 0, %v483
    %v485 = vrot.slane %v268, %v484
    %v487 = vmul.f32 %v465, %v485
    %v488 = vmul.f32 %v466, %v485
    %v489 = vmul.f32 %v467, %v485
    %v490 = vmul.f32 %v468, %v485
    %v491 = vmul.f32 %v469, %v485
    %v492 = vmul.f32 %v470, %v485
    %v493 = vmul.f32 %v471, %v485
    %v494 = vmul.f32 %v472, %v485
    %v495 = vmul.f32 %v473, %v485
    %v496 = vmul.f32 %v474, %v485
    %v497 = vmul.f32 %v475, %v485
    %v498 = vmul.f32 %v476, %v485
    %v499 = vmul.f32 %v477, %v485
    %v500 = vmul.f32 %v478, %v485
    %v501 = vmul.f32 %v479, %v485
    %v502 = vmul.f32 %v480, %v485
    %v504 = vlaneseq
    %v505 = vshrl.u32 %v504, 7
    %v506 = vsub.s32 0, %v505
    %v507 = vrot.slane %v270, %v506
    %v509 = vadd.f32 %v487, %v507
    %v510 = vadd.f32 %v488, %v507
    %v511 = vadd.f32 %v489, %v507
    %v512 = vadd.f32 %v490, %v507
    %v513 = vadd.f32 %v491, %v507
    %v514 = vadd.f32 %v492, %v507
    %v515 = vadd.f32 %v493, %v507
    %v516 = vadd.f32 %v494, %v507
    %v517 = vadd.f32 %v495, %v507
    %v518 = vadd.f32 %v496, %v507
    %v519 = vadd.f32 %v497, %v507
    %v520 = vadd.f32 %v498, %v507
    %v521 = vadd.f32 %v499, %v507
    %v522 = vadd.f32 %v500, %v507
    %v523 = vadd.f32 %v501, %v507
    %v524 = vadd.f32 %v502, %v507
    %v525 = vld [vmem:[%s2] sm:$0xff]
    %v526 = vld [vmem:[%s2 + $0x8] sm:$0xff]
    %v527 = vld [vmem:[%s2 + $0x10] sm:$0xff]
    %v528 = vld [vmem:[%s2 + $0x18] sm:$0xff]
    %v529 = vld [vmem:[#allocation5] sm:$0x1]
    %v531 = vlaneseq
    %v532 = vshrl.u32 %v531, 7
    %v533 = vsub.s32 0, %v532
    %v534 = vrot.slane %v529, %v533
    %v537 = vsel %vm271, %v509, 0
    %v540 = vsel %vm271, %v510, 0
    %v543 = vsel %vm271, %v511, 0
    %v546 = vsel %vm271, %v512, 0
    %v549 = vsel %vm271, %v513, 0
    %v552 = vsel %vm271, %v514, 0
    %v555 = vsel %vm271, %v515, 0
    %v558 = vsel %vm271, %v516, 0
    %v561 = vsel %vm271, %v517, 0
    %v564 = vsel %vm271, %v518, 0
    %v567 = vsel %vm271, %v519, 0
    %v570 = vsel %vm271, %v520, 0
    %v573 = vsel %vm271, %v521, 0
    %v576 = vsel %vm271, %v522, 0
    %v579 = vsel %vm271, %v523, 0
    %v582 = vsel %vm271, %v524, 0
    %584 = vmatprep.subr.mxu0 0.0
    %585 = vmatpush1.msra.mxu0 %v525
    %586 = vmatprep.subr.mxu0 0.0
    %587 = vmatpush1.msra.mxu0 %v526
    %588 = vmatprep.subr.mxu0 0.0
    %589 = vmatpush1.msra.mxu0 %v527
    %590 = vmatprep.subr.mxu0 0.0
    %591 = vmatpush1.msra.mxu0 %v528
    %592 = vmatprep.subr.mxu0 0.0
    %593 = vmatpush1.msra.mxu0 0.0
    %594 = vmatprep.subr.mxu0 0.0
    %595 = vmatpush1.msra.mxu0 0.0
    %596 = vmatprep.subr.mxu0 0.0
    %597 = vmatpush1.msra.mxu0 0.0
    %598 = vmatprep.subr.mxu0 0.0
    %599 = vmatpush1.msra.mxu0 0.0
    %600 = vmatprep.subr.mxu0 0.0
    %601 = vmatpush1.msra.mxu0 0.0
    %602 = vmatprep.subr.mxu0 0.0
    %603 = vmatpush1.msra.mxu0 0.0
    %604 = vmatprep.subr.mxu0 0.0
    %605 = vmatpush1.msra.mxu0 0.0
    %606 = vmatprep.subr.mxu0 0.0
    %607 = vmatpush1.msra.mxu0 0.0
    %608 = vmatprep.subr.mxu0 0.0
    %609 = vmatpush1.msra.mxu0 0.0
    %610 = vmatprep.subr.mxu0 0.0
    %611 = vmatpush1.msra.mxu0 0.0
    %612 = vmatprep.subr.mxu0 0.0
    %613 = vmatpush1.msra.mxu0 0.0
    %614 = vmatprep.subr.mxu0 0.0
    %615 = vmatpush1.msra.mxu0 0.0
    %616 = vmatprep.subr.mxu0 0.0
    %617 = vmatpush1.msra.mxu0 0.0
    %618 = vmatprep.subr.mxu0 0.0
    %619 = vmatpush1.msra.mxu0 0.0
    %620 = vmatprep.subr.mxu0 0.0
    %621 = vmatpush1.msra.mxu0 0.0
    %622 = vmatprep.subr.mxu0 0.0
    %623 = vmatpush1.msra.mxu0 0.0
    %624 = vmatprep.subr.mxu0 0.0
    %625 = vmatpush1.msra.mxu0 0.0
    %626 = vmatprep.subr.mxu0 0.0
    %627 = vmatpush1.msra.mxu0 0.0
    %628 = vmatprep.subr.mxu0 0.0
    %629 = vmatpush1.msra.mxu0 0.0
    %630 = vmatprep.subr.mxu0 0.0
    %631 = vmatpush1.msra.mxu0 0.0
    %632 = vmatprep.subr.mxu0 0.0
    %633 = vmatpush1.msra.mxu0 0.0
    %634 = vmatprep.subr.mxu0 0.0
    %635 = vmatpush1.msra.mxu0 0.0
    %636 = vmatprep.subr.mxu0 0.0
    %637 = vmatpush1.msra.mxu0 0.0
    %638 = vmatprep.subr.mxu0 0.0
    %639 = vmatpush1.msra.mxu0 0.0
    %640 = vmatprep.subr.mxu0 0.0
    %641 = vmatpush1.msra.mxu0 0.0
    %642 = vmatprep.subr.mxu0 0.0
    %643 = vmatpush1.msra.mxu0 0.0
    %644 = vmatprep.subr.mxu0 0.0
    %645 = vmatpush1.msra.mxu0 0.0
    %646 = vmatprep.subr.mxu0 0.0
    %647 = vmatpush1.msra.mxu0 0.0
    %648 = vmatprep.mubr.f32.mxu0 0.0
    %649 = vmatmul.mubr.f32.gmra.mrb[0].mxu0 %v537
    %v650 = vpop.f32.mrb[0].mxu0
    %v651 = vadd.f32 %v534, %v650
    %v652 = vpop.f32.mrb[0].mxu0
    %653 = vmatprep.mubr.f32.mxu0 0.0
    %654 = vmatmul.mubr.f32.gmra.mrb[0].mxu0 %v540
    %v655 = vpop.f32.mrb[0].mxu0
    %v656 = vadd.f32 %v534, %v655
    %v657 = vpop.f32.mrb[0].mxu0
    %658 = vmatprep.mubr.f32.mxu0 0.0
    %659 = vmatmul.mubr.f32.gmra.mrb[0].mxu0 %v543
    %v660 = vpop.f32.mrb[0].mxu0
    %v661 = vadd.f32 %v534, %v660
    %v662 = vpop.f32.mrb[0].mxu0
    %663 = vmatprep.mubr.f32.mxu0 0.0
    %664 = vmatmul.mubr.f32.gmra.mrb[0].mxu0 %v546
    %v665 = vpop.f32.mrb[0].mxu0
    %v666 = vadd.f32 %v534, %v665
    %v667 = vpop.f32.mrb[0].mxu0
    %668 = vmatprep.mubr.f32.mxu0 0.0
    %669 = vmatmul.mubr.f32.gmra.mrb[0].mxu0 %v549
    %v670 = vpop.f32.mrb[0].mxu0
    %v671 = vadd.f32 %v534, %v670
    %v672 = vpop.f32.mrb[0].mxu0
    %673 = vmatprep.mubr.f32.mxu0 0.0
    %674 = vmatmul.mubr.f32.gmra.mrb[0].mxu0 %v552
    %v675 = vpop.f32.mrb[0].mxu0
    %v676 = vadd.f32 %v534, %v675
    %v677 = vpop.f32.mrb[0].mxu0
    %678 = vmatprep.mubr.f32.mxu0 0.0
    %679 = vmatmul.mubr.f32.gmra.mrb[0].mxu0 %v555
    %v680 = vpop.f32.mrb[0].mxu0
    %v681 = vadd.f32 %v534, %v680
    %v682 = vpop.f32.mrb[0].mxu0
    %683 = vmatprep.mubr.f32.mxu0 0.0
    %684 = vmatmul.mubr.f32.gmra.mrb[0].mxu0 %v558
    %v685 = vpop.f32.mrb[0].mxu0
    %v686 = vadd.f32 %v534, %v685
    %v687 = vpop.f32.mrb[0].mxu0
    %688 = vmatprep.mubr.f32.mxu0 0.0
    %689 = vmatmul.mubr.f32.gmra.mrb[0].mxu0 %v561
    %v690 = vpop.f32.mrb[0].mxu0
    %v691 = vadd.f32 %v534, %v690
    %v692 = vpop.f32.mrb[0].mxu0
    %693 = vmatprep.mubr.f32.mxu0 0.0
    %694 = vmatmul.mubr.f32.gmra.mrb[0].mxu0 %v564
    %v695 = vpop.f32.mrb[0].mxu0
    %v696 = vadd.f32 %v534, %v695
    %v697 = vpop.f32.mrb[0].mxu0
    %698 = vmatprep.mubr.f32.mxu0 0.0
    %699 = vmatmul.mubr.f32.gmra.mrb[0].mxu0 %v567
    %v700 = vpop.f32.mrb[0].mxu0
    %v701 = vadd.f32 %v534, %v700
    %v702 = vpop.f32.mrb[0].mxu0
    %703 = vmatprep.mubr.f32.mxu0 0.0
    %704 = vmatmul.mubr.f32.gmra.mrb[0].mxu0 %v570
    %v705 = vpop.f32.mrb[0].mxu0
    %v706 = vadd.f32 %v534, %v705
    %v707 = vpop.f32.mrb[0].mxu0
    %708 = vmatprep.mubr.f32.mxu0 0.0
    %709 = vmatmul.mubr.f32.gmra.mrb[0].mxu0 %v573
    %v710 = vpop.f32.mrb[0].mxu0
    %v711 = vadd.f32 %v534, %v710
    %v712 = vpop.f32.mrb[0].mxu0
    %713 = vmatprep.mubr.f32.mxu0 0.0
    %714 = vmatmul.mubr.f32.gmra.mrb[0].mxu0 %v576
    %v715 = vpop.f32.mrb[0].mxu0
    %v716 = vadd.f32 %v534, %v715
    %v717 = vpop.f32.mrb[0].mxu0
    %718 = vmatprep.mubr.f32.mxu0 0.0
    %719 = vmatmul.mubr.f32.gmra.mrb[0].mxu0 %v579
    %v720 = vpop.f32.mrb[0].mxu0
    %v721 = vadd.f32 %v534, %v720
    %v722 = vpop.f32.mrb[0].mxu0
    %723 = vmatprep.mubr.f32.mxu0 0.0
    %724 = vmatmul.mubr.f32.gmra.mrb[0].mxu0 %v582
    %v725 = vpop.f32.mrb[0].mxu0
    %v726 = vadd.f32 %v534, %v725
    %v727 = vpop.f32.mrb[0].mxu0
    %728 = vdwg.mxu0
    %s729 = scalar_lea.vmem %s2, 64
    %v730 = vld [vmem:[%s729] sm:$0xff]
    %v731 = vld [vmem:[%s729 + $0x8] sm:$0xff]
    %v732 = vld [vmem:[%s729 + $0x10] sm:$0xff]
    %v733 = vld [vmem:[%s729 + $0x18] sm:$0xff]
    %s734 = scalar_lea.vmem [#allocation5], 2
    %v735 = vld [vmem:[%s734] sm:$0x1]
    %v737 = vlaneseq
    %v738 = vshrl.u32 %v737, 7
    %v739 = vsub.s32 0, %v738
    %v740 = vrot.slane %v735, %v739
    %742 = vmatprep.subr.mxu0 0.0
    %743 = vmatpush1.msra.mxu0 %v730
    %744 = vmatprep.subr.mxu0 0.0
    %745 = vmatpush1.msra.mxu0 %v731
    %746 = vmatprep.subr.mxu0 0.0
    %747 = vmatpush1.msra.mxu0 %v732
    %748 = vmatprep.subr.mxu0 0.0
    %749 = vmatpush1.msra.mxu0 %v733
    %750 = vmatprep.subr.mxu0 0.0
    %751 = vmatpush1.msra.mxu0 0.0
    %752 = vmatprep.subr.mxu0 0.0
    %753 = vmatpush1.msra.mxu0 0.0
    %754 = vmatprep.subr.mxu0 0.0
    %755 = vmatpush1.msra.mxu0 0.0
    %756 = vmatprep.subr.mxu0 0.0
    %757 = vmatpush1.msra.mxu0 0.0
    %758 = vmatprep.subr.mxu0 0.0
    %759 = vmatpush1.msra.mxu0 0.0
    %760 = vmatprep.subr.mxu0 0.0
    %761 = vmatpush1.msra.mxu0 0.0
    %762 = vmatprep.subr.mxu0 0.0
    %763 = vmatpush1.msra.mxu0 0.0
    %764 = vmatprep.subr.mxu0 0.0
    %765 = vmatpush1.msra.mxu0 0.0
    %766 = vmatprep.subr.mxu0 0.0
    %767 = vmatpush1.msra.mxu0 0.0
    %768 = vmatprep.subr.mxu0 0.0
    %769 = vmatpush1.msra.mxu0 0.0
    %770 = vmatprep.subr.mxu0 0.0
    %771 = vmatpush1.msra.mxu0 0.0
    %772 = vmatprep.subr.mxu0 0.0
    %773 = vmatpush1.msra.mxu0 0.0
    %774 = vmatprep.subr.mxu0 0.0
    %775 = vmatpush1.msra.mxu0 0.0
    %776 = vmatprep.subr.mxu0 0.0
    %777 = vmatpush1.msra.mxu0 0.0
    %778 = vmatprep.subr.mxu0 0.0
    %779 = vmatpush1.msra.mxu0 0.0
    %780 = vmatprep.subr.mxu0 0.0
    %781 = vmatpush1.msra.mxu0 0.0
    %782 = vmatprep.subr.mxu0 0.0
    %783 = vmatpush1.msra.mxu0 0.0
    %784 = vmatprep.subr.mxu0 0.0
    %785 = vmatpush1.msra.mxu0 0.0
    %786 = vmatprep.subr.mxu0 0.0
    %787 = vmatpush1.msra.mxu0 0.0
    %788 = vmatprep.subr.mxu0 0.0
    %789 = vmatpush1.msra.mxu0 0.0
    %790 = vmatprep.subr.mxu0 0.0
    %791 = vmatpush1.msra.mxu0 0.0
    %792 = vmatprep.subr.mxu0 0.0
    %793 = vmatpush1.msra.mxu0 0.0
    %794 = vmatprep.subr.mxu0 0.0
    %795 = vmatpush1.msra.mxu0 0.0
    %796 = vmatprep.subr.mxu0 0.0
    %797 = vmatpush1.msra.mxu0 0.0
    %798 = vmatprep.subr.mxu0 0.0
    %799 = vmatpush1.msra.mxu0 0.0
    %800 = vmatprep.subr.mxu0 0.0
    %801 = vmatpush1.msra.mxu0 0.0
    %802 = vmatprep.subr.mxu0 0.0
    %803 = vmatpush1.msra.mxu0 0.0
    %804 = vmatprep.subr.mxu0 0.0
    %805 = vmatpush1.msra.mxu0 0.0
    %806 = vmatprep.mubr.f32.mxu0 0.0
    %807 = vmatmul.mubr.f32.gmra.mrb[0].mxu0 %v537
    %v808 = vpop.f32.mrb[0].mxu0
    %v809 = vadd.f32 %v740, %v808
    %v810 = vpop.f32.mrb[0].mxu0
    %811 = vmatprep.mubr.f32.mxu0 0.0
    %812 = vmatmul.mubr.f32.gmra.mrb[0].mxu0 %v540
    %v813 = vpop.f32.mrb[0].mxu0
    %v814 = vadd.f32 %v740, %v813
    %v815 = vpop.f32.mrb[0].mxu0
    %816 = vmatprep.mubr.f32.mxu0 0.0
    %817 = vmatmul.mubr.f32.gmra.mrb[0].mxu0 %v543
    %v818 = vpop.f32.mrb[0].mxu0
    %v819 = vadd.f32 %v740, %v818
    %v820 = vpop.f32.mrb[0].mxu0
    %821 = vmatprep.mubr.f32.mxu0 0.0
    %822 = vmatmul.mubr.f32.gmra.mrb[0].mxu0 %v546
    %v823 = vpop.f32.mrb[0].mxu0
    %v824 = vadd.f32 %v740, %v823
    %v825 = vpop.f32.mrb[0].mxu0
    %826 = vmatprep.mubr.f32.mxu0 0.0
    %827 = vmatmul.mubr.f32.gmra.mrb[0].mxu0 %v549
    %v828 = vpop.f32.mrb[0].mxu0
    %v829 = vadd.f32 %v740, %v828
    %v830 = vpop.f32.mrb[0].mxu0
    %831 = vmatprep.mubr.f32.mxu0 0.0
    %832 = vmatmul.mubr.f32.gmra.mrb[0].mxu0 %v552
    %v833 = vpop.f32.mrb[0].mxu0
    %v834 = vadd.f32 %v740, %v833
    %v835 = vpop.f32.mrb[0].mxu0
    %836 = vmatprep.mubr.f32.mxu0 0.0
    %837 = vmatmul.mubr.f32.gmra.mrb[0].mxu0 %v555
    %v838 = vpop.f32.mrb[0].mxu0
    %v839 = vadd.f32 %v740, %v838
    %v840 = vpop.f32.mrb[0].mxu0
    %841 = vmatprep.mubr.f32.mxu0 0.0
    %842 = vmatmul.mubr.f32.gmra.mrb[0].mxu0 %v558
    %v843 = vpop.f32.mrb[0].mxu0
    %v844 = vadd.f32 %v740, %v843
    %v845 = vpop.f32.mrb[0].mxu0
    %846 = vmatprep.mubr.f32.mxu0 0.0
    %847 = vmatmul.mubr.f32.gmra.mrb[0].mxu0 %v561
    %v848 = vpop.f32.mrb[0].mxu0
    %v849 = vadd.f32 %v740, %v848
    %v850 = vpop.f32.mrb[0].mxu0
    %851 = vmatprep.mubr.f32.mxu0 0.0
    %852 = vmatmul.mubr.f32.gmra.mrb[0].mxu0 %v564
    %v853 = vpop.f32.mrb[0].mxu0
    %v854 = vadd.f32 %v740, %v853
    %v855 = vpop.f32.mrb[0].mxu0
    %856 = vmatprep.mubr.f32.mxu0 0.0
    %857 = vmatmul.mubr.f32.gmra.mrb[0].mxu0 %v567
    %v858 = vpop.f32.mrb[0].mxu0
    %v859 = vadd.f32 %v740, %v858
    %v860 = vpop.f32.mrb[0].mxu0
    %861 = vmatprep.mubr.f32.mxu0 0.0
    %862 = vmatmul.mubr.f32.gmra.mrb[0].mxu0 %v570
    %v863 = vpop.f32.mrb[0].mxu0
    %v864 = vadd.f32 %v740, %v863
    %v865 = vpop.f32.mrb[0].mxu0
    %866 = vmatprep.mubr.f32.mxu0 0.0
    %867 = vmatmul.mubr.f32.gmra.mrb[0].mxu0 %v573
    %v868 = vpop.f32.mrb[0].mxu0
    %v869 = vadd.f32 %v740, %v868
    %v870 = vpop.f32.mrb[0].mxu0
    %871 = vmatprep.mubr.f32.mxu0 0.0
    %872 = vmatmul.mubr.f32.gmra.mrb[0].mxu0 %v576
    %v873 = vpop.f32.mrb[0].mxu0
    %v874 = vadd.f32 %v740, %v873
    %v875 = vpop.f32.mrb[0].mxu0
    %876 = vmatprep.mubr.f32.mxu0 0.0
    %877 = vmatmul.mubr.f32.gmra.mrb[0].mxu0 %v579
    %v878 = vpop.f32.mrb[0].mxu0
    %v879 = vadd.f32 %v740, %v878
    %v880 = vpop.f32.mrb[0].mxu0
    %881 = vmatprep.mubr.f32.mxu0 0.0
    %882 = vmatmul.mubr.f32.gmra.mrb[0].mxu0 %v582
    %v883 = vpop.f32.mrb[0].mxu0
    %v884 = vadd.f32 %v740, %v883
    %v885 = vpop.f32.mrb[0].mxu0
    %886 = vdwg.mxu0
    %s887 = scalar_lea.vmem %s2, 128
    %v888 = vld [vmem:[%s887] sm:$0xff]
    %v889 = vld [vmem:[%s887 + $0x8] sm:$0xff]
    %v890 = vld [vmem:[%s887 + $0x10] sm:$0xff]
    %v891 = vld [vmem:[%s887 + $0x18] sm:$0xff]
    %s892 = scalar_lea.vmem [#allocation5], 4
    %v893 = vld [vmem:[%s892] sm:$0x1]
    %v895 = vlaneseq
    %v896 = vshrl.u32 %v895, 7
    %v897 = vsub.s32 0, %v896
    %v898 = vrot.slane %v893, %v897
    %900 = vmatprep.subr.mxu0 0.0
    %901 = vmatpush1.msra.mxu0 %v888
    %902 = vmatprep.subr.mxu0 0.0
    %903 = vmatpush1.msra.mxu0 %v889
    %904 = vmatprep.subr.mxu0 0.0
    %905 = vmatpush1.msra.mxu0 %v890
    %906 = vmatprep.subr.mxu0 0.0
    %907 = vmatpush1.msra.mxu0 %v891
    %908 = vmatprep.subr.mxu0 0.0
    %909 = vmatpush1.msra.mxu0 0.0
    %910 = vmatprep.subr.mxu0 0.0
    %911 = vmatpush1.msra.mxu0 0.0
    %912 = vmatprep.subr.mxu0 0.0
    %913 = vmatpush1.msra.mxu0 0.0
    %914 = vmatprep.subr.mxu0 0.0
    %915 = vmatpush1.msra.mxu0 0.0
    %916 = vmatprep.subr.mxu0 0.0
    %917 = vmatpush1.msra.mxu0 0.0
    %918 = vmatprep.subr.mxu0 0.0
    %919 = vmatpush1.msra.mxu0 0.0
    %920 = vmatprep.subr.mxu0 0.0
    %921 = vmatpush1.msra.mxu0 0.0
    %922 = vmatprep.subr.mxu0 0.0
    %923 = vmatpush1.msra.mxu0 0.0
    %924 = vmatprep.subr.mxu0 0.0
    %925 = vmatpush1.msra.mxu0 0.0
    %926 = vmatprep.subr.mxu0 0.0
    %927 = vmatpush1.msra.mxu0 0.0
    %928 = vmatprep.subr.mxu0 0.0
    %929 = vmatpush1.msra.mxu0 0.0
    %930 = vmatprep.subr.mxu0 0.0
    %931 = vmatpush1.msra.mxu0 0.0
    %932 = vmatprep.subr.mxu0 0.0
    %933 = vmatpush1.msra.mxu0 0.0
    %934 = vmatprep.subr.mxu0 0.0
    %935 = vmatpush1.msra.mxu0 0.0
    %936 = vmatprep.subr.mxu0 0.0
    %937 = vmatpush1.msra.mxu0 0.0
    %938 = vmatprep.subr.mxu0 0.0
    %939 = vmatpush1.msra.mxu0 0.0
    %940 = vmatprep.subr.mxu0 0.0
    %941 = vmatpush1.msra.mxu0 0.0
    %942 = vmatprep.subr.mxu0 0.0
    %943 = vmatpush1.msra.mxu0 0.0
    %944 = vmatprep.subr.mxu0 0.0
    %945 = vmatpush1.msra.mxu0 0.0
    %946 = vmatprep.subr.mxu0 0.0
    %947 = vmatpush1.msra.mxu0 0.0
    %948 = vmatprep.subr.mxu0 0.0
    %949 = vmatpush1.msra.mxu0 0.0
    %950 = vmatprep.subr.mxu0 0.0
    %951 = vmatpush1.msra.mxu0 0.0
    %952 = vmatprep.subr.mxu0 0.0
    %953 = vmatpush1.msra.mxu0 0.0
    %954 = vmatprep.subr.mxu0 0.0
    %955 = vmatpush1.msra.mxu0 0.0
    %956 = vmatprep.subr.mxu0 0.0
    %957 = vmatpush1.msra.mxu0 0.0
    %958 = vmatprep.subr.mxu0 0.0
    %959 = vmatpush1.msra.mxu0 0.0
    %960 = vmatprep.subr.mxu0 0.0
    %961 = vmatpush1.msra.mxu0 0.0
    %962 = vmatprep.subr.mxu0 0.0
    %963 = vmatpush1.msra.mxu0 0.0
    %964 = vmatprep.mubr.f32.mxu0 0.0
    %965 = vmatmul.mubr.f32.gmra.mrb[0].mxu0 %v537
    %v966 = vpop.f32.mrb[0].mxu0
    %v967 = vadd.f32 %v898, %v966
    %v968 = vpop.f32.mrb[0].mxu0
    %969 = vmatprep.mubr.f32.mxu0 0.0
    %970 = vmatmul.mubr.f32.gmra.mrb[0].mxu0 %v540
    %v971 = vpop.f32.mrb[0].mxu0
    %v972 = vadd.f32 %v898, %v971
    %v973 = vpop.f32.mrb[0].mxu0
    %974 = vmatprep.mubr.f32.mxu0 0.0
    %975 = vmatmul.mubr.f32.gmra.mrb[0].mxu0 %v543
    %v976 = vpop.f32.mrb[0].mxu0
    %v977 = vadd.f32 %v898, %v976
    %v978 = vpop.f32.mrb[0].mxu0
    %979 = vmatprep.mubr.f32.mxu0 0.0
    %980 = vmatmul.mubr.f32.gmra.mrb[0].mxu0 %v546
    %v981 = vpop.f32.mrb[0].mxu0
    %v982 = vadd.f32 %v898, %v981
    %v983 = vpop.f32.mrb[0].mxu0
    %984 = vmatprep.mubr.f32.mxu0 0.0
    %985 = vmatmul.mubr.f32.gmra.mrb[0].mxu0 %v549
    %v986 = vpop.f32.mrb[0].mxu0
    %v987 = vadd.f32 %v898, %v986
    %v988 = vpop.f32.mrb[0].mxu0
    %989 = vmatprep.mubr.f32.mxu0 0.0
    %990 = vmatmul.mubr.f32.gmra.mrb[0].mxu0 %v552
    %v991 = vpop.f32.mrb[0].mxu0
    %v992 = vadd.f32 %v898, %v991
    %v993 = vpop.f32.mrb[0].mxu0
    %994 = vmatprep.mubr.f32.mxu0 0.0
    %995 = vmatmul.mubr.f32.gmra.mrb[0].mxu0 %v555
    %v996 = vpop.f32.mrb[0].mxu0
    %v997 = vadd.f32 %v898, %v996
    %v998 = vpop.f32.mrb[0].mxu0
    %999 = vmatprep.mubr.f32.mxu0 0.0
    %1000 = vmatmul.mubr.f32.gmra.mrb[0].mxu0 %v558
    %v1001 = vpop.f32.mrb[0].mxu0
    %v1002 = vadd.f32 %v898, %v1001
    %v1003 = vpop.f32.mrb[0].mxu0
    %1004 = vmatprep.mubr.f32.mxu0 0.0
    %1005 = vmatmul.mubr.f32.gmra.mrb[0].mxu0 %v561
    %v1006 = vpop.f32.mrb[0].mxu0
    %v1007 = vadd.f32 %v898, %v1006
    %v1008 = vpop.f32.mrb[0].mxu0
    %1009 = vmatprep.mubr.f32.mxu0 0.0
    %1010 = vmatmul.mubr.f32.gmra.mrb[0].mxu0 %v564
    %v1011 = vpop.f32.mrb[0].mxu0
    %v1012 = vadd.f32 %v898, %v1011
    %v1013 = vpop.f32.mrb[0].mxu0
    %1014 = vmatprep.mubr.f32.mxu0 0.0
    %1015 = vmatmul.mubr.f32.gmra.mrb[0].mxu0 %v567
    %v1016 = vpop.f32.mrb[0].mxu0
    %v1017 = vadd.f32 %v898, %v1016
    %v1018 = vpop.f32.mrb[0].mxu0
    %1019 = vmatprep.mubr.f32.mxu0 0.0
    %1020 = vmatmul.mubr.f32.gmra.mrb[0].mxu0 %v570
    %v1021 = vpop.f32.mrb[0].mxu0
    %v1022 = vadd.f32 %v898, %v1021
    %v1023 = vpop.f32.mrb[0].mxu0
    %1024 = vmatprep.mubr.f32.mxu0 0.0
    %1025 = vmatmul.mubr.f32.gmra.mrb[0].mxu0 %v573
    %v1026 = vpop.f32.mrb[0].mxu0
    %v1027 = vadd.f32 %v898, %v1026
    %v1028 = vpop.f32.mrb[0].mxu0
    %1029 = vmatprep.mubr.f32.mxu0 0.0
    %1030 = vmatmul.mubr.f32.gmra.mrb[0].mxu0 %v576
    %v1031 = vpop.f32.mrb[0].mxu0
    %v1032 = vadd.f32 %v898, %v1031
    %v1033 = vpop.f32.mrb[0].mxu0
    %1034 = vmatprep.mubr.f32.mxu0 0.0
    %1035 = vmatmul.mubr.f32.gmra.mrb[0].mxu0 %v579
    %v1036 = vpop.f32.mrb[0].mxu0
    %v1037 = vadd.f32 %v898, %v1036
    %v1038 = vpop.f32.mrb[0].mxu0
    %1039 = vmatprep.mubr.f32.mxu0 0.0
    %1040 = vmatmul.mubr.f32.gmra.mrb[0].mxu0 %v582
    %v1041 = vpop.f32.mrb[0].mxu0
    %v1042 = vadd.f32 %v898, %v1041
    %v1043 = vpop.f32.mrb[0].mxu0
    %1044 = vdwg.mxu0
    %v1045 = vld [vmem:[%s5] sm:$0xff]
    %v1046 = vld [vmem:[%s5 + $0x8] sm:$0xff]
    %v1047 = vld [vmem:[%s5 + $0x10] sm:$0xff]
    %v1048 = vld [vmem:[%s5 + $0x18] sm:$0xff]
    %v1049 = vld [vmem:[%s5 + $0x20] sm:$0xff]
    %v1050 = vld [vmem:[%s5 + $0x28] sm:$0xff]
    %v1051 = vld [vmem:[%s5 + $0x30] sm:$0xff]
    %v1052 = vld [vmem:[%s5 + $0x38] sm:$0xff]
    %v1053 = vld [vmem:[%s5 + $0x40] sm:$0xff]
    %v1054 = vld [vmem:[%s5 + $0x48] sm:$0xff]
    %v1055 = vld [vmem:[%s5 + $0x50] sm:$0xff]
    %v1056 = vld [vmem:[%s5 + $0x58] sm:$0xff]
    %v1057 = vld [vmem:[%s5 + $0x60] sm:$0xff]
    %v1058 = vld [vmem:[%s5 + $0x68] sm:$0xff]
    %v1059 = vld [vmem:[%s5 + $0x70] sm:$0xff]
    %v1060 = vld [vmem:[%s5 + $0x78] sm:$0xff]
    %vm1061 = vcmask 130048
    %v1063 = vsel %vm1061, %v651, 0
    %v1066 = vsel %vm1061, %v656, 0
    %v1069 = vsel %vm1061, %v661, 0
    %v1072 = vsel %vm1061, %v666, 0
    %v1075 = vsel %vm1061, %v671, 0
    %v1078 = vsel %vm1061, %v676, 0
    %v1081 = vsel %vm1061, %v681, 0
    %v1084 = vsel %vm1061, %v686, 0
    %v1087 = vsel %vm1061, %v691, 0
    %v1090 = vsel %vm1061, %v696, 0
    %v1093 = vsel %vm1061, %v701, 0
    %v1096 = vsel %vm1061, %v706, 0
    %v1099 = vsel %vm1061, %v711, 0
    %v1102 = vsel %vm1061, %v716, 0
    %v1105 = vsel %vm1061, %v721, 0
    %v1108 = vsel %vm1061, %v726, 0
    %v1111 = vsel %vm1061, %v809, 0
    %v1114 = vsel %vm1061, %v814, 0
    %v1117 = vsel %vm1061, %v819, 0
    %v1120 = vsel %vm1061, %v824, 0
    %v1123 = vsel %vm1061, %v829, 0
    %v1126 = vsel %vm1061, %v834, 0
    %v1129 = vsel %vm1061, %v839, 0
    %v1132 = vsel %vm1061, %v844, 0
    %v1135 = vsel %vm1061, %v849, 0
    %v1138 = vsel %vm1061, %v854, 0
    %v1141 = vsel %vm1061, %v859, 0
    %v1144 = vsel %vm1061, %v864, 0
    %v1147 = vsel %vm1061, %v869, 0
    %v1150 = vsel %vm1061, %v874, 0
    %v1153 = vsel %vm1061, %v879, 0
    %v1156 = vsel %vm1061, %v884, 0
    %1158 = vmatprep.subr.mxu0 0.0
    %1159 = vmatpush1.xpose.msra.mxu0 %v1111
    %1160 = vmatprep.subr.mxu0 0.0
    %1161 = vmatpush1.xpose.msra.mxu0 %v1114
    %1162 = vmatprep.subr.mxu0 0.0
    %1163 = vmatpush1.xpose.msra.mxu0 %v1117
    %1164 = vmatprep.subr.mxu0 0.0
    %1165 = vmatpush1.xpose.msra.mxu0 %v1120
    %1166 = vmatprep.subr.mxu0 0.0
    %1167 = vmatpush1.xpose.msra.mxu0 %v1123
    %1168 = vmatprep.subr.mxu0 0.0
    %1169 = vmatpush1.xpose.msra.mxu0 %v1126
    %1170 = vmatprep.subr.mxu0 0.0
    %1171 = vmatpush1.xpose.msra.mxu0 %v1129
    %1172 = vmatprep.subr.mxu0 0.0
    %1173 = vmatpush1.xpose.msra.mxu0 %v1132
    %1174 = vmatprep.subr.mxu0 0.0
    %1175 = vmatpush1.xpose.msra.mxu0 %v1135
    %1176 = vmatprep.subr.mxu0 0.0
    %1177 = vmatpush1.xpose.msra.mxu0 %v1138
    %1178 = vmatprep.subr.mxu0 0.0
    %1179 = vmatpush1.xpose.msra.mxu0 %v1141
    %1180 = vmatprep.subr.mxu0 0.0
    %1181 = vmatpush1.xpose.msra.mxu0 %v1144
    %1182 = vmatprep.subr.mxu0 0.0
    %1183 = vmatpush1.xpose.msra.mxu0 %v1147
    %1184 = vmatprep.subr.mxu0 0.0
    %1185 = vmatpush1.xpose.msra.mxu0 %v1150
    %1186 = vmatprep.subr.mxu0 0.0
    %1187 = vmatpush1.xpose.msra.mxu0 %v1153
    %1188 = vmatprep.subr.mxu0 0.0
    %1189 = vmatpush1.xpose.msra.mxu0 %v1156
    %1190 = vmatprep.subr.mxu0 0.0
    %1191 = vmatpush1.xpose.msra.mxu0 0.0
    %1192 = vmatprep.subr.mxu0 0.0
    %1193 = vmatpush1.xpose.msra.mxu0 0.0
    %1194 = vmatprep.subr.mxu0 0.0
    %1195 = vmatpush1.xpose.msra.mxu0 0.0
    %1196 = vmatprep.subr.mxu0 0.0
    %1197 = vmatpush1.xpose.msra.mxu0 0.0
    %1198 = vmatprep.subr.mxu0 0.0
    %1199 = vmatpush1.xpose.msra.mxu0 0.0
    %1200 = vmatprep.subr.mxu0 0.0
    %1201 = vmatpush1.xpose.msra.mxu0 0.0
    %1202 = vmatprep.subr.mxu0 0.0
    %1203 = vmatpush1.xpose.msra.mxu0 0.0
    %1204 = vmatprep.subr.mxu0 0.0
    %1205 = vmatpush1.xpose.msra.mxu0 0.0
    %1206 = vmatprep.subr.mxu0 0.0
    %1207 = vmatpush1.xpose.msra.mxu0 0.0
    %1208 = vmatprep.subr.mxu0 0.0
    %1209 = vmatpush1.xpose.msra.mxu0 0.0
    %1210 = vmatprep.subr.mxu0 0.0
    %1211 = vmatpush1.xpose.msra.mxu0 0.0
    %1212 = vmatprep.subr.mxu0 0.0
    %1213 = vmatpush1.xpose.msra.mxu0 0.0
    %1214 = vmatprep.subr.mxu0 0.0
    %1215 = vmatpush1.xpose.msra.mxu0 0.0
    %1216 = vmatprep.subr.mxu0 0.0
    %1217 = vmatpush1.xpose.msra.mxu0 0.0
    %1218 = vmatprep.subr.mxu0 0.0
    %1219 = vmatpush1.xpose.msra.mxu0 0.0
    %1220 = vmatprep.subr.mxu0 0.0
    %1221 = vmatpush1.xpose.msra.mxu0 0.0
    %1222 = vmatprep.mubr.f32.mxu0 0.0
    %1223 = vmatmul.mubr.f32.gmra.mrb[0].mxu0 %v1063
    %v1224 = vpop.f32.mrb[0].mxu0
    %v1225 = vadd.f32 %v1045, %v1224
    %v1226 = vpop.f32.mrb[0].mxu0
    %1227 = vmatprep.mubr.f32.mxu0 0.0
    %1228 = vmatmul.mubr.f32.gmra.mrb[0].mxu0 %v1066
    %v1229 = vpop.f32.mrb[0].mxu0
    %v1230 = vadd.f32 %v1046, %v1229
    %v1231 = vpop.f32.mrb[0].mxu0
    %1232 = vmatprep.mubr.f32.mxu0 0.0
    %1233 = vmatmul.mubr.f32.gmra.mrb[0].mxu0 %v1069
    %v1234 = vpop.f32.mrb[0].mxu0
    %v1235 = vadd.f32 %v1047, %v1234
    %v1236 = vpop.f32.mrb[0].mxu0
    %1237 = vmatprep.mubr.f32.mxu0 0.0
    %1238 = vmatmul.mubr.f32.gmra.mrb[0].mxu0 %v1072
    %v1239 = vpop.f32.mrb[0].mxu0
    %v1240 = vadd.f32 %v1048, %v1239
    %v1241 = vpop.f32.mrb[0].mxu0
    %1242 = vmatprep.mubr.f32.mxu0 0.0
    %1243 = vmatmul.mubr.f32.gmra.mrb[0].mxu0 %v1075
    %v1244 = vpop.f32.mrb[0].mxu0
    %v1245 = vadd.f32 %v1049, %v1244
    %v1246 = vpop.f32.mrb[0].mxu0
    %1247 = vmatprep.mubr.f32.mxu0 0.0
    %1248 = vmatmul.mubr.f32.gmra.mrb[0].mxu0 %v1078
    %v1249 = vpop.f32.mrb[0].mxu0
    %v1250 = vadd.f32 %v1050, %v1249
    %v1251 = vpop.f32.mrb[0].mxu0
    %1252 = vmatprep.mubr.f32.mxu0 0.0
    %1253 = vmatmul.mubr.f32.gmra.mrb[0].mxu0 %v1081
    %v1254 = vpop.f32.mrb[0].mxu0
    %v1255 = vadd.f32 %v1051, %v1254
    %v1256 = vpop.f32.mrb[0].mxu0
    %1257 = vmatprep.mubr.f32.mxu0 0.0
    %1258 = vmatmul.mubr.f32.gmra.mrb[0].mxu0 %v1084
    %v1259 = vpop.f32.mrb[0].mxu0
    %v1260 = vadd.f32 %v1052, %v1259
    %v1261 = vpop.f32.mrb[0].mxu0
    %1262 = vmatprep.mubr.f32.mxu0 0.0
    %1263 = vmatmul.mubr.f32.gmra.mrb[0].mxu0 %v1087
    %v1264 = vpop.f32.mrb[0].mxu0
    %v1265 = vadd.f32 %v1053, %v1264
    %v1266 = vpop.f32.mrb[0].mxu0
    %1267 = vmatprep.mubr.f32.mxu0 0.0
    %1268 = vmatmul.mubr.f32.gmra.mrb[0].mxu0 %v1090
    %v1269 = vpop.f32.mrb[0].mxu0
    %v1270 = vadd.f32 %v1054, %v1269
    %v1271 = vpop.f32.mrb[0].mxu0
    %1272 = vmatprep.mubr.f32.mxu0 0.0
    %1273 = vmatmul.mubr.f32.gmra.mrb[0].mxu0 %v1093
    %v1274 = vpop.f32.mrb[0].mxu0
    %v1275 = vadd.f32 %v1055, %v1274
    %v1276 = vpop.f32.mrb[0].mxu0
    %1277 = vmatprep.mubr.f32.mxu0 0.0
    %1278 = vmatmul.mubr.f32.gmra.mrb[0].mxu0 %v1096
    %v1279 = vpop.f32.mrb[0].mxu0
    %v1280 = vadd.f32 %v1056, %v1279
    %v1281 = vpop.f32.mrb[0].mxu0
    %1282 = vmatprep.mubr.f32.mxu0 0.0
    %1283 = vmatmul.mubr.f32.gmra.mrb[0].mxu0 %v1099
    %v1284 = vpop.f32.mrb[0].mxu0
    %v1285 = vadd.f32 %v1057, %v1284
    %v1286 = vpop.f32.mrb[0].mxu0
    %1287 = vmatprep.mubr.f32.mxu0 0.0
    %1288 = vmatmul.mubr.f32.gmra.mrb[0].mxu0 %v1102
    %v1289 = vpop.f32.mrb[0].mxu0
    %v1290 = vadd.f32 %v1058, %v1289
    %v1291 = vpop.f32.mrb[0].mxu0
    %1292 = vmatprep.mubr.f32.mxu0 0.0
    %1293 = vmatmul.mubr.f32.gmra.mrb[0].mxu0 %v1105
    %v1294 = vpop.f32.mrb[0].mxu0
    %v1295 = vadd.f32 %v1059, %v1294
    %v1296 = vpop.f32.mrb[0].mxu0
    %1297 = vmatprep.mubr.f32.mxu0 0.0
    %1298 = vmatmul.mubr.f32.gmra.mrb[0].mxu0 %v1108
    %v1299 = vpop.f32.mrb[0].mxu0
    %v1300 = vadd.f32 %v1060, %v1299
    %v1301 = vpop.f32.mrb[0].mxu0
    %1302 = vdwg.mxu0
    %1303 = vmax.xlane.f32.xlu0 %v1225
    %v1304 = vpop.xlane.xlu0 %1303
    %1305 = vmax.xlane.f32.xlu0 %v1230
    %v1306 = vpop.xlane.xlu0 %1305
    %1307 = vmax.xlane.f32.xlu0 %v1235
    %v1308 = vpop.xlane.xlu0 %1307
    %1309 = vmax.xlane.f32.xlu0 %v1240
    %v1310 = vpop.xlane.xlu0 %1309
    %1311 = vmax.xlane.f32.xlu0 %v1245
    %v1312 = vpop.xlane.xlu0 %1311
    %1313 = vmax.xlane.f32.xlu0 %v1250
    %v1314 = vpop.xlane.xlu0 %1313
    %1315 = vmax.xlane.f32.xlu0 %v1255
    %v1316 = vpop.xlane.xlu0 %1315
    %1317 = vmax.xlane.f32.xlu0 %v1260
    %v1318 = vpop.xlane.xlu0 %1317
    %1319 = vmax.xlane.f32.xlu0 %v1265
    %v1320 = vpop.xlane.xlu0 %1319
    %1321 = vmax.xlane.f32.xlu0 %v1270
    %v1322 = vpop.xlane.xlu0 %1321
    %1323 = vmax.xlane.f32.xlu0 %v1275
    %v1324 = vpop.xlane.xlu0 %1323
    %1325 = vmax.xlane.f32.xlu0 %v1280
    %v1326 = vpop.xlane.xlu0 %1325
    %1327 = vmax.xlane.f32.xlu0 %v1285
    %v1328 = vpop.xlane.xlu0 %1327
    %1329 = vmax.xlane.f32.xlu0 %v1290
    %v1330 = vpop.xlane.xlu0 %1329
    %1331 = vmax.xlane.f32.xlu0 %v1295
    %v1332 = vpop.xlane.xlu0 %1331
    %1333 = vmax.xlane.f32.xlu0 %v1300
    %v1334 = vpop.xlane.xlu0 %1333
    %v1335 = vsub.f32 %v1225, %v1304
    %v1336 = vsub.f32 %v1230, %v1306
    %v1337 = vsub.f32 %v1235, %v1308
    %v1338 = vsub.f32 %v1240, %v1310
    %v1339 = vsub.f32 %v1245, %v1312
    %v1340 = vsub.f32 %v1250, %v1314
    %v1341 = vsub.f32 %v1255, %v1316
    %v1342 = vsub.f32 %v1260, %v1318
    %v1343 = vsub.f32 %v1265, %v1320
    %v1344 = vsub.f32 %v1270, %v1322
    %v1345 = vsub.f32 %v1275, %v1324
    %v1346 = vsub.f32 %v1280, %v1326
    %v1347 = vsub.f32 %v1285, %v1328
    %v1348 = vsub.f32 %v1290, %v1330
    %v1349 = vsub.f32 %v1295, %v1332
    %v1350 = vsub.f32 %v1300, %v1334
    %v1351 = vmul.f32 %v1335, 1.442695
    %v1352 = vpow.pop %v1351
    %v1353 = vmul.f32 %v1336, 1.442695
    %v1354 = vpow.pop %v1353
    %v1355 = vmul.f32 %v1337, 1.442695
    %v1356 = vpow.pop %v1355
    %v1357 = vmul.f32 %v1338, 1.442695
    %v1358 = vpow.pop %v1357
    %v1359 = vmul.f32 %v1339, 1.442695
    %v1360 = vpow.pop %v1359
    %v1361 = vmul.f32 %v1340, 1.442695
    %v1362 = vpow.pop %v1361
    %v1363 = vmul.f32 %v1341, 1.442695
    %v1364 = vpow.pop %v1363
    %v1365 = vmul.f32 %v1342, 1.442695
    %v1366 = vpow.pop %v1365
    %v1367 = vmul.f32 %v1343, 1.442695
    %v1368 = vpow.pop %v1367
    %v1369 = vmul.f32 %v1344, 1.442695
    %v1370 = vpow.pop %v1369
    %v1371 = vmul.f32 %v1345, 1.442695
    %v1372 = vpow.pop %v1371
    %v1373 = vmul.f32 %v1346, 1.442695
    %v1374 = vpow.pop %v1373
    %v1375 = vmul.f32 %v1347, 1.442695
    %v1376 = vpow.pop %v1375
    %v1377 = vmul.f32 %v1348, 1.442695
    %v1378 = vpow.pop %v1377
    %v1379 = vmul.f32 %v1349, 1.442695
    %v1380 = vpow.pop %v1379
    %v1381 = vmul.f32 %v1350, 1.442695
    %v1382 = vpow.pop %v1381
    %1383 = vadd.xlane.f32.xlu0 %v1352
    %v1384 = vpop.xlane.xlu0 %1383
    %1385 = vadd.xlane.f32.xlu0 %v1354
    %v1386 = vpop.xlane.xlu0 %1385
    %1387 = vadd.xlane.f32.xlu0 %v1356
    %v1388 = vpop.xlane.xlu0 %1387
    %1389 = vadd.xlane.f32.xlu0 %v1358
    %v1390 = vpop.xlane.xlu0 %1389
    %1391 = vadd.xlane.f32.xlu0 %v1360
    %v1392 = vpop.xlane.xlu0 %1391
    %1393 = vadd.xlane.f32.xlu0 %v1362
    %v1394 = vpop.xlane.xlu0 %1393
    %1395 = vadd.xlane.f32.xlu0 %v1364
    %v1396 = vpop.xlane.xlu0 %1395
    %1397 = vadd.xlane.f32.xlu0 %v1366
    %v1398 = vpop.xlane.xlu0 %1397
    %1399 = vadd.xlane.f32.xlu0 %v1368
    %v1400 = vpop.xlane.xlu0 %1399
    %1401 = vadd.xlane.f32.xlu0 %v1370
    %v1402 = vpop.xlane.xlu0 %1401
    %1403 = vadd.xlane.f32.xlu0 %v1372
    %v1404 = vpop.xlane.xlu0 %1403
    %1405 = vadd.xlane.f32.xlu0 %v1374
    %v1406 = vpop.xlane.xlu0 %1405
    %1407 = vadd.xlane.f32.xlu0 %v1376
    %v1408 = vpop.xlane.xlu0 %1407
    %1409 = vadd.xlane.f32.xlu0 %v1378
    %v1410 = vpop.xlane.xlu0 %1409
    %1411 = vadd.xlane.f32.xlu0 %v1380
    %v1412 = vpop.xlane.xlu0 %1411
    %1413 = vadd.xlane.f32.xlu0 %v1382
    %v1414 = vpop.xlane.xlu0 %1413
    %v1415 = vrcp.pop %v1384
    %v1416 = vrcp.pop %v1386
    %v1417 = vrcp.pop %v1388
    %v1418 = vrcp.pop %v1390
    %v1419 = vrcp.pop %v1392
    %v1420 = vrcp.pop %v1394
    %v1421 = vrcp.pop %v1396
    %v1422 = vrcp.pop %v1398
    %v1423 = vrcp.pop %v1400
    %v1424 = vrcp.pop %v1402
    %v1425 = vrcp.pop %v1404
    %v1426 = vrcp.pop %v1406
    %v1427 = vrcp.pop %v1408
    %v1428 = vrcp.pop %v1410
    %v1429 = vrcp.pop %v1412
    %v1430 = vrcp.pop %v1414
    %v1431 = vmul.f32 %v1352, %v1415
    %v1432 = vmul.f32 %v1354, %v1416
    %v1433 = vmul.f32 %v1356, %v1417
    %v1434 = vmul.f32 %v1358, %v1418
    %v1435 = vmul.f32 %v1360, %v1419
    %v1436 = vmul.f32 %v1362, %v1420
    %v1437 = vmul.f32 %v1364, %v1421
    %v1438 = vmul.f32 %v1366, %v1422
    %v1439 = vmul.f32 %v1368, %v1423
    %v1440 = vmul.f32 %v1370, %v1424
    %v1441 = vmul.f32 %v1372, %v1425
    %v1442 = vmul.f32 %v1374, %v1426
    %v1443 = vmul.f32 %v1376, %v1427
    %v1444 = vmul.f32 %v1378, %v1428
    %v1445 = vmul.f32 %v1380, %v1429
    %v1446 = vmul.f32 %v1382, %v1430
    %1447 = vmatprep.subr.mxu0 0.0
    %1448 = vmatpush1.msra.mxu0 %v967
    %1449 = vmatprep.subr.mxu0 0.0
    %1450 = vmatpush1.msra.mxu0 %v972
    %1451 = vmatprep.subr.mxu0 0.0
    %1452 = vmatpush1.msra.mxu0 %v977
    %1453 = vmatprep.subr.mxu0 0.0
    %1454 = vmatpush1.msra.mxu0 %v982
    %1455 = vmatprep.subr.mxu0 0.0
    %1456 = vmatpush1.msra.mxu0 %v987
    %1457 = vmatprep.subr.mxu0 0.0
    %1458 = vmatpush1.msra.mxu0 %v992
    %1459 = vmatprep.subr.mxu0 0.0
    %1460 = vmatpush1.msra.mxu0 %v997
    %1461 = vmatprep.subr.mxu0 0.0
    %1462 = vmatpush1.msra.mxu0 %v1002
    %1463 = vmatprep.subr.mxu0 0.0
    %1464 = vmatpush1.msra.mxu0 %v1007
    %1465 = vmatprep.subr.mxu0 0.0
    %1466 = vmatpush1.msra.mxu0 %v1012
    %1467 = vmatprep.subr.mxu0 0.0
    %1468 = vmatpush1.msra.mxu0 %v1017
    %1469 = vmatprep.subr.mxu0 0.0
    %1470 = vmatpush1.msra.mxu0 %v1022
    %1471 = vmatprep.subr.mxu0 0.0
    %1472 = vmatpush1.msra.mxu0 %v1027
    %1473 = vmatprep.subr.mxu0 0.0
    %1474 = vmatpush1.msra.mxu0 %v1032
    %1475 = vmatprep.subr.mxu0 0.0
    %1476 = vmatpush1.msra.mxu0 %v1037
    %1477 = vmatprep.subr.mxu0 0.0
    %1478 = vmatpush1.msra.mxu0 %v1042
    %1479 = vmatprep.subr.mxu0 0.0
    %1480 = vmatpush1.msra.mxu0 0.0
    %1481 = vmatprep.subr.mxu0 0.0
    %1482 = vmatpush1.msra.mxu0 0.0
    %1483 = vmatprep.subr.mxu0 0.0
    %1484 = vmatpush1.msra.mxu0 0.0
    %1485 = vmatprep.subr.mxu0 0.0
    %1486 = vmatpush1.msra.mxu0 0.0
    %1487 = vmatprep.subr.mxu0 0.0
    %1488 = vmatpush1.msra.mxu0 0.0
    %1489 = vmatprep.subr.mxu0 0.0
    %1490 = vmatpush1.msra.mxu0 0.0
    %1491 = vmatprep.subr.mxu0 0.0
    %1492 = vmatpush1.msra.mxu0 0.0
    %1493 = vmatprep.subr.mxu0 0.0
    %1494 = vmatpush1.msra.mxu0 0.0
    %1495 = vmatprep.subr.mxu0 0.0
    %1496 = vmatpush1.msra.mxu0 0.0
    %1497 = vmatprep.subr.mxu0 0.0
    %1498 = vmatpush1.msra.mxu0 0.0
    %1499 = vmatprep.subr.mxu0 0.0
    %1500 = vmatpush1.msra.mxu0 0.0
    %1501 = vmatprep.subr.mxu0 0.0
    %1502 = vmatpush1.msra.mxu0 0.0
    %1503 = vmatprep.subr.mxu0 0.0
    %1504 = vmatpush1.msra.mxu0 0.0
    %1505 = vmatprep.subr.mxu0 0.0
    %1506 = vmatpush1.msra.mxu0 0.0
    %1507 = vmatprep.subr.mxu0 0.0
    %1508 = vmatpush1.msra.mxu0 0.0
    %1509 = vmatprep.subr.mxu0 0.0
    %1510 = vmatpush1.msra.mxu0 0.0
    %1511 = vmatprep.mubr.f32.mxu0 0.0
    %1512 = vmatmul.mubr.f32.gmra.mrb[0].mxu0 %v1431
    %v1513 = vpop.f32.mrb[0].mxu0
    %v1514 = vadd.f32 0.0, %v1513
    %v1515 = vpop.f32.mrb[0].mxu0
    %1516 = vmatprep.mubr.f32.mxu0 0.0
    %1517 = vmatmul.mubr.f32.gmra.mrb[0].mxu0 %v1432
    %v1518 = vpop.f32.mrb[0].mxu0
    %v1519 = vadd.f32 0.0, %v1518
    %v1520 = vpop.f32.mrb[0].mxu0
    %1521 = vmatprep.mubr.f32.mxu0 0.0
    %1522 = vmatmul.mubr.f32.gmra.mrb[0].mxu0 %v1433
    %v1523 = vpop.f32.mrb[0].mxu0
    %v1524 = vadd.f32 0.0, %v1523
    %v1525 = vpop.f32.mrb[0].mxu0
    %1526 = vmatprep.mubr.f32.mxu0 0.0
    %1527 = vmatmul.mubr.f32.gmra.mrb[0].mxu0 %v1434
    %v1528 = vpop.f32.mrb[0].mxu0
    %v1529 = vadd.f32 0.0, %v1528
    %v1530 = vpop.f32.mrb[0].mxu0
    %1531 = vmatprep.mubr.f32.mxu0 0.0
    %1532 = vmatmul.mubr.f32.gmra.mrb[0].mxu0 %v1435
    %v1533 = vpop.f32.mrb[0].mxu0
    %v1534 = vadd.f32 0.0, %v1533
    %v1535 = vpop.f32.mrb[0].mxu0
    %1536 = vmatprep.mubr.f32.mxu0 0.0
    %1537 = vmatmul.mubr.f32.gmra.mrb[0].mxu0 %v1436
    %v1538 = vpop.f32.mrb[0].mxu0
    %v1539 = vadd.f32 0.0, %v1538
    %v1540 = vpop.f32.mrb[0].mxu0
    %1541 = vmatprep.mubr.f32.mxu0 0.0
    %1542 = vmatmul.mubr.f32.gmra.mrb[0].mxu0 %v1437
    %v1543 = vpop.f32.mrb[0].mxu0
    %v1544 = vadd.f32 0.0, %v1543
    %v1545 = vpop.f32.mrb[0].mxu0
    %1546 = vmatprep.mubr.f32.mxu0 0.0
    %1547 = vmatmul.mubr.f32.gmra.mrb[0].mxu0 %v1438
    %v1548 = vpop.f32.mrb[0].mxu0
    %v1549 = vadd.f32 0.0, %v1548
    %v1550 = vpop.f32.mrb[0].mxu0
    %1551 = vmatprep.mubr.f32.mxu0 0.0
    %1552 = vmatmul.mubr.f32.gmra.mrb[0].mxu0 %v1439
    %v1553 = vpop.f32.mrb[0].mxu0
    %v1554 = vadd.f32 0.0, %v1553
    %v1555 = vpop.f32.mrb[0].mxu0
    %1556 = vmatprep.mubr.f32.mxu0 0.0
    %1557 = vmatmul.mubr.f32.gmra.mrb[0].mxu0 %v1440
    %v1558 = vpop.f32.mrb[0].mxu0
    %v1559 = vadd.f32 0.0, %v1558
    %v1560 = vpop.f32.mrb[0].mxu0
    %1561 = vmatprep.mubr.f32.mxu0 0.0
    %1562 = vmatmul.mubr.f32.gmra.mrb[0].mxu0 %v1441
    %v1563 = vpop.f32.mrb[0].mxu0
    %v1564 = vadd.f32 0.0, %v1563
    %v1565 = vpop.f32.mrb[0].mxu0
    %1566 = vmatprep.mubr.f32.mxu0 0.0
    %1567 = vmatmul.mubr.f32.gmra.mrb[0].mxu0 %v1442
    %v1568 = vpop.f32.mrb[0].mxu0
    %v1569 = vadd.f32 0.0, %v1568
    %v1570 = vpop.f32.mrb[0].mxu0
    %1571 = vmatprep.mubr.f32.mxu0 0.0
    %1572 = vmatmul.mubr.f32.gmra.mrb[0].mxu0 %v1443
    %v1573 = vpop.f32.mrb[0].mxu0
    %v1574 = vadd.f32 0.0, %v1573
    %v1575 = vpop.f32.mrb[0].mxu0
    %1576 = vmatprep.mubr.f32.mxu0 0.0
    %1577 = vmatmul.mubr.f32.gmra.mrb[0].mxu0 %v1444
    %v1578 = vpop.f32.mrb[0].mxu0
    %v1579 = vadd.f32 0.0, %v1578
    %v1580 = vpop.f32.mrb[0].mxu0
    %1581 = vmatprep.mubr.f32.mxu0 0.0
    %1582 = vmatmul.mubr.f32.gmra.mrb[0].mxu0 %v1445
    %v1583 = vpop.f32.mrb[0].mxu0
    %v1584 = vadd.f32 0.0, %v1583
    %v1585 = vpop.f32.mrb[0].mxu0
    %1586 = vmatprep.mubr.f32.mxu0 0.0
    %1587 = vmatmul.mubr.f32.gmra.mrb[0].mxu0 %v1446
    %v1588 = vpop.f32.mrb[0].mxu0
    %v1589 = vadd.f32 0.0, %v1588
    %v1590 = vpop.f32.mrb[0].mxu0
    %1591 = vdwg.mxu0
    %v1592 = vld [vmem:[#allocation7] sm:$0xff]
    %v1593 = vld [vmem:[#allocation7 + $0x8] sm:$0xff]
    %s1594 = scalar_lea.vmem %s2, 32
    %v1595 = vld [vmem:[%s1594] sm:$0xff]
    %v1596 = vld [vmem:[%s1594 + $0x8] sm:$0xff]
    %v1597 = vld [vmem:[%s1594 + $0x10] sm:$0xff]
    %v1598 = vld [vmem:[%s1594 + $0x18] sm:$0xff]
    %s1599 = scalar_lea.vmem [#allocation5], 1
    %v1600 = vld [vmem:[%s1599] sm:$0x1]
    %v1602 = vlaneseq
    %v1603 = vshrl.u32 %v1602, 7
    %v1604 = vsub.s32 0, %v1603
    %v1605 = vrot.slane %v1600, %v1604
    %1607 = vmatprep.subr.mxu0 0.0
    %1608 = vmatpush1.msra.mxu0 %v1595
    %1609 = vmatprep.subr.mxu0 0.0
    %1610 = vmatpush1.msra.mxu0 %v1596
    %1611 = vmatprep.subr.mxu0 0.0
    %1612 = vmatpush1.msra.mxu0 %v1597
    %1613 = vmatprep.subr.mxu0 0.0
    %1614 = vmatpush1.msra.mxu0 %v1598
    %1615 = vmatprep.subr.mxu0 0.0
    %1616 = vmatpush1.msra.mxu0 0.0
    %1617 = vmatprep.subr.mxu0 0.0
    %1618 = vmatpush1.msra.mxu0 0.0
    %1619 = vmatprep.subr.mxu0 0.0
    %1620 = vmatpush1.msra.mxu0 0.0
    %1621 = vmatprep.subr.mxu0 0.0
    %1622 = vmatpush1.msra.mxu0 0.0
    %1623 = vmatprep.subr.mxu0 0.0
    %1624 = vmatpush1.msra.mxu0 0.0
    %1625 = vmatprep.subr.mxu0 0.0
    %1626 = vmatpush1.msra.mxu0 0.0
    %1627 = vmatprep.subr.mxu0 0.0
    %1628 = vmatpush1.msra.mxu0 0.0
    %1629 = vmatprep.subr.mxu0 0.0
    %1630 = vmatpush1.msra.mxu0 0.0
    %1631 = vmatprep.subr.mxu0 0.0
    %1632 = vmatpush1.msra.mxu0 0.0
    %1633 = vmatprep.subr.mxu0 0.0
    %1634 = vmatpush1.msra.mxu0 0.0
    %1635 = vmatprep.subr.mxu0 0.0
    %1636 = vmatpush1.msra.mxu0 0.0
    %1637 = vmatprep.subr.mxu0 0.0
    %1638 = vmatpush1.msra.mxu0 0.0
    %1639 = vmatprep.subr.mxu0 0.0
    %1640 = vmatpush1.msra.mxu0 0.0
    %1641 = vmatprep.subr.mxu0 0.0
    %1642 = vmatpush1.msra.mxu0 0.0
    %1643 = vmatprep.subr.mxu0 0.0
    %1644 = vmatpush1.msra.mxu0 0.0
    %1645 = vmatprep.subr.mxu0 0.0
    %1646 = vmatpush1.msra.mxu0 0.0
    %1647 = vmatprep.subr.mxu0 0.0
    %1648 = vmatpush1.msra.mxu0 0.0
    %1649 = vmatprep.subr.mxu0 0.0
    %1650 = vmatpush1.msra.mxu0 0.0
    %1651 = vmatprep.subr.mxu0 0.0
    %1652 = vmatpush1.msra.mxu0 0.0
    %1653 = vmatprep.subr.mxu0 0.0
    %1654 = vmatpush1.msra.mxu0 0.0
    %1655 = vmatprep.subr.mxu0 0.0
    %1656 = vmatpush1.msra.mxu0 0.0
    %1657 = vmatprep.subr.mxu0 0.0
    %1658 = vmatpush1.msra.mxu0 0.0
    %1659 = vmatprep.subr.mxu0 0.0
    %1660 = vmatpush1.msra.mxu0 0.0
    %1661 = vmatprep.subr.mxu0 0.0
    %1662 = vmatpush1.msra.mxu0 0.0
    %1663 = vmatprep.subr.mxu0 0.0
    %1664 = vmatpush1.msra.mxu0 0.0
    %1665 = vmatprep.subr.mxu0 0.0
    %1666 = vmatpush1.msra.mxu0 0.0
    %1667 = vmatprep.subr.mxu0 0.0
    %1668 = vmatpush1.msra.mxu0 0.0
    %1669 = vmatprep.subr.mxu0 0.0
    %1670 = vmatpush1.msra.mxu0 0.0
    %1671 = vmatprep.mubr.f32.mxu0 0.0
    %1672 = vmatmul.mubr.f32.gmra.mrb[0].mxu0 %v537
    %v1673 = vpop.f32.mrb[0].mxu0
    %v1674 = vadd.f32 %v1605, %v1673
    %v1675 = vpop.f32.mrb[0].mxu0
    %1676 = vmatprep.mubr.f32.mxu0 0.0
    %1677 = vmatmul.mubr.f32.gmra.mrb[0].mxu0 %v540
    %v1678 = vpop.f32.mrb[0].mxu0
    %v1679 = vadd.f32 %v1605, %v1678
    %v1680 = vpop.f32.mrb[0].mxu0
    %1681 = vmatprep.mubr.f32.mxu0 0.0
    %1682 = vmatmul.mubr.f32.gmra.mrb[0].mxu0 %v543
    %v1683 = vpop.f32.mrb[0].mxu0
    %v1684 = vadd.f32 %v1605, %v1683
    %v1685 = vpop.f32.mrb[0].mxu0
    %1686 = vmatprep.mubr.f32.mxu0 0.0
    %1687 = vmatmul.mubr.f32.gmra.mrb[0].mxu0 %v546
    %v1688 = vpop.f32.mrb[0].mxu0
    %v1689 = vadd.f32 %v1605, %v1688
    %v1690 = vpop.f32.mrb[0].mxu0
    %1691 = vmatprep.mubr.f32.mxu0 0.0
    %1692 = vmatmul.mubr.f32.gmra.mrb[0].mxu0 %v549
    %v1693 = vpop.f32.mrb[0].mxu0
    %v1694 = vadd.f32 %v1605, %v1693
    %v1695 = vpop.f32.mrb[0].mxu0
    %1696 = vmatprep.mubr.f32.mxu0 0.0
    %1697 = vmatmul.mubr.f32.gmra.mrb[0].mxu0 %v552
    %v1698 = vpop.f32.mrb[0].mxu0
    %v1699 = vadd.f32 %v1605, %v1698
    %v1700 = vpop.f32.mrb[0].mxu0
    %1701 = vmatprep.mubr.f32.mxu0 0.0
    %1702 = vmatmul.mubr.f32.gmra.mrb[0].mxu0 %v555
    %v1703 = vpop.f32.mrb[0].mxu0
    %v1704 = vadd.f32 %v1605, %v1703
    %v1705 = vpop.f32.mrb[0].mxu0
    %1706 = vmatprep.mubr.f32.mxu0 0.0
    %1707 = vmatmul.mubr.f32.gmra.mrb[0].mxu0 %v558
    %v1708 = vpop.f32.mrb[0].mxu0
    %v1709 = vadd.f32 %v1605, %v1708
    %v1710 = vpop.f32.mrb[0].mxu0
    %1711 = vmatprep.mubr.f32.mxu0 0.0
    %1712 = vmatmul.mubr.f32.gmra.mrb[0].mxu0 %v561
    %v1713 = vpop.f32.mrb[0].mxu0
    %v1714 = vadd.f32 %v1605, %v1713
    %v1715 = vpop.f32.mrb[0].mxu0
    %1716 = vmatprep.mubr.f32.mxu0 0.0
    %1717 = vmatmul.mubr.f32.gmra.mrb[0].mxu0 %v564
    %v1718 = vpop.f32.mrb[0].mxu0
    %v1719 = vadd.f32 %v1605, %v1718
    %v1720 = vpop.f32.mrb[0].mxu0
    %1721 = vmatprep.mubr.f32.mxu0 0.0
    %1722 = vmatmul.mubr.f32.gmra.mrb[0].mxu0 %v567
    %v1723 = vpop.f32.mrb[0].mxu0
    %v1724 = vadd.f32 %v1605, %v1723
    %v1725 = vpop.f32.mrb[0].mxu0
    %1726 = vmatprep.mubr.f32.mxu0 0.0
    %1727 = vmatmul.mubr.f32.gmra.mrb[0].mxu0 %v570
    %v1728 = vpop.f32.mrb[0].mxu0
    %v1729 = vadd.f32 %v1605, %v1728
    %v1730 = vpop.f32.mrb[0].mxu0
    %1731 = vmatprep.mubr.f32.mxu0 0.0
    %1732 = vmatmul.mubr.f32.gmra.mrb[0].mxu0 %v573
    %v1733 = vpop.f32.mrb[0].mxu0
    %v1734 = vadd.f32 %v1605, %v1733
    %v1735 = vpop.f32.mrb[0].mxu0
    %1736 = vmatprep.mubr.f32.mxu0 0.0
    %1737 = vmatmul.mubr.f32.gmra.mrb[0].mxu0 %v576
    %v1738 = vpop.f32.mrb[0].mxu0
    %v1739 = vadd.f32 %v1605, %v1738
    %v1740 = vpop.f32.mrb[0].mxu0
    %1741 = vmatprep.mubr.f32.mxu0 0.0
    %1742 = vmatmul.mubr.f32.gmra.mrb[0].mxu0 %v579
    %v1743 = vpop.f32.mrb[0].mxu0
    %v1744 = vadd.f32 %v1605, %v1743
    %v1745 = vpop.f32.mrb[0].mxu0
    %1746 = vmatprep.mubr.f32.mxu0 0.0
    %1747 = vmatmul.mubr.f32.gmra.mrb[0].mxu0 %v582
    %v1748 = vpop.f32.mrb[0].mxu0
    %v1749 = vadd.f32 %v1605, %v1748
    %v1750 = vpop.f32.mrb[0].mxu0
    %1751 = vdwg.mxu0
    %s1752 = scalar_lea.vmem %s2, 96
    %v1753 = vld [vmem:[%s1752] sm:$0xff]
    %v1754 = vld [vmem:[%s1752 + $0x8] sm:$0xff]
    %v1755 = vld [vmem:[%s1752 + $0x10] sm:$0xff]
    %v1756 = vld [vmem:[%s1752 + $0x18] sm:$0xff]
    %s1757 = scalar_lea.vmem [#allocation5], 3
    %v1758 = vld [vmem:[%s1757] sm:$0x1]
    %v1760 = vlaneseq
    %v1761 = vshrl.u32 %v1760, 7
    %v1762 = vsub.s32 0, %v1761
    %v1763 = vrot.slane %v1758, %v1762
    %1765 = vmatprep.subr.mxu0 0.0
    %1766 = vmatpush1.msra.mxu0 %v1753
    %1767 = vmatprep.subr.mxu0 0.0
    %1768 = vmatpush1.msra.mxu0 %v1754
    %1769 = vmatprep.subr.mxu0 0.0
    %1770 = vmatpush1.msra.mxu0 %v1755
    %1771 = vmatprep.subr.mxu0 0.0
    %1772 = vmatpush1.msra.mxu0 %v1756
    %1773 = vmatprep.subr.mxu0 0.0
    %1774 = vmatpush1.msra.mxu0 0.0
    %1775 = vmatprep.subr.mxu0 0.0
    %1776 = vmatpush1.msra.mxu0 0.0
    %1777 = vmatprep.subr.mxu0 0.0
    %1778 = vmatpush1.msra.mxu0 0.0
    %1779 = vmatprep.subr.mxu0 0.0
    %1780 = vmatpush1.msra.mxu0 0.0
    %1781 = vmatprep.subr.mxu0 0.0
    %1782 = vmatpush1.msra.mxu0 0.0
    %1783 = vmatprep.subr.mxu0 0.0
    %1784 = vmatpush1.msra.mxu0 0.0
    %1785 = vmatprep.subr.mxu0 0.0
    %1786 = vmatpush1.msra.mxu0 0.0
    %1787 = vmatprep.subr.mxu0 0.0
    %1788 = vmatpush1.msra.mxu0 0.0
    %1789 = vmatprep.subr.mxu0 0.0
    %1790 = vmatpush1.msra.mxu0 0.0
    %1791 = vmatprep.subr.mxu0 0.0
    %1792 = vmatpush1.msra.mxu0 0.0
    %1793 = vmatprep.subr.mxu0 0.0
    %1794 = vmatpush1.msra.mxu0 0.0
    %1795 = vmatprep.subr.mxu0 0.0
    %1796 = vmatpush1.msra.mxu0 0.0
    %1797 = vmatprep.subr.mxu0 0.0
    %1798 = vmatpush1.msra.mxu0 0.0
    %1799 = vmatprep.subr.mxu0 0.0
    %1800 = vmatpush1.msra.mxu0 0.0
    %1801 = vmatprep.subr.mxu0 0.0
    %1802 = vmatpush1.msra.mxu0 0.0
    %1803 = vmatprep.subr.mxu0 0.0
    %1804 = vmatpush1.msra.mxu0 0.0
    %1805 = vmatprep.subr.mxu0 0.0
    %1806 = vmatpush1.msra.mxu0 0.0
    %1807 = vmatprep.subr.mxu0 0.0
    %1808 = vmatpush1.msra.mxu0 0.0
    %1809 = vmatprep.subr.mxu0 0.0
    %1810 = vmatpush1.msra.mxu0 0.0
    %1811 = vmatprep.subr.mxu0 0.0
    %1812 = vmatpush1.msra.mxu0 0.0
    %1813 = vmatprep.subr.mxu0 0.0
    %1814 = vmatpush1.msra.mxu0 0.0
    %1815 = vmatprep.subr.mxu0 0.0
    %1816 = vmatpush1.msra.mxu0 0.0
    %1817 = vmatprep.subr.mxu0 0.0
    %1818 = vmatpush1.msra.mxu0 0.0
    %1819 = vmatprep.subr.mxu0 0.0
    %1820 = vmatpush1.msra.mxu0 0.0
    %1821 = vmatprep.subr.mxu0 0.0
    %1822 = vmatpush1.msra.mxu0 0.0
    %1823 = vmatprep.subr.mxu0 0.0
    %1824 = vmatpush1.msra.mxu0 0.0
    %1825 = vmatprep.subr.mxu0 0.0
    %1826 = vmatpush1.msra.mxu0 0.0
    %1827 = vmatprep.subr.mxu0 0.0
    %1828 = vmatpush1.msra.mxu0 0.0
    %1829 = vmatprep.mubr.f32.mxu0 0.0
    %1830 = vmatmul.mubr.f32.gmra.mrb[0].mxu0 %v537
    %v1831 = vpop.f32.mrb[0].mxu0
    %v1832 = vadd.f32 %v1763, %v1831
    %v1833 = vpop.f32.mrb[0].mxu0
    %1834 = vmatprep.mubr.f32.mxu0 0.0
    %1835 = vmatmul.mubr.f32.gmra.mrb[0].mxu0 %v540
    %v1836 = vpop.f32.mrb[0].mxu0
    %v1837 = vadd.f32 %v1763, %v1836
    %v1838 = vpop.f32.mrb[0].mxu0
    %1839 = vmatprep.mubr.f32.mxu0 0.0
    %1840 = vmatmul.mubr.f32.gmra.mrb[0].mxu0 %v543
    %v1841 = vpop.f32.mrb[0].mxu0
    %v1842 = vadd.f32 %v1763, %v1841
    %v1843 = vpop.f32.mrb[0].mxu0
    %1844 = vmatprep.mubr.f32.mxu0 0.0
    %1845 = vmatmul.mubr.f32.gmra.mrb[0].mxu0 %v546
    %v1846 = vpop.f32.mrb[0].mxu0
    %v1847 = vadd.f32 %v1763, %v1846
    %v1848 = vpop.f32.mrb[0].mxu0
    %1849 = vmatprep.mubr.f32.mxu0 0.0
    %1850 = vmatmul.mubr.f32.gmra.mrb[0].mxu0 %v549
    %v1851 = vpop.f32.mrb[0].mxu0
    %v1852 = vadd.f32 %v1763, %v1851
    %v1853 = vpop.f32.mrb[0].mxu0
    %1854 = vmatprep.mubr.f32.mxu0 0.0
    %1855 = vmatmul.mubr.f32.gmra.mrb[0].mxu0 %v552
    %v1856 = vpop.f32.mrb[0].mxu0
    %v1857 = vadd.f32 %v1763, %v1856
    %v1858 = vpop.f32.mrb[0].mxu0
    %1859 = vmatprep.mubr.f32.mxu0 0.0
    %1860 = vmatmul.mubr.f32.gmra.mrb[0].mxu0 %v555
    %v1861 = vpop.f32.mrb[0].mxu0
    %v1862 = vadd.f32 %v1763, %v1861
    %v1863 = vpop.f32.mrb[0].mxu0
    %1864 = vmatprep.mubr.f32.mxu0 0.0
    %1865 = vmatmul.mubr.f32.gmra.mrb[0].mxu0 %v558
    %v1866 = vpop.f32.mrb[0].mxu0
    %v1867 = vadd.f32 %v1763, %v1866
    %v1868 = vpop.f32.mrb[0].mxu0
    %1869 = vmatprep.mubr.f32.mxu0 0.0
    %1870 = vmatmul.mubr.f32.gmra.mrb[0].mxu0 %v561
    %v1871 = vpop.f32.mrb[0].mxu0
    %v1872 = vadd.f32 %v1763, %v1871
    %v1873 = vpop.f32.mrb[0].mxu0
    %1874 = vmatprep.mubr.f32.mxu0 0.0
    %1875 = vmatmul.mubr.f32.gmra.mrb[0].mxu0 %v564
    %v1876 = vpop.f32.mrb[0].mxu0
    %v1877 = vadd.f32 %v1763, %v1876
    %v1878 = vpop.f32.mrb[0].mxu0
    %1879 = vmatprep.mubr.f32.mxu0 0.0
    %1880 = vmatmul.mubr.f32.gmra.mrb[0].mxu0 %v567
    %v1881 = vpop.f32.mrb[0].mxu0
    %v1882 = vadd.f32 %v1763, %v1881
    %v1883 = vpop.f32.mrb[0].mxu0
    %1884 = vmatprep.mubr.f32.mxu0 0.0
    %1885 = vmatmul.mubr.f32.gmra.mrb[0].mxu0 %v570
    %v1886 = vpop.f32.mrb[0].mxu0
    %v1887 = vadd.f32 %v1763, %v1886
    %v1888 = vpop.f32.mrb[0].mxu0
    %1889 = vmatprep.mubr.f32.mxu0 0.0
    %1890 = vmatmul.mubr.f32.gmra.mrb[0].mxu0 %v573
    %v1891 = vpop.f32.mrb[0].mxu0
    %v1892 = vadd.f32 %v1763, %v1891
    %v1893 = vpop.f32.mrb[0].mxu0
    %1894 = vmatprep.mubr.f32.mxu0 0.0
    %1895 = vmatmul.mubr.f32.gmra.mrb[0].mxu0 %v576
    %v1896 = vpop.f32.mrb[0].mxu0
    %v1897 = vadd.f32 %v1763, %v1896
    %v1898 = vpop.f32.mrb[0].mxu0
    %1899 = vmatprep.mubr.f32.mxu0 0.0
    %1900 = vmatmul.mubr.f32.gmra.mrb[0].mxu0 %v579
    %v1901 = vpop.f32.mrb[0].mxu0
    %v1902 = vadd.f32 %v1763, %v1901
    %v1903 = vpop.f32.mrb[0].mxu0
    %1904 = vmatprep.mubr.f32.mxu0 0.0
    %1905 = vmatmul.mubr.f32.gmra.mrb[0].mxu0 %v582
    %v1906 = vpop.f32.mrb[0].mxu0
    %v1907 = vadd.f32 %v1763, %v1906
    %v1908 = vpop.f32.mrb[0].mxu0
    %1909 = vdwg.mxu0
    %s1910 = scalar_lea.vmem %s2, 160
    %v1911 = vld [vmem:[%s1910] sm:$0xff]
    %v1912 = vld [vmem:[%s1910 + $0x8] sm:$0xff]
    %v1913 = vld [vmem:[%s1910 + $0x10] sm:$0xff]
    %v1914 = vld [vmem:[%s1910 + $0x18] sm:$0xff]
    %s1915 = scalar_lea.vmem [#allocation5], 5
    %v1916 = vld [vmem:[%s1915] sm:$0x1]
    %v1918 = vlaneseq
    %v1919 = vshrl.u32 %v1918, 7
    %v1920 = vsub.s32 0, %v1919
    %v1921 = vrot.slane %v1916, %v1920
    %1923 = vmatprep.subr.mxu0 0.0
    %1924 = vmatpush1.msra.mxu0 %v1911
    %1925 = vmatprep.subr.mxu0 0.0
    %1926 = vmatpush1.msra.mxu0 %v1912
    %1927 = vmatprep.subr.mxu0 0.0
    %1928 = vmatpush1.msra.mxu0 %v1913
    %1929 = vmatprep.subr.mxu0 0.0
    %1930 = vmatpush1.msra.mxu0 %v1914
    %1931 = vmatprep.subr.mxu0 0.0
    %1932 = vmatpush1.msra.mxu0 0.0
    %1933 = vmatprep.subr.mxu0 0.0
    %1934 = vmatpush1.msra.mxu0 0.0
    %1935 = vmatprep.subr.mxu0 0.0
    %1936 = vmatpush1.msra.mxu0 0.0
    %1937 = vmatprep.subr.mxu0 0.0
    %1938 = vmatpush1.msra.mxu0 0.0
    %1939 = vmatprep.subr.mxu0 0.0
    %1940 = vmatpush1.msra.mxu0 0.0
    %1941 = vmatprep.subr.mxu0 0.0
    %1942 = vmatpush1.msra.mxu0 0.0
    %1943 = vmatprep.subr.mxu0 0.0
    %1944 = vmatpush1.msra.mxu0 0.0
    %1945 = vmatprep.subr.mxu0 0.0
    %1946 = vmatpush1.msra.mxu0 0.0
    %1947 = vmatprep.subr.mxu0 0.0
    %1948 = vmatpush1.msra.mxu0 0.0
    %1949 = vmatprep.subr.mxu0 0.0
    %1950 = vmatpush1.msra.mxu0 0.0
    %1951 = vmatprep.subr.mxu0 0.0
    %1952 = vmatpush1.msra.mxu0 0.0
    %1953 = vmatprep.subr.mxu0 0.0
    %1954 = vmatpush1.msra.mxu0 0.0
    %1955 = vmatprep.subr.mxu0 0.0
    %1956 = vmatpush1.msra.mxu0 0.0
    %1957 = vmatprep.subr.mxu0 0.0
    %1958 = vmatpush1.msra.mxu0 0.0
    %1959 = vmatprep.subr.mxu0 0.0
    %1960 = vmatpush1.msra.mxu0 0.0
    %1961 = vmatprep.subr.mxu0 0.0
    %1962 = vmatpush1.msra.mxu0 0.0
    %1963 = vmatprep.subr.mxu0 0.0
    %1964 = vmatpush1.msra.mxu0 0.0
    %1965 = vmatprep.subr.mxu0 0.0
    %1966 = vmatpush1.msra.mxu0 0.0
    %1967 = vmatprep.subr.mxu0 0.0
    %1968 = vmatpush1.msra.mxu0 0.0
    %1969 = vmatprep.subr.mxu0 0.0
    %1970 = vmatpush1.msra.mxu0 0.0
    %1971 = vmatprep.subr.mxu0 0.0
    %1972 = vmatpush1.msra.mxu0 0.0
    %1973 = vmatprep.subr.mxu0 0.0
    %1974 = vmatpush1.msra.mxu0 0.0
    %1975 = vmatprep.subr.mxu0 0.0
    %1976 = vmatpush1.msra.mxu0 0.0
    %1977 = vmatprep.subr.mxu0 0.0
    %1978 = vmatpush1.msra.mxu0 0.0
    %1979 = vmatprep.subr.mxu0 0.0
    %1980 = vmatpush1.msra.mxu0 0.0
    %1981 = vmatprep.subr.mxu0 0.0
    %1982 = vmatpush1.msra.mxu0 0.0
    %1983 = vmatprep.subr.mxu0 0.0
    %1984 = vmatpush1.msra.mxu0 0.0
    %1985 = vmatprep.subr.mxu0 0.0
    %1986 = vmatpush1.msra.mxu0 0.0
    %1987 = vmatprep.mubr.f32.mxu0 0.0
    %1988 = vmatmul.mubr.f32.gmra.mrb[0].mxu0 %v537
    %v1989 = vpop.f32.mrb[0].mxu0
    %v1990 = vadd.f32 %v1921, %v1989
    %v1991 = vpop.f32.mrb[0].mxu0
    %1992 = vmatprep.mubr.f32.mxu0 0.0
    %1993 = vmatmul.mubr.f32.gmra.mrb[0].mxu0 %v540
    %v1994 = vpop.f32.mrb[0].mxu0
    %v1995 = vadd.f32 %v1921, %v1994
    %v1996 = vpop.f32.mrb[0].mxu0
    %1997 = vmatprep.mubr.f32.mxu0 0.0
    %1998 = vmatmul.mubr.f32.gmra.mrb[0].mxu0 %v543
    %v1999 = vpop.f32.mrb[0].mxu0
    %v2000 = vadd.f32 %v1921, %v1999
    %v2001 = vpop.f32.mrb[0].mxu0
    %2002 = vmatprep.mubr.f32.mxu0 0.0
    %2003 = vmatmul.mubr.f32.gmra.mrb[0].mxu0 %v546
    %v2004 = vpop.f32.mrb[0].mxu0
    %v2005 = vadd.f32 %v1921, %v2004
    %v2006 = vpop.f32.mrb[0].mxu0
    %2007 = vmatprep.mubr.f32.mxu0 0.0
    %2008 = vmatmul.mubr.f32.gmra.mrb[0].mxu0 %v549
    %v2009 = vpop.f32.mrb[0].mxu0
    %v2010 = vadd.f32 %v1921, %v2009
    %v2011 = vpop.f32.mrb[0].mxu0
    %2012 = vmatprep.mubr.f32.mxu0 0.0
    %2013 = vmatmul.mubr.f32.gmra.mrb[0].mxu0 %v552
    %v2014 = vpop.f32.mrb[0].mxu0
    %v2015 = vadd.f32 %v1921, %v2014
    %v2016 = vpop.f32.mrb[0].mxu0
    %2017 = vmatprep.mubr.f32.mxu0 0.0
    %2018 = vmatmul.mubr.f32.gmra.mrb[0].mxu0 %v555
    %v2019 = vpop.f32.mrb[0].mxu0
    %v2020 = vadd.f32 %v1921, %v2019
    %v2021 = vpop.f32.mrb[0].mxu0
    %2022 = vmatprep.mubr.f32.mxu0 0.0
    %2023 = vmatmul.mubr.f32.gmra.mrb[0].mxu0 %v558
    %v2024 = vpop.f32.mrb[0].mxu0
    %v2025 = vadd.f32 %v1921, %v2024
    %v2026 = vpop.f32.mrb[0].mxu0
    %2027 = vmatprep.mubr.f32.mxu0 0.0
    %2028 = vmatmul.mubr.f32.gmra.mrb[0].mxu0 %v561
    %v2029 = vpop.f32.mrb[0].mxu0
    %v2030 = vadd.f32 %v1921, %v2029
    %v2031 = vpop.f32.mrb[0].mxu0
    %2032 = vmatprep.mubr.f32.mxu0 0.0
    %2033 = vmatmul.mubr.f32.gmra.mrb[0].mxu0 %v564
    %v2034 = vpop.f32.mrb[0].mxu0
    %v2035 = vadd.f32 %v1921, %v2034
    %v2036 = vpop.f32.mrb[0].mxu0
    %2037 = vmatprep.mubr.f32.mxu0 0.0
    %2038 = vmatmul.mubr.f32.gmra.mrb[0].mxu0 %v567
    %v2039 = vpop.f32.mrb[0].mxu0
    %v2040 = vadd.f32 %v1921, %v2039
    %v2041 = vpop.f32.mrb[0].mxu0
    %2042 = vmatprep.mubr.f32.mxu0 0.0
    %2043 = vmatmul.mubr.f32.gmra.mrb[0].mxu0 %v570
    %v2044 = vpop.f32.mrb[0].mxu0
    %v2045 = vadd.f32 %v1921, %v2044
    %v2046 = vpop.f32.mrb[0].mxu0
    %2047 = vmatprep.mubr.f32.mxu0 0.0
    %2048 = vmatmul.mubr.f32.gmra.mrb[0].mxu0 %v573
    %v2049 = vpop.f32.mrb[0].mxu0
    %v2050 = vadd.f32 %v1921, %v2049
    %v2051 = vpop.f32.mrb[0].mxu0
    %2052 = vmatprep.mubr.f32.mxu0 0.0
    %2053 = vmatmul.mubr.f32.gmra.mrb[0].mxu0 %v576
    %v2054 = vpop.f32.mrb[0].mxu0
    %v2055 = vadd.f32 %v1921, %v2054
    %v2056 = vpop.f32.mrb[0].mxu0
    %2057 = vmatprep.mubr.f32.mxu0 0.0
    %2058 = vmatmul.mubr.f32.gmra.mrb[0].mxu0 %v579
    %v2059 = vpop.f32.mrb[0].mxu0
    %v2060 = vadd.f32 %v1921, %v2059
    %v2061 = vpop.f32.mrb[0].mxu0
    %2062 = vmatprep.mubr.f32.mxu0 0.0
    %2063 = vmatmul.mubr.f32.gmra.mrb[0].mxu0 %v582
    %v2064 = vpop.f32.mrb[0].mxu0
    %v2065 = vadd.f32 %v1921, %v2064
    %v2066 = vpop.f32.mrb[0].mxu0
    %2067 = vdwg.mxu0
    %s2068 = scalar_lea.vmem %s5, 128
    %v2069 = vld [vmem:[%s2068] sm:$0xff]
    %v2070 = vld [vmem:[%s2068 + $0x8] sm:$0xff]
    %v2071 = vld [vmem:[%s2068 + $0x10] sm:$0xff]
    %v2072 = vld [vmem:[%s2068 + $0x18] sm:$0xff]
    %v2073 = vld [vmem:[%s2068 + $0x20] sm:$0xff]
    %v2074 = vld [vmem:[%s2068 + $0x28] sm:$0xff]
    %v2075 = vld [vmem:[%s2068 + $0x30] sm:$0xff]
    %v2076 = vld [vmem:[%s2068 + $0x38] sm:$0xff]
    %v2077 = vld [vmem:[%s2068 + $0x40] sm:$0xff]
    %v2078 = vld [vmem:[%s2068 + $0x48] sm:$0xff]
    %v2079 = vld [vmem:[%s2068 + $0x50] sm:$0xff]
    %v2080 = vld [vmem:[%s2068 + $0x58] sm:$0xff]
    %v2081 = vld [vmem:[%s2068 + $0x60] sm:$0xff]
    %v2082 = vld [vmem:[%s2068 + $0x68] sm:$0xff]
    %v2083 = vld [vmem:[%s2068 + $0x70] sm:$0xff]
    %v2084 = vld [vmem:[%s2068 + $0x78] sm:$0xff]
    %v2086 = vsel %vm1061, %v1674, 0
    %v2089 = vsel %vm1061, %v1679, 0
    %v2092 = vsel %vm1061, %v1684, 0
    %v2095 = vsel %vm1061, %v1689, 0
    %v2098 = vsel %vm1061, %v1694, 0
    %v2101 = vsel %vm1061, %v1699, 0
    %v2104 = vsel %vm1061, %v1704, 0
    %v2107 = vsel %vm1061, %v1709, 0
    %v2110 = vsel %vm1061, %v1714, 0
    %v2113 = vsel %vm1061, %v1719, 0
    %v2116 = vsel %vm1061, %v1724, 0
    %v2119 = vsel %vm1061, %v1729, 0
    %v2122 = vsel %vm1061, %v1734, 0
    %v2125 = vsel %vm1061, %v1739, 0
    %v2128 = vsel %vm1061, %v1744, 0
    %v2131 = vsel %vm1061, %v1749, 0
    %v2134 = vsel %vm1061, %v1832, 0
    %v2137 = vsel %vm1061, %v1837, 0
    %v2140 = vsel %vm1061, %v1842, 0
    %v2143 = vsel %vm1061, %v1847, 0
    %v2146 = vsel %vm1061, %v1852, 0
    %v2149 = vsel %vm1061, %v1857, 0
    %v2152 = vsel %vm1061, %v1862, 0
    %v2155 = vsel %vm1061, %v1867, 0
    %v2158 = vsel %vm1061, %v1872, 0
    %v2161 = vsel %vm1061, %v1877, 0
    %v2164 = vsel %vm1061, %v1882, 0
    %v2167 = vsel %vm1061, %v1887, 0
    %v2170 = vsel %vm1061, %v1892, 0
    %v2173 = vsel %vm1061, %v1897, 0
    %v2176 = vsel %vm1061, %v1902, 0
    %v2179 = vsel %vm1061, %v1907, 0
    %2181 = vmatprep.subr.mxu0 0.0
    %2182 = vmatpush1.xpose.msra.mxu0 %v2134
    %2183 = vmatprep.subr.mxu0 0.0
    %2184 = vmatpush1.xpose.msra.mxu0 %v2137
    %2185 = vmatprep.subr.mxu0 0.0
    %2186 = vmatpush1.xpose.msra.mxu0 %v2140
    %2187 = vmatprep.subr.mxu0 0.0
    %2188 = vmatpush1.xpose.msra.mxu0 %v2143
    %2189 = vmatprep.subr.mxu0 0.0
    %2190 = vmatpush1.xpose.msra.mxu0 %v2146
    %2191 = vmatprep.subr.mxu0 0.0
    %2192 = vmatpush1.xpose.msra.mxu0 %v2149
    %2193 = vmatprep.subr.mxu0 0.0
    %2194 = vmatpush1.xpose.msra.mxu0 %v2152
    %2195 = vmatprep.subr.mxu0 0.0
    %2196 = vmatpush1.xpose.msra.mxu0 %v2155
    %2197 = vmatprep.subr.mxu0 0.0
    %2198 = vmatpush1.xpose.msra.mxu0 %v2158
    %2199 = vmatprep.subr.mxu0 0.0
    %2200 = vmatpush1.xpose.msra.mxu0 %v2161
    %2201 = vmatprep.subr.mxu0 0.0
    %2202 = vmatpush1.xpose.msra.mxu0 %v2164
    %2203 = vmatprep.subr.mxu0 0.0
    %2204 = vmatpush1.xpose.msra.mxu0 %v2167
    %2205 = vmatprep.subr.mxu0 0.0
    %2206 = vmatpush1.xpose.msra.mxu0 %v2170
    %2207 = vmatprep.subr.mxu0 0.0
    %2208 = vmatpush1.xpose.msra.mxu0 %v2173
    %2209 = vmatprep.subr.mxu0 0.0
    %2210 = vmatpush1.xpose.msra.mxu0 %v2176
    %2211 = vmatprep.subr.mxu0 0.0
    %2212 = vmatpush1.xpose.msra.mxu0 %v2179
    %2213 = vmatprep.subr.mxu0 0.0
    %2214 = vmatpush1.xpose.msra.mxu0 0.0
    %2215 = vmatprep.subr.mxu0 0.0
    %2216 = vmatpush1.xpose.msra.mxu0 0.0
    %2217 = vmatprep.subr.mxu0 0.0
    %2218 = vmatpush1.xpose.msra.mxu0 0.0
    %2219 = vmatprep.subr.mxu0 0.0
    %2220 = vmatpush1.xpose.msra.mxu0 0.0
    %2221 = vmatprep.subr.mxu0 0.0
    %2222 = vmatpush1.xpose.msra.mxu0 0.0
    %2223 = vmatprep.subr.mxu0 0.0
    %2224 = vmatpush1.xpose.msra.mxu0 0.0
    %2225 = vmatprep.subr.mxu0 0.0
    %2226 = vmatpush1.xpose.msra.mxu0 0.0
    %2227 = vmatprep.subr.mxu0 0.0
    %2228 = vmatpush1.xpose.msra.mxu0 0.0
    %2229 = vmatprep.subr.mxu0 0.0
    %2230 = vmatpush1.xpose.msra.mxu0 0.0
    %2231 = vmatprep.subr.mxu0 0.0
    %2232 = vmatpush1.xpose.msra.mxu0 0.0
    %2233 = vmatprep.subr.mxu0 0.0
    %2234 = vmatpush1.xpose.msra.mxu0 0.0
    %2235 = vmatprep.subr.mxu0 0.0
    %2236 = vmatpush1.xpose.msra.mxu0 0.0
    %2237 = vmatprep.subr.mxu0 0.0
    %2238 = vmatpush1.xpose.msra.mxu0 0.0
    %2239 = vmatprep.subr.mxu0 0.0
    %2240 = vmatpush1.xpose.msra.mxu0 0.0
    %2241 = vmatprep.subr.mxu0 0.0
    %2242 = vmatpush1.xpose.msra.mxu0 0.0
    %2243 = vmatprep.subr.mxu0 0.0
    %2244 = vmatpush1.xpose.msra.mxu0 0.0
    %2245 = vmatprep.mubr.f32.mxu0 0.0
    %2246 = vmatmul.mubr.f32.gmra.mrb[0].mxu0 %v2086
    %v2247 = vpop.f32.mrb[0].mxu0
    %v2248 = vadd.f32 %v2069, %v2247
    %v2249 = vpop.f32.mrb[0].mxu0
    %2250 = vmatprep.mubr.f32.mxu0 0.0
    %2251 = vmatmul.mubr.f32.gmra.mrb[0].mxu0 %v2089
    %v2252 = vpop.f32.mrb[0].mxu0
    %v2253 = vadd.f32 %v2070, %v2252
    %v2254 = vpop.f32.mrb[0].mxu0
    %2255 = vmatprep.mubr.f32.mxu0 0.0
    %2256 = vmatmul.mubr.f32.gmra.mrb[0].mxu0 %v2092
    %v2257 = vpop.f32.mrb[0].mxu0
    %v2258 = vadd.f32 %v2071, %v2257
    %v2259 = vpop.f32.mrb[0].mxu0
    %2260 = vmatprep.mubr.f32.mxu0 0.0
    %2261 = vmatmul.mubr.f32.gmra.mrb[0].mxu0 %v2095
    %v2262 = vpop.f32.mrb[0].mxu0
    %v2263 = vadd.f32 %v2072, %v2262
    %v2264 = vpop.f32.mrb[0].mxu0
    %2265 = vmatprep.mubr.f32.mxu0 0.0
    %2266 = vmatmul.mubr.f32.gmra.mrb[0].mxu0 %v2098
    %v2267 = vpop.f32.mrb[0].mxu0
    %v2268 = vadd.f32 %v2073, %v2267
    %v2269 = vpop.f32.mrb[0].mxu0
    %2270 = vmatprep.mubr.f32.mxu0 0.0
    %2271 = vmatmul.mubr.f32.gmra.mrb[0].mxu0 %v2101
    %v2272 = vpop.f32.mrb[0].mxu0
    %v2273 = vadd.f32 %v2074, %v2272
    %v2274 = vpop.f32.mrb[0].mxu0
    %2275 = vmatprep.mubr.f32.mxu0 0.0
    %2276 = vmatmul.mubr.f32.gmra.mrb[0].mxu0 %v2104
    %v2277 = vpop.f32.mrb[0].mxu0
    %v2278 = vadd.f32 %v2075, %v2277
    %v2279 = vpop.f32.mrb[0].mxu0
    %2280 = vmatprep.mubr.f32.mxu0 0.0
    %2281 = vmatmul.mubr.f32.gmra.mrb[0].mxu0 %v2107
    %v2282 = vpop.f32.mrb[0].mxu0
    %v2283 = vadd.f32 %v2076, %v2282
    %v2284 = vpop.f32.mrb[0].mxu0
    %2285 = vmatprep.mubr.f32.mxu0 0.0
    %2286 = vmatmul.mubr.f32.gmra.mrb[0].mxu0 %v2110
    %v2287 = vpop.f32.mrb[0].mxu0
    %v2288 = vadd.f32 %v2077, %v2287
    %v2289 = vpop.f32.mrb[0].mxu0
    %2290 = vmatprep.mubr.f32.mxu0 0.0
    %2291 = vmatmul.mubr.f32.gmra.mrb[0].mxu0 %v2113
    %v2292 = vpop.f32.mrb[0].mxu0
    %v2293 = vadd.f32 %v2078, %v2292
    %v2294 = vpop.f32.mrb[0].mxu0
    %2295 = vmatprep.mubr.f32.mxu0 0.0
    %2296 = vmatmul.mubr.f32.gmra.mrb[0].mxu0 %v2116
    %v2297 = vpop.f32.mrb[0].mxu0
    %v2298 = vadd.f32 %v2079, %v2297
    %v2299 = vpop.f32.mrb[0].mxu0
    %2300 = vmatprep.mubr.f32.mxu0 0.0
    %2301 = vmatmul.mubr.f32.gmra.mrb[0].mxu0 %v2119
    %v2302 = vpop.f32.mrb[0].mxu0
    %v2303 = vadd.f32 %v2080, %v2302
    %v2304 = vpop.f32.mrb[0].mxu0
    %2305 = vmatprep.mubr.f32.mxu0 0.0
    %2306 = vmatmul.mubr.f32.gmra.mrb[0].mxu0 %v2122
    %v2307 = vpop.f32.mrb[0].mxu0
    %v2308 = vadd.f32 %v2081, %v2307
    %v2309 = vpop.f32.mrb[0].mxu0
    %2310 = vmatprep.mubr.f32.mxu0 0.0
    %2311 = vmatmul.mubr.f32.gmra.mrb[0].mxu0 %v2125
    %v2312 = vpop.f32.mrb[0].mxu0
    %v2313 = vadd.f32 %v2082, %v2312
    %v2314 = vpop.f32.mrb[0].mxu0
    %2315 = vmatprep.mubr.f32.mxu0 0.0
    %2316 = vmatmul.mubr.f32.gmra.mrb[0].mxu0 %v2128
    %v2317 = vpop.f32.mrb[0].mxu0
    %v2318 = vadd.f32 %v2083, %v2317
    %v2319 = vpop.f32.mrb[0].mxu0
    %2320 = vmatprep.mubr.f32.mxu0 0.0
    %2321 = vmatmul.mubr.f32.gmra.mrb[0].mxu0 %v2131
    %v2322 = vpop.f32.mrb[0].mxu0
    %v2323 = vadd.f32 %v2084, %v2322
    %v2324 = vpop.f32.mrb[0].mxu0
    %2325 = vdwg.mxu0
    %2326 = vmax.xlane.f32.xlu0 %v2248
    %v2327 = vpop.xlane.xlu0 %2326
    %2328 = vmax.xlane.f32.xlu0 %v2253
    %v2329 = vpop.xlane.xlu0 %2328
    %2330 = vmax.xlane.f32.xlu0 %v2258
    %v2331 = vpop.xlane.xlu0 %2330
    %2332 = vmax.xlane.f32.xlu0 %v2263
    %v2333 = vpop.xlane.xlu0 %2332
    %2334 = vmax.xlane.f32.xlu0 %v2268
    %v2335 = vpop.xlane.xlu0 %2334
    %2336 = vmax.xlane.f32.xlu0 %v2273
    %v2337 = vpop.xlane.xlu0 %2336
    %2338 = vmax.xlane.f32.xlu0 %v2278
    %v2339 = vpop.xlane.xlu0 %2338
    %2340 = vmax.xlane.f32.xlu0 %v2283
    %v2341 = vpop.xlane.xlu0 %2340
    %2342 = vmax.xlane.f32.xlu0 %v2288
    %v2343 = vpop.xlane.xlu0 %2342
    %2344 = vmax.xlane.f32.xlu0 %v2293
    %v2345 = vpop.xlane.xlu0 %2344
    %2346 = vmax.xlane.f32.xlu0 %v2298
    %v2347 = vpop.xlane.xlu0 %2346
    %2348 = vmax.xlane.f32.xlu0 %v2303
    %v2349 = vpop.xlane.xlu0 %2348
    %2350 = vmax.xlane.f32.xlu0 %v2308
    %v2351 = vpop.xlane.xlu0 %2350
    %2352 = vmax.xlane.f32.xlu0 %v2313
    %v2353 = vpop.xlane.xlu0 %2352
    %2354 = vmax.xlane.f32.xlu0 %v2318
    %v2355 = vpop.xlane.xlu0 %2354
    %2356 = vmax.xlane.f32.xlu0 %v2323
    %v2357 = vpop.xlane.xlu0 %2356
    %v2358 = vsub.f32 %v2248, %v2327
    %v2359 = vsub.f32 %v2253, %v2329
    %v2360 = vsub.f32 %v2258, %v2331
    %v2361 = vsub.f32 %v2263, %v2333
    %v2362 = vsub.f32 %v2268, %v2335
    %v2363 = vsub.f32 %v2273, %v2337
    %v2364 = vsub.f32 %v2278, %v2339
    %v2365 = vsub.f32 %v2283, %v2341
    %v2366 = vsub.f32 %v2288, %v2343
    %v2367 = vsub.f32 %v2293, %v2345
    %v2368 = vsub.f32 %v2298, %v2347
    %v2369 = vsub.f32 %v2303, %v2349
    %v2370 = vsub.f32 %v2308, %v2351
    %v2371 = vsub.f32 %v2313, %v2353
    %v2372 = vsub.f32 %v2318, %v2355
    %v2373 = vsub.f32 %v2323, %v2357
    %v2374 = vmul.f32 %v2358, 1.442695
    %v2375 = vpow.pop %v2374
    %v2376 = vmul.f32 %v2359, 1.442695
    %v2377 = vpow.pop %v2376
    %v2378 = vmul.f32 %v2360, 1.442695
    %v2379 = vpow.pop %v2378
    %v2380 = vmul.f32 %v2361, 1.442695
    %v2381 = vpow.pop %v2380
    %v2382 = vmul.f32 %v2362, 1.442695
    %v2383 = vpow.pop %v2382
    %v2384 = vmul.f32 %v2363, 1.442695
    %v2385 = vpow.pop %v2384
    %v2386 = vmul.f32 %v2364, 1.442695
    %v2387 = vpow.pop %v2386
    %v2388 = vmul.f32 %v2365, 1.442695
    %v2389 = vpow.pop %v2388
    %v2390 = vmul.f32 %v2366, 1.442695
    %v2391 = vpow.pop %v2390
    %v2392 = vmul.f32 %v2367, 1.442695
    %v2393 = vpow.pop %v2392
    %v2394 = vmul.f32 %v2368, 1.442695
    %v2395 = vpow.pop %v2394
    %v2396 = vmul.f32 %v2369, 1.442695
    %v2397 = vpow.pop %v2396
    %v2398 = vmul.f32 %v2370, 1.442695
    %v2399 = vpow.pop %v2398
    %v2400 = vmul.f32 %v2371, 1.442695
    %v2401 = vpow.pop %v2400
    %v2402 = vmul.f32 %v2372, 1.442695
    %v2403 = vpow.pop %v2402
    %v2404 = vmul.f32 %v2373, 1.442695
    %v2405 = vpow.pop %v2404
    %2406 = vadd.xlane.f32.xlu0 %v2375
    %v2407 = vpop.xlane.xlu0 %2406
    %2408 = vadd.xlane.f32.xlu0 %v2377
    %v2409 = vpop.xlane.xlu0 %2408
    %2410 = vadd.xlane.f32.xlu0 %v2379
    %v2411 = vpop.xlane.xlu0 %2410
    %2412 = vadd.xlane.f32.xlu0 %v2381
    %v2413 = vpop.xlane.xlu0 %2412
    %2414 = vadd.xlane.f32.xlu0 %v2383
    %v2415 = vpop.xlane.xlu0 %2414
    %2416 = vadd.xlane.f32.xlu0 %v2385
    %v2417 = vpop.xlane.xlu0 %2416
    %2418 = vadd.xlane.f32.xlu0 %v2387
    %v2419 = vpop.xlane.xlu0 %2418
    %2420 = vadd.xlane.f32.xlu0 %v2389
    %v2421 = vpop.xlane.xlu0 %2420
    %2422 = vadd.xlane.f32.xlu0 %v2391
    %v2423 = vpop.xlane.xlu0 %2422
    %2424 = vadd.xlane.f32.xlu0 %v2393
    %v2425 = vpop.xlane.xlu0 %2424
    %2426 = vadd.xlane.f32.xlu0 %v2395
    %v2427 = vpop.xlane.xlu0 %2426
    %2428 = vadd.xlane.f32.xlu0 %v2397
    %v2429 = vpop.xlane.xlu0 %2428
    %2430 = vadd.xlane.f32.xlu0 %v2399
    %v2431 = vpop.xlane.xlu0 %2430
    %2432 = vadd.xlane.f32.xlu0 %v2401
    %v2433 = vpop.xlane.xlu0 %2432
    %2434 = vadd.xlane.f32.xlu0 %v2403
    %v2435 = vpop.xlane.xlu0 %2434
    %2436 = vadd.xlane.f32.xlu0 %v2405
    %v2437 = vpop.xlane.xlu0 %2436
    %v2438 = vrcp.pop %v2407
    %v2439 = vrcp.pop %v2409
    %v2440 = vrcp.pop %v2411
    %v2441 = vrcp.pop %v2413
    %v2442 = vrcp.pop %v2415
    %v2443 = vrcp.pop %v2417
    %v2444 = vrcp.pop %v2419
    %v2445 = vrcp.pop %v2421
    %v2446 = vrcp.pop %v2423
    %v2447 = vrcp.pop %v2425
    %v2448 = vrcp.pop %v2427
    %v2449 = vrcp.pop %v2429
    %v2450 = vrcp.pop %v2431
    %v2451 = vrcp.pop %v2433
    %v2452 = vrcp.pop %v2435
    %v2453 = vrcp.pop %v2437
    %v2454 = vmul.f32 %v2375, %v2438
    %v2455 = vmul.f32 %v2377, %v2439
    %v2456 = vmul.f32 %v2379, %v2440
    %v2457 = vmul.f32 %v2381, %v2441
    %v2458 = vmul.f32 %v2383, %v2442
    %v2459 = vmul.f32 %v2385, %v2443
    %v2460 = vmul.f32 %v2387, %v2444
    %v2461 = vmul.f32 %v2389, %v2445
    %v2462 = vmul.f32 %v2391, %v2446
    %v2463 = vmul.f32 %v2393, %v2447
    %v2464 = vmul.f32 %v2395, %v2448
    %v2465 = vmul.f32 %v2397, %v2449
    %v2466 = vmul.f32 %v2399, %v2450
    %v2467 = vmul.f32 %v2401, %v2451
    %v2468 = vmul.f32 %v2403, %v2452
    %v2469 = vmul.f32 %v2405, %v2453
    %2470 = vmatprep.subr.mxu0 0.0
    %2471 = vmatpush1.msra.mxu0 %v1990
    %2472 = vmatprep.subr.mxu0 0.0
    %2473 = vmatpush1.msra.mxu0 %v1995
    %2474 = vmatprep.subr.mxu0 0.0
    %2475 = vmatpush1.msra.mxu0 %v2000
    %2476 = vmatprep.subr.mxu0 0.0
    %2477 = vmatpush1.msra.mxu0 %v2005
    %2478 = vmatprep.subr.mxu0 0.0
    %2479 = vmatpush1.msra.mxu0 %v2010
    %2480 = vmatprep.subr.mxu0 0.0
    %2481 = vmatpush1.msra.mxu0 %v2015
    %2482 = vmatprep.subr.mxu0 0.0
    %2483 = vmatpush1.msra.mxu0 %v2020
    %2484 = vmatprep.subr.mxu0 0.0
    %2485 = vmatpush1.msra.mxu0 %v2025
    %2486 = vmatprep.subr.mxu0 0.0
    %2487 = vmatpush1.msra.mxu0 %v2030
    %2488 = vmatprep.subr.mxu0 0.0
    %2489 = vmatpush1.msra.mxu0 %v2035
    %2490 = vmatprep.subr.mxu0 0.0
    %2491 = vmatpush1.msra.mxu0 %v2040
    %2492 = vmatprep.subr.mxu0 0.0
    %2493 = vmatpush1.msra.mxu0 %v2045
    %2494 = vmatprep.subr.mxu0 0.0
    %2495 = vmatpush1.msra.mxu0 %v2050
    %2496 = vmatprep.subr.mxu0 0.0
    %2497 = vmatpush1.msra.mxu0 %v2055
    %2498 = vmatprep.subr.mxu0 0.0
    %2499 = vmatpush1.msra.mxu0 %v2060
    %2500 = vmatprep.subr.mxu0 0.0
    %2501 = vmatpush1.msra.mxu0 %v2065
    %2502 = vmatprep.subr.mxu0 0.0
    %2503 = vmatpush1.msra.mxu0 0.0
    %2504 = vmatprep.subr.mxu0 0.0
    %2505 = vmatpush1.msra.mxu0 0.0
    %2506 = vmatprep.subr.mxu0 0.0
    %2507 = vmatpush1.msra.mxu0 0.0
    %2508 = vmatprep.subr.mxu0 0.0
    %2509 = vmatpush1.msra.mxu0 0.0
    %2510 = vmatprep.subr.mxu0 0.0
    %2511 = vmatpush1.msra.mxu0 0.0
    %2512 = vmatprep.subr.mxu0 0.0
    %2513 = vmatpush1.msra.mxu0 0.0
    %2514 = vmatprep.subr.mxu0 0.0
    %2515 = vmatpush1.msra.mxu0 0.0
    %2516 = vmatprep.subr.mxu0 0.0
    %2517 = vmatpush1.msra.mxu0 0.0
    %2518 = vmatprep.subr.mxu0 0.0
    %2519 = vmatpush1.msra.mxu0 0.0
    %2520 = vmatprep.subr.mxu0 0.0
    %2521 = vmatpush1.msra.mxu0 0.0
    %2522 = vmatprep.subr.mxu0 0.0
    %2523 = vmatpush1.msra.mxu0 0.0
    %2524 = vmatprep.subr.mxu0 0.0
    %2525 = vmatpush1.msra.mxu0 0.0
    %2526 = vmatprep.subr.mxu0 0.0
    %2527 = vmatpush1.msra.mxu0 0.0
    %2528 = vmatprep.subr.mxu0 0.0
    %2529 = vmatpush1.msra.mxu0 0.0
    %2530 = vmatprep.subr.mxu0 0.0
    %2531 = vmatpush1.msra.mxu0 0.0
    %2532 = vmatprep.subr.mxu0 0.0
    %2533 = vmatpush1.msra.mxu0 0.0
    %2534 = vmatprep.mubr.f32.mxu0 0.0
    %2535 = vmatmul.mubr.f32.gmra.mrb[0].mxu0 %v2454
    %v2536 = vpop.f32.mrb[0].mxu0
    %v2537 = vadd.f32 0.0, %v2536
    %v2538 = vpop.f32.mrb[0].mxu0
    %2539 = vmatprep.mubr.f32.mxu0 0.0
    %2540 = vmatmul.mubr.f32.gmra.mrb[0].mxu0 %v2455
    %v2541 = vpop.f32.mrb[0].mxu0
    %v2542 = vadd.f32 0.0, %v2541
    %v2543 = vpop.f32.mrb[0].mxu0
    %2544 = vmatprep.mubr.f32.mxu0 0.0
    %2545 = vmatmul.mubr.f32.gmra.mrb[0].mxu0 %v2456
    %v2546 = vpop.f32.mrb[0].mxu0
    %v2547 = vadd.f32 0.0, %v2546
    %v2548 = vpop.f32.mrb[0].mxu0
    %2549 = vmatprep.mubr.f32.mxu0 0.0
    %2550 = vmatmul.mubr.f32.gmra.mrb[0].mxu0 %v2457
    %v2551 = vpop.f32.mrb[0].mxu0
    %v2552 = vadd.f32 0.0, %v2551
    %v2553 = vpop.f32.mrb[0].mxu0
    %2554 = vmatprep.mubr.f32.mxu0 0.0
    %2555 = vmatmul.mubr.f32.gmra.mrb[0].mxu0 %v2458
    %v2556 = vpop.f32.mrb[0].mxu0
    %v2557 = vadd.f32 0.0, %v2556
    %v2558 = vpop.f32.mrb[0].mxu0
    %2559 = vmatprep.mubr.f32.mxu0 0.0
    %2560 = vmatmul.mubr.f32.gmra.mrb[0].mxu0 %v2459
    %v2561 = vpop.f32.mrb[0].mxu0
    %v2562 = vadd.f32 0.0, %v2561
    %v2563 = vpop.f32.mrb[0].mxu0
    %2564 = vmatprep.mubr.f32.mxu0 0.0
    %2565 = vmatmul.mubr.f32.gmra.mrb[0].mxu0 %v2460
    %v2566 = vpop.f32.mrb[0].mxu0
    %v2567 = vadd.f32 0.0, %v2566
    %v2568 = vpop.f32.mrb[0].mxu0
    %2569 = vmatprep.mubr.f32.mxu0 0.0
    %2570 = vmatmul.mubr.f32.gmra.mrb[0].mxu0 %v2461
    %v2571 = vpop.f32.mrb[0].mxu0
    %v2572 = vadd.f32 0.0, %v2571
    %v2573 = vpop.f32.mrb[0].mxu0
    %2574 = vmatprep.mubr.f32.mxu0 0.0
    %2575 = vmatmul.mubr.f32.gmra.mrb[0].mxu0 %v2462
    %v2576 = vpop.f32.mrb[0].mxu0
    %v2577 = vadd.f32 0.0, %v2576
    %v2578 = vpop.f32.mrb[0].mxu0
    %2579 = vmatprep.mubr.f32.mxu0 0.0
    %2580 = vmatmul.mubr.f32.gmra.mrb[0].mxu0 %v2463
    %v2581 = vpop.f32.mrb[0].mxu0
    %v2582 = vadd.f32 0.0, %v2581
    %v2583 = vpop.f32.mrb[0].mxu0
    %2584 = vmatprep.mubr.f32.mxu0 0.0
    %2585 = vmatmul.mubr.f32.gmra.mrb[0].mxu0 %v2464
    %v2586 = vpop.f32.mrb[0].mxu0
    %v2587 = vadd.f32 0.0, %v2586
    %v2588 = vpop.f32.mrb[0].mxu0
    %2589 = vmatprep.mubr.f32.mxu0 0.0
    %2590 = vmatmul.mubr.f32.gmra.mrb[0].mxu0 %v2465
    %v2591 = vpop.f32.mrb[0].mxu0
    %v2592 = vadd.f32 0.0, %v2591
    %v2593 = vpop.f32.mrb[0].mxu0
    %2594 = vmatprep.mubr.f32.mxu0 0.0
    %2595 = vmatmul.mubr.f32.gmra.mrb[0].mxu0 %v2466
    %v2596 = vpop.f32.mrb[0].mxu0
    %v2597 = vadd.f32 0.0, %v2596
    %v2598 = vpop.f32.mrb[0].mxu0
    %2599 = vmatprep.mubr.f32.mxu0 0.0
    %2600 = vmatmul.mubr.f32.gmra.mrb[0].mxu0 %v2467
    %v2601 = vpop.f32.mrb[0].mxu0
    %v2602 = vadd.f32 0.0, %v2601
    %v2603 = vpop.f32.mrb[0].mxu0
    %2604 = vmatprep.mubr.f32.mxu0 0.0
    %2605 = vmatmul.mubr.f32.gmra.mrb[0].mxu0 %v2468
    %v2606 = vpop.f32.mrb[0].mxu0
    %v2607 = vadd.f32 0.0, %v2606
    %v2608 = vpop.f32.mrb[0].mxu0
    %2609 = vmatprep.mubr.f32.mxu0 0.0
    %2610 = vmatmul.mubr.f32.gmra.mrb[0].mxu0 %v2469
    %v2611 = vpop.f32.mrb[0].mxu0
    %v2612 = vadd.f32 0.0, %v2611
    %v2613 = vpop.f32.mrb[0].mxu0
    %2614 = vdwg.mxu0
    %s2615 = scalar_lea.vmem [#allocation7], 16
    %v2616 = vld [vmem:[%s2615] sm:$0xff]
    %v2617 = vld [vmem:[%s2615 + $0x8] sm:$0xff]
    %v2619 = vsel %vm1061, %v2537, 0
    %v2622 = vsel %vm1061, %v2542, 0
    %v2625 = vsel %vm1061, %v2547, 0
    %v2628 = vsel %vm1061, %v2552, 0
    %v2631 = vsel %vm1061, %v2557, 0
    %v2634 = vsel %vm1061, %v2562, 0
    %v2637 = vsel %vm1061, %v2567, 0
    %v2640 = vsel %vm1061, %v2572, 0
    %v2643 = vsel %vm1061, %v2577, 0
    %v2646 = vsel %vm1061, %v2582, 0
    %v2649 = vsel %vm1061, %v2587, 0
    %v2652 = vsel %vm1061, %v2592, 0
    %v2655 = vsel %vm1061, %v2597, 0
    %v2658 = vsel %vm1061, %v2602, 0
    %v2661 = vsel %vm1061, %v2607, 0
    %v2664 = vsel %vm1061, %v2612, 0
    %2666 = vmatprep.subr.mxu0 0.0
    %2667 = vmatpush1.msra.mxu0 %v2616
    %2668 = vmatprep.subr.mxu0 0.0
    %2669 = vmatpush1.msra.mxu0 %v2617
    %2670 = vmatprep.subr.mxu0 0.0
    %2671 = vmatpush1.msra.mxu0 0.0
    %2672 = vmatprep.subr.mxu0 0.0
    %2673 = vmatpush1.msra.mxu0 0.0
    %2674 = vmatprep.subr.mxu0 0.0
    %2675 = vmatpush1.msra.mxu0 0.0
    %2676 = vmatprep.subr.mxu0 0.0
    %2677 = vmatpush1.msra.mxu0 0.0
    %2678 = vmatprep.subr.mxu0 0.0
    %2679 = vmatpush1.msra.mxu0 0.0
    %2680 = vmatprep.subr.mxu0 0.0
    %2681 = vmatpush1.msra.mxu0 0.0
    %2682 = vmatprep.subr.mxu0 0.0
    %2683 = vmatpush1.msra.mxu0 0.0
    %2684 = vmatprep.subr.mxu0 0.0
    %2685 = vmatpush1.msra.mxu0 0.0
    %2686 = vmatprep.subr.mxu0 0.0
    %2687 = vmatpush1.msra.mxu0 0.0
    %2688 = vmatprep.subr.mxu0 0.0
    %2689 = vmatpush1.msra.mxu0 0.0
    %2690 = vmatprep.subr.mxu0 0.0
    %2691 = vmatpush1.msra.mxu0 0.0
    %2692 = vmatprep.subr.mxu0 0.0
    %2693 = vmatpush1.msra.mxu0 0.0
    %2694 = vmatprep.subr.mxu0 0.0
    %2695 = vmatpush1.msra.mxu0 0.0
    %2696 = vmatprep.subr.mxu0 0.0
    %2697 = vmatpush1.msra.mxu0 0.0
    %2698 = vmatprep.subr.mxu0 0.0
    %2699 = vmatpush1.msra.mxu0 0.0
    %2700 = vmatprep.subr.mxu0 0.0
    %2701 = vmatpush1.msra.mxu0 0.0
    %2702 = vmatprep.subr.mxu0 0.0
    %2703 = vmatpush1.msra.mxu0 0.0
    %2704 = vmatprep.subr.mxu0 0.0
    %2705 = vmatpush1.msra.mxu0 0.0
    %2706 = vmatprep.subr.mxu0 0.0
    %2707 = vmatpush1.msra.mxu0 0.0
    %2708 = vmatprep.subr.mxu0 0.0
    %2709 = vmatpush1.msra.mxu0 0.0
    %2710 = vmatprep.subr.mxu0 0.0
    %2711 = vmatpush1.msra.mxu0 0.0
    %2712 = vmatprep.subr.mxu0 0.0
    %2713 = vmatpush1.msra.mxu0 0.0
    %2714 = vmatprep.subr.mxu0 0.0
    %2715 = vmatpush1.msra.mxu0 0.0
    %2716 = vmatprep.subr.mxu0 0.0
    %2717 = vmatpush1.msra.mxu0 0.0
    %2718 = vmatprep.subr.mxu0 0.0
    %2719 = vmatpush1.msra.mxu0 0.0
    %2720 = vmatprep.subr.mxu0 0.0
    %2721 = vmatpush1.msra.mxu0 0.0
    %2722 = vmatprep.subr.mxu0 0.0
    %2723 = vmatpush1.msra.mxu0 0.0
    %2724 = vmatprep.subr.mxu0 0.0
    %2725 = vmatpush1.msra.mxu0 0.0
    %2726 = vmatprep.subr.mxu0 0.0
    %2727 = vmatpush1.msra.mxu0 0.0
    %2728 = vmatprep.subr.mxu0 0.0
    %2729 = vmatpush1.msra.mxu0 0.0
    %2730 = vmatprep.mubr.f32.mxu0 0.0
    %2731 = vmatmul.mubr.f32.gmra.mrb[0].mxu0 %v2619
    %v2732 = vpop.f32.mrb[0].mxu0
    %v2733 = vadd.f32 0.0, %v2732
    %v2734 = vpop.f32.mrb[0].mxu0
    %2735 = vmatprep.mubr.f32.mxu0 0.0
    %2736 = vmatmul.mubr.f32.gmra.mrb[0].mxu0 %v2622
    %v2737 = vpop.f32.mrb[0].mxu0
    %v2738 = vadd.f32 0.0, %v2737
    %v2739 = vpop.f32.mrb[0].mxu0
    %2740 = vmatprep.mubr.f32.mxu0 0.0
    %2741 = vmatmul.mubr.f32.gmra.mrb[0].mxu0 %v2625
    %v2742 = vpop.f32.mrb[0].mxu0
    %v2743 = vadd.f32 0.0, %v2742
    %v2744 = vpop.f32.mrb[0].mxu0
    %2745 = vmatprep.mubr.f32.mxu0 0.0
    %2746 = vmatmul.mubr.f32.gmra.mrb[0].mxu0 %v2628
    %v2747 = vpop.f32.mrb[0].mxu0
    %v2748 = vadd.f32 0.0, %v2747
    %v2749 = vpop.f32.mrb[0].mxu0
    %2750 = vmatprep.mubr.f32.mxu0 0.0
    %2751 = vmatmul.mubr.f32.gmra.mrb[0].mxu0 %v2631
    %v2752 = vpop.f32.mrb[0].mxu0
    %v2753 = vadd.f32 0.0, %v2752
    %v2754 = vpop.f32.mrb[0].mxu0
    %2755 = vmatprep.mubr.f32.mxu0 0.0
    %2756 = vmatmul.mubr.f32.gmra.mrb[0].mxu0 %v2634
    %v2757 = vpop.f32.mrb[0].mxu0
    %v2758 = vadd.f32 0.0, %v2757
    %v2759 = vpop.f32.mrb[0].mxu0
    %2760 = vmatprep.mubr.f32.mxu0 0.0
    %2761 = vmatmul.mubr.f32.gmra.mrb[0].mxu0 %v2637
    %v2762 = vpop.f32.mrb[0].mxu0
    %v2763 = vadd.f32 0.0, %v2762
    %v2764 = vpop.f32.mrb[0].mxu0
    %2765 = vmatprep.mubr.f32.mxu0 0.0
    %2766 = vmatmul.mubr.f32.gmra.mrb[0].mxu0 %v2640
    %v2767 = vpop.f32.mrb[0].mxu0
    %v2768 = vadd.f32 0.0, %v2767
    %v2769 = vpop.f32.mrb[0].mxu0
    %2770 = vmatprep.mubr.f32.mxu0 0.0
    %2771 = vmatmul.mubr.f32.gmra.mrb[0].mxu0 %v2643
    %v2772 = vpop.f32.mrb[0].mxu0
    %v2773 = vadd.f32 0.0, %v2772
    %v2774 = vpop.f32.mrb[0].mxu0
    %2775 = vmatprep.mubr.f32.mxu0 0.0
    %2776 = vmatmul.mubr.f32.gmra.mrb[0].mxu0 %v2646
    %v2777 = vpop.f32.mrb[0].mxu0
    %v2778 = vadd.f32 0.0, %v2777
    %v2779 = vpop.f32.mrb[0].mxu0
    %2780 = vmatprep.mubr.f32.mxu0 0.0
    %2781 = vmatmul.mubr.f32.gmra.mrb[0].mxu0 %v2649
    %v2782 = vpop.f32.mrb[0].mxu0
    %v2783 = vadd.f32 0.0, %v2782
    %v2784 = vpop.f32.mrb[0].mxu0
    %2785 = vmatprep.mubr.f32.mxu0 0.0
    %2786 = vmatmul.mubr.f32.gmra.mrb[0].mxu0 %v2652
    %v2787 = vpop.f32.mrb[0].mxu0
    %v2788 = vadd.f32 0.0, %v2787
    %v2789 = vpop.f32.mrb[0].mxu0
    %2790 = vmatprep.mubr.f32.mxu0 0.0
    %2791 = vmatmul.mubr.f32.gmra.mrb[0].mxu0 %v2655
    %v2792 = vpop.f32.mrb[0].mxu0
    %v2793 = vadd.f32 0.0, %v2792
    %v2794 = vpop.f32.mrb[0].mxu0
    %2795 = vmatprep.mubr.f32.mxu0 0.0
    %2796 = vmatmul.mubr.f32.gmra.mrb[0].mxu0 %v2658
    %v2797 = vpop.f32.mrb[0].mxu0
    %v2798 = vadd.f32 0.0, %v2797
    %v2799 = vpop.f32.mrb[0].mxu0
    %2800 = vmatprep.mubr.f32.mxu0 0.0
    %2801 = vmatmul.mubr.f32.gmra.mrb[0].mxu0 %v2661
    %v2802 = vpop.f32.mrb[0].mxu0
    %v2803 = vadd.f32 0.0, %v2802
    %v2804 = vpop.f32.mrb[0].mxu0
    %2805 = vmatprep.mubr.f32.mxu0 0.0
    %2806 = vmatmul.mubr.f32.gmra.mrb[0].mxu0 %v2664
    %v2807 = vpop.f32.mrb[0].mxu0
    %v2808 = vadd.f32 0.0, %v2807
    %v2809 = vpop.f32.mrb[0].mxu0
    %2810 = vdwg.mxu0
    %v2812 = vsel %vm1061, %v1514, 0
    %v2815 = vsel %vm1061, %v1519, 0
    %v2818 = vsel %vm1061, %v1524, 0
    %v2821 = vsel %vm1061, %v1529, 0
    %v2824 = vsel %vm1061, %v1534, 0
    %v2827 = vsel %vm1061, %v1539, 0
    %v2830 = vsel %vm1061, %v1544, 0
    %v2833 = vsel %vm1061, %v1549, 0
    %v2836 = vsel %vm1061, %v1554, 0
    %v2839 = vsel %vm1061, %v1559, 0
    %v2842 = vsel %vm1061, %v1564, 0
    %v2845 = vsel %vm1061, %v1569, 0
    %v2848 = vsel %vm1061, %v1574, 0
    %v2851 = vsel %vm1061, %v1579, 0
    %v2854 = vsel %vm1061, %v1584, 0
    %v2857 = vsel %vm1061, %v1589, 0
    %2859 = vmatprep.subr.mxu0 0.0
    %2860 = vmatpush1.msra.mxu0 %v1592
    %2861 = vmatprep.subr.mxu0 0.0
    %2862 = vmatpush1.msra.mxu0 %v1593
    %2863 = vmatprep.subr.mxu0 0.0
    %2864 = vmatpush1.msra.mxu0 0.0
    %2865 = vmatprep.subr.mxu0 0.0
    %2866 = vmatpush1.msra.mxu0 0.0
    %2867 = vmatprep.subr.mxu0 0.0
    %2868 = vmatpush1.msra.mxu0 0.0
    %2869 = vmatprep.subr.mxu0 0.0
    %2870 = vmatpush1.msra.mxu0 0.0
    %2871 = vmatprep.subr.mxu0 0.0
    %2872 = vmatpush1.msra.mxu0 0.0
    %2873 = vmatprep.subr.mxu0 0.0
    %2874 = vmatpush1.msra.mxu0 0.0
    %2875 = vmatprep.subr.mxu0 0.0
    %2876 = vmatpush1.msra.mxu0 0.0
    %2877 = vmatprep.subr.mxu0 0.0
    %2878 = vmatpush1.msra.mxu0 0.0
    %2879 = vmatprep.subr.mxu0 0.0
    %2880 = vmatpush1.msra.mxu0 0.0
    %2881 = vmatprep.subr.mxu0 0.0
    %2882 = vmatpush1.msra.mxu0 0.0
    %2883 = vmatprep.subr.mxu0 0.0
    %2884 = vmatpush1.msra.mxu0 0.0
    %2885 = vmatprep.subr.mxu0 0.0
    %2886 = vmatpush1.msra.mxu0 0.0
    %2887 = vmatprep.subr.mxu0 0.0
    %2888 = vmatpush1.msra.mxu0 0.0
    %2889 = vmatprep.subr.mxu0 0.0
    %2890 = vmatpush1.msra.mxu0 0.0
    %2891 = vmatprep.subr.mxu0 0.0
    %2892 = vmatpush1.msra.mxu0 0.0
    %2893 = vmatprep.subr.mxu0 0.0
    %2894 = vmatpush1.msra.mxu0 0.0
    %2895 = vmatprep.subr.mxu0 0.0
    %2896 = vmatpush1.msra.mxu0 0.0
    %2897 = vmatprep.subr.mxu0 0.0
    %2898 = vmatpush1.msra.mxu0 0.0
    %2899 = vmatprep.subr.mxu0 0.0
    %2900 = vmatpush1.msra.mxu0 0.0
    %2901 = vmatprep.subr.mxu0 0.0
    %2902 = vmatpush1.msra.mxu0 0.0
    %2903 = vmatprep.subr.mxu0 0.0
    %2904 = vmatpush1.msra.mxu0 0.0
    %2905 = vmatprep.subr.mxu0 0.0
    %2906 = vmatpush1.msra.mxu0 0.0
    %2907 = vmatprep.subr.mxu0 0.0
    %2908 = vmatpush1.msra.mxu0 0.0
    %2909 = vmatprep.subr.mxu0 0.0
    %2910 = vmatpush1.msra.mxu0 0.0
    %2911 = vmatprep.subr.mxu0 0.0
    %2912 = vmatpush1.msra.mxu0 0.0
    %2913 = vmatprep.subr.mxu0 0.0
    %2914 = vmatpush1.msra.mxu0 0.0
    %2915 = vmatprep.subr.mxu0 0.0
    %2916 = vmatpush1.msra.mxu0 0.0
    %2917 = vmatprep.subr.mxu0 0.0
    %2918 = vmatpush1.msra.mxu0 0.0
    %2919 = vmatprep.subr.mxu0 0.0
    %2920 = vmatpush1.msra.mxu0 0.0
    %2921 = vmatprep.subr.mxu0 0.0
    %2922 = vmatpush1.msra.mxu0 0.0
    %2923 = vmatprep.mubr.f32.mxu0 0.0
    %2924 = vmatmul.mubr.f32.gmra.mrb[0].mxu0 %v2812
    %v2925 = vpop.f32.mrb[0].mxu0
    %v2926 = vadd.f32 %v2733, %v2925
    %v2927 = vpop.f32.mrb[0].mxu0
    %2928 = vmatprep.mubr.f32.mxu0 0.0
    %2929 = vmatmul.mubr.f32.gmra.mrb[0].mxu0 %v2815
    %v2930 = vpop.f32.mrb[0].mxu0
    %v2931 = vadd.f32 %v2738, %v2930
    %v2932 = vpop.f32.mrb[0].mxu0
    %2933 = vmatprep.mubr.f32.mxu0 0.0
    %2934 = vmatmul.mubr.f32.gmra.mrb[0].mxu0 %v2818
    %v2935 = vpop.f32.mrb[0].mxu0
    %v2936 = vadd.f32 %v2743, %v2935
    %v2937 = vpop.f32.mrb[0].mxu0
    %2938 = vmatprep.mubr.f32.mxu0 0.0
    %2939 = vmatmul.mubr.f32.gmra.mrb[0].mxu0 %v2821
    %v2940 = vpop.f32.mrb[0].mxu0
    %v2941 = vadd.f32 %v2748, %v2940
    %v2942 = vpop.f32.mrb[0].mxu0
    %2943 = vmatprep.mubr.f32.mxu0 0.0
    %2944 = vmatmul.mubr.f32.gmra.mrb[0].mxu0 %v2824
    %v2945 = vpop.f32.mrb[0].mxu0
    %v2946 = vadd.f32 %v2753, %v2945
    %v2947 = vpop.f32.mrb[0].mxu0
    %2948 = vmatprep.mubr.f32.mxu0 0.0
    %2949 = vmatmul.mubr.f32.gmra.mrb[0].mxu0 %v2827
    %v2950 = vpop.f32.mrb[0].mxu0
    %v2951 = vadd.f32 %v2758, %v2950
    %v2952 = vpop.f32.mrb[0].mxu0
    %2953 = vmatprep.mubr.f32.mxu0 0.0
    %2954 = vmatmul.mubr.f32.gmra.mrb[0].mxu0 %v2830
    %v2955 = vpop.f32.mrb[0].mxu0
    %v2956 = vadd.f32 %v2763, %v2955
    %v2957 = vpop.f32.mrb[0].mxu0
    %2958 = vmatprep.mubr.f32.mxu0 0.0
    %2959 = vmatmul.mubr.f32.gmra.mrb[0].mxu0 %v2833
    %v2960 = vpop.f32.mrb[0].mxu0
    %v2961 = vadd.f32 %v2768, %v2960
    %v2962 = vpop.f32.mrb[0].mxu0
    %2963 = vmatprep.mubr.f32.mxu0 0.0
    %2964 = vmatmul.mubr.f32.gmra.mrb[0].mxu0 %v2836
    %v2965 = vpop.f32.mrb[0].mxu0
    %v2966 = vadd.f32 %v2773, %v2965
    %v2967 = vpop.f32.mrb[0].mxu0
    %2968 = vmatprep.mubr.f32.mxu0 0.0
    %2969 = vmatmul.mubr.f32.gmra.mrb[0].mxu0 %v2839
    %v2970 = vpop.f32.mrb[0].mxu0
    %v2971 = vadd.f32 %v2778, %v2970
    %v2972 = vpop.f32.mrb[0].mxu0
    %2973 = vmatprep.mubr.f32.mxu0 0.0
    %2974 = vmatmul.mubr.f32.gmra.mrb[0].mxu0 %v2842
    %v2975 = vpop.f32.mrb[0].mxu0
    %v2976 = vadd.f32 %v2783, %v2975
    %v2977 = vpop.f32.mrb[0].mxu0
    %2978 = vmatprep.mubr.f32.mxu0 0.0
    %2979 = vmatmul.mubr.f32.gmra.mrb[0].mxu0 %v2845
    %v2980 = vpop.f32.mrb[0].mxu0
    %v2981 = vadd.f32 %v2788, %v2980
    %v2982 = vpop.f32.mrb[0].mxu0
    %2983 = vmatprep.mubr.f32.mxu0 0.0
    %2984 = vmatmul.mubr.f32.gmra.mrb[0].mxu0 %v2848
    %v2985 = vpop.f32.mrb[0].mxu0
    %v2986 = vadd.f32 %v2793, %v2985
    %v2987 = vpop.f32.mrb[0].mxu0
    %2988 = vmatprep.mubr.f32.mxu0 0.0
    %2989 = vmatmul.mubr.f32.gmra.mrb[0].mxu0 %v2851
    %v2990 = vpop.f32.mrb[0].mxu0
    %v2991 = vadd.f32 %v2798, %v2990
    %v2992 = vpop.f32.mrb[0].mxu0
    %2993 = vmatprep.mubr.f32.mxu0 0.0
    %2994 = vmatmul.mubr.f32.gmra.mrb[0].mxu0 %v2854
    %v2995 = vpop.f32.mrb[0].mxu0
    %v2996 = vadd.f32 %v2803, %v2995
    %v2997 = vpop.f32.mrb[0].mxu0
    %2998 = vmatprep.mubr.f32.mxu0 0.0
    %2999 = vmatmul.mubr.f32.gmra.mrb[0].mxu0 %v2857
    %v3000 = vpop.f32.mrb[0].mxu0
    %v3001 = vadd.f32 %v2808, %v3000
    %v3002 = vpop.f32.mrb[0].mxu0
    %3003 = vdwg.mxu0
    %v3004 = vadd.f32 %v190, %v2926
    %v3005 = vadd.f32 %v195, %v2931
    %v3006 = vadd.f32 %v200, %v2936
    %v3007 = vadd.f32 %v205, %v2941
    %v3008 = vadd.f32 %v210, %v2946
    %v3009 = vadd.f32 %v215, %v2951
    %v3010 = vadd.f32 %v220, %v2956
    %v3011 = vadd.f32 %v225, %v2961
    %v3012 = vadd.f32 %v230, %v2966
    %v3013 = vadd.f32 %v235, %v2971
    %v3014 = vadd.f32 %v240, %v2976
    %v3015 = vadd.f32 %v245, %v2981
    %v3016 = vadd.f32 %v250, %v2986
    %v3017 = vadd.f32 %v255, %v2991
    %v3018 = vadd.f32 %v260, %v2996
    %v3019 = vadd.f32 %v265, %v3001
    %s3020 = scalar_lea.vmem %s9, 4
    %v3021 = vld [vmem:[%s3020] sm:$0x1]
    %v3023 = vlaneseq
    %v3024 = vshrl.u32 %v3023, 7
    %v3025 = vsub.s32 0, %v3024
    %v3026 = vrot.slane %v3021, %v3025
    %v3028 = vadd.f32 %v3004, %v3026
    %v3029 = vadd.f32 %v3005, %v3026
    %v3030 = vadd.f32 %v3006, %v3026
    %v3031 = vadd.f32 %v3007, %v3026
    %v3032 = vadd.f32 %v3008, %v3026
    %v3033 = vadd.f32 %v3009, %v3026
    %v3034 = vadd.f32 %v3010, %v3026
    %v3035 = vadd.f32 %v3011, %v3026
    %v3036 = vadd.f32 %v3012, %v3026
    %v3037 = vadd.f32 %v3013, %v3026
    %v3038 = vadd.f32 %v3014, %v3026
    %v3039 = vadd.f32 %v3015, %v3026
    %v3040 = vadd.f32 %v3016, %v3026
    %v3041 = vadd.f32 %v3017, %v3026
    %v3042 = vadd.f32 %v3018, %v3026
    %v3043 = vadd.f32 %v3019, %v3026
    %s3044 = scalar_lea.vmem %s9, 2
    %v3045 = vld [vmem:[%s3044] sm:$0x1]
    %s3046 = scalar_lea.vmem %s9, 3
    %v3047 = vld [vmem:[%s3046] sm:$0x1]
    %v3048 = vsel %vm271, %v3028, 0.0
    %3049 = vadd.xlane.f32.xlu0 %v3048
    %v3050 = vpop.xlane.xlu0 %3049
    %v3051 = vsel %vm271, %v3029, 0.0
    %3052 = vadd.xlane.f32.xlu0 %v3051
    %v3053 = vpop.xlane.xlu0 %3052
    %v3054 = vsel %vm271, %v3030, 0.0
    %3055 = vadd.xlane.f32.xlu0 %v3054
    %v3056 = vpop.xlane.xlu0 %3055
    %v3057 = vsel %vm271, %v3031, 0.0
    %3058 = vadd.xlane.f32.xlu0 %v3057
    %v3059 = vpop.xlane.xlu0 %3058
    %v3060 = vsel %vm271, %v3032, 0.0
    %3061 = vadd.xlane.f32.xlu0 %v3060
    %v3062 = vpop.xlane.xlu0 %3061
    %v3063 = vsel %vm271, %v3033, 0.0
    %3064 = vadd.xlane.f32.xlu0 %v3063
    %v3065 = vpop.xlane.xlu0 %3064
    %v3066 = vsel %vm271, %v3034, 0.0
    %3067 = vadd.xlane.f32.xlu0 %v3066
    %v3068 = vpop.xlane.xlu0 %3067
    %v3069 = vsel %vm271, %v3035, 0.0
    %3070 = vadd.xlane.f32.xlu0 %v3069
    %v3071 = vpop.xlane.xlu0 %3070
    %v3072 = vsel %vm271, %v3036, 0.0
    %3073 = vadd.xlane.f32.xlu0 %v3072
    %v3074 = vpop.xlane.xlu0 %3073
    %v3075 = vsel %vm271, %v3037, 0.0
    %3076 = vadd.xlane.f32.xlu0 %v3075
    %v3077 = vpop.xlane.xlu0 %3076
    %v3078 = vsel %vm271, %v3038, 0.0
    %3079 = vadd.xlane.f32.xlu0 %v3078
    %v3080 = vpop.xlane.xlu0 %3079
    %v3081 = vsel %vm271, %v3039, 0.0
    %3082 = vadd.xlane.f32.xlu0 %v3081
    %v3083 = vpop.xlane.xlu0 %3082
    %v3084 = vsel %vm271, %v3040, 0.0
    %3085 = vadd.xlane.f32.xlu0 %v3084
    %v3086 = vpop.xlane.xlu0 %3085
    %v3087 = vsel %vm271, %v3041, 0.0
    %3088 = vadd.xlane.f32.xlu0 %v3087
    %v3089 = vpop.xlane.xlu0 %3088
    %v3090 = vsel %vm271, %v3042, 0.0
    %3091 = vadd.xlane.f32.xlu0 %v3090
    %v3092 = vpop.xlane.xlu0 %3091
    %v3093 = vsel %vm271, %v3043, 0.0
    %3094 = vadd.xlane.f32.xlu0 %v3093
    %v3095 = vpop.xlane.xlu0 %3094
    %v3096 = vmul.f32 %v3050, %v320
    %v3097 = vmul.f32 %v3053, %v320
    %v3098 = vmul.f32 %v3056, %v320
    %v3099 = vmul.f32 %v3059, %v320
    %v3100 = vmul.f32 %v3062, %v320
    %v3101 = vmul.f32 %v3065, %v320
    %v3102 = vmul.f32 %v3068, %v320
    %v3103 = vmul.f32 %v3071, %v320
    %v3104 = vmul.f32 %v3074, %v320
    %v3105 = vmul.f32 %v3077, %v320
    %v3106 = vmul.f32 %v3080, %v320
    %v3107 = vmul.f32 %v3083, %v320
    %v3108 = vmul.f32 %v3086, %v320
    %v3109 = vmul.f32 %v3089, %v320
    %v3110 = vmul.f32 %v3092, %v320
    %v3111 = vmul.f32 %v3095, %v320
    %v3112 = vsub.f32 %v3028, %v3096
    %v3113 = vsub.f32 %v3029, %v3097
    %v3114 = vsub.f32 %v3030, %v3098
    %v3115 = vsub.f32 %v3031, %v3099
    %v3116 = vsub.f32 %v3032, %v3100
    %v3117 = vsub.f32 %v3033, %v3101
    %v3118 = vsub.f32 %v3034, %v3102
    %v3119 = vsub.f32 %v3035, %v3103
    %v3120 = vsub.f32 %v3036, %v3104
    %v3121 = vsub.f32 %v3037, %v3105
    %v3122 = vsub.f32 %v3038, %v3106
    %v3123 = vsub.f32 %v3039, %v3107
    %v3124 = vsub.f32 %v3040, %v3108
    %v3125 = vsub.f32 %v3041, %v3109
    %v3126 = vsub.f32 %v3042, %v3110
    %v3127 = vsub.f32 %v3043, %v3111
    %v3128 = vmul.f32 %v3112, %v3112
    %v3129 = vmul.f32 %v3113, %v3113
    %v3130 = vmul.f32 %v3114, %v3114
    %v3131 = vmul.f32 %v3115, %v3115
    %v3132 = vmul.f32 %v3116, %v3116
    %v3133 = vmul.f32 %v3117, %v3117
    %v3134 = vmul.f32 %v3118, %v3118
    %v3135 = vmul.f32 %v3119, %v3119
    %v3136 = vmul.f32 %v3120, %v3120
    %v3137 = vmul.f32 %v3121, %v3121
    %v3138 = vmul.f32 %v3122, %v3122
    %v3139 = vmul.f32 %v3123, %v3123
    %v3140 = vmul.f32 %v3124, %v3124
    %v3141 = vmul.f32 %v3125, %v3125
    %v3142 = vmul.f32 %v3126, %v3126
    %v3143 = vmul.f32 %v3127, %v3127
    %v3144 = vsel %vm271, %v3128, 0.0
    %3145 = vadd.xlane.f32.xlu0 %v3144
    %v3146 = vpop.xlane.xlu0 %3145
    %v3147 = vsel %vm271, %v3129, 0.0
    %3148 = vadd.xlane.f32.xlu0 %v3147
    %v3149 = vpop.xlane.xlu0 %3148
    %v3150 = vsel %vm271, %v3130, 0.0
    %3151 = vadd.xlane.f32.xlu0 %v3150
    %v3152 = vpop.xlane.xlu0 %3151
    %v3153 = vsel %vm271, %v3131, 0.0
    %3154 = vadd.xlane.f32.xlu0 %v3153
    %v3155 = vpop.xlane.xlu0 %3154
    %v3156 = vsel %vm271, %v3132, 0.0
    %3157 = vadd.xlane.f32.xlu0 %v3156
    %v3158 = vpop.xlane.xlu0 %3157
    %v3159 = vsel %vm271, %v3133, 0.0
    %3160 = vadd.xlane.f32.xlu0 %v3159
    %v3161 = vpop.xlane.xlu0 %3160
    %v3162 = vsel %vm271, %v3134, 0.0
    %3163 = vadd.xlane.f32.xlu0 %v3162
    %v3164 = vpop.xlane.xlu0 %3163
    %v3165 = vsel %vm271, %v3135, 0.0
    %3166 = vadd.xlane.f32.xlu0 %v3165
    %v3167 = vpop.xlane.xlu0 %3166
    %v3168 = vsel %vm271, %v3136, 0.0
    %3169 = vadd.xlane.f32.xlu0 %v3168
    %v3170 = vpop.xlane.xlu0 %3169
    %v3171 = vsel %vm271, %v3137, 0.0
    %3172 = vadd.xlane.f32.xlu0 %v3171
    %v3173 = vpop.xlane.xlu0 %3172
    %v3174 = vsel %vm271, %v3138, 0.0
    %3175 = vadd.xlane.f32.xlu0 %v3174
    %v3176 = vpop.xlane.xlu0 %3175
    %v3177 = vsel %vm271, %v3139, 0.0
    %3178 = vadd.xlane.f32.xlu0 %v3177
    %v3179 = vpop.xlane.xlu0 %3178
    %v3180 = vsel %vm271, %v3140, 0.0
    %3181 = vadd.xlane.f32.xlu0 %v3180
    %v3182 = vpop.xlane.xlu0 %3181
    %v3183 = vsel %vm271, %v3141, 0.0
    %3184 = vadd.xlane.f32.xlu0 %v3183
    %v3185 = vpop.xlane.xlu0 %3184
    %v3186 = vsel %vm271, %v3142, 0.0
    %3187 = vadd.xlane.f32.xlu0 %v3186
    %v3188 = vpop.xlane.xlu0 %3187
    %v3189 = vsel %vm271, %v3143, 0.0
    %3190 = vadd.xlane.f32.xlu0 %v3189
    %v3191 = vpop.xlane.xlu0 %3190
    %v3192 = vmul.f32 %v3146, %v320
    %v3193 = vmul.f32 %v3149, %v320
    %v3194 = vmul.f32 %v3152, %v320
    %v3195 = vmul.f32 %v3155, %v320
    %v3196 = vmul.f32 %v3158, %v320
    %v3197 = vmul.f32 %v3161, %v320
    %v3198 = vmul.f32 %v3164, %v320
    %v3199 = vmul.f32 %v3167, %v320
    %v3200 = vmul.f32 %v3170, %v320
    %v3201 = vmul.f32 %v3173, %v320
    %v3202 = vmul.f32 %v3176, %v320
    %v3203 = vmul.f32 %v3179, %v320
    %v3204 = vmul.f32 %v3182, %v320
    %v3205 = vmul.f32 %v3185, %v320
    %v3206 = vmul.f32 %v3188, %v320
    %v3207 = vmul.f32 %v3191, %v320
    %v3208 = vadd.f32 %v3192, 1e-05
    %v3209 = vadd.f32 %v3193, 1e-05
    %v3210 = vadd.f32 %v3194, 1e-05
    %v3211 = vadd.f32 %v3195, 1e-05
    %v3212 = vadd.f32 %v3196, 1e-05
    %v3213 = vadd.f32 %v3197, 1e-05
    %v3214 = vadd.f32 %v3198, 1e-05
    %v3215 = vadd.f32 %v3199, 1e-05
    %v3216 = vadd.f32 %v3200, 1e-05
    %v3217 = vadd.f32 %v3201, 1e-05
    %v3218 = vadd.f32 %v3202, 1e-05
    %v3219 = vadd.f32 %v3203, 1e-05
    %v3220 = vadd.f32 %v3204, 1e-05
    %v3221 = vadd.f32 %v3205, 1e-05
    %v3222 = vadd.f32 %v3206, 1e-05
    %v3223 = vadd.f32 %v3207, 1e-05
    %v3224 = vrsqrt.pop %v3208
    %v3225 = vrsqrt.pop %v3209
    %v3226 = vrsqrt.pop %v3210
    %v3227 = vrsqrt.pop %v3211
    %v3228 = vrsqrt.pop %v3212
    %v3229 = vrsqrt.pop %v3213
    %v3230 = vrsqrt.pop %v3214
    %v3231 = vrsqrt.pop %v3215
    %v3232 = vrsqrt.pop %v3216
    %v3233 = vrsqrt.pop %v3217
    %v3234 = vrsqrt.pop %v3218
    %v3235 = vrsqrt.pop %v3219
    %v3236 = vrsqrt.pop %v3220
    %v3237 = vrsqrt.pop %v3221
    %v3238 = vrsqrt.pop %v3222
    %v3239 = vrsqrt.pop %v3223
    %v3240 = vmul.f32 %v3112, %v3224
    %v3241 = vmul.f32 %v3113, %v3225
    %v3242 = vmul.f32 %v3114, %v3226
    %v3243 = vmul.f32 %v3115, %v3227
    %v3244 = vmul.f32 %v3116, %v3228
    %v3245 = vmul.f32 %v3117, %v3229
    %v3246 = vmul.f32 %v3118, %v3230
    %v3247 = vmul.f32 %v3119, %v3231
    %v3248 = vmul.f32 %v3120, %v3232
    %v3249 = vmul.f32 %v3121, %v3233
    %v3250 = vmul.f32 %v3122, %v3234
    %v3251 = vmul.f32 %v3123, %v3235
    %v3252 = vmul.f32 %v3124, %v3236
    %v3253 = vmul.f32 %v3125, %v3237
    %v3254 = vmul.f32 %v3126, %v3238
    %v3255 = vmul.f32 %v3127, %v3239
    %v3257 = vlaneseq
    %v3258 = vshrl.u32 %v3257, 7
    %v3259 = vsub.s32 0, %v3258
    %v3260 = vrot.slane %v3045, %v3259
    %v3262 = vmul.f32 %v3240, %v3260
    %v3263 = vmul.f32 %v3241, %v3260
    %v3264 = vmul.f32 %v3242, %v3260
    %v3265 = vmul.f32 %v3243, %v3260
    %v3266 = vmul.f32 %v3244, %v3260
    %v3267 = vmul.f32 %v3245, %v3260
    %v3268 = vmul.f32 %v3246, %v3260
    %v3269 = vmul.f32 %v3247, %v3260
    %v3270 = vmul.f32 %v3248, %v3260
    %v3271 = vmul.f32 %v3249, %v3260
    %v3272 = vmul.f32 %v3250, %v3260
    %v3273 = vmul.f32 %v3251, %v3260
    %v3274 = vmul.f32 %v3252, %v3260
    %v3275 = vmul.f32 %v3253, %v3260
    %v3276 = vmul.f32 %v3254, %v3260
    %v3277 = vmul.f32 %v3255, %v3260
    %v3279 = vlaneseq
    %v3280 = vshrl.u32 %v3279, 7
    %v3281 = vsub.s32 0, %v3280
    %v3282 = vrot.slane %v3047, %v3281
    %v3284 = vadd.f32 %v3262, %v3282
    %v3285 = vadd.f32 %v3263, %v3282
    %v3286 = vadd.f32 %v3264, %v3282
    %v3287 = vadd.f32 %v3265, %v3282
    %v3288 = vadd.f32 %v3266, %v3282
    %v3289 = vadd.f32 %v3267, %v3282
    %v3290 = vadd.f32 %v3268, %v3282
    %v3291 = vadd.f32 %v3269, %v3282
    %v3292 = vadd.f32 %v3270, %v3282
    %v3293 = vadd.f32 %v3271, %v3282
    %v3294 = vadd.f32 %v3272, %v3282
    %v3295 = vadd.f32 %v3273, %v3282
    %v3296 = vadd.f32 %v3274, %v3282
    %v3297 = vadd.f32 %v3275, %v3282
    %v3298 = vadd.f32 %v3276, %v3282
    %v3299 = vadd.f32 %v3277, %v3282
    %v3300 = vld [vmem:[#allocation8] sm:$0xff]
    %v3301 = vld [vmem:[#allocation8 + $0x8] sm:$0xff]
    %v3302 = vld [vmem:[#allocation8 + $0x10] sm:$0xff]
    %v3303 = vld [vmem:[#allocation8 + $0x18] sm:$0xff]
    %v3304 = vld [vmem:[%s7] sm:$0x1]
    %v3306 = vlaneseq
    %v3307 = vshrl.u32 %v3306, 7
    %v3308 = vsub.s32 0, %v3307
    %v3309 = vrot.slane %v3304, %v3308
    %v3312 = vsel %vm271, %v3284, 0
    %v3315 = vsel %vm271, %v3285, 0
    %v3318 = vsel %vm271, %v3286, 0
    %v3321 = vsel %vm271, %v3287, 0
    %v3324 = vsel %vm271, %v3288, 0
    %v3327 = vsel %vm271, %v3289, 0
    %v3330 = vsel %vm271, %v3290, 0
    %v3333 = vsel %vm271, %v3291, 0
    %v3336 = vsel %vm271, %v3292, 0
    %v3339 = vsel %vm271, %v3293, 0
    %v3342 = vsel %vm271, %v3294, 0
    %v3345 = vsel %vm271, %v3295, 0
    %v3348 = vsel %vm271, %v3296, 0
    %v3351 = vsel %vm271, %v3297, 0
    %v3354 = vsel %vm271, %v3298, 0
    %v3357 = vsel %vm271, %v3299, 0
    %3359 = vmatprep.subr.mxu0 0.0
    %3360 = vmatpush1.msra.mxu0 %v3300
    %3361 = vmatprep.subr.mxu0 0.0
    %3362 = vmatpush1.msra.mxu0 %v3301
    %3363 = vmatprep.subr.mxu0 0.0
    %3364 = vmatpush1.msra.mxu0 %v3302
    %3365 = vmatprep.subr.mxu0 0.0
    %3366 = vmatpush1.msra.mxu0 %v3303
    %3367 = vmatprep.subr.mxu0 0.0
    %3368 = vmatpush1.msra.mxu0 0.0
    %3369 = vmatprep.subr.mxu0 0.0
    %3370 = vmatpush1.msra.mxu0 0.0
    %3371 = vmatprep.subr.mxu0 0.0
    %3372 = vmatpush1.msra.mxu0 0.0
    %3373 = vmatprep.subr.mxu0 0.0
    %3374 = vmatpush1.msra.mxu0 0.0
    %3375 = vmatprep.subr.mxu0 0.0
    %3376 = vmatpush1.msra.mxu0 0.0
    %3377 = vmatprep.subr.mxu0 0.0
    %3378 = vmatpush1.msra.mxu0 0.0
    %3379 = vmatprep.subr.mxu0 0.0
    %3380 = vmatpush1.msra.mxu0 0.0
    %3381 = vmatprep.subr.mxu0 0.0
    %3382 = vmatpush1.msra.mxu0 0.0
    %3383 = vmatprep.subr.mxu0 0.0
    %3384 = vmatpush1.msra.mxu0 0.0
    %3385 = vmatprep.subr.mxu0 0.0
    %3386 = vmatpush1.msra.mxu0 0.0
    %3387 = vmatprep.subr.mxu0 0.0
    %3388 = vmatpush1.msra.mxu0 0.0
    %3389 = vmatprep.subr.mxu0 0.0
    %3390 = vmatpush1.msra.mxu0 0.0
    %3391 = vmatprep.subr.mxu0 0.0
    %3392 = vmatpush1.msra.mxu0 0.0
    %3393 = vmatprep.subr.mxu0 0.0
    %3394 = vmatpush1.msra.mxu0 0.0
    %3395 = vmatprep.subr.mxu0 0.0
    %3396 = vmatpush1.msra.mxu0 0.0
    %3397 = vmatprep.subr.mxu0 0.0
    %3398 = vmatpush1.msra.mxu0 0.0
    %3399 = vmatprep.subr.mxu0 0.0
    %3400 = vmatpush1.msra.mxu0 0.0
    %3401 = vmatprep.subr.mxu0 0.0
    %3402 = vmatpush1.msra.mxu0 0.0
    %3403 = vmatprep.subr.mxu0 0.0
    %3404 = vmatpush1.msra.mxu0 0.0
    %3405 = vmatprep.subr.mxu0 0.0
    %3406 = vmatpush1.msra.mxu0 0.0
    %3407 = vmatprep.subr.mxu0 0.0
    %3408 = vmatpush1.msra.mxu0 0.0
    %3409 = vmatprep.subr.mxu0 0.0
    %3410 = vmatpush1.msra.mxu0 0.0
    %3411 = vmatprep.subr.mxu0 0.0
    %3412 = vmatpush1.msra.mxu0 0.0
    %3413 = vmatprep.subr.mxu0 0.0
    %3414 = vmatpush1.msra.mxu0 0.0
    %3415 = vmatprep.subr.mxu0 0.0
    %3416 = vmatpush1.msra.mxu0 0.0
    %3417 = vmatprep.subr.mxu0 0.0
    %3418 = vmatpush1.msra.mxu0 0.0
    %3419 = vmatprep.subr.mxu0 0.0
    %3420 = vmatpush1.msra.mxu0 0.0
    %3421 = vmatprep.subr.mxu0 0.0
    %3422 = vmatpush1.msra.mxu0 0.0
    %3423 = vmatprep.mubr.f32.mxu0 0.0
    %3424 = vmatmul.mubr.f32.gmra.mrb[0].mxu0 %v3312
    %v3425 = vpop.f32.mrb[0].mxu0
    %v3426 = vadd.f32 %v3309, %v3425
    %v3427 = vpop.f32.mrb[0].mxu0
    %3428 = vmatprep.mubr.f32.mxu0 0.0
    %3429 = vmatmul.mubr.f32.gmra.mrb[0].mxu0 %v3315
    %v3430 = vpop.f32.mrb[0].mxu0
    %v3431 = vadd.f32 %v3309, %v3430
    %v3432 = vpop.f32.mrb[0].mxu0
    %3433 = vmatprep.mubr.f32.mxu0 0.0
    %3434 = vmatmul.mubr.f32.gmra.mrb[0].mxu0 %v3318
    %v3435 = vpop.f32.mrb[0].mxu0
    %v3436 = vadd.f32 %v3309, %v3435
    %v3437 = vpop.f32.mrb[0].mxu0
    %3438 = vmatprep.mubr.f32.mxu0 0.0
    %3439 = vmatmul.mubr.f32.gmra.mrb[0].mxu0 %v3321
    %v3440 = vpop.f32.mrb[0].mxu0
    %v3441 = vadd.f32 %v3309, %v3440
    %v3442 = vpop.f32.mrb[0].mxu0
    %3443 = vmatprep.mubr.f32.mxu0 0.0
    %3444 = vmatmul.mubr.f32.gmra.mrb[0].mxu0 %v3324
    %v3445 = vpop.f32.mrb[0].mxu0
    %v3446 = vadd.f32 %v3309, %v3445
    %v3447 = vpop.f32.mrb[0].mxu0
    %3448 = vmatprep.mubr.f32.mxu0 0.0
    %3449 = vmatmul.mubr.f32.gmra.mrb[0].mxu0 %v3327
    %v3450 = vpop.f32.mrb[0].mxu0
    %v3451 = vadd.f32 %v3309, %v3450
    %v3452 = vpop.f32.mrb[0].mxu0
    %3453 = vmatprep.mubr.f32.mxu0 0.0
    %3454 = vmatmul.mubr.f32.gmra.mrb[0].mxu0 %v3330
    %v3455 = vpop.f32.mrb[0].mxu0
    %v3456 = vadd.f32 %v3309, %v3455
    %v3457 = vpop.f32.mrb[0].mxu0
    %3458 = vmatprep.mubr.f32.mxu0 0.0
    %3459 = vmatmul.mubr.f32.gmra.mrb[0].mxu0 %v3333
    %v3460 = vpop.f32.mrb[0].mxu0
    %v3461 = vadd.f32 %v3309, %v3460
    %v3462 = vpop.f32.mrb[0].mxu0
    %3463 = vmatprep.mubr.f32.mxu0 0.0
    %3464 = vmatmul.mubr.f32.gmra.mrb[0].mxu0 %v3336
    %v3465 = vpop.f32.mrb[0].mxu0
    %v3466 = vadd.f32 %v3309, %v3465
    %v3467 = vpop.f32.mrb[0].mxu0
    %3468 = vmatprep.mubr.f32.mxu0 0.0
    %3469 = vmatmul.mubr.f32.gmra.mrb[0].mxu0 %v3339
    %v3470 = vpop.f32.mrb[0].mxu0
    %v3471 = vadd.f32 %v3309, %v3470
    %v3472 = vpop.f32.mrb[0].mxu0
    %3473 = vmatprep.mubr.f32.mxu0 0.0
    %3474 = vmatmul.mubr.f32.gmra.mrb[0].mxu0 %v3342
    %v3475 = vpop.f32.mrb[0].mxu0
    %v3476 = vadd.f32 %v3309, %v3475
    %v3477 = vpop.f32.mrb[0].mxu0
    %3478 = vmatprep.mubr.f32.mxu0 0.0
    %3479 = vmatmul.mubr.f32.gmra.mrb[0].mxu0 %v3345
    %v3480 = vpop.f32.mrb[0].mxu0
    %v3481 = vadd.f32 %v3309, %v3480
    %v3482 = vpop.f32.mrb[0].mxu0
    %3483 = vmatprep.mubr.f32.mxu0 0.0
    %3484 = vmatmul.mubr.f32.gmra.mrb[0].mxu0 %v3348
    %v3485 = vpop.f32.mrb[0].mxu0
    %v3486 = vadd.f32 %v3309, %v3485
    %v3487 = vpop.f32.mrb[0].mxu0
    %3488 = vmatprep.mubr.f32.mxu0 0.0
    %3489 = vmatmul.mubr.f32.gmra.mrb[0].mxu0 %v3351
    %v3490 = vpop.f32.mrb[0].mxu0
    %v3491 = vadd.f32 %v3309, %v3490
    %v3492 = vpop.f32.mrb[0].mxu0
    %3493 = vmatprep.mubr.f32.mxu0 0.0
    %3494 = vmatmul.mubr.f32.gmra.mrb[0].mxu0 %v3354
    %v3495 = vpop.f32.mrb[0].mxu0
    %v3496 = vadd.f32 %v3309, %v3495
    %v3497 = vpop.f32.mrb[0].mxu0
    %3498 = vmatprep.mubr.f32.mxu0 0.0
    %3499 = vmatmul.mubr.f32.gmra.mrb[0].mxu0 %v3357
    %v3500 = vpop.f32.mrb[0].mxu0
    %v3501 = vadd.f32 %v3309, %v3500
    %v3502 = vpop.f32.mrb[0].mxu0
    %3503 = vdwg.mxu0
    %v3504 = vmul.f32 %v3426, 0.5
    %v3505 = vmul.f32 %v3431, 0.5
    %v3506 = vmul.f32 %v3436, 0.5
    %v3507 = vmul.f32 %v3441, 0.5
    %v3508 = vmul.f32 %v3446, 0.5
    %v3509 = vmul.f32 %v3451, 0.5
    %v3510 = vmul.f32 %v3456, 0.5
    %v3511 = vmul.f32 %v3461, 0.5
    %v3512 = vmul.f32 %v3466, 0.5
    %v3513 = vmul.f32 %v3471, 0.5
    %v3514 = vmul.f32 %v3476, 0.5
    %v3515 = vmul.f32 %v3481, 0.5
    %v3516 = vmul.f32 %v3486, 0.5
    %v3517 = vmul.f32 %v3491, 0.5
    %v3518 = vmul.f32 %v3496, 0.5
    %v3519 = vmul.f32 %v3501, 0.5
    %v3520 = vmul.f32 %v3426, 0.044715
    %v3521 = vmul.f32 %v3431, 0.044715
    %v3522 = vmul.f32 %v3436, 0.044715
    %v3523 = vmul.f32 %v3441, 0.044715
    %v3524 = vmul.f32 %v3446, 0.044715
    %v3525 = vmul.f32 %v3451, 0.044715
    %v3526 = vmul.f32 %v3456, 0.044715
    %v3527 = vmul.f32 %v3461, 0.044715
    %v3528 = vmul.f32 %v3466, 0.044715
    %v3529 = vmul.f32 %v3471, 0.044715
    %v3530 = vmul.f32 %v3476, 0.044715
    %v3531 = vmul.f32 %v3481, 0.044715
    %v3532 = vmul.f32 %v3486, 0.044715
    %v3533 = vmul.f32 %v3491, 0.044715
    %v3534 = vmul.f32 %v3496, 0.044715
    %v3535 = vmul.f32 %v3501, 0.044715
    %v3536 = vmul.f32 %v3520, %v3426
    %v3537 = vmul.f32 %v3521, %v3431
    %v3538 = vmul.f32 %v3522, %v3436
    %v3539 = vmul.f32 %v3523, %v3441
    %v3540 = vmul.f32 %v3524, %v3446
    %v3541 = vmul.f32 %v3525, %v3451
    %v3542 = vmul.f32 %v3526, %v3456
    %v3543 = vmul.f32 %v3527, %v3461
    %v3544 = vmul.f32 %v3528, %v3466
    %v3545 = vmul.f32 %v3529, %v3471
    %v3546 = vmul.f32 %v3530, %v3476
    %v3547 = vmul.f32 %v3531, %v3481
    %v3548 = vmul.f32 %v3532, %v3486
    %v3549 = vmul.f32 %v3533, %v3491
    %v3550 = vmul.f32 %v3534, %v3496
    %v3551 = vmul.f32 %v3535, %v3501
    %v3552 = vmul.f32 %v3536, %v3426
    %v3553 = vmul.f32 %v3537, %v3431
    %v3554 = vmul.f32 %v3538, %v3436
    %v3555 = vmul.f32 %v3539, %v3441
    %v3556 = vmul.f32 %v3540, %v3446
    %v3557 = vmul.f32 %v3541, %v3451
    %v3558 = vmul.f32 %v3542, %v3456
    %v3559 = vmul.f32 %v3543, %v3461
    %v3560 = vmul.f32 %v3544, %v3466
    %v3561 = vmul.f32 %v3545, %v3471
    %v3562 = vmul.f32 %v3546, %v3476
    %v3563 = vmul.f32 %v3547, %v3481
    %v3564 = vmul.f32 %v3548, %v3486
    %v3565 = vmul.f32 %v3549, %v3491
    %v3566 = vmul.f32 %v3550, %v3496
    %v3567 = vmul.f32 %v3551, %v3501
    %v3568 = vadd.f32 %v3426, %v3552
    %v3569 = vadd.f32 %v3431, %v3553
    %v3570 = vadd.f32 %v3436, %v3554
    %v3571 = vadd.f32 %v3441, %v3555
    %v3572 = vadd.f32 %v3446, %v3556
    %v3573 = vadd.f32 %v3451, %v3557
    %v3574 = vadd.f32 %v3456, %v3558
    %v3575 = vadd.f32 %v3461, %v3559
    %v3576 = vadd.f32 %v3466, %v3560
    %v3577 = vadd.f32 %v3471, %v3561
    %v3578 = vadd.f32 %v3476, %v3562
    %v3579 = vadd.f32 %v3481, %v3563
    %v3580 = vadd.f32 %v3486, %v3564
    %v3581 = vadd.f32 %v3491, %v3565
    %v3582 = vadd.f32 %v3496, %v3566
    %v3583 = vadd.f32 %v3501, %v3567
    %v3584 = vmul.f32 %v3568, 0.7978846
    %v3585 = vmul.f32 %v3569, 0.7978846
    %v3586 = vmul.f32 %v3570, 0.7978846
    %v3587 = vmul.f32 %v3571, 0.7978846
    %v3588 = vmul.f32 %v3572, 0.7978846
    %v3589 = vmul.f32 %v3573, 0.7978846
    %v3590 = vmul.f32 %v3574, 0.7978846
    %v3591 = vmul.f32 %v3575, 0.7978846
    %v3592 = vmul.f32 %v3576, 0.7978846
    %v3593 = vmul.f32 %v3577, 0.7978846
    %v3594 = vmul.f32 %v3578, 0.7978846
    %v3595 = vmul.f32 %v3579, 0.7978846
    %v3596 = vmul.f32 %v3580, 0.7978846
    %v3597 = vmul.f32 %v3581, 0.7978846
    %v3598 = vmul.f32 %v3582, 0.7978846
    %v3599 = vmul.f32 %v3583, 0.7978846
    %v3600 = vtanh.pop %v3584
    %v3601 = vtanh.pop %v3585
    %v3602 = vtanh.pop %v3586
    %v3603 = vtanh.pop %v3587
    %v3604 = vtanh.pop %v3588
    %v3605 = vtanh.pop %v3589
    %v3606 = vtanh.pop %v3590
    %v3607 = vtanh.pop %v3591
    %v3608 = vtanh.pop %v3592
    %v3609 = vtanh.pop %v3593
    %v3610 = vtanh.pop %v3594
    %v3611 = vtanh.pop %v3595
    %v3612 = vtanh.pop %v3596
    %v3613 = vtanh.pop %v3597
    %v3614 = vtanh.pop %v3598
    %v3615 = vtanh.pop %v3599
    %v3616 = vadd.f32 %v3600, 1.0
    %v3617 = vadd.f32 %v3601, 1.0
    %v3618 = vadd.f32 %v3602, 1.0
    %v3619 = vadd.f32 %v3603, 1.0
    %v3620 = vadd.f32 %v3604, 1.0
    %v3621 = vadd.f32 %v3605, 1.0
    %v3622 = vadd.f32 %v3606, 1.0
    %v3623 = vadd.f32 %v3607, 1.0
    %v3624 = vadd.f32 %v3608, 1.0
    %v3625 = vadd.f32 %v3609, 1.0
    %v3626 = vadd.f32 %v3610, 1.0
    %v3627 = vadd.f32 %v3611, 1.0
    %v3628 = vadd.f32 %v3612, 1.0
    %v3629 = vadd.f32 %v3613, 1.0
    %v3630 = vadd.f32 %v3614, 1.0
    %v3631 = vadd.f32 %v3615, 1.0
    %v3632 = vmul.f32 %v3504, %v3616
    %v3633 = vmul.f32 %v3505, %v3617
    %v3634 = vmul.f32 %v3506, %v3618
    %v3635 = vmul.f32 %v3507, %v3619
    %v3636 = vmul.f32 %v3508, %v3620
    %v3637 = vmul.f32 %v3509, %v3621
    %v3638 = vmul.f32 %v3510, %v3622
    %v3639 = vmul.f32 %v3511, %v3623
    %v3640 = vmul.f32 %v3512, %v3624
    %v3641 = vmul.f32 %v3513, %v3625
    %v3642 = vmul.f32 %v3514, %v3626
    %v3643 = vmul.f32 %v3515, %v3627
    %v3644 = vmul.f32 %v3516, %v3628
    %v3645 = vmul.f32 %v3517, %v3629
    %v3646 = vmul.f32 %v3518, %v3630
    %v3647 = vmul.f32 %v3519, %v3631
    %v3648 = vld [vmem:[%s8] sm:$0xff]
    %v3649 = vld [vmem:[%s8 + $0x8] sm:$0xff]
    %v3650 = vld [vmem:[%s8 + $0x10] sm:$0xff]
    %v3651 = vld [vmem:[%s8 + $0x18] sm:$0xff]
    %v3652 = vld [vmem:[%s8 + $0x20] sm:$0xff]
    %v3653 = vld [vmem:[%s8 + $0x28] sm:$0xff]
    %v3654 = vld [vmem:[%s8 + $0x30] sm:$0xff]
    %v3655 = vld [vmem:[%s8 + $0x38] sm:$0xff]
    %v3656 = vld [vmem:[%s8 + $0x40] sm:$0xff]
    %v3657 = vld [vmem:[%s8 + $0x48] sm:$0xff]
    %v3658 = vld [vmem:[%s8 + $0x50] sm:$0xff]
    %v3659 = vld [vmem:[%s8 + $0x58] sm:$0xff]
    %v3660 = vld [vmem:[%s8 + $0x60] sm:$0xff]
    %v3661 = vld [vmem:[%s8 + $0x68] sm:$0xff]
    %v3662 = vld [vmem:[%s8 + $0x70] sm:$0xff]
    %v3663 = vld [vmem:[%s8 + $0x78] sm:$0xff]
    %s3664 = scalar_lea.vmem %s9, 5
    %v3665 = vld [vmem:[%s3664] sm:$0x1]
    %v3667 = vlaneseq
    %v3668 = vshrl.u32 %v3667, 7
    %v3669 = vsub.s32 0, %v3668
    %v3670 = vrot.slane %v3665, %v3669
    %3672 = vmatprep.subr.mxu0 0.0
    %3673 = vmatpush1.msra.mxu0 %v3648
    %3674 = vmatprep.subr.mxu0 0.0
    %3675 = vmatpush1.msra.mxu0 %v3649
    %3676 = vmatprep.subr.mxu0 0.0
    %3677 = vmatpush1.msra.mxu0 %v3650
    %3678 = vmatprep.subr.mxu0 0.0
    %3679 = vmatpush1.msra.mxu0 %v3651
    %3680 = vmatprep.subr.mxu0 0.0
    %3681 = vmatpush1.msra.mxu0 %v3652
    %3682 = vmatprep.subr.mxu0 0.0
    %3683 = vmatpush1.msra.mxu0 %v3653
    %3684 = vmatprep.subr.mxu0 0.0
    %3685 = vmatpush1.msra.mxu0 %v3654
    %3686 = vmatprep.subr.mxu0 0.0
    %3687 = vmatpush1.msra.mxu0 %v3655
    %3688 = vmatprep.subr.mxu0 0.0
    %3689 = vmatpush1.msra.mxu0 %v3656
    %3690 = vmatprep.subr.mxu0 0.0
    %3691 = vmatpush1.msra.mxu0 %v3657
    %3692 = vmatprep.subr.mxu0 0.0
    %3693 = vmatpush1.msra.mxu0 %v3658
    %3694 = vmatprep.subr.mxu0 0.0
    %3695 = vmatpush1.msra.mxu0 %v3659
    %3696 = vmatprep.subr.mxu0 0.0
    %3697 = vmatpush1.msra.mxu0 %v3660
    %3698 = vmatprep.subr.mxu0 0.0
    %3699 = vmatpush1.msra.mxu0 %v3661
    %3700 = vmatprep.subr.mxu0 0.0
    %3701 = vmatpush1.msra.mxu0 %v3662
    %3702 = vmatprep.subr.mxu0 0.0
    %3703 = vmatpush1.msra.mxu0 %v3663
    %3704 = vmatprep.subr.mxu0 0.0
    %3705 = vmatpush1.msra.mxu0 0.0
    %3706 = vmatprep.subr.mxu0 0.0
    %3707 = vmatpush1.msra.mxu0 0.0
    %3708 = vmatprep.subr.mxu0 0.0
    %3709 = vmatpush1.msra.mxu0 0.0
    %3710 = vmatprep.subr.mxu0 0.0
    %3711 = vmatpush1.msra.mxu0 0.0
    %3712 = vmatprep.subr.mxu0 0.0
    %3713 = vmatpush1.msra.mxu0 0.0
    %3714 = vmatprep.subr.mxu0 0.0
    %3715 = vmatpush1.msra.mxu0 0.0
    %3716 = vmatprep.subr.mxu0 0.0
    %3717 = vmatpush1.msra.mxu0 0.0
    %3718 = vmatprep.subr.mxu0 0.0
    %3719 = vmatpush1.msra.mxu0 0.0
    %3720 = vmatprep.subr.mxu0 0.0
    %3721 = vmatpush1.msra.mxu0 0.0
    %3722 = vmatprep.subr.mxu0 0.0
    %3723 = vmatpush1.msra.mxu0 0.0
    %3724 = vmatprep.subr.mxu0 0.0
    %3725 = vmatpush1.msra.mxu0 0.0
    %3726 = vmatprep.subr.mxu0 0.0
    %3727 = vmatpush1.msra.mxu0 0.0
    %3728 = vmatprep.subr.mxu0 0.0
    %3729 = vmatpush1.msra.mxu0 0.0
    %3730 = vmatprep.subr.mxu0 0.0
    %3731 = vmatpush1.msra.mxu0 0.0
    %3732 = vmatprep.subr.mxu0 0.0
    %3733 = vmatpush1.msra.mxu0 0.0
    %3734 = vmatprep.subr.mxu0 0.0
    %3735 = vmatpush1.msra.mxu0 0.0
    %3736 = vmatprep.mubr.f32.mxu0 0.0
    %3737 = vmatmul.mubr.f32.gmra.mrb[0].mxu0 %v3632
    %v3738 = vpop.f32.mrb[0].mxu0
    %v3739 = vadd.f32 %v3670, %v3738
    %v3740 = vpop.f32.mrb[0].mxu0
    %3741 = vmatprep.mubr.f32.mxu0 0.0
    %3742 = vmatmul.mubr.f32.gmra.mrb[0].mxu0 %v3633
    %v3743 = vpop.f32.mrb[0].mxu0
    %v3744 = vadd.f32 %v3670, %v3743
    %v3745 = vpop.f32.mrb[0].mxu0
    %3746 = vmatprep.mubr.f32.mxu0 0.0
    %3747 = vmatmul.mubr.f32.gmra.mrb[0].mxu0 %v3634
    %v3748 = vpop.f32.mrb[0].mxu0
    %v3749 = vadd.f32 %v3670, %v3748
    %v3750 = vpop.f32.mrb[0].mxu0
    %3751 = vmatprep.mubr.f32.mxu0 0.0
    %3752 = vmatmul.mubr.f32.gmra.mrb[0].mxu0 %v3635
    %v3753 = vpop.f32.mrb[0].mxu0
    %v3754 = vadd.f32 %v3670, %v3753
    %v3755 = vpop.f32.mrb[0].mxu0
    %3756 = vmatprep.mubr.f32.mxu0 0.0
    %3757 = vmatmul.mubr.f32.gmra.mrb[0].mxu0 %v3636
    %v3758 = vpop.f32.mrb[0].mxu0
    %v3759 = vadd.f32 %v3670, %v3758
    %v3760 = vpop.f32.mrb[0].mxu0
    %3761 = vmatprep.mubr.f32.mxu0 0.0
    %3762 = vmatmul.mubr.f32.gmra.mrb[0].mxu0 %v3637
    %v3763 = vpop.f32.mrb[0].mxu0
    %v3764 = vadd.f32 %v3670, %v3763
    %v3765 = vpop.f32.mrb[0].mxu0
    %3766 = vmatprep.mubr.f32.mxu0 0.0
    %3767 = vmatmul.mubr.f32.gmra.mrb[0].mxu0 %v3638
    %v3768 = vpop.f32.mrb[0].mxu0
    %v3769 = vadd.f32 %v3670, %v3768
    %v3770 = vpop.f32.mrb[0].mxu0
    %3771 = vmatprep.mubr.f32.mxu0 0.0
    %3772 = vmatmul.mubr.f32.gmra.mrb[0].mxu0 %v3639
    %v3773 = vpop.f32.mrb[0].mxu0
    %v3774 = vadd.f32 %v3670, %v3773
    %v3775 = vpop.f32.mrb[0].mxu0
    %3776 = vmatprep.mubr.f32.mxu0 0.0
    %3777 = vmatmul.mubr.f32.gmra.mrb[0].mxu0 %v3640
    %v3778 = vpop.f32.mrb[0].mxu0
    %v3779 = vadd.f32 %v3670, %v3778
    %v3780 = vpop.f32.mrb[0].mxu0
    %3781 = vmatprep.mubr.f32.mxu0 0.0
    %3782 = vmatmul.mubr.f32.gmra.mrb[0].mxu0 %v3641
    %v3783 = vpop.f32.mrb[0].mxu0
    %v3784 = vadd.f32 %v3670, %v3783
    %v3785 = vpop.f32.mrb[0].mxu0
    %3786 = vmatprep.mubr.f32.mxu0 0.0
    %3787 = vmatmul.mubr.f32.gmra.mrb[0].mxu0 %v3642
    %v3788 = vpop.f32.mrb[0].mxu0
    %v3789 = vadd.f32 %v3670, %v3788
    %v3790 = vpop.f32.mrb[0].mxu0
    %3791 = vmatprep.mubr.f32.mxu0 0.0
    %3792 = vmatmul.mubr.f32.gmra.mrb[0].mxu0 %v3643
    %v3793 = vpop.f32.mrb[0].mxu0
    %v3794 = vadd.f32 %v3670, %v3793
    %v3795 = vpop.f32.mrb[0].mxu0
    %3796 = vmatprep.mubr.f32.mxu0 0.0
    %3797 = vmatmul.mubr.f32.gmra.mrb[0].mxu0 %v3644
    %v3798 = vpop.f32.mrb[0].mxu0
    %v3799 = vadd.f32 %v3670, %v3798
    %v3800 = vpop.f32.mrb[0].mxu0
    %3801 = vmatprep.mubr.f32.mxu0 0.0
    %3802 = vmatmul.mubr.f32.gmra.mrb[0].mxu0 %v3645
    %v3803 = vpop.f32.mrb[0].mxu0
    %v3804 = vadd.f32 %v3670, %v3803
    %v3805 = vpop.f32.mrb[0].mxu0
    %3806 = vmatprep.mubr.f32.mxu0 0.0
    %3807 = vmatmul.mubr.f32.gmra.mrb[0].mxu0 %v3646
    %v3808 = vpop.f32.mrb[0].mxu0
    %v3809 = vadd.f32 %v3670, %v3808
    %v3810 = vpop.f32.mrb[0].mxu0
    %3811 = vmatprep.mubr.f32.mxu0 0.0
    %3812 = vmatmul.mubr.f32.gmra.mrb[0].mxu0 %v3647
    %v3813 = vpop.f32.mrb[0].mxu0
    %v3814 = vadd.f32 %v3670, %v3813
    %v3815 = vpop.f32.mrb[0].mxu0
    %3816 = vdwg.mxu0
    %v3817 = vadd.f32 %v3028, %v3739
    %v3818 = vadd.f32 %v3029, %v3744
    %v3819 = vadd.f32 %v3030, %v3749
    %v3820 = vadd.f32 %v3031, %v3754
    %v3821 = vadd.f32 %v3032, %v3759
    %v3822 = vadd.f32 %v3033, %v3764
    %v3823 = vadd.f32 %v3034, %v3769
    %v3824 = vadd.f32 %v3035, %v3774
    %v3825 = vadd.f32 %v3036, %v3779
    %v3826 = vadd.f32 %v3037, %v3784
    %v3827 = vadd.f32 %v3038, %v3789
    %v3828 = vadd.f32 %v3039, %v3794
    %v3829 = vadd.f32 %v3040, %v3799
    %v3830 = vadd.f32 %v3041, %v3804
    %v3831 = vadd.f32 %v3042, %v3809
    %v3832 = vadd.f32 %v3043, %v3814
    %s3833 = scalar_lea.vmem %s1, 128
    %v3834 = vld [vmem:[%s3833] sm:$0xff]
    %v3835 = vld [vmem:[%s3833 + $0x8] sm:$0xff]
    %v3836 = vld [vmem:[%s3833 + $0x10] sm:$0xff]
    %v3837 = vld [vmem:[%s3833 + $0x18] sm:$0xff]
    %v3838 = vld [vmem:[%s3833 + $0x20] sm:$0xff]
    %v3839 = vld [vmem:[%s3833 + $0x28] sm:$0xff]
    %v3840 = vld [vmem:[%s3833 + $0x30] sm:$0xff]
    %v3841 = vld [vmem:[%s3833 + $0x38] sm:$0xff]
    %v3842 = vld [vmem:[%s3833 + $0x40] sm:$0xff]
    %v3843 = vld [vmem:[%s3833 + $0x48] sm:$0xff]
    %v3844 = vld [vmem:[%s3833 + $0x50] sm:$0xff]
    %v3845 = vld [vmem:[%s3833 + $0x58] sm:$0xff]
    %v3846 = vld [vmem:[%s3833 + $0x60] sm:$0xff]
    %v3847 = vld [vmem:[%s3833 + $0x68] sm:$0xff]
    %v3848 = vld [vmem:[%s3833 + $0x70] sm:$0xff]
    %v3849 = vld [vmem:[%s3833 + $0x78] sm:$0xff]
    %3850 = vmatprep.subr.mxu0 0.0
    %3851 = vmatpush1.msra.mxu0 %v3817
    %3852 = vmatprep.subr.mxu0 0.0
    %3853 = vmatpush1.msra.mxu0 %v3818
    %3854 = vmatprep.subr.mxu0 0.0
    %3855 = vmatpush1.msra.mxu0 %v3819
    %3856 = vmatprep.subr.mxu0 0.0
    %3857 = vmatpush1.msra.mxu0 %v3820
    %3858 = vmatprep.subr.mxu0 0.0
    %3859 = vmatpush1.msra.mxu0 %v3821
    %3860 = vmatprep.subr.mxu0 0.0
    %3861 = vmatpush1.msra.mxu0 %v3822
    %3862 = vmatprep.subr.mxu0 0.0
    %3863 = vmatpush1.msra.mxu0 %v3823
    %3864 = vmatprep.subr.mxu0 0.0
    %3865 = vmatpush1.msra.mxu0 %v3824
    %3866 = vmatprep.subr.mxu0 0.0
    %3867 = vmatpush1.msra.mxu0 %v3825
    %3868 = vmatprep.subr.mxu0 0.0
    %3869 = vmatpush1.msra.mxu0 %v3826
    %3870 = vmatprep.subr.mxu0 0.0
    %3871 = vmatpush1.msra.mxu0 %v3827
    %3872 = vmatprep.subr.mxu0 0.0
    %3873 = vmatpush1.msra.mxu0 %v3828
    %3874 = vmatprep.subr.mxu0 0.0
    %3875 = vmatpush1.msra.mxu0 %v3829
    %3876 = vmatprep.subr.mxu0 0.0
    %3877 = vmatpush1.msra.mxu0 %v3830
    %3878 = vmatprep.subr.mxu0 0.0
    %3879 = vmatpush1.msra.mxu0 %v3831
    %3880 = vmatprep.subr.mxu0 0.0
    %3881 = vmatpush1.msra.mxu0 %v3832
    %3882 = vmatprep.subr.mxu0 0.0
    %3883 = vmatpush1.msra.mxu0 0.0
    %3884 = vmatprep.subr.mxu0 0.0
    %3885 = vmatpush1.msra.mxu0 0.0
    %3886 = vmatprep.subr.mxu0 0.0
    %3887 = vmatpush1.msra.mxu0 0.0
    %3888 = vmatprep.subr.mxu0 0.0
    %3889 = vmatpush1.msra.mxu0 0.0
    %3890 = vmatprep.subr.mxu0 0.0
    %3891 = vmatpush1.msra.mxu0 0.0
    %3892 = vmatprep.subr.mxu0 0.0
    %3893 = vmatpush1.msra.mxu0 0.0
    %3894 = vmatprep.subr.mxu0 0.0
    %3895 = vmatpush1.msra.mxu0 0.0
    %3896 = vmatprep.subr.mxu0 0.0
    %3897 = vmatpush1.msra.mxu0 0.0
    %3898 = vmatprep.subr.mxu0 0.0
    %3899 = vmatpush1.msra.mxu0 0.0
    %3900 = vmatprep.subr.mxu0 0.0
    %3901 = vmatpush1.msra.mxu0 0.0
    %3902 = vmatprep.subr.mxu0 0.0
    %3903 = vmatpush1.msra.mxu0 0.0
    %3904 = vmatprep.subr.mxu0 0.0
    %3905 = vmatpush1.msra.mxu0 0.0
    %3906 = vmatprep.subr.mxu0 0.0
    %3907 = vmatpush1.msra.mxu0 0.0
    %3908 = vmatprep.subr.mxu0 0.0
    %3909 = vmatpush1.msra.mxu0 0.0
    %3910 = vmatprep.subr.mxu0 0.0
    %3911 = vmatpush1.msra.mxu0 0.0
    %3912 = vmatprep.subr.mxu0 0.0
    %3913 = vmatpush1.msra.mxu0 0.0
    %3914 = vmatprep.mubr.f32.mxu0 0.0
    %3915 = vmatmul.mubr.f32.gmra.mrb[0].mxu0 %v3834
    %v3916 = vpop.f32.mrb[0].mxu0
    %v3917 = vadd.f32 0.0, %v3916
    %v3918 = vpop.f32.mrb[0].mxu0
    %3919 = vmatprep.mubr.f32.mxu0 0.0
    %3920 = vmatmul.mubr.f32.gmra.mrb[0].mxu0 %v3835
    %v3921 = vpop.f32.mrb[0].mxu0
    %v3922 = vadd.f32 0.0, %v3921
    %v3923 = vpop.f32.mrb[0].mxu0
    %3924 = vmatprep.mubr.f32.mxu0 0.0
    %3925 = vmatmul.mubr.f32.gmra.mrb[0].mxu0 %v3836
    %v3926 = vpop.f32.mrb[0].mxu0
    %v3927 = vadd.f32 0.0, %v3926
    %v3928 = vpop.f32.mrb[0].mxu0
    %3929 = vmatprep.mubr.f32.mxu0 0.0
    %3930 = vmatmul.mubr.f32.gmra.mrb[0].mxu0 %v3837
    %v3931 = vpop.f32.mrb[0].mxu0
    %v3932 = vadd.f32 0.0, %v3931
    %v3933 = vpop.f32.mrb[0].mxu0
    %3934 = vmatprep.mubr.f32.mxu0 0.0
    %3935 = vmatmul.mubr.f32.gmra.mrb[0].mxu0 %v3838
    %v3936 = vpop.f32.mrb[0].mxu0
    %v3937 = vadd.f32 0.0, %v3936
    %v3938 = vpop.f32.mrb[0].mxu0
    %3939 = vmatprep.mubr.f32.mxu0 0.0
    %3940 = vmatmul.mubr.f32.gmra.mrb[0].mxu0 %v3839
    %v3941 = vpop.f32.mrb[0].mxu0
    %v3942 = vadd.f32 0.0, %v3941
    %v3943 = vpop.f32.mrb[0].mxu0
    %3944 = vmatprep.mubr.f32.mxu0 0.0
    %3945 = vmatmul.mubr.f32.gmra.mrb[0].mxu0 %v3840
    %v3946 = vpop.f32.mrb[0].mxu0
    %v3947 = vadd.f32 0.0, %v3946
    %v3948 = vpop.f32.mrb[0].mxu0
    %3949 = vmatprep.mubr.f32.mxu0 0.0
    %3950 = vmatmul.mubr.f32.gmra.mrb[0].mxu0 %v3841
    %v3951 = vpop.f32.mrb[0].mxu0
    %v3952 = vadd.f32 0.0, %v3951
    %v3953 = vpop.f32.mrb[0].mxu0
    %3954 = vmatprep.mubr.f32.mxu0 0.0
    %3955 = vmatmul.mubr.f32.gmra.mrb[0].mxu0 %v3842
    %v3956 = vpop.f32.mrb[0].mxu0
    %v3957 = vadd.f32 0.0, %v3956
    %v3958 = vpop.f32.mrb[0].mxu0
    %3959 = vmatprep.mubr.f32.mxu0 0.0
    %3960 = vmatmul.mubr.f32.gmra.mrb[0].mxu0 %v3843
    %v3961 = vpop.f32.mrb[0].mxu0
    %v3962 = vadd.f32 0.0, %v3961
    %v3963 = vpop.f32.mrb[0].mxu0
    %3964 = vmatprep.mubr.f32.mxu0 0.0
    %3965 = vmatmul.mubr.f32.gmra.mrb[0].mxu0 %v3844
    %v3966 = vpop.f32.mrb[0].mxu0
    %v3967 = vadd.f32 0.0, %v3966
    %v3968 = vpop.f32.mrb[0].mxu0
    %3969 = vmatprep.mubr.f32.mxu0 0.0
    %3970 = vmatmul.mubr.f32.gmra.mrb[0].mxu0 %v3845
    %v3971 = vpop.f32.mrb[0].mxu0
    %v3972 = vadd.f32 0.0, %v3971
    %v3973 = vpop.f32.mrb[0].mxu0
    %3974 = vmatprep.mubr.f32.mxu0 0.0
    %3975 = vmatmul.mubr.f32.gmra.mrb[0].mxu0 %v3846
    %v3976 = vpop.f32.mrb[0].mxu0
    %v3977 = vadd.f32 0.0, %v3976
    %v3978 = vpop.f32.mrb[0].mxu0
    %3979 = vmatprep.mubr.f32.mxu0 0.0
    %3980 = vmatmul.mubr.f32.gmra.mrb[0].mxu0 %v3847
    %v3981 = vpop.f32.mrb[0].mxu0
    %v3982 = vadd.f32 0.0, %v3981
    %v3983 = vpop.f32.mrb[0].mxu0
    %3984 = vmatprep.mubr.f32.mxu0 0.0
    %3985 = vmatmul.mubr.f32.gmra.mrb[0].mxu0 %v3848
    %v3986 = vpop.f32.mrb[0].mxu0
    %v3987 = vadd.f32 0.0, %v3986
    %v3988 = vpop.f32.mrb[0].mxu0
    %3989 = vmatprep.mubr.f32.mxu0 0.0
    %3990 = vmatmul.mubr.f32.gmra.mrb[0].mxu0 %v3849
    %v3991 = vpop.f32.mrb[0].mxu0
    %v3992 = vadd.f32 0.0, %v3991
    %v3993 = vpop.f32.mrb[0].mxu0
    %3994 = vdwg.mxu0
    %s3995 = scalar_lea.vmem %s9, 6
    %v3996 = vld [vmem:[%s3995] sm:$0x1]
    %s3997 = scalar_lea.vmem %s9, 7
    %v3998 = vld [vmem:[%s3997] sm:$0x1]
    %v3999 = vsel %vm271, %v3917, 0.0
    %4000 = vadd.xlane.f32.xlu0 %v3999
    %v4001 = vpop.xlane.xlu0 %4000
    %v4002 = vsel %vm271, %v3922, 0.0
    %4003 = vadd.xlane.f32.xlu0 %v4002
    %v4004 = vpop.xlane.xlu0 %4003
    %v4005 = vsel %vm271, %v3927, 0.0
    %4006 = vadd.xlane.f32.xlu0 %v4005
    %v4007 = vpop.xlane.xlu0 %4006
    %v4008 = vsel %vm271, %v3932, 0.0
    %4009 = vadd.xlane.f32.xlu0 %v4008
    %v4010 = vpop.xlane.xlu0 %4009
    %v4011 = vsel %vm271, %v3937, 0.0
    %4012 = vadd.xlane.f32.xlu0 %v4011
    %v4013 = vpop.xlane.xlu0 %4012
    %v4014 = vsel %vm271, %v3942, 0.0
    %4015 = vadd.xlane.f32.xlu0 %v4014
    %v4016 = vpop.xlane.xlu0 %4015
    %v4017 = vsel %vm271, %v3947, 0.0
    %4018 = vadd.xlane.f32.xlu0 %v4017
    %v4019 = vpop.xlane.xlu0 %4018
    %v4020 = vsel %vm271, %v3952, 0.0
    %4021 = vadd.xlane.f32.xlu0 %v4020
    %v4022 = vpop.xlane.xlu0 %4021
    %v4023 = vsel %vm271, %v3957, 0.0
    %4024 = vadd.xlane.f32.xlu0 %v4023
    %v4025 = vpop.xlane.xlu0 %4024
    %v4026 = vsel %vm271, %v3962, 0.0
    %4027 = vadd.xlane.f32.xlu0 %v4026
    %v4028 = vpop.xlane.xlu0 %4027
    %v4029 = vsel %vm271, %v3967, 0.0
    %4030 = vadd.xlane.f32.xlu0 %v4029
    %v4031 = vpop.xlane.xlu0 %4030
    %v4032 = vsel %vm271, %v3972, 0.0
    %4033 = vadd.xlane.f32.xlu0 %v4032
    %v4034 = vpop.xlane.xlu0 %4033
    %v4035 = vsel %vm271, %v3977, 0.0
    %4036 = vadd.xlane.f32.xlu0 %v4035
    %v4037 = vpop.xlane.xlu0 %4036
    %v4038 = vsel %vm271, %v3982, 0.0
    %4039 = vadd.xlane.f32.xlu0 %v4038
    %v4040 = vpop.xlane.xlu0 %4039
    %v4041 = vsel %vm271, %v3987, 0.0
    %4042 = vadd.xlane.f32.xlu0 %v4041
    %v4043 = vpop.xlane.xlu0 %4042
    %v4044 = vsel %vm271, %v3992, 0.0
    %4045 = vadd.xlane.f32.xlu0 %v4044
    %v4046 = vpop.xlane.xlu0 %4045
    %v4047 = vmul.f32 %v4001, %v320
    %v4048 = vmul.f32 %v4004, %v320
    %v4049 = vmul.f32 %v4007, %v320
    %v4050 = vmul.f32 %v4010, %v320
    %v4051 = vmul.f32 %v4013, %v320
    %v4052 = vmul.f32 %v4016, %v320
    %v4053 = vmul.f32 %v4019, %v320
    %v4054 = vmul.f32 %v4022, %v320
    %v4055 = vmul.f32 %v4025, %v320
    %v4056 = vmul.f32 %v4028, %v320
    %v4057 = vmul.f32 %v4031, %v320
    %v4058 = vmul.f32 %v4034, %v320
    %v4059 = vmul.f32 %v4037, %v320
    %v4060 = vmul.f32 %v4040, %v320
    %v4061 = vmul.f32 %v4043, %v320
    %v4062 = vmul.f32 %v4046, %v320
    %v4063 = vsub.f32 %v3917, %v4047
    %v4064 = vsub.f32 %v3922, %v4048
    %v4065 = vsub.f32 %v3927, %v4049
    %v4066 = vsub.f32 %v3932, %v4050
    %v4067 = vsub.f32 %v3937, %v4051
    %v4068 = vsub.f32 %v3942, %v4052
    %v4069 = vsub.f32 %v3947, %v4053
    %v4070 = vsub.f32 %v3952, %v4054
    %v4071 = vsub.f32 %v3957, %v4055
    %v4072 = vsub.f32 %v3962, %v4056
    %v4073 = vsub.f32 %v3967, %v4057
    %v4074 = vsub.f32 %v3972, %v4058
    %v4075 = vsub.f32 %v3977, %v4059
    %v4076 = vsub.f32 %v3982, %v4060
    %v4077 = vsub.f32 %v3987, %v4061
    %v4078 = vsub.f32 %v3992, %v4062
    %v4079 = vmul.f32 %v4063, %v4063
    %v4080 = vmul.f32 %v4064, %v4064
    %v4081 = vmul.f32 %v4065, %v4065
    %v4082 = vmul.f32 %v4066, %v4066
    %v4083 = vmul.f32 %v4067, %v4067
    %v4084 = vmul.f32 %v4068, %v4068
    %v4085 = vmul.f32 %v4069, %v4069
    %v4086 = vmul.f32 %v4070, %v4070
    %v4087 = vmul.f32 %v4071, %v4071
    %v4088 = vmul.f32 %v4072, %v4072
    %v4089 = vmul.f32 %v4073, %v4073
    %v4090 = vmul.f32 %v4074, %v4074
    %v4091 = vmul.f32 %v4075, %v4075
    %v4092 = vmul.f32 %v4076, %v4076
    %v4093 = vmul.f32 %v4077, %v4077
    %v4094 = vmul.f32 %v4078, %v4078
    %v4095 = vsel %vm271, %v4079, 0.0
    %4096 = vadd.xlane.f32.xlu0 %v4095
    %v4097 = vpop.xlane.xlu0 %4096
    %v4098 = vsel %vm271, %v4080, 0.0
    %4099 = vadd.xlane.f32.xlu0 %v4098
    %v4100 = vpop.xlane.xlu0 %4099
    %v4101 = vsel %vm271, %v4081, 0.0
    %4102 = vadd.xlane.f32.xlu0 %v4101
    %v4103 = vpop.xlane.xlu0 %4102
    %v4104 = vsel %vm271, %v4082, 0.0
    %4105 = vadd.xlane.f32.xlu0 %v4104
    %v4106 = vpop.xlane.xlu0 %4105
    %v4107 = vsel %vm271, %v4083, 0.0
    %4108 = vadd.xlane.f32.xlu0 %v4107
    %v4109 = vpop.xlane.xlu0 %4108
    %v4110 = vsel %vm271, %v4084, 0.0
    %4111 = vadd.xlane.f32.xlu0 %v4110
    %v4112 = vpop.xlane.xlu0 %4111
    %v4113 = vsel %vm271, %v4085, 0.0
    %4114 = vadd.xlane.f32.xlu0 %v4113
    %v4115 = vpop.xlane.xlu0 %4114
    %v4116 = vsel %vm271, %v4086, 0.0
    %4117 = vadd.xlane.f32.xlu0 %v4116
    %v4118 = vpop.xlane.xlu0 %4117
    %v4119 = vsel %vm271, %v4087, 0.0
    %4120 = vadd.xlane.f32.xlu0 %v4119
    %v4121 = vpop.xlane.xlu0 %4120
    %v4122 = vsel %vm271, %v4088, 0.0
    %4123 = vadd.xlane.f32.xlu0 %v4122
    %v4124 = vpop.xlane.xlu0 %4123
    %v4125 = vsel %vm271, %v4089, 0.0
    %4126 = vadd.xlane.f32.xlu0 %v4125
    %v4127 = vpop.xlane.xlu0 %4126
    %v4128 = vsel %vm271, %v4090, 0.0
    %4129 = vadd.xlane.f32.xlu0 %v4128
    %v4130 = vpop.xlane.xlu0 %4129
    %v4131 = vsel %vm271, %v4091, 0.0
    %4132 = vadd.xlane.f32.xlu0 %v4131
    %v4133 = vpop.xlane.xlu0 %4132
    %v4134 = vsel %vm271, %v4092, 0.0
    %4135 = vadd.xlane.f32.xlu0 %v4134
    %v4136 = vpop.xlane.xlu0 %4135
    %v4137 = vsel %vm271, %v4093, 0.0
    %4138 = vadd.xlane.f32.xlu0 %v4137
    %v4139 = vpop.xlane.xlu0 %4138
    %v4140 = vsel %vm271, %v4094, 0.0
    %4141 = vadd.xlane.f32.xlu0 %v4140
    %v4142 = vpop.xlane.xlu0 %4141
    %v4143 = vmul.f32 %v4097, %v320
    %v4144 = vmul.f32 %v4100, %v320
    %v4145 = vmul.f32 %v4103, %v320
    %v4146 = vmul.f32 %v4106, %v320
    %v4147 = vmul.f32 %v4109, %v320
    %v4148 = vmul.f32 %v4112, %v320
    %v4149 = vmul.f32 %v4115, %v320
    %v4150 = vmul.f32 %v4118, %v320
    %v4151 = vmul.f32 %v4121, %v320
    %v4152 = vmul.f32 %v4124, %v320
    %v4153 = vmul.f32 %v4127, %v320
    %v4154 = vmul.f32 %v4130, %v320
    %v4155 = vmul.f32 %v4133, %v320
    %v4156 = vmul.f32 %v4136, %v320
    %v4157 = vmul.f32 %v4139, %v320
    %v4158 = vmul.f32 %v4142, %v320
    %v4159 = vadd.f32 %v4143, 1e-05
    %v4160 = vadd.f32 %v4144, 1e-05
    %v4161 = vadd.f32 %v4145, 1e-05
    %v4162 = vadd.f32 %v4146, 1e-05
    %v4163 = vadd.f32 %v4147, 1e-05
    %v4164 = vadd.f32 %v4148, 1e-05
    %v4165 = vadd.f32 %v4149, 1e-05
    %v4166 = vadd.f32 %v4150, 1e-05
    %v4167 = vadd.f32 %v4151, 1e-05
    %v4168 = vadd.f32 %v4152, 1e-05
    %v4169 = vadd.f32 %v4153, 1e-05
    %v4170 = vadd.f32 %v4154, 1e-05
    %v4171 = vadd.f32 %v4155, 1e-05
    %v4172 = vadd.f32 %v4156, 1e-05
    %v4173 = vadd.f32 %v4157, 1e-05
    %v4174 = vadd.f32 %v4158, 1e-05
    %v4175 = vrsqrt.pop %v4159
    %v4176 = vrsqrt.pop %v4160
    %v4177 = vrsqrt.pop %v4161
    %v4178 = vrsqrt.pop %v4162
    %v4179 = vrsqrt.pop %v4163
    %v4180 = vrsqrt.pop %v4164
    %v4181 = vrsqrt.pop %v4165
    %v4182 = vrsqrt.pop %v4166
    %v4183 = vrsqrt.pop %v4167
    %v4184 = vrsqrt.pop %v4168
    %v4185 = vrsqrt.pop %v4169
    %v4186 = vrsqrt.pop %v4170
    %v4187 = vrsqrt.pop %v4171
    %v4188 = vrsqrt.pop %v4172
    %v4189 = vrsqrt.pop %v4173
    %v4190 = vrsqrt.pop %v4174
    %v4191 = vmul.f32 %v4063, %v4175
    %v4192 = vmul.f32 %v4064, %v4176
    %v4193 = vmul.f32 %v4065, %v4177
    %v4194 = vmul.f32 %v4066, %v4178
    %v4195 = vmul.f32 %v4067, %v4179
    %v4196 = vmul.f32 %v4068, %v4180
    %v4197 = vmul.f32 %v4069, %v4181
    %v4198 = vmul.f32 %v4070, %v4182
    %v4199 = vmul.f32 %v4071, %v4183
    %v4200 = vmul.f32 %v4072, %v4184
    %v4201 = vmul.f32 %v4073, %v4185
    %v4202 = vmul.f32 %v4074, %v4186
    %v4203 = vmul.f32 %v4075, %v4187
    %v4204 = vmul.f32 %v4076, %v4188
    %v4205 = vmul.f32 %v4077, %v4189
    %v4206 = vmul.f32 %v4078, %v4190
    %v4208 = vlaneseq
    %v4209 = vshrl.u32 %v4208, 7
    %v4210 = vsub.s32 0, %v4209
    %v4211 = vrot.slane %v3996, %v4210
    %v4213 = vmul.f32 %v4191, %v4211
    %v4214 = vmul.f32 %v4192, %v4211
    %v4215 = vmul.f32 %v4193, %v4211
    %v4216 = vmul.f32 %v4194, %v4211
    %v4217 = vmul.f32 %v4195, %v4211
    %v4218 = vmul.f32 %v4196, %v4211
    %v4219 = vmul.f32 %v4197, %v4211
    %v4220 = vmul.f32 %v4198, %v4211
    %v4221 = vmul.f32 %v4199, %v4211
    %v4222 = vmul.f32 %v4200, %v4211
    %v4223 = vmul.f32 %v4201, %v4211
    %v4224 = vmul.f32 %v4202, %v4211
    %v4225 = vmul.f32 %v4203, %v4211
    %v4226 = vmul.f32 %v4204, %v4211
    %v4227 = vmul.f32 %v4205, %v4211
    %v4228 = vmul.f32 %v4206, %v4211
    %v4230 = vlaneseq
    %v4231 = vshrl.u32 %v4230, 7
    %v4232 = vsub.s32 0, %v4231
    %v4233 = vrot.slane %v3998, %v4232
    %v4235 = vadd.f32 %v4213, %v4233
    %v4236 = vadd.f32 %v4214, %v4233
    %v4237 = vadd.f32 %v4215, %v4233
    %v4238 = vadd.f32 %v4216, %v4233
    %v4239 = vadd.f32 %v4217, %v4233
    %v4240 = vadd.f32 %v4218, %v4233
    %v4241 = vadd.f32 %v4219, %v4233
    %v4242 = vadd.f32 %v4220, %v4233
    %v4243 = vadd.f32 %v4221, %v4233
    %v4244 = vadd.f32 %v4222, %v4233
    %v4245 = vadd.f32 %v4223, %v4233
    %v4246 = vadd.f32 %v4224, %v4233
    %v4247 = vadd.f32 %v4225, %v4233
    %v4248 = vadd.f32 %v4226, %v4233
    %v4249 = vadd.f32 %v4227, %v4233
    %v4250 = vadd.f32 %v4228, %v4233
    %s4251 = scalar_lea.vmem %s2, 192
    %v4252 = vld [vmem:[%s4251] sm:$0xff]
    %v4253 = vld [vmem:[%s4251 + $0x8] sm:$0xff]
    %v4254 = vld [vmem:[%s4251 + $0x10] sm:$0xff]
    %v4255 = vld [vmem:[%s4251 + $0x18] sm:$0xff]
    %s4256 = scalar_lea.vmem [#allocation5], 6
    %v4257 = vld [vmem:[%s4256] sm:$0x1]
    %v4259 = vlaneseq
    %v4260 = vshrl.u32 %v4259, 7
    %v4261 = vsub.s32 0, %v4260
    %v4262 = vrot.slane %v4257, %v4261
    %v4265 = vsel %vm271, %v4235, 0
    %v4268 = vsel %vm271, %v4236, 0
    %v4271 = vsel %vm271, %v4237, 0
    %v4274 = vsel %vm271, %v4238, 0
    %v4277 = vsel %vm271, %v4239, 0
    %v4280 = vsel %vm271, %v4240, 0
    %v4283 = vsel %vm271, %v4241, 0
    %v4286 = vsel %vm271, %v4242, 0
    %v4289 = vsel %vm271, %v4243, 0
    %v4292 = vsel %vm271, %v4244, 0
    %v4295 = vsel %vm271, %v4245, 0
    %v4298 = vsel %vm271, %v4246, 0
    %v4301 = vsel %vm271, %v4247, 0
    %v4304 = vsel %vm271, %v4248, 0
    %v4307 = vsel %vm271, %v4249, 0
    %v4310 = vsel %vm271, %v4250, 0
    %4312 = vmatprep.subr.mxu0 0.0
    %4313 = vmatpush1.msra.mxu0 %v4252
    %4314 = vmatprep.subr.mxu0 0.0
    %4315 = vmatpush1.msra.mxu0 %v4253
    %4316 = vmatprep.subr.mxu0 0.0
    %4317 = vmatpush1.msra.mxu0 %v4254
    %4318 = vmatprep.subr.mxu0 0.0
    %4319 = vmatpush1.msra.mxu0 %v4255
    %4320 = vmatprep.subr.mxu0 0.0
    %4321 = vmatpush1.msra.mxu0 0.0
    %4322 = vmatprep.subr.mxu0 0.0
    %4323 = vmatpush1.msra.mxu0 0.0
    %4324 = vmatprep.subr.mxu0 0.0
    %4325 = vmatpush1.msra.mxu0 0.0
    %4326 = vmatprep.subr.mxu0 0.0
    %4327 = vmatpush1.msra.mxu0 0.0
    %4328 = vmatprep.subr.mxu0 0.0
    %4329 = vmatpush1.msra.mxu0 0.0
    %4330 = vmatprep.subr.mxu0 0.0
    %4331 = vmatpush1.msra.mxu0 0.0
    %4332 = vmatprep.subr.mxu0 0.0
    %4333 = vmatpush1.msra.mxu0 0.0
    %4334 = vmatprep.subr.mxu0 0.0
    %4335 = vmatpush1.msra.mxu0 0.0
    %4336 = vmatprep.subr.mxu0 0.0
    %4337 = vmatpush1.msra.mxu0 0.0
    %4338 = vmatprep.subr.mxu0 0.0
    %4339 = vmatpush1.msra.mxu0 0.0
    %4340 = vmatprep.subr.mxu0 0.0
    %4341 = vmatpush1.msra.mxu0 0.0
    %4342 = vmatprep.subr.mxu0 0.0
    %4343 = vmatpush1.msra.mxu0 0.0
    %4344 = vmatprep.subr.mxu0 0.0
    %4345 = vmatpush1.msra.mxu0 0.0
    %4346 = vmatprep.subr.mxu0 0.0
    %4347 = vmatpush1.msra.mxu0 0.0
    %4348 = vmatprep.subr.mxu0 0.0
    %4349 = vmatpush1.msra.mxu0 0.0
    %4350 = vmatprep.subr.mxu0 0.0
    %4351 = vmatpush1.msra.mxu0 0.0
    %4352 = vmatprep.subr.mxu0 0.0
    %4353 = vmatpush1.msra.mxu0 0.0
    %4354 = vmatprep.subr.mxu0 0.0
    %4355 = vmatpush1.msra.mxu0 0.0
    %4356 = vmatprep.subr.mxu0 0.0
    %4357 = vmatpush1.msra.mxu0 0.0
    %4358 = vmatprep.subr.mxu0 0.0
    %4359 = vmatpush1.msra.mxu0 0.0
    %4360 = vmatprep.subr.mxu0 0.0
    %4361 = vmatpush1.msra.mxu0 0.0
    %4362 = vmatprep.subr.mxu0 0.0
    %4363 = vmatpush1.msra.mxu0 0.0
    %4364 = vmatprep.subr.mxu0 0.0
    %4365 = vmatpush1.msra.mxu0 0.0
    %4366 = vmatprep.subr.mxu0 0.0
    %4367 = vmatpush1.msra.mxu0 0.0
    %4368 = vmatprep.subr.mxu0 0.0
    %4369 = vmatpush1.msra.mxu0 0.0
    %4370 = vmatprep.subr.mxu0 0.0
    %4371 = vmatpush1.msra.mxu0 0.0
    %4372 = vmatprep.subr.mxu0 0.0
    %4373 = vmatpush1.msra.mxu0 0.0
    %4374 = vmatprep.subr.mxu0 0.0
    %4375 = vmatpush1.msra.mxu0 0.0
    %4376 = vmatprep.mubr.f32.mxu0 0.0
    %4377 = vmatmul.mubr.f32.gmra.mrb[0].mxu0 %v4265
    %v4378 = vpop.f32.mrb[0].mxu0
    %v4379 = vadd.f32 %v4262, %v4378
    %v4380 = vpop.f32.mrb[0].mxu0
    %4381 = vmatprep.mubr.f32.mxu0 0.0
    %4382 = vmatmul.mubr.f32.gmra.mrb[0].mxu0 %v4268
    %v4383 = vpop.f32.mrb[0].mxu0
    %v4384 = vadd.f32 %v4262, %v4383
    %v4385 = vpop.f32.mrb[0].mxu0
    %4386 = vmatprep.mubr.f32.mxu0 0.0
    %4387 = vmatmul.mubr.f32.gmra.mrb[0].mxu0 %v4271
    %v4388 = vpop.f32.mrb[0].mxu0
    %v4389 = vadd.f32 %v4262, %v4388
    %v4390 = vpop.f32.mrb[0].mxu0
    %4391 = vmatprep.mubr.f32.mxu0 0.0
    %4392 = vmatmul.mubr.f32.gmra.mrb[0].mxu0 %v4274
    %v4393 = vpop.f32.mrb[0].mxu0
    %v4394 = vadd.f32 %v4262, %v4393
    %v4395 = vpop.f32.mrb[0].mxu0
    %4396 = vmatprep.mubr.f32.mxu0 0.0
    %4397 = vmatmul.mubr.f32.gmra.mrb[0].mxu0 %v4277
    %v4398 = vpop.f32.mrb[0].mxu0
    %v4399 = vadd.f32 %v4262, %v4398
    %v4400 = vpop.f32.mrb[0].mxu0
    %4401 = vmatprep.mubr.f32.mxu0 0.0
    %4402 = vmatmul.mubr.f32.gmra.mrb[0].mxu0 %v4280
    %v4403 = vpop.f32.mrb[0].mxu0
    %v4404 = vadd.f32 %v4262, %v4403
    %v4405 = vpop.f32.mrb[0].mxu0
    %4406 = vmatprep.mubr.f32.mxu0 0.0
    %4407 = vmatmul.mubr.f32.gmra.mrb[0].mxu0 %v4283
    %v4408 = vpop.f32.mrb[0].mxu0
    %v4409 = vadd.f32 %v4262, %v4408
    %v4410 = vpop.f32.mrb[0].mxu0
    %4411 = vmatprep.mubr.f32.mxu0 0.0
    %4412 = vmatmul.mubr.f32.gmra.mrb[0].mxu0 %v4286
    %v4413 = vpop.f32.mrb[0].mxu0
    %v4414 = vadd.f32 %v4262, %v4413
    %v4415 = vpop.f32.mrb[0].mxu0
    %4416 = vmatprep.mubr.f32.mxu0 0.0
    %4417 = vmatmul.mubr.f32.gmra.mrb[0].mxu0 %v4289
    %v4418 = vpop.f32.mrb[0].mxu0
    %v4419 = vadd.f32 %v4262, %v4418
    %v4420 = vpop.f32.mrb[0].mxu0
    %4421 = vmatprep.mubr.f32.mxu0 0.0
    %4422 = vmatmul.mubr.f32.gmra.mrb[0].mxu0 %v4292
    %v4423 = vpop.f32.mrb[0].mxu0
    %v4424 = vadd.f32 %v4262, %v4423
    %v4425 = vpop.f32.mrb[0].mxu0
    %4426 = vmatprep.mubr.f32.mxu0 0.0
    %4427 = vmatmul.mubr.f32.gmra.mrb[0].mxu0 %v4295
    %v4428 = vpop.f32.mrb[0].mxu0
    %v4429 = vadd.f32 %v4262, %v4428
    %v4430 = vpop.f32.mrb[0].mxu0
    %4431 = vmatprep.mubr.f32.mxu0 0.0
    %4432 = vmatmul.mubr.f32.gmra.mrb[0].mxu0 %v4298
    %v4433 = vpop.f32.mrb[0].mxu0
    %v4434 = vadd.f32 %v4262, %v4433
    %v4435 = vpop.f32.mrb[0].mxu0
    %4436 = vmatprep.mubr.f32.mxu0 0.0
    %4437 = vmatmul.mubr.f32.gmra.mrb[0].mxu0 %v4301
    %v4438 = vpop.f32.mrb[0].mxu0
    %v4439 = vadd.f32 %v4262, %v4438
    %v4440 = vpop.f32.mrb[0].mxu0
    %4441 = vmatprep.mubr.f32.mxu0 0.0
    %4442 = vmatmul.mubr.f32.gmra.mrb[0].mxu0 %v4304
    %v4443 = vpop.f32.mrb[0].mxu0
    %v4444 = vadd.f32 %v4262, %v4443
    %v4445 = vpop.f32.mrb[0].mxu0
    %4446 = vmatprep.mubr.f32.mxu0 0.0
    %4447 = vmatmul.mubr.f32.gmra.mrb[0].mxu0 %v4307
    %v4448 = vpop.f32.mrb[0].mxu0
    %v4449 = vadd.f32 %v4262, %v4448
    %v4450 = vpop.f32.mrb[0].mxu0
    %4451 = vmatprep.mubr.f32.mxu0 0.0
    %4452 = vmatmul.mubr.f32.gmra.mrb[0].mxu0 %v4310
    %v4453 = vpop.f32.mrb[0].mxu0
    %v4454 = vadd.f32 %v4262, %v4453
    %v4455 = vpop.f32.mrb[0].mxu0
    %4456 = vdwg.mxu0
    %s4457 = scalar_lea.vmem %s2, 256
    %v4458 = vld [vmem:[%s4457] sm:$0xff]
    %v4459 = vld [vmem:[%s4457 + $0x8] sm:$0xff]
    %v4460 = vld [vmem:[%s4457 + $0x10] sm:$0xff]
    %v4461 = vld [vmem:[%s4457 + $0x18] sm:$0xff]
    %s4462 = scalar_lea.vmem [#allocation5], 8
    %v4463 = vld [vmem:[%s4462] sm:$0x1]
    %v4465 = vlaneseq
    %v4466 = vshrl.u32 %v4465, 7
    %v4467 = vsub.s32 0, %v4466
    %v4468 = vrot.slane %v4463, %v4467
    %4470 = vmatprep.subr.mxu0 0.0
    %4471 = vmatpush1.msra.mxu0 %v4458
    %4472 = vmatprep.subr.mxu0 0.0
    %4473 = vmatpush1.msra.mxu0 %v4459
    %4474 = vmatprep.subr.mxu0 0.0
    %4475 = vmatpush1.msra.mxu0 %v4460
    %4476 = vmatprep.subr.mxu0 0.0
    %4477 = vmatpush1.msra.mxu0 %v4461
    %4478 = vmatprep.subr.mxu0 0.0
    %4479 = vmatpush1.msra.mxu0 0.0
    %4480 = vmatprep.subr.mxu0 0.0
    %4481 = vmatpush1.msra.mxu0 0.0
    %4482 = vmatprep.subr.mxu0 0.0
    %4483 = vmatpush1.msra.mxu0 0.0
    %4484 = vmatprep.subr.mxu0 0.0
    %4485 = vmatpush1.msra.mxu0 0.0
    %4486 = vmatprep.subr.mxu0 0.0
    %4487 = vmatpush1.msra.mxu0 0.0
    %4488 = vmatprep.subr.mxu0 0.0
    %4489 = vmatpush1.msra.mxu0 0.0
    %4490 = vmatprep.subr.mxu0 0.0
    %4491 = vmatpush1.msra.mxu0 0.0
    %4492 = vmatprep.subr.mxu0 0.0
    %4493 = vmatpush1.msra.mxu0 0.0
    %4494 = vmatprep.subr.mxu0 0.0
    %4495 = vmatpush1.msra.mxu0 0.0
    %4496 = vmatprep.subr.mxu0 0.0
    %4497 = vmatpush1.msra.mxu0 0.0
    %4498 = vmatprep.subr.mxu0 0.0
    %4499 = vmatpush1.msra.mxu0 0.0
    %4500 = vmatprep.subr.mxu0 0.0
    %4501 = vmatpush1.msra.mxu0 0.0
    %4502 = vmatprep.subr.mxu0 0.0
    %4503 = vmatpush1.msra.mxu0 0.0
    %4504 = vmatprep.subr.mxu0 0.0
    %4505 = vmatpush1.msra.mxu0 0.0
    %4506 = vmatprep.subr.mxu0 0.0
    %4507 = vmatpush1.msra.mxu0 0.0
    %4508 = vmatprep.subr.mxu0 0.0
    %4509 = vmatpush1.msra.mxu0 0.0
    %4510 = vmatprep.subr.mxu0 0.0
    %4511 = vmatpush1.msra.mxu0 0.0
    %4512 = vmatprep.subr.mxu0 0.0
    %4513 = vmatpush1.msra.mxu0 0.0
    %4514 = vmatprep.subr.mxu0 0.0
    %4515 = vmatpush1.msra.mxu0 0.0
    %4516 = vmatprep.subr.mxu0 0.0
    %4517 = vmatpush1.msra.mxu0 0.0
    %4518 = vmatprep.subr.mxu0 0.0
    %4519 = vmatpush1.msra.mxu0 0.0
    %4520 = vmatprep.subr.mxu0 0.0
    %4521 = vmatpush1.msra.mxu0 0.0
    %4522 = vmatprep.subr.mxu0 0.0
    %4523 = vmatpush1.msra.mxu0 0.0
    %4524 = vmatprep.subr.mxu0 0.0
    %4525 = vmatpush1.msra.mxu0 0.0
    %4526 = vmatprep.subr.mxu0 0.0
    %4527 = vmatpush1.msra.mxu0 0.0
    %4528 = vmatprep.subr.mxu0 0.0
    %4529 = vmatpush1.msra.mxu0 0.0
    %4530 = vmatprep.subr.mxu0 0.0
    %4531 = vmatpush1.msra.mxu0 0.0
    %4532 = vmatprep.subr.mxu0 0.0
    %4533 = vmatpush1.msra.mxu0 0.0
    %4534 = vmatprep.mubr.f32.mxu0 0.0
    %4535 = vmatmul.mubr.f32.gmra.mrb[0].mxu0 %v4265
    %v4536 = vpop.f32.mrb[0].mxu0
    %v4537 = vadd.f32 %v4468, %v4536
    %v4538 = vpop.f32.mrb[0].mxu0
    %4539 = vmatprep.mubr.f32.mxu0 0.0
    %4540 = vmatmul.mubr.f32.gmra.mrb[0].mxu0 %v4268
    %v4541 = vpop.f32.mrb[0].mxu0
    %v4542 = vadd.f32 %v4468, %v4541
    %v4543 = vpop.f32.mrb[0].mxu0
    %4544 = vmatprep.mubr.f32.mxu0 0.0
    %4545 = vmatmul.mubr.f32.gmra.mrb[0].mxu0 %v4271
    %v4546 = vpop.f32.mrb[0].mxu0
    %v4547 = vadd.f32 %v4468, %v4546
    %v4548 = vpop.f32.mrb[0].mxu0
    %4549 = vmatprep.mubr.f32.mxu0 0.0
    %4550 = vmatmul.mubr.f32.gmra.mrb[0].mxu0 %v4274
    %v4551 = vpop.f32.mrb[0].mxu0
    %v4552 = vadd.f32 %v4468, %v4551
    %v4553 = vpop.f32.mrb[0].mxu0
    %4554 = vmatprep.mubr.f32.mxu0 0.0
    %4555 = vmatmul.mubr.f32.gmra.mrb[0].mxu0 %v4277
    %v4556 = vpop.f32.mrb[0].mxu0
    %v4557 = vadd.f32 %v4468, %v4556
    %v4558 = vpop.f32.mrb[0].mxu0
    %4559 = vmatprep.mubr.f32.mxu0 0.0
    %4560 = vmatmul.mubr.f32.gmra.mrb[0].mxu0 %v4280
    %v4561 = vpop.f32.mrb[0].mxu0
    %v4562 = vadd.f32 %v4468, %v4561
    %v4563 = vpop.f32.mrb[0].mxu0
    %4564 = vmatprep.mubr.f32.mxu0 0.0
    %4565 = vmatmul.mubr.f32.gmra.mrb[0].mxu0 %v4283
    %v4566 = vpop.f32.mrb[0].mxu0
    %v4567 = vadd.f32 %v4468, %v4566
    %v4568 = vpop.f32.mrb[0].mxu0
    %4569 = vmatprep.mubr.f32.mxu0 0.0
    %4570 = vmatmul.mubr.f32.gmra.mrb[0].mxu0 %v4286
    %v4571 = vpop.f32.mrb[0].mxu0
    %v4572 = vadd.f32 %v4468, %v4571
    %v4573 = vpop.f32.mrb[0].mxu0
    %4574 = vmatprep.mubr.f32.mxu0 0.0
    %4575 = vmatmul.mubr.f32.gmra.mrb[0].mxu0 %v4289
    %v4576 = vpop.f32.mrb[0].mxu0
    %v4577 = vadd.f32 %v4468, %v4576
    %v4578 = vpop.f32.mrb[0].mxu0
    %4579 = vmatprep.mubr.f32.mxu0 0.0
    %4580 = vmatmul.mubr.f32.gmra.mrb[0].mxu0 %v4292
    %v4581 = vpop.f32.mrb[0].mxu0
    %v4582 = vadd.f32 %v4468, %v4581
    %v4583 = vpop.f32.mrb[0].mxu0
    %4584 = vmatprep.mubr.f32.mxu0 0.0
    %4585 = vmatmul.mubr.f32.gmra.mrb[0].mxu0 %v4295
    %v4586 = vpop.f32.mrb[0].mxu0
    %v4587 = vadd.f32 %v4468, %v4586
    %v4588 = vpop.f32.mrb[0].mxu0
    %4589 = vmatprep.mubr.f32.mxu0 0.0
    %4590 = vmatmul.mubr.f32.gmra.mrb[0].mxu0 %v4298
    %v4591 = vpop.f32.mrb[0].mxu0
    %v4592 = vadd.f32 %v4468, %v4591
    %v4593 = vpop.f32.mrb[0].mxu0
    %4594 = vmatprep.mubr.f32.mxu0 0.0
    %4595 = vmatmul.mubr.f32.gmra.mrb[0].mxu0 %v4301
    %v4596 = vpop.f32.mrb[0].mxu0
    %v4597 = vadd.f32 %v4468, %v4596
    %v4598 = vpop.f32.mrb[0].mxu0
    %4599 = vmatprep.mubr.f32.mxu0 0.0
    %4600 = vmatmul.mubr.f32.gmra.mrb[0].mxu0 %v4304
    %v4601 = vpop.f32.mrb[0].mxu0
    %v4602 = vadd.f32 %v4468, %v4601
    %v4603 = vpop.f32.mrb[0].mxu0
    %4604 = vmatprep.mubr.f32.mxu0 0.0
    %4605 = vmatmul.mubr.f32.gmra.mrb[0].mxu0 %v4307
    %v4606 = vpop.f32.mrb[0].mxu0
    %v4607 = vadd.f32 %v4468, %v4606
    %v4608 = vpop.f32.mrb[0].mxu0
    %4609 = vmatprep.mubr.f32.mxu0 0.0
    %4610 = vmatmul.mubr.f32.gmra.mrb[0].mxu0 %v4310
    %v4611 = vpop.f32.mrb[0].mxu0
    %v4612 = vadd.f32 %v4468, %v4611
    %v4613 = vpop.f32.mrb[0].mxu0
    %4614 = vdwg.mxu0
    %s4615 = scalar_lea.vmem %s2, 320
    %v4616 = vld [vmem:[%s4615] sm:$0xff]
    %v4617 = vld [vmem:[%s4615 + $0x8] sm:$0xff]
    %v4618 = vld [vmem:[%s4615 + $0x10] sm:$0xff]
    %v4619 = vld [vmem:[%s4615 + $0x18] sm:$0xff]
    %s4620 = scalar_lea.vmem [#allocation5], 10
    %v4621 = vld [vmem:[%s4620] sm:$0x1]
    %v4623 = vlaneseq
    %v4624 = vshrl.u32 %v4623, 7
    %v4625 = vsub.s32 0, %v4624
    %v4626 = vrot.slane %v4621, %v4625
    %4628 = vmatprep.subr.mxu0 0.0
    %4629 = vmatpush1.msra.mxu0 %v4616
    %4630 = vmatprep.subr.mxu0 0.0
    %4631 = vmatpush1.msra.mxu0 %v4617
    %4632 = vmatprep.subr.mxu0 0.0
    %4633 = vmatpush1.msra.mxu0 %v4618
    %4634 = vmatprep.subr.mxu0 0.0
    %4635 = vmatpush1.msra.mxu0 %v4619
    %4636 = vmatprep.subr.mxu0 0.0
    %4637 = vmatpush1.msra.mxu0 0.0
    %4638 = vmatprep.subr.mxu0 0.0
    %4639 = vmatpush1.msra.mxu0 0.0
    %4640 = vmatprep.subr.mxu0 0.0
    %4641 = vmatpush1.msra.mxu0 0.0
    %4642 = vmatprep.subr.mxu0 0.0
    %4643 = vmatpush1.msra.mxu0 0.0
    %4644 = vmatprep.subr.mxu0 0.0
    %4645 = vmatpush1.msra.mxu0 0.0
    %4646 = vmatprep.subr.mxu0 0.0
    %4647 = vmatpush1.msra.mxu0 0.0
    %4648 = vmatprep.subr.mxu0 0.0
    %4649 = vmatpush1.msra.mxu0 0.0
    %4650 = vmatprep.subr.mxu0 0.0
    %4651 = vmatpush1.msra.mxu0 0.0
    %4652 = vmatprep.subr.mxu0 0.0
    %4653 = vmatpush1.msra.mxu0 0.0
    %4654 = vmatprep.subr.mxu0 0.0
    %4655 = vmatpush1.msra.mxu0 0.0
    %4656 = vmatprep.subr.mxu0 0.0
    %4657 = vmatpush1.msra.mxu0 0.0
    %4658 = vmatprep.subr.mxu0 0.0
    %4659 = vmatpush1.msra.mxu0 0.0
    %4660 = vmatprep.subr.mxu0 0.0
    %4661 = vmatpush1.msra.mxu0 0.0
    %4662 = vmatprep.subr.mxu0 0.0
    %4663 = vmatpush1.msra.mxu0 0.0
    %4664 = vmatprep.subr.mxu0 0.0
    %4665 = vmatpush1.msra.mxu0 0.0
    %4666 = vmatprep.subr.mxu0 0.0
    %4667 = vmatpush1.msra.mxu0 0.0
    %4668 = vmatprep.subr.mxu0 0.0
    %4669 = vmatpush1.msra.mxu0 0.0
    %4670 = vmatprep.subr.mxu0 0.0
    %4671 = vmatpush1.msra.mxu0 0.0
    %4672 = vmatprep.subr.mxu0 0.0
    %4673 = vmatpush1.msra.mxu0 0.0
    %4674 = vmatprep.subr.mxu0 0.0
    %4675 = vmatpush1.msra.mxu0 0.0
    %4676 = vmatprep.subr.mxu0 0.0
    %4677 = vmatpush1.msra.mxu0 0.0
    %4678 = vmatprep.subr.mxu0 0.0
    %4679 = vmatpush1.msra.mxu0 0.0
    %4680 = vmatprep.subr.mxu0 0.0
    %4681 = vmatpush1.msra.mxu0 0.0
    %4682 = vmatprep.subr.mxu0 0.0
    %4683 = vmatpush1.msra.mxu0 0.0
    %4684 = vmatprep.subr.mxu0 0.0
    %4685 = vmatpush1.msra.mxu0 0.0
    %4686 = vmatprep.subr.mxu0 0.0
    %4687 = vmatpush1.msra.mxu0 0.0
    %4688 = vmatprep.subr.mxu0 0.0
    %4689 = vmatpush1.msra.mxu0 0.0
    %4690 = vmatprep.subr.mxu0 0.0
    %4691 = vmatpush1.msra.mxu0 0.0
    %4692 = vmatprep.mubr.f32.mxu0 0.0
    %4693 = vmatmul.mubr.f32.gmra.mrb[0].mxu0 %v4265
    %v4694 = vpop.f32.mrb[0].mxu0
    %v4695 = vadd.f32 %v4626, %v4694
    %v4696 = vpop.f32.mrb[0].mxu0
    %4697 = vmatprep.mubr.f32.mxu0 0.0
    %4698 = vmatmul.mubr.f32.gmra.mrb[0].mxu0 %v4268
    %v4699 = vpop.f32.mrb[0].mxu0
    %v4700 = vadd.f32 %v4626, %v4699
    %v4701 = vpop.f32.mrb[0].mxu0
    %4702 = vmatprep.mubr.f32.mxu0 0.0
    %4703 = vmatmul.mubr.f32.gmra.mrb[0].mxu0 %v4271
    %v4704 = vpop.f32.mrb[0].mxu0
    %v4705 = vadd.f32 %v4626, %v4704
    %v4706 = vpop.f32.mrb[0].mxu0
    %4707 = vmatprep.mubr.f32.mxu0 0.0
    %4708 = vmatmul.mubr.f32.gmra.mrb[0].mxu0 %v4274
    %v4709 = vpop.f32.mrb[0].mxu0
    %v4710 = vadd.f32 %v4626, %v4709
    %v4711 = vpop.f32.mrb[0].mxu0
    %4712 = vmatprep.mubr.f32.mxu0 0.0
    %4713 = vmatmul.mubr.f32.gmra.mrb[0].mxu0 %v4277
    %v4714 = vpop.f32.mrb[0].mxu0
    %v4715 = vadd.f32 %v4626, %v4714
    %v4716 = vpop.f32.mrb[0].mxu0
    %4717 = vmatprep.mubr.f32.mxu0 0.0
    %4718 = vmatmul.mubr.f32.gmra.mrb[0].mxu0 %v4280
    %v4719 = vpop.f32.mrb[0].mxu0
    %v4720 = vadd.f32 %v4626, %v4719
    %v4721 = vpop.f32.mrb[0].mxu0
    %4722 = vmatprep.mubr.f32.mxu0 0.0
    %4723 = vmatmul.mubr.f32.gmra.mrb[0].mxu0 %v4283
    %v4724 = vpop.f32.mrb[0].mxu0
    %v4725 = vadd.f32 %v4626, %v4724
    %v4726 = vpop.f32.mrb[0].mxu0
    %4727 = vmatprep.mubr.f32.mxu0 0.0
    %4728 = vmatmul.mubr.f32.gmra.mrb[0].mxu0 %v4286
    %v4729 = vpop.f32.mrb[0].mxu0
    %v4730 = vadd.f32 %v4626, %v4729
    %v4731 = vpop.f32.mrb[0].mxu0
    %4732 = vmatprep.mubr.f32.mxu0 0.0
    %4733 = vmatmul.mubr.f32.gmra.mrb[0].mxu0 %v4289
    %v4734 = vpop.f32.mrb[0].mxu0
    %v4735 = vadd.f32 %v4626, %v4734
    %v4736 = vpop.f32.mrb[0].mxu0
    %4737 = vmatprep.mubr.f32.mxu0 0.0
    %4738 = vmatmul.mubr.f32.gmra.mrb[0].mxu0 %v4292
    %v4739 = vpop.f32.mrb[0].mxu0
    %v4740 = vadd.f32 %v4626, %v4739
    %v4741 = vpop.f32.mrb[0].mxu0
    %4742 = vmatprep.mubr.f32.mxu0 0.0
    %4743 = vmatmul.mubr.f32.gmra.mrb[0].mxu0 %v4295
    %v4744 = vpop.f32.mrb[0].mxu0
    %v4745 = vadd.f32 %v4626, %v4744
    %v4746 = vpop.f32.mrb[0].mxu0
    %4747 = vmatprep.mubr.f32.mxu0 0.0
    %4748 = vmatmul.mubr.f32.gmra.mrb[0].mxu0 %v4298
    %v4749 = vpop.f32.mrb[0].mxu0
    %v4750 = vadd.f32 %v4626, %v4749
    %v4751 = vpop.f32.mrb[0].mxu0
    %4752 = vmatprep.mubr.f32.mxu0 0.0
    %4753 = vmatmul.mubr.f32.gmra.mrb[0].mxu0 %v4301
    %v4754 = vpop.f32.mrb[0].mxu0
    %v4755 = vadd.f32 %v4626, %v4754
    %v4756 = vpop.f32.mrb[0].mxu0
    %4757 = vmatprep.mubr.f32.mxu0 0.0
    %4758 = vmatmul.mubr.f32.gmra.mrb[0].mxu0 %v4304
    %v4759 = vpop.f32.mrb[0].mxu0
    %v4760 = vadd.f32 %v4626, %v4759
    %v4761 = vpop.f32.mrb[0].mxu0
    %4762 = vmatprep.mubr.f32.mxu0 0.0
    %4763 = vmatmul.mubr.f32.gmra.mrb[0].mxu0 %v4307
    %v4764 = vpop.f32.mrb[0].mxu0
    %v4765 = vadd.f32 %v4626, %v4764
    %v4766 = vpop.f32.mrb[0].mxu0
    %4767 = vmatprep.mubr.f32.mxu0 0.0
    %4768 = vmatmul.mubr.f32.gmra.mrb[0].mxu0 %v4310
    %v4769 = vpop.f32.mrb[0].mxu0
    %v4770 = vadd.f32 %v4626, %v4769
    %v4771 = vpop.f32.mrb[0].mxu0
    %4772 = vdwg.mxu0
    %s4773 = scalar_lea.vmem %s5, 256
    %v4774 = vld [vmem:[%s4773] sm:$0xff]
    %v4775 = vld [vmem:[%s4773 + $0x8] sm:$0xff]
    %v4776 = vld [vmem:[%s4773 + $0x10] sm:$0xff]
    %v4777 = vld [vmem:[%s4773 + $0x18] sm:$0xff]
    %v4778 = vld [vmem:[%s4773 + $0x20] sm:$0xff]
    %v4779 = vld [vmem:[%s4773 + $0x28] sm:$0xff]
    %v4780 = vld [vmem:[%s4773 + $0x30] sm:$0xff]
    %v4781 = vld [vmem:[%s4773 + $0x38] sm:$0xff]
    %v4782 = vld [vmem:[%s4773 + $0x40] sm:$0xff]
    %v4783 = vld [vmem:[%s4773 + $0x48] sm:$0xff]
    %v4784 = vld [vmem:[%s4773 + $0x50] sm:$0xff]
    %v4785 = vld [vmem:[%s4773 + $0x58] sm:$0xff]
    %v4786 = vld [vmem:[%s4773 + $0x60] sm:$0xff]
    %v4787 = vld [vmem:[%s4773 + $0x68] sm:$0xff]
    %v4788 = vld [vmem:[%s4773 + $0x70] sm:$0xff]
    %v4789 = vld [vmem:[%s4773 + $0x78] sm:$0xff]
    %v4791 = vsel %vm1061, %v4379, 0
    %v4794 = vsel %vm1061, %v4384, 0
    %v4797 = vsel %vm1061, %v4389, 0
    %v4800 = vsel %vm1061, %v4394, 0
    %v4803 = vsel %vm1061, %v4399, 0
    %v4806 = vsel %vm1061, %v4404, 0
    %v4809 = vsel %vm1061, %v4409, 0
    %v4812 = vsel %vm1061, %v4414, 0
    %v4815 = vsel %vm1061, %v4419, 0
    %v4818 = vsel %vm1061, %v4424, 0
    %v4821 = vsel %vm1061, %v4429, 0
    %v4824 = vsel %vm1061, %v4434, 0
    %v4827 = vsel %vm1061, %v4439, 0
    %v4830 = vsel %vm1061, %v4444, 0
    %v4833 = vsel %vm1061, %v4449, 0
    %v4836 = vsel %vm1061, %v4454, 0
    %v4839 = vsel %vm1061, %v4537, 0
    %v4842 = vsel %vm1061, %v4542, 0
    %v4845 = vsel %vm1061, %v4547, 0
    %v4848 = vsel %vm1061, %v4552, 0
    %v4851 = vsel %vm1061, %v4557, 0
    %v4854 = vsel %vm1061, %v4562, 0
    %v4857 = vsel %vm1061, %v4567, 0
    %v4860 = vsel %vm1061, %v4572, 0
    %v4863 = vsel %vm1061, %v4577, 0
    %v4866 = vsel %vm1061, %v4582, 0
    %v4869 = vsel %vm1061, %v4587, 0
    %v4872 = vsel %vm1061, %v4592, 0
    %v4875 = vsel %vm1061, %v4597, 0
    %v4878 = vsel %vm1061, %v4602, 0
    %v4881 = vsel %vm1061, %v4607, 0
    %v4884 = vsel %vm1061, %v4612, 0
    %4886 = vmatprep.subr.mxu0 0.0
    %4887 = vmatpush1.xpose.msra.mxu0 %v4839
    %4888 = vmatprep.subr.mxu0 0.0
    %4889 = vmatpush1.xpose.msra.mxu0 %v4842
    %4890 = vmatprep.subr.mxu0 0.0
    %4891 = vmatpush1.xpose.msra.mxu0 %v4845
    %4892 = vmatprep.subr.mxu0 0.0
    %4893 = vmatpush1.xpose.msra.mxu0 %v4848
    %4894 = vmatprep.subr.mxu0 0.0
    %4895 = vmatpush1.xpose.msra.mxu0 %v4851
    %4896 = vmatprep.subr.mxu0 0.0
    %4897 = vmatpush1.xpose.msra.mxu0 %v4854
    %4898 = vmatprep.subr.mxu0 0.0
    %4899 = vmatpush1.xpose.msra.mxu0 %v4857
    %4900 = vmatprep.subr.mxu0 0.0
    %4901 = vmatpush1.xpose.msra.mxu0 %v4860
    %4902 = vmatprep.subr.mxu0 0.0
    %4903 = vmatpush1.xpose.msra.mxu0 %v4863
    %4904 = vmatprep.subr.mxu0 0.0
    %4905 = vmatpush1.xpose.msra.mxu0 %v4866
    %4906 = vmatprep.subr.mxu0 0.0
    %4907 = vmatpush1.xpose.msra.mxu0 %v4869
    %4908 = vmatprep.subr.mxu0 0.0
    %4909 = vmatpush1.xpose.msra.mxu0 %v4872
    %4910 = vmatprep.subr.mxu0 0.0
    %4911 = vmatpush1.xpose.msra.mxu0 %v4875
    %4912 = vmatprep.subr.mxu0 0.0
    %4913 = vmatpush1.xpose.msra.mxu0 %v4878
    %4914 = vmatprep.subr.mxu0 0.0
    %4915 = vmatpush1.xpose.msra.mxu0 %v4881
    %4916 = vmatprep.subr.mxu0 0.0
    %4917 = vmatpush1.xpose.msra.mxu0 %v4884
    %4918 = vmatprep.subr.mxu0 0.0
    %4919 = vmatpush1.xpose.msra.mxu0 0.0
    %4920 = vmatprep.subr.mxu0 0.0
    %4921 = vmatpush1.xpose.msra.mxu0 0.0
    %4922 = vmatprep.subr.mxu0 0.0
    %4923 = vmatpush1.xpose.msra.mxu0 0.0
    %4924 = vmatprep.subr.mxu0 0.0
    %4925 = vmatpush1.xpose.msra.mxu0 0.0
    %4926 = vmatprep.subr.mxu0 0.0
    %4927 = vmatpush1.xpose.msra.mxu0 0.0
    %4928 = vmatprep.subr.mxu0 0.0
    %4929 = vmatpush1.xpose.msra.mxu0 0.0
    %4930 = vmatprep.subr.mxu0 0.0
    %4931 = vmatpush1.xpose.msra.mxu0 0.0
    %4932 = vmatprep.subr.mxu0 0.0
    %4933 = vmatpush1.xpose.msra.mxu0 0.0
    %4934 = vmatprep.subr.mxu0 0.0
    %4935 = vmatpush1.xpose.msra.mxu0 0.0
    %4936 = vmatprep.subr.mxu0 0.0
    %4937 = vmatpush1.xpose.msra.mxu0 0.0
    %4938 = vmatprep.subr.mxu0 0.0
    %4939 = vmatpush1.xpose.msra.mxu0 0.0
    %4940 = vmatprep.subr.mxu0 0.0
    %4941 = vmatpush1.xpose.msra.mxu0 0.0
    %4942 = vmatprep.subr.mxu0 0.0
    %4943 = vmatpush1.xpose.msra.mxu0 0.0
    %4944 = vmatprep.subr.mxu0 0.0
    %4945 = vmatpush1.xpose.msra.mxu0 0.0
    %4946 = vmatprep.subr.mxu0 0.0
    %4947 = vmatpush1.xpose.msra.mxu0 0.0
    %4948 = vmatprep.subr.mxu0 0.0
    %4949 = vmatpush1.xpose.msra.mxu0 0.0
    %4950 = vmatprep.mubr.f32.mxu0 0.0
    %4951 = vmatmul.mubr.f32.gmra.mrb[0].mxu0 %v4791
    %v4952 = vpop.f32.mrb[0].mxu0
    %v4953 = vadd.f32 %v4774, %v4952
    %v4954 = vpop.f32.mrb[0].mxu0
    %4955 = vmatprep.mubr.f32.mxu0 0.0
    %4956 = vmatmul.mubr.f32.gmra.mrb[0].mxu0 %v4794
    %v4957 = vpop.f32.mrb[0].mxu0
    %v4958 = vadd.f32 %v4775, %v4957
    %v4959 = vpop.f32.mrb[0].mxu0
    %4960 = vmatprep.mubr.f32.mxu0 0.0
    %4961 = vmatmul.mubr.f32.gmra.mrb[0].mxu0 %v4797
    %v4962 = vpop.f32.mrb[0].mxu0
    %v4963 = vadd.f32 %v4776, %v4962
    %v4964 = vpop.f32.mrb[0].mxu0
    %4965 = vmatprep.mubr.f32.mxu0 0.0
    %4966 = vmatmul.mubr.f32.gmra.mrb[0].mxu0 %v4800
    %v4967 = vpop.f32.mrb[0].mxu0
    %v4968 = vadd.f32 %v4777, %v4967
    %v4969 = vpop.f32.mrb[0].mxu0
    %4970 = vmatprep.mubr.f32.mxu0 0.0
    %4971 = vmatmul.mubr.f32.gmra.mrb[0].mxu0 %v4803
    %v4972 = vpop.f32.mrb[0].mxu0
    %v4973 = vadd.f32 %v4778, %v4972
    %v4974 = vpop.f32.mrb[0].mxu0
    %4975 = vmatprep.mubr.f32.mxu0 0.0
    %4976 = vmatmul.mubr.f32.gmra.mrb[0].mxu0 %v4806
    %v4977 = vpop.f32.mrb[0].mxu0
    %v4978 = vadd.f32 %v4779, %v4977
    %v4979 = vpop.f32.mrb[0].mxu0
    %4980 = vmatprep.mubr.f32.mxu0 0.0
    %4981 = vmatmul.mubr.f32.gmra.mrb[0].mxu0 %v4809
    %v4982 = vpop.f32.mrb[0].mxu0
    %v4983 = vadd.f32 %v4780, %v4982
    %v4984 = vpop.f32.mrb[0].mxu0
    %4985 = vmatprep.mubr.f32.mxu0 0.0
    %4986 = vmatmul.mubr.f32.gmra.mrb[0].mxu0 %v4812
    %v4987 = vpop.f32.mrb[0].mxu0
    %v4988 = vadd.f32 %v4781, %v4987
    %v4989 = vpop.f32.mrb[0].mxu0
    %4990 = vmatprep.mubr.f32.mxu0 0.0
    %4991 = vmatmul.mubr.f32.gmra.mrb[0].mxu0 %v4815
    %v4992 = vpop.f32.mrb[0].mxu0
    %v4993 = vadd.f32 %v4782, %v4992
    %v4994 = vpop.f32.mrb[0].mxu0
    %4995 = vmatprep.mubr.f32.mxu0 0.0
    %4996 = vmatmul.mubr.f32.gmra.mrb[0].mxu0 %v4818
    %v4997 = vpop.f32.mrb[0].mxu0
    %v4998 = vadd.f32 %v4783, %v4997
    %v4999 = vpop.f32.mrb[0].mxu0
    %5000 = vmatprep.mubr.f32.mxu0 0.0
    %5001 = vmatmul.mubr.f32.gmra.mrb[0].mxu0 %v4821
    %v5002 = vpop.f32.mrb[0].mxu0
    %v5003 = vadd.f32 %v4784, %v5002
    %v5004 = vpop.f32.mrb[0].mxu0
    %5005 = vmatprep.mubr.f32.mxu0 0.0
    %5006 = vmatmul.mubr.f32.gmra.mrb[0].mxu0 %v4824
    %v5007 = vpop.f32.mrb[0].mxu0
    %v5008 = vadd.f32 %v4785, %v5007
    %v5009 = vpop.f32.mrb[0].mxu0
    %5010 = vmatprep.mubr.f32.mxu0 0.0
    %5011 = vmatmul.mubr.f32.gmra.mrb[0].mxu0 %v4827
    %v5012 = vpop.f32.mrb[0].mxu0
    %v5013 = vadd.f32 %v4786, %v5012
    %v5014 = vpop.f32.mrb[0].mxu0
    %5015 = vmatprep.mubr.f32.mxu0 0.0
    %5016 = vmatmul.mubr.f32.gmra.mrb[0].mxu0 %v4830
    %v5017 = vpop.f32.mrb[0].mxu0
    %v5018 = vadd.f32 %v4787, %v5017
    %v5019 = vpop.f32.mrb[0].mxu0
    %5020 = vmatprep.mubr.f32.mxu0 0.0
    %5021 = vmatmul.mubr.f32.gmra.mrb[0].mxu0 %v4833
    %v5022 = vpop.f32.mrb[0].mxu0
    %v5023 = vadd.f32 %v4788, %v5022
    %v5024 = vpop.f32.mrb[0].mxu0
    %5025 = vmatprep.mubr.f32.mxu0 0.0
    %5026 = vmatmul.mubr.f32.gmra.mrb[0].mxu0 %v4836
    %v5027 = vpop.f32.mrb[0].mxu0
    %v5028 = vadd.f32 %v4789, %v5027
    %v5029 = vpop.f32.mrb[0].mxu0
    %5030 = vdwg.mxu0
    %5031 = vmax.xlane.f32.xlu0 %v4953
    %v5032 = vpop.xlane.xlu0 %5031
    %5033 = vmax.xlane.f32.xlu0 %v4958
    %v5034 = vpop.xlane.xlu0 %5033
    %5035 = vmax.xlane.f32.xlu0 %v4963
    %v5036 = vpop.xlane.xlu0 %5035
    %5037 = vmax.xlane.f32.xlu0 %v4968
    %v5038 = vpop.xlane.xlu0 %5037
    %5039 = vmax.xlane.f32.xlu0 %v4973
    %v5040 = vpop.xlane.xlu0 %5039
    %5041 = vmax.xlane.f32.xlu0 %v4978
    %v5042 = vpop.xlane.xlu0 %5041
    %5043 = vmax.xlane.f32.xlu0 %v4983
    %v5044 = vpop.xlane.xlu0 %5043
    %5045 = vmax.xlane.f32.xlu0 %v4988
    %v5046 = vpop.xlane.xlu0 %5045
    %5047 = vmax.xlane.f32.xlu0 %v4993
    %v5048 = vpop.xlane.xlu0 %5047
    %5049 = vmax.xlane.f32.xlu0 %v4998
    %v5050 = vpop.xlane.xlu0 %5049
    %5051 = vmax.xlane.f32.xlu0 %v5003
    %v5052 = vpop.xlane.xlu0 %5051
    %5053 = vmax.xlane.f32.xlu0 %v5008
    %v5054 = vpop.xlane.xlu0 %5053
    %5055 = vmax.xlane.f32.xlu0 %v5013
    %v5056 = vpop.xlane.xlu0 %5055
    %5057 = vmax.xlane.f32.xlu0 %v5018
    %v5058 = vpop.xlane.xlu0 %5057
    %5059 = vmax.xlane.f32.xlu0 %v5023
    %v5060 = vpop.xlane.xlu0 %5059
    %5061 = vmax.xlane.f32.xlu0 %v5028
    %v5062 = vpop.xlane.xlu0 %5061
    %v5063 = vsub.f32 %v4953, %v5032
    %v5064 = vsub.f32 %v4958, %v5034
    %v5065 = vsub.f32 %v4963, %v5036
    %v5066 = vsub.f32 %v4968, %v5038
    %v5067 = vsub.f32 %v4973, %v5040
    %v5068 = vsub.f32 %v4978, %v5042
    %v5069 = vsub.f32 %v4983, %v5044
    %v5070 = vsub.f32 %v4988, %v5046
    %v5071 = vsub.f32 %v4993, %v5048
    %v5072 = vsub.f32 %v4998, %v5050
    %v5073 = vsub.f32 %v5003, %v5052
    %v5074 = vsub.f32 %v5008, %v5054
    %v5075 = vsub.f32 %v5013, %v5056
    %v5076 = vsub.f32 %v5018, %v5058
    %v5077 = vsub.f32 %v5023, %v5060
    %v5078 = vsub.f32 %v5028, %v5062
    %v5079 = vmul.f32 %v5063, 1.442695
    %v5080 = vpow.pop %v5079
    %v5081 = vmul.f32 %v5064, 1.442695
    %v5082 = vpow.pop %v5081
    %v5083 = vmul.f32 %v5065, 1.442695
    %v5084 = vpow.pop %v5083
    %v5085 = vmul.f32 %v5066, 1.442695
    %v5086 = vpow.pop %v5085
    %v5087 = vmul.f32 %v5067, 1.442695
    %v5088 = vpow.pop %v5087
    %v5089 = vmul.f32 %v5068, 1.442695
    %v5090 = vpow.pop %v5089
    %v5091 = vmul.f32 %v5069, 1.442695
    %v5092 = vpow.pop %v5091
    %v5093 = vmul.f32 %v5070, 1.442695
    %v5094 = vpow.pop %v5093
    %v5095 = vmul.f32 %v5071, 1.442695
    %v5096 = vpow.pop %v5095
    %v5097 = vmul.f32 %v5072, 1.442695
    %v5098 = vpow.pop %v5097
    %v5099 = vmul.f32 %v5073, 1.442695
    %v5100 = vpow.pop %v5099
    %v5101 = vmul.f32 %v5074, 1.442695
    %v5102 = vpow.pop %v5101
    %v5103 = vmul.f32 %v5075, 1.442695
    %v5104 = vpow.pop %v5103
    %v5105 = vmul.f32 %v5076, 1.442695
    %v5106 = vpow.pop %v5105
    %v5107 = vmul.f32 %v5077, 1.442695
    %v5108 = vpow.pop %v5107
    %v5109 = vmul.f32 %v5078, 1.442695
    %v5110 = vpow.pop %v5109
    %5111 = vadd.xlane.f32.xlu0 %v5080
    %v5112 = vpop.xlane.xlu0 %5111
    %5113 = vadd.xlane.f32.xlu0 %v5082
    %v5114 = vpop.xlane.xlu0 %5113
    %5115 = vadd.xlane.f32.xlu0 %v5084
    %v5116 = vpop.xlane.xlu0 %5115
    %5117 = vadd.xlane.f32.xlu0 %v5086
    %v5118 = vpop.xlane.xlu0 %5117
    %5119 = vadd.xlane.f32.xlu0 %v5088
    %v5120 = vpop.xlane.xlu0 %5119
    %5121 = vadd.xlane.f32.xlu0 %v5090
    %v5122 = vpop.xlane.xlu0 %5121
    %5123 = vadd.xlane.f32.xlu0 %v5092
    %v5124 = vpop.xlane.xlu0 %5123
    %5125 = vadd.xlane.f32.xlu0 %v5094
    %v5126 = vpop.xlane.xlu0 %5125
    %5127 = vadd.xlane.f32.xlu0 %v5096
    %v5128 = vpop.xlane.xlu0 %5127
    %5129 = vadd.xlane.f32.xlu0 %v5098
    %v5130 = vpop.xlane.xlu0 %5129
    %5131 = vadd.xlane.f32.xlu0 %v5100
    %v5132 = vpop.xlane.xlu0 %5131
    %5133 = vadd.xlane.f32.xlu0 %v5102
    %v5134 = vpop.xlane.xlu0 %5133
    %5135 = vadd.xlane.f32.xlu0 %v5104
    %v5136 = vpop.xlane.xlu0 %5135
    %5137 = vadd.xlane.f32.xlu0 %v5106
    %v5138 = vpop.xlane.xlu0 %5137
    %5139 = vadd.xlane.f32.xlu0 %v5108
    %v5140 = vpop.xlane.xlu0 %5139
    %5141 = vadd.xlane.f32.xlu0 %v5110
    %v5142 = vpop.xlane.xlu0 %5141
    %v5143 = vrcp.pop %v5112
    %v5144 = vrcp.pop %v5114
    %v5145 = vrcp.pop %v5116
    %v5146 = vrcp.pop %v5118
    %v5147 = vrcp.pop %v5120
    %v5148 = vrcp.pop %v5122
    %v5149 = vrcp.pop %v5124
    %v5150 = vrcp.pop %v5126
    %v5151 = vrcp.pop %v5128
    %v5152 = vrcp.pop %v5130
    %v5153 = vrcp.pop %v5132
    %v5154 = vrcp.pop %v5134
    %v5155 = vrcp.pop %v5136
    %v5156 = vrcp.pop %v5138
    %v5157 = vrcp.pop %v5140
    %v5158 = vrcp.pop %v5142
    %v5159 = vmul.f32 %v5080, %v5143
    %v5160 = vmul.f32 %v5082, %v5144
    %v5161 = vmul.f32 %v5084, %v5145
    %v5162 = vmul.f32 %v5086, %v5146
    %v5163 = vmul.f32 %v5088, %v5147
    %v5164 = vmul.f32 %v5090, %v5148
    %v5165 = vmul.f32 %v5092, %v5149
    %v5166 = vmul.f32 %v5094, %v5150
    %v5167 = vmul.f32 %v5096, %v5151
    %v5168 = vmul.f32 %v5098, %v5152
    %v5169 = vmul.f32 %v5100, %v5153
    %v5170 = vmul.f32 %v5102, %v5154
    %v5171 = vmul.f32 %v5104, %v5155
    %v5172 = vmul.f32 %v5106, %v5156
    %v5173 = vmul.f32 %v5108, %v5157
    %v5174 = vmul.f32 %v5110, %v5158
    %5175 = vmatprep.subr.mxu0 0.0
    %5176 = vmatpush1.msra.mxu0 %v4695
    %5177 = vmatprep.subr.mxu0 0.0
    %5178 = vmatpush1.msra.mxu0 %v4700
    %5179 = vmatprep.subr.mxu0 0.0
    %5180 = vmatpush1.msra.mxu0 %v4705
    %5181 = vmatprep.subr.mxu0 0.0
    %5182 = vmatpush1.msra.mxu0 %v4710
    %5183 = vmatprep.subr.mxu0 0.0
    %5184 = vmatpush1.msra.mxu0 %v4715
    %5185 = vmatprep.subr.mxu0 0.0
    %5186 = vmatpush1.msra.mxu0 %v4720
    %5187 = vmatprep.subr.mxu0 0.0
    %5188 = vmatpush1.msra.mxu0 %v4725
    %5189 = vmatprep.subr.mxu0 0.0
    %5190 = vmatpush1.msra.mxu0 %v4730
    %5191 = vmatprep.subr.mxu0 0.0
    %5192 = vmatpush1.msra.mxu0 %v4735
    %5193 = vmatprep.subr.mxu0 0.0
    %5194 = vmatpush1.msra.mxu0 %v4740
    %5195 = vmatprep.subr.mxu0 0.0
    %5196 = vmatpush1.msra.mxu0 %v4745
    %5197 = vmatprep.subr.mxu0 0.0
    %5198 = vmatpush1.msra.mxu0 %v4750
    %5199 = vmatprep.subr.mxu0 0.0
    %5200 = vmatpush1.msra.mxu0 %v4755
    %5201 = vmatprep.subr.mxu0 0.0
    %5202 = vmatpush1.msra.mxu0 %v4760
    %5203 = vmatprep.subr.mxu0 0.0
    %5204 = vmatpush1.msra.mxu0 %v4765
    %5205 = vmatprep.subr.mxu0 0.0
    %5206 = vmatpush1.msra.mxu0 %v4770
    %5207 = vmatprep.subr.mxu0 0.0
    %5208 = vmatpush1.msra.mxu0 0.0
    %5209 = vmatprep.subr.mxu0 0.0
    %5210 = vmatpush1.msra.mxu0 0.0
    %5211 = vmatprep.subr.mxu0 0.0
    %5212 = vmatpush1.msra.mxu0 0.0
    %5213 = vmatprep.subr.mxu0 0.0
    %5214 = vmatpush1.msra.mxu0 0.0
    %5215 = vmatprep.subr.mxu0 0.0
    %5216 = vmatpush1.msra.mxu0 0.0
    %5217 = vmatprep.subr.mxu0 0.0
    %5218 = vmatpush1.msra.mxu0 0.0
    %5219 = vmatprep.subr.mxu0 0.0
    %5220 = vmatpush1.msra.mxu0 0.0
    %5221 = vmatprep.subr.mxu0 0.0
    %5222 = vmatpush1.msra.mxu0 0.0
    %5223 = vmatprep.subr.mxu0 0.0
    %5224 = vmatpush1.msra.mxu0 0.0
    %5225 = vmatprep.subr.mxu0 0.0
    %5226 = vmatpush1.msra.mxu0 0.0
    %5227 = vmatprep.subr.mxu0 0.0
    %5228 = vmatpush1.msra.mxu0 0.0
    %5229 = vmatprep.subr.mxu0 0.0
    %5230 = vmatpush1.msra.mxu0 0.0
    %5231 = vmatprep.subr.mxu0 0.0
    %5232 = vmatpush1.msra.mxu0 0.0
    %5233 = vmatprep.subr.mxu0 0.0
    %5234 = vmatpush1.msra.mxu0 0.0
    %5235 = vmatprep.subr.mxu0 0.0
    %5236 = vmatpush1.msra.mxu0 0.0
    %5237 = vmatprep.subr.mxu0 0.0
    %5238 = vmatpush1.msra.mxu0 0.0
    %5239 = vmatprep.mubr.f32.mxu0 0.0
    %5240 = vmatmul.mubr.f32.gmra.mrb[0].mxu0 %v5159
    %v5241 = vpop.f32.mrb[0].mxu0
    %v5242 = vadd.f32 0.0, %v5241
    %v5243 = vpop.f32.mrb[0].mxu0
    %5244 = vmatprep.mubr.f32.mxu0 0.0
    %5245 = vmatmul.mubr.f32.gmra.mrb[0].mxu0 %v5160
    %v5246 = vpop.f32.mrb[0].mxu0
    %v5247 = vadd.f32 0.0, %v5246
    %v5248 = vpop.f32.mrb[0].mxu0
    %5249 = vmatprep.mubr.f32.mxu0 0.0
    %5250 = vmatmul.mubr.f32.gmra.mrb[0].mxu0 %v5161
    %v5251 = vpop.f32.mrb[0].mxu0
    %v5252 = vadd.f32 0.0, %v5251
    %v5253 = vpop.f32.mrb[0].mxu0
    %5254 = vmatprep.mubr.f32.mxu0 0.0
    %5255 = vmatmul.mubr.f32.gmra.mrb[0].mxu0 %v5162
    %v5256 = vpop.f32.mrb[0].mxu0
    %v5257 = vadd.f32 0.0, %v5256
    %v5258 = vpop.f32.mrb[0].mxu0
    %5259 = vmatprep.mubr.f32.mxu0 0.0
    %5260 = vmatmul.mubr.f32.gmra.mrb[0].mxu0 %v5163
    %v5261 = vpop.f32.mrb[0].mxu0
    %v5262 = vadd.f32 0.0, %v5261
    %v5263 = vpop.f32.mrb[0].mxu0
    %5264 = vmatprep.mubr.f32.mxu0 0.0
    %5265 = vmatmul.mubr.f32.gmra.mrb[0].mxu0 %v5164
    %v5266 = vpop.f32.mrb[0].mxu0
    %v5267 = vadd.f32 0.0, %v5266
    %v5268 = vpop.f32.mrb[0].mxu0
    %5269 = vmatprep.mubr.f32.mxu0 0.0
    %5270 = vmatmul.mubr.f32.gmra.mrb[0].mxu0 %v5165
    %v5271 = vpop.f32.mrb[0].mxu0
    %v5272 = vadd.f32 0.0, %v5271
    %v5273 = vpop.f32.mrb[0].mxu0
    %5274 = vmatprep.mubr.f32.mxu0 0.0
    %5275 = vmatmul.mubr.f32.gmra.mrb[0].mxu0 %v5166
    %v5276 = vpop.f32.mrb[0].mxu0
    %v5277 = vadd.f32 0.0, %v5276
    %v5278 = vpop.f32.mrb[0].mxu0
    %5279 = vmatprep.mubr.f32.mxu0 0.0
    %5280 = vmatmul.mubr.f32.gmra.mrb[0].mxu0 %v5167
    %v5281 = vpop.f32.mrb[0].mxu0
    %v5282 = vadd.f32 0.0, %v5281
    %v5283 = vpop.f32.mrb[0].mxu0
    %5284 = vmatprep.mubr.f32.mxu0 0.0
    %5285 = vmatmul.mubr.f32.gmra.mrb[0].mxu0 %v5168
    %v5286 = vpop.f32.mrb[0].mxu0
    %v5287 = vadd.f32 0.0, %v5286
    %v5288 = vpop.f32.mrb[0].mxu0
    %5289 = vmatprep.mubr.f32.mxu0 0.0
    %5290 = vmatmul.mubr.f32.gmra.mrb[0].mxu0 %v5169
    %v5291 = vpop.f32.mrb[0].mxu0
    %v5292 = vadd.f32 0.0, %v5291
    %v5293 = vpop.f32.mrb[0].mxu0
    %5294 = vmatprep.mubr.f32.mxu0 0.0
    %5295 = vmatmul.mubr.f32.gmra.mrb[0].mxu0 %v5170
    %v5296 = vpop.f32.mrb[0].mxu0
    %v5297 = vadd.f32 0.0, %v5296
    %v5298 = vpop.f32.mrb[0].mxu0
    %5299 = vmatprep.mubr.f32.mxu0 0.0
    %5300 = vmatmul.mubr.f32.gmra.mrb[0].mxu0 %v5171
    %v5301 = vpop.f32.mrb[0].mxu0
    %v5302 = vadd.f32 0.0, %v5301
    %v5303 = vpop.f32.mrb[0].mxu0
    %5304 = vmatprep.mubr.f32.mxu0 0.0
    %5305 = vmatmul.mubr.f32.gmra.mrb[0].mxu0 %v5172
    %v5306 = vpop.f32.mrb[0].mxu0
    %v5307 = vadd.f32 0.0, %v5306
    %v5308 = vpop.f32.mrb[0].mxu0
    %5309 = vmatprep.mubr.f32.mxu0 0.0
    %5310 = vmatmul.mubr.f32.gmra.mrb[0].mxu0 %v5173
    %v5311 = vpop.f32.mrb[0].mxu0
    %v5312 = vadd.f32 0.0, %v5311
    %v5313 = vpop.f32.mrb[0].mxu0
    %5314 = vmatprep.mubr.f32.mxu0 0.0
    %5315 = vmatmul.mubr.f32.gmra.mrb[0].mxu0 %v5174
    %v5316 = vpop.f32.mrb[0].mxu0
    %v5317 = vadd.f32 0.0, %v5316
    %v5318 = vpop.f32.mrb[0].mxu0
    %5319 = vdwg.mxu0
    %s5320 = scalar_lea.vmem [#allocation7], 32
    %v5321 = vld [vmem:[%s5320] sm:$0xff]
    %v5322 = vld [vmem:[%s5320 + $0x8] sm:$0xff]
    %s5323 = scalar_lea.vmem %s2, 224
    %v5324 = vld [vmem:[%s5323] sm:$0xff]
    %v5325 = vld [vmem:[%s5323 + $0x8] sm:$0xff]
    %v5326 = vld [vmem:[%s5323 + $0x10] sm:$0xff]
    %v5327 = vld [vmem:[%s5323 + $0x18] sm:$0xff]
    %s5328 = scalar_lea.vmem [#allocation5], 7
    %v5329 = vld [vmem:[%s5328] sm:$0x1]
    %v5331 = vlaneseq
    %v5332 = vshrl.u32 %v5331, 7
    %v5333 = vsub.s32 0, %v5332
    %v5334 = vrot.slane %v5329, %v5333
    %5336 = vmatprep.subr.mxu0 0.0
    %5337 = vmatpush1.msra.mxu0 %v5324
    %5338 = vmatprep.subr.mxu0 0.0
    %5339 = vmatpush1.msra.mxu0 %v5325
    %5340 = vmatprep.subr.mxu0 0.0
    %5341 = vmatpush1.msra.mxu0 %v5326
    %5342 = vmatprep.subr.mxu0 0.0
    %5343 = vmatpush1.msra.mxu0 %v5327
    %5344 = vmatprep.subr.mxu0 0.0
    %5345 = vmatpush1.msra.mxu0 0.0
    %5346 = vmatprep.subr.mxu0 0.0
    %5347 = vmatpush1.msra.mxu0 0.0
    %5348 = vmatprep.subr.mxu0 0.0
    %5349 = vmatpush1.msra.mxu0 0.0
    %5350 = vmatprep.subr.mxu0 0.0
    %5351 = vmatpush1.msra.mxu0 0.0
    %5352 = vmatprep.subr.mxu0 0.0
    %5353 = vmatpush1.msra.mxu0 0.0
    %5354 = vmatprep.subr.mxu0 0.0
    %5355 = vmatpush1.msra.mxu0 0.0
    %5356 = vmatprep.subr.mxu0 0.0
    %5357 = vmatpush1.msra.mxu0 0.0
    %5358 = vmatprep.subr.mxu0 0.0
    %5359 = vmatpush1.msra.mxu0 0.0
    %5360 = vmatprep.subr.mxu0 0.0
    %5361 = vmatpush1.msra.mxu0 0.0
    %5362 = vmatprep.subr.mxu0 0.0
    %5363 = vmatpush1.msra.mxu0 0.0
    %5364 = vmatprep.subr.mxu0 0.0
    %5365 = vmatpush1.msra.mxu0 0.0
    %5366 = vmatprep.subr.mxu0 0.0
    %5367 = vmatpush1.msra.mxu0 0.0
    %5368 = vmatprep.subr.mxu0 0.0
    %5369 = vmatpush1.msra.mxu0 0.0
    %5370 = vmatprep.subr.mxu0 0.0
    %5371 = vmatpush1.msra.mxu0 0.0
    %5372 = vmatprep.subr.mxu0 0.0
    %5373 = vmatpush1.msra.mxu0 0.0
    %5374 = vmatprep.subr.mxu0 0.0
    %5375 = vmatpush1.msra.mxu0 0.0
    %5376 = vmatprep.subr.mxu0 0.0
    %5377 = vmatpush1.msra.mxu0 0.0
    %5378 = vmatprep.subr.mxu0 0.0
    %5379 = vmatpush1.msra.mxu0 0.0
    %5380 = vmatprep.subr.mxu0 0.0
    %5381 = vmatpush1.msra.mxu0 0.0
    %5382 = vmatprep.subr.mxu0 0.0
    %5383 = vmatpush1.msra.mxu0 0.0
    %5384 = vmatprep.subr.mxu0 0.0
    %5385 = vmatpush1.msra.mxu0 0.0
    %5386 = vmatprep.subr.mxu0 0.0
    %5387 = vmatpush1.msra.mxu0 0.0
    %5388 = vmatprep.subr.mxu0 0.0
    %5389 = vmatpush1.msra.mxu0 0.0
    %5390 = vmatprep.subr.mxu0 0.0
    %5391 = vmatpush1.msra.mxu0 0.0
    %5392 = vmatprep.subr.mxu0 0.0
    %5393 = vmatpush1.msra.mxu0 0.0
    %5394 = vmatprep.subr.mxu0 0.0
    %5395 = vmatpush1.msra.mxu0 0.0
    %5396 = vmatprep.subr.mxu0 0.0
    %5397 = vmatpush1.msra.mxu0 0.0
    %5398 = vmatprep.subr.mxu0 0.0
    %5399 = vmatpush1.msra.mxu0 0.0
    %5400 = vmatprep.mubr.f32.mxu0 0.0
    %5401 = vmatmul.mubr.f32.gmra.mrb[0].mxu0 %v4265
    %v5402 = vpop.f32.mrb[0].mxu0
    %v5403 = vadd.f32 %v5334, %v5402
    %v5404 = vpop.f32.mrb[0].mxu0
    %5405 = vmatprep.mubr.f32.mxu0 0.0
    %5406 = vmatmul.mubr.f32.gmra.mrb[0].mxu0 %v4268
    %v5407 = vpop.f32.mrb[0].mxu0
    %v5408 = vadd.f32 %v5334, %v5407
    %v5409 = vpop.f32.mrb[0].mxu0
    %5410 = vmatprep.mubr.f32.mxu0 0.0
    %5411 = vmatmul.mubr.f32.gmra.mrb[0].mxu0 %v4271
    %v5412 = vpop.f32.mrb[0].mxu0
    %v5413 = vadd.f32 %v5334, %v5412
    %v5414 = vpop.f32.mrb[0].mxu0
    %5415 = vmatprep.mubr.f32.mxu0 0.0
    %5416 = vmatmul.mubr.f32.gmra.mrb[0].mxu0 %v4274
    %v5417 = vpop.f32.mrb[0].mxu0
    %v5418 = vadd.f32 %v5334, %v5417
    %v5419 = vpop.f32.mrb[0].mxu0
    %5420 = vmatprep.mubr.f32.mxu0 0.0
    %5421 = vmatmul.mubr.f32.gmra.mrb[0].mxu0 %v4277
    %v5422 = vpop.f32.mrb[0].mxu0
    %v5423 = vadd.f32 %v5334, %v5422
    %v5424 = vpop.f32.mrb[0].mxu0
    %5425 = vmatprep.mubr.f32.mxu0 0.0
    %5426 = vmatmul.mubr.f32.gmra.mrb[0].mxu0 %v4280
    %v5427 = vpop.f32.mrb[0].mxu0
    %v5428 = vadd.f32 %v5334, %v5427
    %v5429 = vpop.f32.mrb[0].mxu0
    %5430 = vmatprep.mubr.f32.mxu0 0.0
    %5431 = vmatmul.mubr.f32.gmra.mrb[0].mxu0 %v4283
    %v5432 = vpop.f32.mrb[0].mxu0
    %v5433 = vadd.f32 %v5334, %v5432
    %v5434 = vpop.f32.mrb[0].mxu0
    %5435 = vmatprep.mubr.f32.mxu0 0.0
    %5436 = vmatmul.mubr.f32.gmra.mrb[0].mxu0 %v4286
    %v5437 = vpop.f32.mrb[0].mxu0
    %v5438 = vadd.f32 %v5334, %v5437
    %v5439 = vpop.f32.mrb[0].mxu0
    %5440 = vmatprep.mubr.f32.mxu0 0.0
    %5441 = vmatmul.mubr.f32.gmra.mrb[0].mxu0 %v4289
    %v5442 = vpop.f32.mrb[0].mxu0
    %v5443 = vadd.f32 %v5334, %v5442
    %v5444 = vpop.f32.mrb[0].mxu0
    %5445 = vmatprep.mubr.f32.mxu0 0.0
    %5446 = vmatmul.mubr.f32.gmra.mrb[0].mxu0 %v4292
    %v5447 = vpop.f32.mrb[0].mxu0
    %v5448 = vadd.f32 %v5334, %v5447
    %v5449 = vpop.f32.mrb[0].mxu0
    %5450 = vmatprep.mubr.f32.mxu0 0.0
    %5451 = vmatmul.mubr.f32.gmra.mrb[0].mxu0 %v4295
    %v5452 = vpop.f32.mrb[0].mxu0
    %v5453 = vadd.f32 %v5334, %v5452
    %v5454 = vpop.f32.mrb[0].mxu0
    %5455 = vmatprep.mubr.f32.mxu0 0.0
    %5456 = vmatmul.mubr.f32.gmra.mrb[0].mxu0 %v4298
    %v5457 = vpop.f32.mrb[0].mxu0
    %v5458 = vadd.f32 %v5334, %v5457
    %v5459 = vpop.f32.mrb[0].mxu0
    %5460 = vmatprep.mubr.f32.mxu0 0.0
    %5461 = vmatmul.mubr.f32.gmra.mrb[0].mxu0 %v4301
    %v5462 = vpop.f32.mrb[0].mxu0
    %v5463 = vadd.f32 %v5334, %v5462
    %v5464 = vpop.f32.mrb[0].mxu0
    %5465 = vmatprep.mubr.f32.mxu0 0.0
    %5466 = vmatmul.mubr.f32.gmra.mrb[0].mxu0 %v4304
    %v5467 = vpop.f32.mrb[0].mxu0
    %v5468 = vadd.f32 %v5334, %v5467
    %v5469 = vpop.f32.mrb[0].mxu0
    %5470 = vmatprep.mubr.f32.mxu0 0.0
    %5471 = vmatmul.mubr.f32.gmra.mrb[0].mxu0 %v4307
    %v5472 = vpop.f32.mrb[0].mxu0
    %v5473 = vadd.f32 %v5334, %v5472
    %v5474 = vpop.f32.mrb[0].mxu0
    %5475 = vmatprep.mubr.f32.mxu0 0.0
    %5476 = vmatmul.mubr.f32.gmra.mrb[0].mxu0 %v4310
    %v5477 = vpop.f32.mrb[0].mxu0
    %v5478 = vadd.f32 %v5334, %v5477
    %v5479 = vpop.f32.mrb[0].mxu0
    %5480 = vdwg.mxu0
    %s5481 = scalar_lea.vmem %s2, 288
    %v5482 = vld [vmem:[%s5481] sm:$0xff]
    %v5483 = vld [vmem:[%s5481 + $0x8] sm:$0xff]
    %v5484 = vld [vmem:[%s5481 + $0x10] sm:$0xff]
    %v5485 = vld [vmem:[%s5481 + $0x18] sm:$0xff]
    %s5486 = scalar_lea.vmem [#allocation5], 9
    %v5487 = vld [vmem:[%s5486] sm:$0x1]
    %v5489 = vlaneseq
    %v5490 = vshrl.u32 %v5489, 7
    %v5491 = vsub.s32 0, %v5490
    %v5492 = vrot.slane %v5487, %v5491
    %5494 = vmatprep.subr.mxu0 0.0
    %5495 = vmatpush1.msra.mxu0 %v5482
    %5496 = vmatprep.subr.mxu0 0.0
    %5497 = vmatpush1.msra.mxu0 %v5483
    %5498 = vmatprep.subr.mxu0 0.0
    %5499 = vmatpush1.msra.mxu0 %v5484
    %5500 = vmatprep.subr.mxu0 0.0
    %5501 = vmatpush1.msra.mxu0 %v5485
    %5502 = vmatprep.subr.mxu0 0.0
    %5503 = vmatpush1.msra.mxu0 0.0
    %5504 = vmatprep.subr.mxu0 0.0
    %5505 = vmatpush1.msra.mxu0 0.0
    %5506 = vmatprep.subr.mxu0 0.0
    %5507 = vmatpush1.msra.mxu0 0.0
    %5508 = vmatprep.subr.mxu0 0.0
    %5509 = vmatpush1.msra.mxu0 0.0
    %5510 = vmatprep.subr.mxu0 0.0
    %5511 = vmatpush1.msra.mxu0 0.0
    %5512 = vmatprep.subr.mxu0 0.0
    %5513 = vmatpush1.msra.mxu0 0.0
    %5514 = vmatprep.subr.mxu0 0.0
    %5515 = vmatpush1.msra.mxu0 0.0
    %5516 = vmatprep.subr.mxu0 0.0
    %5517 = vmatpush1.msra.mxu0 0.0
    %5518 = vmatprep.subr.mxu0 0.0
    %5519 = vmatpush1.msra.mxu0 0.0
    %5520 = vmatprep.subr.mxu0 0.0
    %5521 = vmatpush1.msra.mxu0 0.0
    %5522 = vmatprep.subr.mxu0 0.0
    %5523 = vmatpush1.msra.mxu0 0.0
    %5524 = vmatprep.subr.mxu0 0.0
    %5525 = vmatpush1.msra.mxu0 0.0
    %5526 = vmatprep.subr.mxu0 0.0
    %5527 = vmatpush1.msra.mxu0 0.0
    %5528 = vmatprep.subr.mxu0 0.0
    %5529 = vmatpush1.msra.mxu0 0.0
    %5530 = vmatprep.subr.mxu0 0.0
    %5531 = vmatpush1.msra.mxu0 0.0
    %5532 = vmatprep.subr.mxu0 0.0
    %5533 = vmatpush1.msra.mxu0 0.0
    %5534 = vmatprep.subr.mxu0 0.0
    %5535 = vmatpush1.msra.mxu0 0.0
    %5536 = vmatprep.subr.mxu0 0.0
    %5537 = vmatpush1.msra.mxu0 0.0
    %5538 = vmatprep.subr.mxu0 0.0
    %5539 = vmatpush1.msra.mxu0 0.0
    %5540 = vmatprep.subr.mxu0 0.0
    %5541 = vmatpush1.msra.mxu0 0.0
    %5542 = vmatprep.subr.mxu0 0.0
    %5543 = vmatpush1.msra.mxu0 0.0
    %5544 = vmatprep.subr.mxu0 0.0
    %5545 = vmatpush1.msra.mxu0 0.0
    %5546 = vmatprep.subr.mxu0 0.0
    %5547 = vmatpush1.msra.mxu0 0.0
    %5548 = vmatprep.subr.mxu0 0.0
    %5549 = vmatpush1.msra.mxu0 0.0
    %5550 = vmatprep.subr.mxu0 0.0
    %5551 = vmatpush1.msra.mxu0 0.0
    %5552 = vmatprep.subr.mxu0 0.0
    %5553 = vmatpush1.msra.mxu0 0.0
    %5554 = vmatprep.subr.mxu0 0.0
    %5555 = vmatpush1.msra.mxu0 0.0
    %5556 = vmatprep.subr.mxu0 0.0
    %5557 = vmatpush1.msra.mxu0 0.0
    %5558 = vmatprep.mubr.f32.mxu0 0.0
    %5559 = vmatmul.mubr.f32.gmra.mrb[0].mxu0 %v4265
    %v5560 = vpop.f32.mrb[0].mxu0
    %v5561 = vadd.f32 %v5492, %v5560
    %v5562 = vpop.f32.mrb[0].mxu0
    %5563 = vmatprep.mubr.f32.mxu0 0.0
    %5564 = vmatmul.mubr.f32.gmra.mrb[0].mxu0 %v4268
    %v5565 = vpop.f32.mrb[0].mxu0
    %v5566 = vadd.f32 %v5492, %v5565
    %v5567 = vpop.f32.mrb[0].mxu0
    %5568 = vmatprep.mubr.f32.mxu0 0.0
    %5569 = vmatmul.mubr.f32.gmra.mrb[0].mxu0 %v4271
    %v5570 = vpop.f32.mrb[0].mxu0
    %v5571 = vadd.f32 %v5492, %v5570
    %v5572 = vpop.f32.mrb[0].mxu0
    %5573 = vmatprep.mubr.f32.mxu0 0.0
    %5574 = vmatmul.mubr.f32.gmra.mrb[0].mxu0 %v4274
    %v5575 = vpop.f32.mrb[0].mxu0
    %v5576 = vadd.f32 %v5492, %v5575
    %v5577 = vpop.f32.mrb[0].mxu0
    %5578 = vmatprep.mubr.f32.mxu0 0.0
    %5579 = vmatmul.mubr.f32.gmra.mrb[0].mxu0 %v4277
    %v5580 = vpop.f32.mrb[0].mxu0
    %v5581 = vadd.f32 %v5492, %v5580
    %v5582 = vpop.f32.mrb[0].mxu0
    %5583 = vmatprep.mubr.f32.mxu0 0.0
    %5584 = vmatmul.mubr.f32.gmra.mrb[0].mxu0 %v4280
    %v5585 = vpop.f32.mrb[0].mxu0
    %v5586 = vadd.f32 %v5492, %v5585
    %v5587 = vpop.f32.mrb[0].mxu0
    %5588 = vmatprep.mubr.f32.mxu0 0.0
    %5589 = vmatmul.mubr.f32.gmra.mrb[0].mxu0 %v4283
    %v5590 = vpop.f32.mrb[0].mxu0
    %v5591 = vadd.f32 %v5492, %v5590
    %v5592 = vpop.f32.mrb[0].mxu0
    %5593 = vmatprep.mubr.f32.mxu0 0.0
    %5594 = vmatmul.mubr.f32.gmra.mrb[0].mxu0 %v4286
    %v5595 = vpop.f32.mrb[0].mxu0
    %v5596 = vadd.f32 %v5492, %v5595
    %v5597 = vpop.f32.mrb[0].mxu0
    %5598 = vmatprep.mubr.f32.mxu0 0.0
    %5599 = vmatmul.mubr.f32.gmra.mrb[0].mxu0 %v4289
    %v5600 = vpop.f32.mrb[0].mxu0
    %v5601 = vadd.f32 %v5492, %v5600
    %v5602 = vpop.f32.mrb[0].mxu0
    %5603 = vmatprep.mubr.f32.mxu0 0.0
    %5604 = vmatmul.mubr.f32.gmra.mrb[0].mxu0 %v4292
    %v5605 = vpop.f32.mrb[0].mxu0
    %v5606 = vadd.f32 %v5492, %v5605
    %v5607 = vpop.f32.mrb[0].mxu0
    %5608 = vmatprep.mubr.f32.mxu0 0.0
    %5609 = vmatmul.mubr.f32.gmra.mrb[0].mxu0 %v4295
    %v5610 = vpop.f32.mrb[0].mxu0
    %v5611 = vadd.f32 %v5492, %v5610
    %v5612 = vpop.f32.mrb[0].mxu0
    %5613 = vmatprep.mubr.f32.mxu0 0.0
    %5614 = vmatmul.mubr.f32.gmra.mrb[0].mxu0 %v4298
    %v5615 = vpop.f32.mrb[0].mxu0
    %v5616 = vadd.f32 %v5492, %v5615
    %v5617 = vpop.f32.mrb[0].mxu0
    %5618 = vmatprep.mubr.f32.mxu0 0.0
    %5619 = vmatmul.mubr.f32.gmra.mrb[0].mxu0 %v4301
    %v5620 = vpop.f32.mrb[0].mxu0
    %v5621 = vadd.f32 %v5492, %v5620
    %v5622 = vpop.f32.mrb[0].mxu0
    %5623 = vmatprep.mubr.f32.mxu0 0.0
    %5624 = vmatmul.mubr.f32.gmra.mrb[0].mxu0 %v4304
    %v5625 = vpop.f32.mrb[0].mxu0
    %v5626 = vadd.f32 %v5492, %v5625
    %v5627 = vpop.f32.mrb[0].mxu0
    %5628 = vmatprep.mubr.f32.mxu0 0.0
    %5629 = vmatmul.mubr.f32.gmra.mrb[0].mxu0 %v4307
    %v5630 = vpop.f32.mrb[0].mxu0
    %v5631 = vadd.f32 %v5492, %v5630
    %v5632 = vpop.f32.mrb[0].mxu0
    %5633 = vmatprep.mubr.f32.mxu0 0.0
    %5634 = vmatmul.mubr.f32.gmra.mrb[0].mxu0 %v4310
    %v5635 = vpop.f32.mrb[0].mxu0
    %v5636 = vadd.f32 %v5492, %v5635
    %v5637 = vpop.f32.mrb[0].mxu0
    %5638 = vdwg.mxu0
    %s5639 = scalar_lea.vmem %s2, 352
    %v5640 = vld [vmem:[%s5639] sm:$0xff]
    %v5641 = vld [vmem:[%s5639 + $0x8] sm:$0xff]
    %v5642 = vld [vmem:[%s5639 + $0x10] sm:$0xff]
    %v5643 = vld [vmem:[%s5639 + $0x18] sm:$0xff]
    %s5644 = scalar_lea.vmem [#allocation5], 11
    %v5645 = vld [vmem:[%s5644] sm:$0x1]
    %v5647 = vlaneseq
    %v5648 = vshrl.u32 %v5647, 7
    %v5649 = vsub.s32 0, %v5648
    %v5650 = vrot.slane %v5645, %v5649
    %5652 = vmatprep.subr.mxu0 0.0
    %5653 = vmatpush1.msra.mxu0 %v5640
    %5654 = vmatprep.subr.mxu0 0.0
    %5655 = vmatpush1.msra.mxu0 %v5641
    %5656 = vmatprep.subr.mxu0 0.0
    %5657 = vmatpush1.msra.mxu0 %v5642
    %5658 = vmatprep.subr.mxu0 0.0
    %5659 = vmatpush1.msra.mxu0 %v5643
    %5660 = vmatprep.subr.mxu0 0.0
    %5661 = vmatpush1.msra.mxu0 0.0
    %5662 = vmatprep.subr.mxu0 0.0
    %5663 = vmatpush1.msra.mxu0 0.0
    %5664 = vmatprep.subr.mxu0 0.0
    %5665 = vmatpush1.msra.mxu0 0.0
    %5666 = vmatprep.subr.mxu0 0.0
    %5667 = vmatpush1.msra.mxu0 0.0
    %5668 = vmatprep.subr.mxu0 0.0
    %5669 = vmatpush1.msra.mxu0 0.0
    %5670 = vmatprep.subr.mxu0 0.0
    %5671 = vmatpush1.msra.mxu0 0.0
    %5672 = vmatprep.subr.mxu0 0.0
    %5673 = vmatpush1.msra.mxu0 0.0
    %5674 = vmatprep.subr.mxu0 0.0
    %5675 = vmatpush1.msra.mxu0 0.0
    %5676 = vmatprep.subr.mxu0 0.0
    %5677 = vmatpush1.msra.mxu0 0.0
    %5678 = vmatprep.subr.mxu0 0.0
    %5679 = vmatpush1.msra.mxu0 0.0
    %5680 = vmatprep.subr.mxu0 0.0
    %5681 = vmatpush1.msra.mxu0 0.0
    %5682 = vmatprep.subr.mxu0 0.0
    %5683 = vmatpush1.msra.mxu0 0.0
    %5684 = vmatprep.subr.mxu0 0.0
    %5685 = vmatpush1.msra.mxu0 0.0
    %5686 = vmatprep.subr.mxu0 0.0
    %5687 = vmatpush1.msra.mxu0 0.0
    %5688 = vmatprep.subr.mxu0 0.0
    %5689 = vmatpush1.msra.mxu0 0.0
    %5690 = vmatprep.subr.mxu0 0.0
    %5691 = vmatpush1.msra.mxu0 0.0
    %5692 = vmatprep.subr.mxu0 0.0
    %5693 = vmatpush1.msra.mxu0 0.0
    %5694 = vmatprep.subr.mxu0 0.0
    %5695 = vmatpush1.msra.mxu0 0.0
    %5696 = vmatprep.subr.mxu0 0.0
    %5697 = vmatpush1.msra.mxu0 0.0
    %5698 = vmatprep.subr.mxu0 0.0
    %5699 = vmatpush1.msra.mxu0 0.0
    %5700 = vmatprep.subr.mxu0 0.0
    %5701 = vmatpush1.msra.mxu0 0.0
    %5702 = vmatprep.subr.mxu0 0.0
    %5703 = vmatpush1.msra.mxu0 0.0
    %5704 = vmatprep.subr.mxu0 0.0
    %5705 = vmatpush1.msra.mxu0 0.0
    %5706 = vmatprep.subr.mxu0 0.0
    %5707 = vmatpush1.msra.mxu0 0.0
    %5708 = vmatprep.subr.mxu0 0.0
    %5709 = vmatpush1.msra.mxu0 0.0
    %5710 = vmatprep.subr.mxu0 0.0
    %5711 = vmatpush1.msra.mxu0 0.0
    %5712 = vmatprep.subr.mxu0 0.0
    %5713 = vmatpush1.msra.mxu0 0.0
    %5714 = vmatprep.subr.mxu0 0.0
    %5715 = vmatpush1.msra.mxu0 0.0
    %5716 = vmatprep.mubr.f32.mxu0 0.0
    %5717 = vmatmul.mubr.f32.gmra.mrb[0].mxu0 %v4265
    %v5718 = vpop.f32.mrb[0].mxu0
    %v5719 = vadd.f32 %v5650, %v5718
    %v5720 = vpop.f32.mrb[0].mxu0
    %5721 = vmatprep.mubr.f32.mxu0 0.0
    %5722 = vmatmul.mubr.f32.gmra.mrb[0].mxu0 %v4268
    %v5723 = vpop.f32.mrb[0].mxu0
    %v5724 = vadd.f32 %v5650, %v5723
    %v5725 = vpop.f32.mrb[0].mxu0
    %5726 = vmatprep.mubr.f32.mxu0 0.0
    %5727 = vmatmul.mubr.f32.gmra.mrb[0].mxu0 %v4271
    %v5728 = vpop.f32.mrb[0].mxu0
    %v5729 = vadd.f32 %v5650, %v5728
    %v5730 = vpop.f32.mrb[0].mxu0
    %5731 = vmatprep.mubr.f32.mxu0 0.0
    %5732 = vmatmul.mubr.f32.gmra.mrb[0].mxu0 %v4274
    %v5733 = vpop.f32.mrb[0].mxu0
    %v5734 = vadd.f32 %v5650, %v5733
    %v5735 = vpop.f32.mrb[0].mxu0
    %5736 = vmatprep.mubr.f32.mxu0 0.0
    %5737 = vmatmul.mubr.f32.gmra.mrb[0].mxu0 %v4277
    %v5738 = vpop.f32.mrb[0].mxu0
    %v5739 = vadd.f32 %v5650, %v5738
    %v5740 = vpop.f32.mrb[0].mxu0
    %5741 = vmatprep.mubr.f32.mxu0 0.0
    %5742 = vmatmul.mubr.f32.gmra.mrb[0].mxu0 %v4280
    %v5743 = vpop.f32.mrb[0].mxu0
    %v5744 = vadd.f32 %v5650, %v5743
    %v5745 = vpop.f32.mrb[0].mxu0
    %5746 = vmatprep.mubr.f32.mxu0 0.0
    %5747 = vmatmul.mubr.f32.gmra.mrb[0].mxu0 %v4283
    %v5748 = vpop.f32.mrb[0].mxu0
    %v5749 = vadd.f32 %v5650, %v5748
    %v5750 = vpop.f32.mrb[0].mxu0
    %5751 = vmatprep.mubr.f32.mxu0 0.0
    %5752 = vmatmul.mubr.f32.gmra.mrb[0].mxu0 %v4286
    %v5753 = vpop.f32.mrb[0].mxu0
    %v5754 = vadd.f32 %v5650, %v5753
    %v5755 = vpop.f32.mrb[0].mxu0
    %5756 = vmatprep.mubr.f32.mxu0 0.0
    %5757 = vmatmul.mubr.f32.gmra.mrb[0].mxu0 %v4289
    %v5758 = vpop.f32.mrb[0].mxu0
    %v5759 = vadd.f32 %v5650, %v5758
    %v5760 = vpop.f32.mrb[0].mxu0
    %5761 = vmatprep.mubr.f32.mxu0 0.0
    %5762 = vmatmul.mubr.f32.gmra.mrb[0].mxu0 %v4292
    %v5763 = vpop.f32.mrb[0].mxu0
    %v5764 = vadd.f32 %v5650, %v5763
    %v5765 = vpop.f32.mrb[0].mxu0
    %5766 = vmatprep.mubr.f32.mxu0 0.0
    %5767 = vmatmul.mubr.f32.gmra.mrb[0].mxu0 %v4295
    %v5768 = vpop.f32.mrb[0].mxu0
    %v5769 = vadd.f32 %v5650, %v5768
    %v5770 = vpop.f32.mrb[0].mxu0
    %5771 = vmatprep.mubr.f32.mxu0 0.0
    %5772 = vmatmul.mubr.f32.gmra.mrb[0].mxu0 %v4298
    %v5773 = vpop.f32.mrb[0].mxu0
    %v5774 = vadd.f32 %v5650, %v5773
    %v5775 = vpop.f32.mrb[0].mxu0
    %5776 = vmatprep.mubr.f32.mxu0 0.0
    %5777 = vmatmul.mubr.f32.gmra.mrb[0].mxu0 %v4301
    %v5778 = vpop.f32.mrb[0].mxu0
    %v5779 = vadd.f32 %v5650, %v5778
    %v5780 = vpop.f32.mrb[0].mxu0
    %5781 = vmatprep.mubr.f32.mxu0 0.0
    %5782 = vmatmul.mubr.f32.gmra.mrb[0].mxu0 %v4304
    %v5783 = vpop.f32.mrb[0].mxu0
    %v5784 = vadd.f32 %v5650, %v5783
    %v5785 = vpop.f32.mrb[0].mxu0
    %5786 = vmatprep.mubr.f32.mxu0 0.0
    %5787 = vmatmul.mubr.f32.gmra.mrb[0].mxu0 %v4307
    %v5788 = vpop.f32.mrb[0].mxu0
    %v5789 = vadd.f32 %v5650, %v5788
    %v5790 = vpop.f32.mrb[0].mxu0
    %5791 = vmatprep.mubr.f32.mxu0 0.0
    %5792 = vmatmul.mubr.f32.gmra.mrb[0].mxu0 %v4310
    %v5793 = vpop.f32.mrb[0].mxu0
    %v5794 = vadd.f32 %v5650, %v5793
    %v5795 = vpop.f32.mrb[0].mxu0
    %5796 = vdwg.mxu0
    %s5797 = scalar_lea.vmem %s5, 384
    %v5798 = vld [vmem:[%s5797] sm:$0xff]
    %v5799 = vld [vmem:[%s5797 + $0x8] sm:$0xff]
    %v5800 = vld [vmem:[%s5797 + $0x10] sm:$0xff]
    %v5801 = vld [vmem:[%s5797 + $0x18] sm:$0xff]
    %v5802 = vld [vmem:[%s5797 + $0x20] sm:$0xff]
    %v5803 = vld [vmem:[%s5797 + $0x28] sm:$0xff]
    %v5804 = vld [vmem:[%s5797 + $0x30] sm:$0xff]
    %v5805 = vld [vmem:[%s5797 + $0x38] sm:$0xff]
    %v5806 = vld [vmem:[%s5797 + $0x40] sm:$0xff]
    %v5807 = vld [vmem:[%s5797 + $0x48] sm:$0xff]
    %v5808 = vld [vmem:[%s5797 + $0x50] sm:$0xff]
    %v5809 = vld [vmem:[%s5797 + $0x58] sm:$0xff]
    %v5810 = vld [vmem:[%s5797 + $0x60] sm:$0xff]
    %v5811 = vld [vmem:[%s5797 + $0x68] sm:$0xff]
    %v5812 = vld [vmem:[%s5797 + $0x70] sm:$0xff]
    %v5813 = vld [vmem:[%s5797 + $0x78] sm:$0xff]
    %v5815 = vsel %vm1061, %v5403, 0
    %v5818 = vsel %vm1061, %v5408, 0
    %v5821 = vsel %vm1061, %v5413, 0
    %v5824 = vsel %vm1061, %v5418, 0
    %v5827 = vsel %vm1061, %v5423, 0
    %v5830 = vsel %vm1061, %v5428, 0
    %v5833 = vsel %vm1061, %v5433, 0
    %v5836 = vsel %vm1061, %v5438, 0
    %v5839 = vsel %vm1061, %v5443, 0
    %v5842 = vsel %vm1061, %v5448, 0
    %v5845 = vsel %vm1061, %v5453, 0
    %v5848 = vsel %vm1061, %v5458, 0
    %v5851 = vsel %vm1061, %v5463, 0
    %v5854 = vsel %vm1061, %v5468, 0
    %v5857 = vsel %vm1061, %v5473, 0
    %v5860 = vsel %vm1061, %v5478, 0
    %v5863 = vsel %vm1061, %v5561, 0
    %v5866 = vsel %vm1061, %v5566, 0
    %v5869 = vsel %vm1061, %v5571, 0
    %v5872 = vsel %vm1061, %v5576, 0
    %v5875 = vsel %vm1061, %v5581, 0
    %v5878 = vsel %vm1061, %v5586, 0
    %v5881 = vsel %vm1061, %v5591, 0
    %v5884 = vsel %vm1061, %v5596, 0
    %v5887 = vsel %vm1061, %v5601, 0
    %v5890 = vsel %vm1061, %v5606, 0
    %v5893 = vsel %vm1061, %v5611, 0
    %v5896 = vsel %vm1061, %v5616, 0
    %v5899 = vsel %vm1061, %v5621, 0
    %v5902 = vsel %vm1061, %v5626, 0
    %v5905 = vsel %vm1061, %v5631, 0
    %v5908 = vsel %vm1061, %v5636, 0
    %5910 = vmatprep.subr.mxu0 0.0
    %5911 = vmatpush1.xpose.msra.mxu0 %v5863
    %5912 = vmatprep.subr.mxu0 0.0
    %5913 = vmatpush1.xpose.msra.mxu0 %v5866
    %5914 = vmatprep.subr.mxu0 0.0
    %5915 = vmatpush1.xpose.msra.mxu0 %v5869
    %5916 = vmatprep.subr.mxu0 0.0
    %5917 = vmatpush1.xpose.msra.mxu0 %v5872
    %5918 = vmatprep.subr.mxu0 0.0
    %5919 = vmatpush1.xpose.msra.mxu0 %v5875
    %5920 = vmatprep.subr.mxu0 0.0
    %5921 = vmatpush1.xpose.msra.mxu0 %v5878
    %5922 = vmatprep.subr.mxu0 0.0
    %5923 = vmatpush1.xpose.msra.mxu0 %v5881
    %5924 = vmatprep.subr.mxu0 0.0
    %5925 = vmatpush1.xpose.msra.mxu0 %v5884
    %5926 = vmatprep.subr.mxu0 0.0
    %5927 = vmatpush1.xpose.msra.mxu0 %v5887
    %5928 = vmatprep.subr.mxu0 0.0
    %5929 = vmatpush1.xpose.msra.mxu0 %v5890
    %5930 = vmatprep.subr.mxu0 0.0
    %5931 = vmatpush1.xpose.msra.mxu0 %v5893
    %5932 = vmatprep.subr.mxu0 0.0
    %5933 = vmatpush1.xpose.msra.mxu0 %v5896
    %5934 = vmatprep.subr.mxu0 0.0
    %5935 = vmatpush1.xpose.msra.mxu0 %v5899
    %5936 = vmatprep.subr.mxu0 0.0
    %5937 = vmatpush1.xpose.msra.mxu0 %v5902
    %5938 = vmatprep.subr.mxu0 0.0
    %5939 = vmatpush1.xpose.msra.mxu0 %v5905
    %5940 = vmatprep.subr.mxu0 0.0
    %5941 = vmatpush1.xpose.msra.mxu0 %v5908
    %5942 = vmatprep.subr.mxu0 0.0
    %5943 = vmatpush1.xpose.msra.mxu0 0.0
    %5944 = vmatprep.subr.mxu0 0.0
    %5945 = vmatpush1.xpose.msra.mxu0 0.0
    %5946 = vmatprep.subr.mxu0 0.0
    %5947 = vmatpush1.xpose.msra.mxu0 0.0
    %5948 = vmatprep.subr.mxu0 0.0
    %5949 = vmatpush1.xpose.msra.mxu0 0.0
    %5950 = vmatprep.subr.mxu0 0.0
    %5951 = vmatpush1.xpose.msra.mxu0 0.0
    %5952 = vmatprep.subr.mxu0 0.0
    %5953 = vmatpush1.xpose.msra.mxu0 0.0
    %5954 = vmatprep.subr.mxu0 0.0
    %5955 = vmatpush1.xpose.msra.mxu0 0.0
    %5956 = vmatprep.subr.mxu0 0.0
    %5957 = vmatpush1.xpose.msra.mxu0 0.0
    %5958 = vmatprep.subr.mxu0 0.0
    %5959 = vmatpush1.xpose.msra.mxu0 0.0
    %5960 = vmatprep.subr.mxu0 0.0
    %5961 = vmatpush1.xpose.msra.mxu0 0.0
    %5962 = vmatprep.subr.mxu0 0.0
    %5963 = vmatpush1.xpose.msra.mxu0 0.0
    %5964 = vmatprep.subr.mxu0 0.0
    %5965 = vmatpush1.xpose.msra.mxu0 0.0
    %5966 = vmatprep.subr.mxu0 0.0
    %5967 = vmatpush1.xpose.msra.mxu0 0.0
    %5968 = vmatprep.subr.mxu0 0.0
    %5969 = vmatpush1.xpose.msra.mxu0 0.0
    %5970 = vmatprep.subr.mxu0 0.0
    %5971 = vmatpush1.xpose.msra.mxu0 0.0
    %5972 = vmatprep.subr.mxu0 0.0
    %5973 = vmatpush1.xpose.msra.mxu0 0.0
    %5974 = vmatprep.mubr.f32.mxu0 0.0
    %5975 = vmatmul.mubr.f32.gmra.mrb[0].mxu0 %v5815
    %v5976 = vpop.f32.mrb[0].mxu0
    %v5977 = vadd.f32 %v5798, %v5976
    %v5978 = vpop.f32.mrb[0].mxu0
    %5979 = vmatprep.mubr.f32.mxu0 0.0
    %5980 = vmatmul.mubr.f32.gmra.mrb[0].mxu0 %v5818
    %v5981 = vpop.f32.mrb[0].mxu0
    %v5982 = vadd.f32 %v5799, %v5981
    %v5983 = vpop.f32.mrb[0].mxu0
    %5984 = vmatprep.mubr.f32.mxu0 0.0
    %5985 = vmatmul.mubr.f32.gmra.mrb[0].mxu0 %v5821
    %v5986 = vpop.f32.mrb[0].mxu0
    %v5987 = vadd.f32 %v5800, %v5986
    %v5988 = vpop.f32.mrb[0].mxu0
    %5989 = vmatprep.mubr.f32.mxu0 0.0
    %5990 = vmatmul.mubr.f32.gmra.mrb[0].mxu0 %v5824
    %v5991 = vpop.f32.mrb[0].mxu0
    %v5992 = vadd.f32 %v5801, %v5991
    %v5993 = vpop.f32.mrb[0].mxu0
    %5994 = vmatprep.mubr.f32.mxu0 0.0
    %5995 = vmatmul.mubr.f32.gmra.mrb[0].mxu0 %v5827
    %v5996 = vpop.f32.mrb[0].mxu0
    %v5997 = vadd.f32 %v5802, %v5996
    %v5998 = vpop.f32.mrb[0].mxu0
    %5999 = vmatprep.mubr.f32.mxu0 0.0
    %6000 = vmatmul.mubr.f32.gmra.mrb[0].mxu0 %v5830
    %v6001 = vpop.f32.mrb[0].mxu0
    %v6002 = vadd.f32 %v5803, %v6001
    %v6003 = vpop.f32.mrb[0].mxu0
    %6004 = vmatprep.mubr.f32.mxu0 0.0
    %6005 = vmatmul.mubr.f32.gmra.mrb[0].mxu0 %v5833
    %v6006 = vpop.f32.mrb[0].mxu0
    %v6007 = vadd.f32 %v5804, %v6006
    %v6008 = vpop.f32.mrb[0].mxu0
    %6009 = vmatprep.mubr.f32.mxu0 0.0
    %6010 = vmatmul.mubr.f32.gmra.mrb[0].mxu0 %v5836
    %v6011 = vpop.f32.mrb[0].mxu0
    %v6012 = vadd.f32 %v5805, %v6011
    %v6013 = vpop.f32.mrb[0].mxu0
    %6014 = vmatprep.mubr.f32.mxu0 0.0
    %6015 = vmatmul.mubr.f32.gmra.mrb[0].mxu0 %v5839
    %v6016 = vpop.f32.mrb[0].mxu0
    %v6017 = vadd.f32 %v5806, %v6016
    %v6018 = vpop.f32.mrb[0].mxu0
    %6019 = vmatprep.mubr.f32.mxu0 0.0
    %6020 = vmatmul.mubr.f32.gmra.mrb[0].mxu0 %v5842
    %v6021 = vpop.f32.mrb[0].mxu0
    %v6022 = vadd.f32 %v5807, %v6021
    %v6023 = vpop.f32.mrb[0].mxu0
    %6024 = vmatprep.mubr.f32.mxu0 0.0
    %6025 = vmatmul.mubr.f32.gmra.mrb[0].mxu0 %v5845
    %v6026 = vpop.f32.mrb[0].mxu0
    %v6027 = vadd.f32 %v5808, %v6026
    %v6028 = vpop.f32.mrb[0].mxu0
    %6029 = vmatprep.mubr.f32.mxu0 0.0
    %6030 = vmatmul.mubr.f32.gmra.mrb[0].mxu0 %v5848
    %v6031 = vpop.f32.mrb[0].mxu0
    %v6032 = vadd.f32 %v5809, %v6031
    %v6033 = vpop.f32.mrb[0].mxu0
    %6034 = vmatprep.mubr.f32.mxu0 0.0
    %6035 = vmatmul.mubr.f32.gmra.mrb[0].mxu0 %v5851
    %v6036 = vpop.f32.mrb[0].mxu0
    %v6037 = vadd.f32 %v5810, %v6036
    %v6038 = vpop.f32.mrb[0].mxu0
    %6039 = vmatprep.mubr.f32.mxu0 0.0
    %6040 = vmatmul.mubr.f32.gmra.mrb[0].mxu0 %v5854
    %v6041 = vpop.f32.mrb[0].mxu0
    %v6042 = vadd.f32 %v5811, %v6041
    %v6043 = vpop.f32.mrb[0].mxu0
    %6044 = vmatprep.mubr.f32.mxu0 0.0
    %6045 = vmatmul.mubr.f32.gmra.mrb[0].mxu0 %v5857
    %v6046 = vpop.f32.mrb[0].mxu0
    %v6047 = vadd.f32 %v5812, %v6046
    %v6048 = vpop.f32.mrb[0].mxu0
    %6049 = vmatprep.mubr.f32.mxu0 0.0
    %6050 = vmatmul.mubr.f32.gmra.mrb[0].mxu0 %v5860
    %v6051 = vpop.f32.mrb[0].mxu0
    %v6052 = vadd.f32 %v5813, %v6051
    %v6053 = vpop.f32.mrb[0].mxu0
    %6054 = vdwg.mxu0
    %6055 = vmax.xlane.f32.xlu0 %v5977
    %v6056 = vpop.xlane.xlu0 %6055
    %6057 = vmax.xlane.f32.xlu0 %v5982
    %v6058 = vpop.xlane.xlu0 %6057
    %6059 = vmax.xlane.f32.xlu0 %v5987
    %v6060 = vpop.xlane.xlu0 %6059
    %6061 = vmax.xlane.f32.xlu0 %v5992
    %v6062 = vpop.xlane.xlu0 %6061
    %6063 = vmax.xlane.f32.xlu0 %v5997
    %v6064 = vpop.xlane.xlu0 %6063
    %6065 = vmax.xlane.f32.xlu0 %v6002
    %v6066 = vpop.xlane.xlu0 %6065
    %6067 = vmax.xlane.f32.xlu0 %v6007
    %v6068 = vpop.xlane.xlu0 %6067
    %6069 = vmax.xlane.f32.xlu0 %v6012
    %v6070 = vpop.xlane.xlu0 %6069
    %6071 = vmax.xlane.f32.xlu0 %v6017
    %v6072 = vpop.xlane.xlu0 %6071
    %6073 = vmax.xlane.f32.xlu0 %v6022
    %v6074 = vpop.xlane.xlu0 %6073
    %6075 = vmax.xlane.f32.xlu0 %v6027
    %v6076 = vpop.xlane.xlu0 %6075
    %6077 = vmax.xlane.f32.xlu0 %v6032
    %v6078 = vpop.xlane.xlu0 %6077
    %6079 = vmax.xlane.f32.xlu0 %v6037
    %v6080 = vpop.xlane.xlu0 %6079
    %6081 = vmax.xlane.f32.xlu0 %v6042
    %v6082 = vpop.xlane.xlu0 %6081
    %6083 = vmax.xlane.f32.xlu0 %v6047
    %v6084 = vpop.xlane.xlu0 %6083
    %6085 = vmax.xlane.f32.xlu0 %v6052
    %v6086 = vpop.xlane.xlu0 %6085
    %v6087 = vsub.f32 %v5977, %v6056
    %v6088 = vsub.f32 %v5982, %v6058
    %v6089 = vsub.f32 %v5987, %v6060
    %v6090 = vsub.f32 %v5992, %v6062
    %v6091 = vsub.f32 %v5997, %v6064
    %v6092 = vsub.f32 %v6002, %v6066
    %v6093 = vsub.f32 %v6007, %v6068
    %v6094 = vsub.f32 %v6012, %v6070
    %v6095 = vsub.f32 %v6017, %v6072
    %v6096 = vsub.f32 %v6022, %v6074
    %v6097 = vsub.f32 %v6027, %v6076
    %v6098 = vsub.f32 %v6032, %v6078
    %v6099 = vsub.f32 %v6037, %v6080
    %v6100 = vsub.f32 %v6042, %v6082
    %v6101 = vsub.f32 %v6047, %v6084
    %v6102 = vsub.f32 %v6052, %v6086
    %v6103 = vmul.f32 %v6087, 1.442695
    %v6104 = vpow.pop %v6103
    %v6105 = vmul.f32 %v6088, 1.442695
    %v6106 = vpow.pop %v6105
    %v6107 = vmul.f32 %v6089, 1.442695
    %v6108 = vpow.pop %v6107
    %v6109 = vmul.f32 %v6090, 1.442695
    %v6110 = vpow.pop %v6109
    %v6111 = vmul.f32 %v6091, 1.442695
    %v6112 = vpow.pop %v6111
    %v6113 = vmul.f32 %v6092, 1.442695
    %v6114 = vpow.pop %v6113
    %v6115 = vmul.f32 %v6093, 1.442695
    %v6116 = vpow.pop %v6115
    %v6117 = vmul.f32 %v6094, 1.442695
    %v6118 = vpow.pop %v6117
    %v6119 = vmul.f32 %v6095, 1.442695
    %v6120 = vpow.pop %v6119
    %v6121 = vmul.f32 %v6096, 1.442695
    %v6122 = vpow.pop %v6121
    %v6123 = vmul.f32 %v6097, 1.442695
    %v6124 = vpow.pop %v6123
    %v6125 = vmul.f32 %v6098, 1.442695
    %v6126 = vpow.pop %v6125
    %v6127 = vmul.f32 %v6099, 1.442695
    %v6128 = vpow.pop %v6127
    %v6129 = vmul.f32 %v6100, 1.442695
    %v6130 = vpow.pop %v6129
    %v6131 = vmul.f32 %v6101, 1.442695
    %v6132 = vpow.pop %v6131
    %v6133 = vmul.f32 %v6102, 1.442695
    %v6134 = vpow.pop %v6133
    %6135 = vadd.xlane.f32.xlu0 %v6104
    %v6136 = vpop.xlane.xlu0 %6135
    %6137 = vadd.xlane.f32.xlu0 %v6106
    %v6138 = vpop.xlane.xlu0 %6137
    %6139 = vadd.xlane.f32.xlu0 %v6108
    %v6140 = vpop.xlane.xlu0 %6139
    %6141 = vadd.xlane.f32.xlu0 %v6110
    %v6142 = vpop.xlane.xlu0 %6141
    %6143 = vadd.xlane.f32.xlu0 %v6112
    %v6144 = vpop.xlane.xlu0 %6143
    %6145 = vadd.xlane.f32.xlu0 %v6114
    %v6146 = vpop.xlane.xlu0 %6145
    %6147 = vadd.xlane.f32.xlu0 %v6116
    %v6148 = vpop.xlane.xlu0 %6147
    %6149 = vadd.xlane.f32.xlu0 %v6118
    %v6150 = vpop.xlane.xlu0 %6149
    %6151 = vadd.xlane.f32.xlu0 %v6120
    %v6152 = vpop.xlane.xlu0 %6151
    %6153 = vadd.xlane.f32.xlu0 %v6122
    %v6154 = vpop.xlane.xlu0 %6153
    %6155 = vadd.xlane.f32.xlu0 %v6124
    %v6156 = vpop.xlane.xlu0 %6155
    %6157 = vadd.xlane.f32.xlu0 %v6126
    %v6158 = vpop.xlane.xlu0 %6157
    %6159 = vadd.xlane.f32.xlu0 %v6128
    %v6160 = vpop.xlane.xlu0 %6159
    %6161 = vadd.xlane.f32.xlu0 %v6130
    %v6162 = vpop.xlane.xlu0 %6161
    %6163 = vadd.xlane.f32.xlu0 %v6132
    %v6164 = vpop.xlane.xlu0 %6163
    %6165 = vadd.xlane.f32.xlu0 %v6134
    %v6166 = vpop.xlane.xlu0 %6165
    %v6167 = vrcp.pop %v6136
    %v6168 = vrcp.pop %v6138
    %v6169 = vrcp.pop %v6140
    %v6170 = vrcp.pop %v6142
    %v6171 = vrcp.pop %v6144
    %v6172 = vrcp.pop %v6146
    %v6173 = vrcp.pop %v6148
    %v6174 = vrcp.pop %v6150
    %v6175 = vrcp.pop %v6152
    %v6176 = vrcp.pop %v6154
    %v6177 = vrcp.pop %v6156
    %v6178 = vrcp.pop %v6158
    %v6179 = vrcp.pop %v6160
    %v6180 = vrcp.pop %v6162
    %v6181 = vrcp.pop %v6164
    %v6182 = vrcp.pop %v6166
    %v6183 = vmul.f32 %v6104, %v6167
    %v6184 = vmul.f32 %v6106, %v6168
    %v6185 = vmul.f32 %v6108, %v6169
    %v6186 = vmul.f32 %v6110, %v6170
    %v6187 = vmul.f32 %v6112, %v6171
    %v6188 = vmul.f32 %v6114, %v6172
    %v6189 = vmul.f32 %v6116, %v6173
    %v6190 = vmul.f32 %v6118, %v6174
    %v6191 = vmul.f32 %v6120, %v6175
    %v6192 = vmul.f32 %v6122, %v6176
    %v6193 = vmul.f32 %v6124, %v6177
    %v6194 = vmul.f32 %v6126, %v6178
    %v6195 = vmul.f32 %v6128, %v6179
    %v6196 = vmul.f32 %v6130, %v6180
    %v6197 = vmul.f32 %v6132, %v6181
    %v6198 = vmul.f32 %v6134, %v6182
    %6199 = vmatprep.subr.mxu0 0.0
    %6200 = vmatpush1.msra.mxu0 %v5719
    %6201 = vmatprep.subr.mxu0 0.0
    %6202 = vmatpush1.msra.mxu0 %v5724
    %6203 = vmatprep.subr.mxu0 0.0
    %6204 = vmatpush1.msra.mxu0 %v5729
    %6205 = vmatprep.subr.mxu0 0.0
    %6206 = vmatpush1.msra.mxu0 %v5734
    %6207 = vmatprep.subr.mxu0 0.0
    %6208 = vmatpush1.msra.mxu0 %v5739
    %6209 = vmatprep.subr.mxu0 0.0
    %6210 = vmatpush1.msra.mxu0 %v5744
    %6211 = vmatprep.subr.mxu0 0.0
    %6212 = vmatpush1.msra.mxu0 %v5749
    %6213 = vmatprep.subr.mxu0 0.0
    %6214 = vmatpush1.msra.mxu0 %v5754
    %6215 = vmatprep.subr.mxu0 0.0
    %6216 = vmatpush1.msra.mxu0 %v5759
    %6217 = vmatprep.subr.mxu0 0.0
    %6218 = vmatpush1.msra.mxu0 %v5764
    %6219 = vmatprep.subr.mxu0 0.0
    %6220 = vmatpush1.msra.mxu0 %v5769
    %6221 = vmatprep.subr.mxu0 0.0
    %6222 = vmatpush1.msra.mxu0 %v5774
    %6223 = vmatprep.subr.mxu0 0.0
    %6224 = vmatpush1.msra.mxu0 %v5779
    %6225 = vmatprep.subr.mxu0 0.0
    %6226 = vmatpush1.msra.mxu0 %v5784
    %6227 = vmatprep.subr.mxu0 0.0
    %6228 = vmatpush1.msra.mxu0 %v5789
    %6229 = vmatprep.subr.mxu0 0.0
    %6230 = vmatpush1.msra.mxu0 %v5794
    %6231 = vmatprep.subr.mxu0 0.0
    %6232 = vmatpush1.msra.mxu0 0.0
    %6233 = vmatprep.subr.mxu0 0.0
    %6234 = vmatpush1.msra.mxu0 0.0
    %6235 = vmatprep.subr.mxu0 0.0
    %6236 = vmatpush1.msra.mxu0 0.0
    %6237 = vmatprep.subr.mxu0 0.0
    %6238 = vmatpush1.msra.mxu0 0.0
    %6239 = vmatprep.subr.mxu0 0.0
    %6240 = vmatpush1.msra.mxu0 0.0
    %6241 = vmatprep.subr.mxu0 0.0
    %6242 = vmatpush1.msra.mxu0 0.0
    %6243 = vmatprep.subr.mxu0 0.0
    %6244 = vmatpush1.msra.mxu0 0.0
    %6245 = vmatprep.subr.mxu0 0.0
    %6246 = vmatpush1.msra.mxu0 0.0
    %6247 = vmatprep.subr.mxu0 0.0
    %6248 = vmatpush1.msra.mxu0 0.0
    %6249 = vmatprep.subr.mxu0 0.0
    %6250 = vmatpush1.msra.mxu0 0.0
    %6251 = vmatprep.subr.mxu0 0.0
    %6252 = vmatpush1.msra.mxu0 0.0
    %6253 = vmatprep.subr.mxu0 0.0
    %6254 = vmatpush1.msra.mxu0 0.0
    %6255 = vmatprep.subr.mxu0 0.0
    %6256 = vmatpush1.msra.mxu0 0.0
    %6257 = vmatprep.subr.mxu0 0.0
    %6258 = vmatpush1.msra.mxu0 0.0
    %6259 = vmatprep.subr.mxu0 0.0
    %6260 = vmatpush1.msra.mxu0 0.0
    %6261 = vmatprep.subr.mxu0 0.0
    %6262 = vmatpush1.msra.mxu0 0.0
    %6263 = vmatprep.mubr.f32.mxu0 0.0
    %6264 = vmatmul.mubr.f32.gmra.mrb[0].mxu0 %v6183
    %v6265 = vpop.f32.mrb[0].mxu0
    %v6266 = vadd.f32 0.0, %v6265
    %v6267 = vpop.f32.mrb[0].mxu0
    %6268 = vmatprep.mubr.f32.mxu0 0.0
    %6269 = vmatmul.mubr.f32.gmra.mrb[0].mxu0 %v6184
    %v6270 = vpop.f32.mrb[0].mxu0
    %v6271 = vadd.f32 0.0, %v6270
    %v6272 = vpop.f32.mrb[0].mxu0
    %6273 = vmatprep.mubr.f32.mxu0 0.0
    %6274 = vmatmul.mubr.f32.gmra.mrb[0].mxu0 %v6185
    %v6275 = vpop.f32.mrb[0].mxu0
    %v6276 = vadd.f32 0.0, %v6275
    %v6277 = vpop.f32.mrb[0].mxu0
    %6278 = vmatprep.mubr.f32.mxu0 0.0
    %6279 = vmatmul.mubr.f32.gmra.mrb[0].mxu0 %v6186
    %v6280 = vpop.f32.mrb[0].mxu0
    %v6281 = vadd.f32 0.0, %v6280
    %v6282 = vpop.f32.mrb[0].mxu0
    %6283 = vmatprep.mubr.f32.mxu0 0.0
    %6284 = vmatmul.mubr.f32.gmra.mrb[0].mxu0 %v6187
    %v6285 = vpop.f32.mrb[0].mxu0
    %v6286 = vadd.f32 0.0, %v6285
    %v6287 = vpop.f32.mrb[0].mxu0
    %6288 = vmatprep.mubr.f32.mxu0 0.0
    %6289 = vmatmul.mubr.f32.gmra.mrb[0].mxu0 %v6188
    %v6290 = vpop.f32.mrb[0].mxu0
    %v6291 = vadd.f32 0.0, %v6290
    %v6292 = vpop.f32.mrb[0].mxu0
    %6293 = vmatprep.mubr.f32.mxu0 0.0
    %6294 = vmatmul.mubr.f32.gmra.mrb[0].mxu0 %v6189
    %v6295 = vpop.f32.mrb[0].mxu0
    %v6296 = vadd.f32 0.0, %v6295
    %v6297 = vpop.f32.mrb[0].mxu0
    %6298 = vmatprep.mubr.f32.mxu0 0.0
    %6299 = vmatmul.mubr.f32.gmra.mrb[0].mxu0 %v6190
    %v6300 = vpop.f32.mrb[0].mxu0
    %v6301 = vadd.f32 0.0, %v6300
    %v6302 = vpop.f32.mrb[0].mxu0
    %6303 = vmatprep.mubr.f32.mxu0 0.0
    %6304 = vmatmul.mubr.f32.gmra.mrb[0].mxu0 %v6191
    %v6305 = vpop.f32.mrb[0].mxu0
    %v6306 = vadd.f32 0.0, %v6305
    %v6307 = vpop.f32.mrb[0].mxu0
    %6308 = vmatprep.mubr.f32.mxu0 0.0
    %6309 = vmatmul.mubr.f32.gmra.mrb[0].mxu0 %v6192
    %v6310 = vpop.f32.mrb[0].mxu0
    %v6311 = vadd.f32 0.0, %v6310
    %v6312 = vpop.f32.mrb[0].mxu0
    %6313 = vmatprep.mubr.f32.mxu0 0.0
    %6314 = vmatmul.mubr.f32.gmra.mrb[0].mxu0 %v6193
    %v6315 = vpop.f32.mrb[0].mxu0
    %v6316 = vadd.f32 0.0, %v6315
    %v6317 = vpop.f32.mrb[0].mxu0
    %6318 = vmatprep.mubr.f32.mxu0 0.0
    %6319 = vmatmul.mubr.f32.gmra.mrb[0].mxu0 %v6194
    %v6320 = vpop.f32.mrb[0].mxu0
    %v6321 = vadd.f32 0.0, %v6320
    %v6322 = vpop.f32.mrb[0].mxu0
    %6323 = vmatprep.mubr.f32.mxu0 0.0
    %6324 = vmatmul.mubr.f32.gmra.mrb[0].mxu0 %v6195
    %v6325 = vpop.f32.mrb[0].mxu0
    %v6326 = vadd.f32 0.0, %v6325
    %v6327 = vpop.f32.mrb[0].mxu0
    %6328 = vmatprep.mubr.f32.mxu0 0.0
    %6329 = vmatmul.mubr.f32.gmra.mrb[0].mxu0 %v6196
    %v6330 = vpop.f32.mrb[0].mxu0
    %v6331 = vadd.f32 0.0, %v6330
    %v6332 = vpop.f32.mrb[0].mxu0
    %6333 = vmatprep.mubr.f32.mxu0 0.0
    %6334 = vmatmul.mubr.f32.gmra.mrb[0].mxu0 %v6197
    %v6335 = vpop.f32.mrb[0].mxu0
    %v6336 = vadd.f32 0.0, %v6335
    %v6337 = vpop.f32.mrb[0].mxu0
    %6338 = vmatprep.mubr.f32.mxu0 0.0
    %6339 = vmatmul.mubr.f32.gmra.mrb[0].mxu0 %v6198
    %v6340 = vpop.f32.mrb[0].mxu0
    %v6341 = vadd.f32 0.0, %v6340
    %v6342 = vpop.f32.mrb[0].mxu0
    %6343 = vdwg.mxu0
    %s6344 = scalar_lea.vmem [#allocation7], 48
    %v6345 = vld [vmem:[%s6344] sm:$0xff]
    %v6346 = vld [vmem:[%s6344 + $0x8] sm:$0xff]
    %v6348 = vsel %vm1061, %v6266, 0
    %v6351 = vsel %vm1061, %v6271, 0
    %v6354 = vsel %vm1061, %v6276, 0
    %v6357 = vsel %vm1061, %v6281, 0
    %v6360 = vsel %vm1061, %v6286, 0
    %v6363 = vsel %vm1061, %v6291, 0
    %v6366 = vsel %vm1061, %v6296, 0
    %v6369 = vsel %vm1061, %v6301, 0
    %v6372 = vsel %vm1061, %v6306, 0
    %v6375 = vsel %vm1061, %v6311, 0
    %v6378 = vsel %vm1061, %v6316, 0
    %v6381 = vsel %vm1061, %v6321, 0
    %v6384 = vsel %vm1061, %v6326, 0
    %v6387 = vsel %vm1061, %v6331, 0
    %v6390 = vsel %vm1061, %v6336, 0
    %v6393 = vsel %vm1061, %v6341, 0
    %6395 = vmatprep.subr.mxu0 0.0
    %6396 = vmatpush1.msra.mxu0 %v6345
    %6397 = vmatprep.subr.mxu0 0.0
    %6398 = vmatpush1.msra.mxu0 %v6346
    %6399 = vmatprep.subr.mxu0 0.0
    %6400 = vmatpush1.msra.mxu0 0.0
    %6401 = vmatprep.subr.mxu0 0.0
    %6402 = vmatpush1.msra.mxu0 0.0
    %6403 = vmatprep.subr.mxu0 0.0
    %6404 = vmatpush1.msra.mxu0 0.0
    %6405 = vmatprep.subr.mxu0 0.0
    %6406 = vmatpush1.msra.mxu0 0.0
    %6407 = vmatprep.subr.mxu0 0.0
    %6408 = vmatpush1.msra.mxu0 0.0
    %6409 = vmatprep.subr.mxu0 0.0
    %6410 = vmatpush1.msra.mxu0 0.0
    %6411 = vmatprep.subr.mxu0 0.0
    %6412 = vmatpush1.msra.mxu0 0.0
    %6413 = vmatprep.subr.mxu0 0.0
    %6414 = vmatpush1.msra.mxu0 0.0
    %6415 = vmatprep.subr.mxu0 0.0
    %6416 = vmatpush1.msra.mxu0 0.0
    %6417 = vmatprep.subr.mxu0 0.0
    %6418 = vmatpush1.msra.mxu0 0.0
    %6419 = vmatprep.subr.mxu0 0.0
    %6420 = vmatpush1.msra.mxu0 0.0
    %6421 = vmatprep.subr.mxu0 0.0
    %6422 = vmatpush1.msra.mxu0 0.0
    %6423 = vmatprep.subr.mxu0 0.0
    %6424 = vmatpush1.msra.mxu0 0.0
    %6425 = vmatprep.subr.mxu0 0.0
    %6426 = vmatpush1.msra.mxu0 0.0
    %6427 = vmatprep.subr.mxu0 0.0
    %6428 = vmatpush1.msra.mxu0 0.0
    %6429 = vmatprep.subr.mxu0 0.0
    %6430 = vmatpush1.msra.mxu0 0.0
    %6431 = vmatprep.subr.mxu0 0.0
    %6432 = vmatpush1.msra.mxu0 0.0
    %6433 = vmatprep.subr.mxu0 0.0
    %6434 = vmatpush1.msra.mxu0 0.0
    %6435 = vmatprep.subr.mxu0 0.0
    %6436 = vmatpush1.msra.mxu0 0.0
    %6437 = vmatprep.subr.mxu0 0.0
    %6438 = vmatpush1.msra.mxu0 0.0
    %6439 = vmatprep.subr.mxu0 0.0
    %6440 = vmatpush1.msra.mxu0 0.0
    %6441 = vmatprep.subr.mxu0 0.0
    %6442 = vmatpush1.msra.mxu0 0.0
    %6443 = vmatprep.subr.mxu0 0.0
    %6444 = vmatpush1.msra.mxu0 0.0
    %6445 = vmatprep.subr.mxu0 0.0
    %6446 = vmatpush1.msra.mxu0 0.0
    %6447 = vmatprep.subr.mxu0 0.0
    %6448 = vmatpush1.msra.mxu0 0.0
    %6449 = vmatprep.subr.mxu0 0.0
    %6450 = vmatpush1.msra.mxu0 0.0
    %6451 = vmatprep.subr.mxu0 0.0
    %6452 = vmatpush1.msra.mxu0 0.0
    %6453 = vmatprep.subr.mxu0 0.0
    %6454 = vmatpush1.msra.mxu0 0.0
    %6455 = vmatprep.subr.mxu0 0.0
    %6456 = vmatpush1.msra.mxu0 0.0
    %6457 = vmatprep.subr.mxu0 0.0
    %6458 = vmatpush1.msra.mxu0 0.0
    %6459 = vmatprep.mubr.f32.mxu0 0.0
    %6460 = vmatmul.mubr.f32.gmra.mrb[0].mxu0 %v6348
    %v6461 = vpop.f32.mrb[0].mxu0
    %v6462 = vadd.f32 0.0, %v6461
    %v6463 = vpop.f32.mrb[0].mxu0
    %6464 = vmatprep.mubr.f32.mxu0 0.0
    %6465 = vmatmul.mubr.f32.gmra.mrb[0].mxu0 %v6351
    %v6466 = vpop.f32.mrb[0].mxu0
    %v6467 = vadd.f32 0.0, %v6466
    %v6468 = vpop.f32.mrb[0].mxu0
    %6469 = vmatprep.mubr.f32.mxu0 0.0
    %6470 = vmatmul.mubr.f32.gmra.mrb[0].mxu0 %v6354
    %v6471 = vpop.f32.mrb[0].mxu0
    %v6472 = vadd.f32 0.0, %v6471
    %v6473 = vpop.f32.mrb[0].mxu0
    %6474 = vmatprep.mubr.f32.mxu0 0.0
    %6475 = vmatmul.mubr.f32.gmra.mrb[0].mxu0 %v6357
    %v6476 = vpop.f32.mrb[0].mxu0
    %v6477 = vadd.f32 0.0, %v6476
    %v6478 = vpop.f32.mrb[0].mxu0
    %6479 = vmatprep.mubr.f32.mxu0 0.0
    %6480 = vmatmul.mubr.f32.gmra.mrb[0].mxu0 %v6360
    %v6481 = vpop.f32.mrb[0].mxu0
    %v6482 = vadd.f32 0.0, %v6481
    %v6483 = vpop.f32.mrb[0].mxu0
    %6484 = vmatprep.mubr.f32.mxu0 0.0
    %6485 = vmatmul.mubr.f32.gmra.mrb[0].mxu0 %v6363
    %v6486 = vpop.f32.mrb[0].mxu0
    %v6487 = vadd.f32 0.0, %v6486
    %v6488 = vpop.f32.mrb[0].mxu0
    %6489 = vmatprep.mubr.f32.mxu0 0.0
    %6490 = vmatmul.mubr.f32.gmra.mrb[0].mxu0 %v6366
    %v6491 = vpop.f32.mrb[0].mxu0
    %v6492 = vadd.f32 0.0, %v6491
    %v6493 = vpop.f32.mrb[0].mxu0
    %6494 = vmatprep.mubr.f32.mxu0 0.0
    %6495 = vmatmul.mubr.f32.gmra.mrb[0].mxu0 %v6369
    %v6496 = vpop.f32.mrb[0].mxu0
    %v6497 = vadd.f32 0.0, %v6496
    %v6498 = vpop.f32.mrb[0].mxu0
    %6499 = vmatprep.mubr.f32.mxu0 0.0
    %6500 = vmatmul.mubr.f32.gmra.mrb[0].mxu0 %v6372
    %v6501 = vpop.f32.mrb[0].mxu0
    %v6502 = vadd.f32 0.0, %v6501
    %v6503 = vpop.f32.mrb[0].mxu0
    %6504 = vmatprep.mubr.f32.mxu0 0.0
    %6505 = vmatmul.mubr.f32.gmra.mrb[0].mxu0 %v6375
    %v6506 = vpop.f32.mrb[0].mxu0
    %v6507 = vadd.f32 0.0, %v6506
    %v6508 = vpop.f32.mrb[0].mxu0
    %6509 = vmatprep.mubr.f32.mxu0 0.0
    %6510 = vmatmul.mubr.f32.gmra.mrb[0].mxu0 %v6378
    %v6511 = vpop.f32.mrb[0].mxu0
    %v6512 = vadd.f32 0.0, %v6511
    %v6513 = vpop.f32.mrb[0].mxu0
    %6514 = vmatprep.mubr.f32.mxu0 0.0
    %6515 = vmatmul.mubr.f32.gmra.mrb[0].mxu0 %v6381
    %v6516 = vpop.f32.mrb[0].mxu0
    %v6517 = vadd.f32 0.0, %v6516
    %v6518 = vpop.f32.mrb[0].mxu0
    %6519 = vmatprep.mubr.f32.mxu0 0.0
    %6520 = vmatmul.mubr.f32.gmra.mrb[0].mxu0 %v6384
    %v6521 = vpop.f32.mrb[0].mxu0
    %v6522 = vadd.f32 0.0, %v6521
    %v6523 = vpop.f32.mrb[0].mxu0
    %6524 = vmatprep.mubr.f32.mxu0 0.0
    %6525 = vmatmul.mubr.f32.gmra.mrb[0].mxu0 %v6387
    %v6526 = vpop.f32.mrb[0].mxu0
    %v6527 = vadd.f32 0.0, %v6526
    %v6528 = vpop.f32.mrb[0].mxu0
    %6529 = vmatprep.mubr.f32.mxu0 0.0
    %6530 = vmatmul.mubr.f32.gmra.mrb[0].mxu0 %v6390
    %v6531 = vpop.f32.mrb[0].mxu0
    %v6532 = vadd.f32 0.0, %v6531
    %v6533 = vpop.f32.mrb[0].mxu0
    %6534 = vmatprep.mubr.f32.mxu0 0.0
    %6535 = vmatmul.mubr.f32.gmra.mrb[0].mxu0 %v6393
    %v6536 = vpop.f32.mrb[0].mxu0
    %v6537 = vadd.f32 0.0, %v6536
    %v6538 = vpop.f32.mrb[0].mxu0
    %6539 = vdwg.mxu0
    %v6541 = vsel %vm1061, %v5242, 0
    %v6544 = vsel %vm1061, %v5247, 0
    %v6547 = vsel %vm1061, %v5252, 0
    %v6550 = vsel %vm1061, %v5257, 0
    %v6553 = vsel %vm1061, %v5262, 0
    %v6556 = vsel %vm1061, %v5267, 0
    %v6559 = vsel %vm1061, %v5272, 0
    %v6562 = vsel %vm1061, %v5277, 0
    %v6565 = vsel %vm1061, %v5282, 0
    %v6568 = vsel %vm1061, %v5287, 0
    %v6571 = vsel %vm1061, %v5292, 0
    %v6574 = vsel %vm1061, %v5297, 0
    %v6577 = vsel %vm1061, %v5302, 0
    %v6580 = vsel %vm1061, %v5307, 0
    %v6583 = vsel %vm1061, %v5312, 0
    %v6586 = vsel %vm1061, %v5317, 0
    %6588 = vmatprep.subr.mxu0 0.0
    %6589 = vmatpush1.msra.mxu0 %v5321
    %6590 = vmatprep.subr.mxu0 0.0
    %6591 = vmatpush1.msra.mxu0 %v5322
    %6592 = vmatprep.subr.mxu0 0.0
    %6593 = vmatpush1.msra.mxu0 0.0
    %6594 = vmatprep.subr.mxu0 0.0
    %6595 = vmatpush1.msra.mxu0 0.0
    %6596 = vmatprep.subr.mxu0 0.0
    %6597 = vmatpush1.msra.mxu0 0.0
    %6598 = vmatprep.subr.mxu0 0.0
    %6599 = vmatpush1.msra.mxu0 0.0
    %6600 = vmatprep.subr.mxu0 0.0
    %6601 = vmatpush1.msra.mxu0 0.0
    %6602 = vmatprep.subr.mxu0 0.0
    %6603 = vmatpush1.msra.mxu0 0.0
    %6604 = vmatprep.subr.mxu0 0.0
    %6605 = vmatpush1.msra.mxu0 0.0
    %6606 = vmatprep.subr.mxu0 0.0
    %6607 = vmatpush1.msra.mxu0 0.0
    %6608 = vmatprep.subr.mxu0 0.0
    %6609 = vmatpush1.msra.mxu0 0.0
    %6610 = vmatprep.subr.mxu0 0.0
    %6611 = vmatpush1.msra.mxu0 0.0
    %6612 = vmatprep.subr.mxu0 0.0
    %6613 = vmatpush1.msra.mxu0 0.0
    %6614 = vmatprep.subr.mxu0 0.0
    %6615 = vmatpush1.msra.mxu0 0.0
    %6616 = vmatprep.subr.mxu0 0.0
    %6617 = vmatpush1.msra.mxu0 0.0
    %6618 = vmatprep.subr.mxu0 0.0
    %6619 = vmatpush1.msra.mxu0 0.0
    %6620 = vmatprep.subr.mxu0 0.0
    %6621 = vmatpush1.msra.mxu0 0.0
    %6622 = vmatprep.subr.mxu0 0.0
    %6623 = vmatpush1.msra.mxu0 0.0
    %6624 = vmatprep.subr.mxu0 0.0
    %6625 = vmatpush1.msra.mxu0 0.0
    %6626 = vmatprep.subr.mxu0 0.0
    %6627 = vmatpush1.msra.mxu0 0.0
    %6628 = vmatprep.subr.mxu0 0.0
    %6629 = vmatpush1.msra.mxu0 0.0
    %6630 = vmatprep.subr.mxu0 0.0
    %6631 = vmatpush1.msra.mxu0 0.0
    %6632 = vmatprep.subr.mxu0 0.0
    %6633 = vmatpush1.msra.mxu0 0.0
    %6634 = vmatprep.subr.mxu0 0.0
    %6635 = vmatpush1.msra.mxu0 0.0
    %6636 = vmatprep.subr.mxu0 0.0
    %6637 = vmatpush1.msra.mxu0 0.0
    %6638 = vmatprep.subr.mxu0 0.0
    %6639 = vmatpush1.msra.mxu0 0.0
    %6640 = vmatprep.subr.mxu0 0.0
    %6641 = vmatpush1.msra.mxu0 0.0
    %6642 = vmatprep.subr.mxu0 0.0
    %6643 = vmatpush1.msra.mxu0 0.0
    %6644 = vmatprep.subr.mxu0 0.0
    %6645 = vmatpush1.msra.mxu0 0.0
    %6646 = vmatprep.subr.mxu0 0.0
    %6647 = vmatpush1.msra.mxu0 0.0
    %6648 = vmatprep.subr.mxu0 0.0
    %6649 = vmatpush1.msra.mxu0 0.0
    %6650 = vmatprep.subr.mxu0 0.0
    %6651 = vmatpush1.msra.mxu0 0.0
    %6652 = vmatprep.mubr.f32.mxu0 0.0
    %6653 = vmatmul.mubr.f32.gmra.mrb[0].mxu0 %v6541
    %v6654 = vpop.f32.mrb[0].mxu0
    %v6655 = vadd.f32 %v6462, %v6654
    %v6656 = vpop.f32.mrb[0].mxu0
    %6657 = vmatprep.mubr.f32.mxu0 0.0
    %6658 = vmatmul.mubr.f32.gmra.mrb[0].mxu0 %v6544
    %v6659 = vpop.f32.mrb[0].mxu0
    %v6660 = vadd.f32 %v6467, %v6659
    %v6661 = vpop.f32.mrb[0].mxu0
    %6662 = vmatprep.mubr.f32.mxu0 0.0
    %6663 = vmatmul.mubr.f32.gmra.mrb[0].mxu0 %v6547
    %v6664 = vpop.f32.mrb[0].mxu0
    %v6665 = vadd.f32 %v6472, %v6664
    %v6666 = vpop.f32.mrb[0].mxu0
    %6667 = vmatprep.mubr.f32.mxu0 0.0
    %6668 = vmatmul.mubr.f32.gmra.mrb[0].mxu0 %v6550
    %v6669 = vpop.f32.mrb[0].mxu0
    %v6670 = vadd.f32 %v6477, %v6669
    %v6671 = vpop.f32.mrb[0].mxu0
    %6672 = vmatprep.mubr.f32.mxu0 0.0
    %6673 = vmatmul.mubr.f32.gmra.mrb[0].mxu0 %v6553
    %v6674 = vpop.f32.mrb[0].mxu0
    %v6675 = vadd.f32 %v6482, %v6674
    %v6676 = vpop.f32.mrb[0].mxu0
    %6677 = vmatprep.mubr.f32.mxu0 0.0
    %6678 = vmatmul.mubr.f32.gmra.mrb[0].mxu0 %v6556
    %v6679 = vpop.f32.mrb[0].mxu0
    %v6680 = vadd.f32 %v6487, %v6679
    %v6681 = vpop.f32.mrb[0].mxu0
    %6682 = vmatprep.mubr.f32.mxu0 0.0
    %6683 = vmatmul.mubr.f32.gmra.mrb[0].mxu0 %v6559
    %v6684 = vpop.f32.mrb[0].mxu0
    %v6685 = vadd.f32 %v6492, %v6684
    %v6686 = vpop.f32.mrb[0].mxu0
    %6687 = vmatprep.mubr.f32.mxu0 0.0
    %6688 = vmatmul.mubr.f32.gmra.mrb[0].mxu0 %v6562
    %v6689 = vpop.f32.mrb[0].mxu0
    %v6690 = vadd.f32 %v6497, %v6689
    %v6691 = vpop.f32.mrb[0].mxu0
    %6692 = vmatprep.mubr.f32.mxu0 0.0
    %6693 = vmatmul.mubr.f32.gmra.mrb[0].mxu0 %v6565
    %v6694 = vpop.f32.mrb[0].mxu0
    %v6695 = vadd.f32 %v6502, %v6694
    %v6696 = vpop.f32.mrb[0].mxu0
    %6697 = vmatprep.mubr.f32.mxu0 0.0
    %6698 = vmatmul.mubr.f32.gmra.mrb[0].mxu0 %v6568
    %v6699 = vpop.f32.mrb[0].mxu0
    %v6700 = vadd.f32 %v6507, %v6699
    %v6701 = vpop.f32.mrb[0].mxu0
    %6702 = vmatprep.mubr.f32.mxu0 0.0
    %6703 = vmatmul.mubr.f32.gmra.mrb[0].mxu0 %v6571
    %v6704 = vpop.f32.mrb[0].mxu0
    %v6705 = vadd.f32 %v6512, %v6704
    %v6706 = vpop.f32.mrb[0].mxu0
    %6707 = vmatprep.mubr.f32.mxu0 0.0
    %6708 = vmatmul.mubr.f32.gmra.mrb[0].mxu0 %v6574
    %v6709 = vpop.f32.mrb[0].mxu0
    %v6710 = vadd.f32 %v6517, %v6709
    %v6711 = vpop.f32.mrb[0].mxu0
    %6712 = vmatprep.mubr.f32.mxu0 0.0
    %6713 = vmatmul.mubr.f32.gmra.mrb[0].mxu0 %v6577
    %v6714 = vpop.f32.mrb[0].mxu0
    %v6715 = vadd.f32 %v6522, %v6714
    %v6716 = vpop.f32.mrb[0].mxu0
    %6717 = vmatprep.mubr.f32.mxu0 0.0
    %6718 = vmatmul.mubr.f32.gmra.mrb[0].mxu0 %v6580
    %v6719 = vpop.f32.mrb[0].mxu0
    %v6720 = vadd.f32 %v6527, %v6719
    %v6721 = vpop.f32.mrb[0].mxu0
    %6722 = vmatprep.mubr.f32.mxu0 0.0
    %6723 = vmatmul.mubr.f32.gmra.mrb[0].mxu0 %v6583
    %v6724 = vpop.f32.mrb[0].mxu0
    %v6725 = vadd.f32 %v6532, %v6724
    %v6726 = vpop.f32.mrb[0].mxu0
    %6727 = vmatprep.mubr.f32.mxu0 0.0
    %6728 = vmatmul.mubr.f32.gmra.mrb[0].mxu0 %v6586
    %v6729 = vpop.f32.mrb[0].mxu0
    %v6730 = vadd.f32 %v6537, %v6729
    %v6731 = vpop.f32.mrb[0].mxu0
    %6732 = vdwg.mxu0
    %v6733 = vadd.f32 %v3917, %v6655
    %v6734 = vadd.f32 %v3922, %v6660
    %v6735 = vadd.f32 %v3927, %v6665
    %v6736 = vadd.f32 %v3932, %v6670
    %v6737 = vadd.f32 %v3937, %v6675
    %v6738 = vadd.f32 %v3942, %v6680
    %v6739 = vadd.f32 %v3947, %v6685
    %v6740 = vadd.f32 %v3952, %v6690
    %v6741 = vadd.f32 %v3957, %v6695
    %v6742 = vadd.f32 %v3962, %v6700
    %v6743 = vadd.f32 %v3967, %v6705
    %v6744 = vadd.f32 %v3972, %v6710
    %v6745 = vadd.f32 %v3977, %v6715
    %v6746 = vadd.f32 %v3982, %v6720
    %v6747 = vadd.f32 %v3987, %v6725
    %v6748 = vadd.f32 %v3992, %v6730
    %s6749 = scalar_lea.vmem %s9, 10
    %v6750 = vld [vmem:[%s6749] sm:$0x1]
    %v6752 = vlaneseq
    %v6753 = vshrl.u32 %v6752, 7
    %v6754 = vsub.s32 0, %v6753
    %v6755 = vrot.slane %v6750, %v6754
    %v6757 = vadd.f32 %v6733, %v6755
    %v6758 = vadd.f32 %v6734, %v6755
    %v6759 = vadd.f32 %v6735, %v6755
    %v6760 = vadd.f32 %v6736, %v6755
    %v6761 = vadd.f32 %v6737, %v6755
    %v6762 = vadd.f32 %v6738, %v6755
    %v6763 = vadd.f32 %v6739, %v6755
    %v6764 = vadd.f32 %v6740, %v6755
    %v6765 = vadd.f32 %v6741, %v6755
    %v6766 = vadd.f32 %v6742, %v6755
    %v6767 = vadd.f32 %v6743, %v6755
    %v6768 = vadd.f32 %v6744, %v6755
    %v6769 = vadd.f32 %v6745, %v6755
    %v6770 = vadd.f32 %v6746, %v6755
    %v6771 = vadd.f32 %v6747, %v6755
    %v6772 = vadd.f32 %v6748, %v6755
    %s6773 = scalar_lea.vmem %s9, 8
    %v6774 = vld [vmem:[%s6773] sm:$0x1]
    %s6775 = scalar_lea.vmem %s9, 9
    %v6776 = vld [vmem:[%s6775] sm:$0x1]
    %v6777 = vsel %vm271, %v6757, 0.0
    %6778 = vadd.xlane.f32.xlu0 %v6777
    %v6779 = vpop.xlane.xlu0 %6778
    %v6780 = vsel %vm271, %v6758, 0.0
    %6781 = vadd.xlane.f32.xlu0 %v6780
    %v6782 = vpop.xlane.xlu0 %6781
    %v6783 = vsel %vm271, %v6759, 0.0
    %6784 = vadd.xlane.f32.xlu0 %v6783
    %v6785 = vpop.xlane.xlu0 %6784
    %v6786 = vsel %vm271, %v6760, 0.0
    %6787 = vadd.xlane.f32.xlu0 %v6786
    %v6788 = vpop.xlane.xlu0 %6787
    %v6789 = vsel %vm271, %v6761, 0.0
    %6790 = vadd.xlane.f32.xlu0 %v6789
    %v6791 = vpop.xlane.xlu0 %6790
    %v6792 = vsel %vm271, %v6762, 0.0
    %6793 = vadd.xlane.f32.xlu0 %v6792
    %v6794 = vpop.xlane.xlu0 %6793
    %v6795 = vsel %vm271, %v6763, 0.0
    %6796 = vadd.xlane.f32.xlu0 %v6795
    %v6797 = vpop.xlane.xlu0 %6796
    %v6798 = vsel %vm271, %v6764, 0.0
    %6799 = vadd.xlane.f32.xlu0 %v6798
    %v6800 = vpop.xlane.xlu0 %6799
    %v6801 = vsel %vm271, %v6765, 0.0
    %6802 = vadd.xlane.f32.xlu0 %v6801
    %v6803 = vpop.xlane.xlu0 %6802
    %v6804 = vsel %vm271, %v6766, 0.0
    %6805 = vadd.xlane.f32.xlu0 %v6804
    %v6806 = vpop.xlane.xlu0 %6805
    %v6807 = vsel %vm271, %v6767, 0.0
    %6808 = vadd.xlane.f32.xlu0 %v6807
    %v6809 = vpop.xlane.xlu0 %6808
    %v6810 = vsel %vm271, %v6768, 0.0
    %6811 = vadd.xlane.f32.xlu0 %v6810
    %v6812 = vpop.xlane.xlu0 %6811
    %v6813 = vsel %vm271, %v6769, 0.0
    %6814 = vadd.xlane.f32.xlu0 %v6813
    %v6815 = vpop.xlane.xlu0 %6814
    %v6816 = vsel %vm271, %v6770, 0.0
    %6817 = vadd.xlane.f32.xlu0 %v6816
    %v6818 = vpop.xlane.xlu0 %6817
    %v6819 = vsel %vm271, %v6771, 0.0
    %6820 = vadd.xlane.f32.xlu0 %v6819
    %v6821 = vpop.xlane.xlu0 %6820
    %v6822 = vsel %vm271, %v6772, 0.0
    %6823 = vadd.xlane.f32.xlu0 %v6822
    %v6824 = vpop.xlane.xlu0 %6823
    %v6825 = vmul.f32 %v6779, %v320
    %v6826 = vmul.f32 %v6782, %v320
    %v6827 = vmul.f32 %v6785, %v320
    %v6828 = vmul.f32 %v6788, %v320
    %v6829 = vmul.f32 %v6791, %v320
    %v6830 = vmul.f32 %v6794, %v320
    %v6831 = vmul.f32 %v6797, %v320
    %v6832 = vmul.f32 %v6800, %v320
    %v6833 = vmul.f32 %v6803, %v320
    %v6834 = vmul.f32 %v6806, %v320
    %v6835 = vmul.f32 %v6809, %v320
    %v6836 = vmul.f32 %v6812, %v320
    %v6837 = vmul.f32 %v6815, %v320
    %v6838 = vmul.f32 %v6818, %v320
    %v6839 = vmul.f32 %v6821, %v320
    %v6840 = vmul.f32 %v6824, %v320
    %v6841 = vsub.f32 %v6757, %v6825
    %v6842 = vsub.f32 %v6758, %v6826
    %v6843 = vsub.f32 %v6759, %v6827
    %v6844 = vsub.f32 %v6760, %v6828
    %v6845 = vsub.f32 %v6761, %v6829
    %v6846 = vsub.f32 %v6762, %v6830
    %v6847 = vsub.f32 %v6763, %v6831
    %v6848 = vsub.f32 %v6764, %v6832
    %v6849 = vsub.f32 %v6765, %v6833
    %v6850 = vsub.f32 %v6766, %v6834
    %v6851 = vsub.f32 %v6767, %v6835
    %v6852 = vsub.f32 %v6768, %v6836
    %v6853 = vsub.f32 %v6769, %v6837
    %v6854 = vsub.f32 %v6770, %v6838
    %v6855 = vsub.f32 %v6771, %v6839
    %v6856 = vsub.f32 %v6772, %v6840
    %v6857 = vmul.f32 %v6841, %v6841
    %v6858 = vmul.f32 %v6842, %v6842
    %v6859 = vmul.f32 %v6843, %v6843
    %v6860 = vmul.f32 %v6844, %v6844
    %v6861 = vmul.f32 %v6845, %v6845
    %v6862 = vmul.f32 %v6846, %v6846
    %v6863 = vmul.f32 %v6847, %v6847
    %v6864 = vmul.f32 %v6848, %v6848
    %v6865 = vmul.f32 %v6849, %v6849
    %v6866 = vmul.f32 %v6850, %v6850
    %v6867 = vmul.f32 %v6851, %v6851
    %v6868 = vmul.f32 %v6852, %v6852
    %v6869 = vmul.f32 %v6853, %v6853
    %v6870 = vmul.f32 %v6854, %v6854
    %v6871 = vmul.f32 %v6855, %v6855
    %v6872 = vmul.f32 %v6856, %v6856
    %v6873 = vsel %vm271, %v6857, 0.0
    %6874 = vadd.xlane.f32.xlu0 %v6873
    %v6875 = vpop.xlane.xlu0 %6874
    %v6876 = vsel %vm271, %v6858, 0.0
    %6877 = vadd.xlane.f32.xlu0 %v6876
    %v6878 = vpop.xlane.xlu0 %6877
    %v6879 = vsel %vm271, %v6859, 0.0
    %6880 = vadd.xlane.f32.xlu0 %v6879
    %v6881 = vpop.xlane.xlu0 %6880
    %v6882 = vsel %vm271, %v6860, 0.0
    %6883 = vadd.xlane.f32.xlu0 %v6882
    %v6884 = vpop.xlane.xlu0 %6883
    %v6885 = vsel %vm271, %v6861, 0.0
    %6886 = vadd.xlane.f32.xlu0 %v6885
    %v6887 = vpop.xlane.xlu0 %6886
    %v6888 = vsel %vm271, %v6862, 0.0
    %6889 = vadd.xlane.f32.xlu0 %v6888
    %v6890 = vpop.xlane.xlu0 %6889
    %v6891 = vsel %vm271, %v6863, 0.0
    %6892 = vadd.xlane.f32.xlu0 %v6891
    %v6893 = vpop.xlane.xlu0 %6892
    %v6894 = vsel %vm271, %v6864, 0.0
    %6895 = vadd.xlane.f32.xlu0 %v6894
    %v6896 = vpop.xlane.xlu0 %6895
    %v6897 = vsel %vm271, %v6865, 0.0
    %6898 = vadd.xlane.f32.xlu0 %v6897
    %v6899 = vpop.xlane.xlu0 %6898
    %v6900 = vsel %vm271, %v6866, 0.0
    %6901 = vadd.xlane.f32.xlu0 %v6900
    %v6902 = vpop.xlane.xlu0 %6901
    %v6903 = vsel %vm271, %v6867, 0.0
    %6904 = vadd.xlane.f32.xlu0 %v6903
    %v6905 = vpop.xlane.xlu0 %6904
    %v6906 = vsel %vm271, %v6868, 0.0
    %6907 = vadd.xlane.f32.xlu0 %v6906
    %v6908 = vpop.xlane.xlu0 %6907
    %v6909 = vsel %vm271, %v6869, 0.0
    %6910 = vadd.xlane.f32.xlu0 %v6909
    %v6911 = vpop.xlane.xlu0 %6910
    %v6912 = vsel %vm271, %v6870, 0.0
    %6913 = vadd.xlane.f32.xlu0 %v6912
    %v6914 = vpop.xlane.xlu0 %6913
    %v6915 = vsel %vm271, %v6871, 0.0
    %6916 = vadd.xlane.f32.xlu0 %v6915
    %v6917 = vpop.xlane.xlu0 %6916
    %v6918 = vsel %vm271, %v6872, 0.0
    %6919 = vadd.xlane.f32.xlu0 %v6918
    %v6920 = vpop.xlane.xlu0 %6919
    %v6921 = vmul.f32 %v6875, %v320
    %v6922 = vmul.f32 %v6878, %v320
    %v6923 = vmul.f32 %v6881, %v320
    %v6924 = vmul.f32 %v6884, %v320
    %v6925 = vmul.f32 %v6887, %v320
    %v6926 = vmul.f32 %v6890, %v320
    %v6927 = vmul.f32 %v6893, %v320
    %v6928 = vmul.f32 %v6896, %v320
    %v6929 = vmul.f32 %v6899, %v320
    %v6930 = vmul.f32 %v6902, %v320
    %v6931 = vmul.f32 %v6905, %v320
    %v6932 = vmul.f32 %v6908, %v320
    %v6933 = vmul.f32 %v6911, %v320
    %v6934 = vmul.f32 %v6914, %v320
    %v6935 = vmul.f32 %v6917, %v320
    %v6936 = vmul.f32 %v6920, %v320
    %v6937 = vadd.f32 %v6921, 1e-05
    %v6938 = vadd.f32 %v6922, 1e-05
    %v6939 = vadd.f32 %v6923, 1e-05
    %v6940 = vadd.f32 %v6924, 1e-05
    %v6941 = vadd.f32 %v6925, 1e-05
    %v6942 = vadd.f32 %v6926, 1e-05
    %v6943 = vadd.f32 %v6927, 1e-05
    %v6944 = vadd.f32 %v6928, 1e-05
    %v6945 = vadd.f32 %v6929, 1e-05
    %v6946 = vadd.f32 %v6930, 1e-05
    %v6947 = vadd.f32 %v6931, 1e-05
    %v6948 = vadd.f32 %v6932, 1e-05
    %v6949 = vadd.f32 %v6933, 1e-05
    %v6950 = vadd.f32 %v6934, 1e-05
    %v6951 = vadd.f32 %v6935, 1e-05
    %v6952 = vadd.f32 %v6936, 1e-05
    %v6953 = vrsqrt.pop %v6937
    %v6954 = vrsqrt.pop %v6938
    %v6955 = vrsqrt.pop %v6939
    %v6956 = vrsqrt.pop %v6940
    %v6957 = vrsqrt.pop %v6941
    %v6958 = vrsqrt.pop %v6942
    %v6959 = vrsqrt.pop %v6943
    %v6960 = vrsqrt.pop %v6944
    %v6961 = vrsqrt.pop %v6945
    %v6962 = vrsqrt.pop %v6946
    %v6963 = vrsqrt.pop %v6947
    %v6964 = vrsqrt.pop %v6948
    %v6965 = vrsqrt.pop %v6949
    %v6966 = vrsqrt.pop %v6950
    %v6967 = vrsqrt.pop %v6951
    %v6968 = vrsqrt.pop %v6952
    %v6969 = vmul.f32 %v6841, %v6953
    %v6970 = vmul.f32 %v6842, %v6954
    %v6971 = vmul.f32 %v6843, %v6955
    %v6972 = vmul.f32 %v6844, %v6956
    %v6973 = vmul.f32 %v6845, %v6957
    %v6974 = vmul.f32 %v6846, %v6958
    %v6975 = vmul.f32 %v6847, %v6959
    %v6976 = vmul.f32 %v6848, %v6960
    %v6977 = vmul.f32 %v6849, %v6961
    %v6978 = vmul.f32 %v6850, %v6962
    %v6979 = vmul.f32 %v6851, %v6963
    %v6980 = vmul.f32 %v6852, %v6964
    %v6981 = vmul.f32 %v6853, %v6965
    %v6982 = vmul.f32 %v6854, %v6966
    %v6983 = vmul.f32 %v6855, %v6967
    %v6984 = vmul.f32 %v6856, %v6968
    %v6986 = vlaneseq
    %v6987 = vshrl.u32 %v6986, 7
    %v6988 = vsub.s32 0, %v6987
    %v6989 = vrot.slane %v6774, %v6988
    %v6991 = vmul.f32 %v6969, %v6989
    %v6992 = vmul.f32 %v6970, %v6989
    %v6993 = vmul.f32 %v6971, %v6989
    %v6994 = vmul.f32 %v6972, %v6989
    %v6995 = vmul.f32 %v6973, %v6989
    %v6996 = vmul.f32 %v6974, %v6989
    %v6997 = vmul.f32 %v6975, %v6989
    %v6998 = vmul.f32 %v6976, %v6989
    %v6999 = vmul.f32 %v6977, %v6989
    %v7000 = vmul.f32 %v6978, %v6989
    %v7001 = vmul.f32 %v6979, %v6989
    %v7002 = vmul.f32 %v6980, %v6989
    %v7003 = vmul.f32 %v6981, %v6989
    %v7004 = vmul.f32 %v6982, %v6989
    %v7005 = vmul.f32 %v6983, %v6989
    %v7006 = vmul.f32 %v6984, %v6989
    %v7008 = vlaneseq
    %v7009 = vshrl.u32 %v7008, 7
    %v7010 = vsub.s32 0, %v7009
    %v7011 = vrot.slane %v6776, %v7010
    %v7013 = vadd.f32 %v6991, %v7011
    %v7014 = vadd.f32 %v6992, %v7011
    %v7015 = vadd.f32 %v6993, %v7011
    %v7016 = vadd.f32 %v6994, %v7011
    %v7017 = vadd.f32 %v6995, %v7011
    %v7018 = vadd.f32 %v6996, %v7011
    %v7019 = vadd.f32 %v6997, %v7011
    %v7020 = vadd.f32 %v6998, %v7011
    %v7021 = vadd.f32 %v6999, %v7011
    %v7022 = vadd.f32 %v7000, %v7011
    %v7023 = vadd.f32 %v7001, %v7011
    %v7024 = vadd.f32 %v7002, %v7011
    %v7025 = vadd.f32 %v7003, %v7011
    %v7026 = vadd.f32 %v7004, %v7011
    %v7027 = vadd.f32 %v7005, %v7011
    %v7028 = vadd.f32 %v7006, %v7011
    %s7029 = scalar_lea.vmem [#allocation8], 32
    %v7030 = vld [vmem:[%s7029] sm:$0xff]
    %v7031 = vld [vmem:[%s7029 + $0x8] sm:$0xff]
    %v7032 = vld [vmem:[%s7029 + $0x10] sm:$0xff]
    %v7033 = vld [vmem:[%s7029 + $0x18] sm:$0xff]
    %s7034 = scalar_lea.vmem %s7, 1
    %v7035 = vld [vmem:[%s7034] sm:$0x1]
    %v7037 = vlaneseq
    %v7038 = vshrl.u32 %v7037, 7
    %v7039 = vsub.s32 0, %v7038
    %v7040 = vrot.slane %v7035, %v7039
    %v7043 = vsel %vm271, %v7013, 0
    %v7046 = vsel %vm271, %v7014, 0
    %v7049 = vsel %vm271, %v7015, 0
    %v7052 = vsel %vm271, %v7016, 0
    %v7055 = vsel %vm271, %v7017, 0
    %v7058 = vsel %vm271, %v7018, 0
    %v7061 = vsel %vm271, %v7019, 0
    %v7064 = vsel %vm271, %v7020, 0
    %v7067 = vsel %vm271, %v7021, 0
    %v7070 = vsel %vm271, %v7022, 0
    %v7073 = vsel %vm271, %v7023, 0
    %v7076 = vsel %vm271, %v7024, 0
    %v7079 = vsel %vm271, %v7025, 0
    %v7082 = vsel %vm271, %v7026, 0
    %v7085 = vsel %vm271, %v7027, 0
    %v7088 = vsel %vm271, %v7028, 0
    %7090 = vmatprep.subr.mxu0 0.0
    %7091 = vmatpush1.msra.mxu0 %v7030
    %7092 = vmatprep.subr.mxu0 0.0
    %7093 = vmatpush1.msra.mxu0 %v7031
    %7094 = vmatprep.subr.mxu0 0.0
    %7095 = vmatpush1.msra.mxu0 %v7032
    %7096 = vmatprep.subr.mxu0 0.0
    %7097 = vmatpush1.msra.mxu0 %v7033
    %7098 = vmatprep.subr.mxu0 0.0
    %7099 = vmatpush1.msra.mxu0 0.0
    %7100 = vmatprep.subr.mxu0 0.0
    %7101 = vmatpush1.msra.mxu0 0.0
    %7102 = vmatprep.subr.mxu0 0.0
    %7103 = vmatpush1.msra.mxu0 0.0
    %7104 = vmatprep.subr.mxu0 0.0
    %7105 = vmatpush1.msra.mxu0 0.0
    %7106 = vmatprep.subr.mxu0 0.0
    %7107 = vmatpush1.msra.mxu0 0.0
    %7108 = vmatprep.subr.mxu0 0.0
    %7109 = vmatpush1.msra.mxu0 0.0
    %7110 = vmatprep.subr.mxu0 0.0
    %7111 = vmatpush1.msra.mxu0 0.0
    %7112 = vmatprep.subr.mxu0 0.0
    %7113 = vmatpush1.msra.mxu0 0.0
    %7114 = vmatprep.subr.mxu0 0.0
    %7115 = vmatpush1.msra.mxu0 0.0
    %7116 = vmatprep.subr.mxu0 0.0
    %7117 = vmatpush1.msra.mxu0 0.0
    %7118 = vmatprep.subr.mxu0 0.0
    %7119 = vmatpush1.msra.mxu0 0.0
    %7120 = vmatprep.subr.mxu0 0.0
    %7121 = vmatpush1.msra.mxu0 0.0
    %7122 = vmatprep.subr.mxu0 0.0
    %7123 = vmatpush1.msra.mxu0 0.0
    %7124 = vmatprep.subr.mxu0 0.0
    %7125 = vmatpush1.msra.mxu0 0.0
    %7126 = vmatprep.subr.mxu0 0.0
    %7127 = vmatpush1.msra.mxu0 0.0
    %7128 = vmatprep.subr.mxu0 0.0
    %7129 = vmatpush1.msra.mxu0 0.0
    %7130 = vmatprep.subr.mxu0 0.0
    %7131 = vmatpush1.msra.mxu0 0.0
    %7132 = vmatprep.subr.mxu0 0.0
    %7133 = vmatpush1.msra.mxu0 0.0
    %7134 = vmatprep.subr.mxu0 0.0
    %7135 = vmatpush1.msra.mxu0 0.0
    %7136 = vmatprep.subr.mxu0 0.0
    %7137 = vmatpush1.msra.mxu0 0.0
    %7138 = vmatprep.subr.mxu0 0.0
    %7139 = vmatpush1.msra.mxu0 0.0
    %7140 = vmatprep.subr.mxu0 0.0
    %7141 = vmatpush1.msra.mxu0 0.0
    %7142 = vmatprep.subr.mxu0 0.0
    %7143 = vmatpush1.msra.mxu0 0.0
    %7144 = vmatprep.subr.mxu0 0.0
    %7145 = vmatpush1.msra.mxu0 0.0
    %7146 = vmatprep.subr.mxu0 0.0
    %7147 = vmatpush1.msra.mxu0 0.0
    %7148 = vmatprep.subr.mxu0 0.0
    %7149 = vmatpush1.msra.mxu0 0.0
    %7150 = vmatprep.subr.mxu0 0.0
    %7151 = vmatpush1.msra.mxu0 0.0
    %7152 = vmatprep.subr.mxu0 0.0
    %7153 = vmatpush1.msra.mxu0 0.0
    %7154 = vmatprep.mubr.f32.mxu0 0.0
    %7155 = vmatmul.mubr.f32.gmra.mrb[0].mxu0 %v7043
    %v7156 = vpop.f32.mrb[0].mxu0
    %v7157 = vadd.f32 %v7040, %v7156
    %v7158 = vpop.f32.mrb[0].mxu0
    %7159 = vmatprep.mubr.f32.mxu0 0.0
    %7160 = vmatmul.mubr.f32.gmra.mrb[0].mxu0 %v7046
    %v7161 = vpop.f32.mrb[0].mxu0
    %v7162 = vadd.f32 %v7040, %v7161
    %v7163 = vpop.f32.mrb[0].mxu0
    %7164 = vmatprep.mubr.f32.mxu0 0.0
    %7165 = vmatmul.mubr.f32.gmra.mrb[0].mxu0 %v7049
    %v7166 = vpop.f32.mrb[0].mxu0
    %v7167 = vadd.f32 %v7040, %v7166
    %v7168 = vpop.f32.mrb[0].mxu0
    %7169 = vmatprep.mubr.f32.mxu0 0.0
    %7170 = vmatmul.mubr.f32.gmra.mrb[0].mxu0 %v7052
    %v7171 = vpop.f32.mrb[0].mxu0
    %v7172 = vadd.f32 %v7040, %v7171
    %v7173 = vpop.f32.mrb[0].mxu0
    %7174 = vmatprep.mubr.f32.mxu0 0.0
    %7175 = vmatmul.mubr.f32.gmra.mrb[0].mxu0 %v7055
    %v7176 = vpop.f32.mrb[0].mxu0
    %v7177 = vadd.f32 %v7040, %v7176
    %v7178 = vpop.f32.mrb[0].mxu0
    %7179 = vmatprep.mubr.f32.mxu0 0.0
    %7180 = vmatmul.mubr.f32.gmra.mrb[0].mxu0 %v7058
    %v7181 = vpop.f32.mrb[0].mxu0
    %v7182 = vadd.f32 %v7040, %v7181
    %v7183 = vpop.f32.mrb[0].mxu0
    %7184 = vmatprep.mubr.f32.mxu0 0.0
    %7185 = vmatmul.mubr.f32.gmra.mrb[0].mxu0 %v7061
    %v7186 = vpop.f32.mrb[0].mxu0
    %v7187 = vadd.f32 %v7040, %v7186
    %v7188 = vpop.f32.mrb[0].mxu0
    %7189 = vmatprep.mubr.f32.mxu0 0.0
    %7190 = vmatmul.mubr.f32.gmra.mrb[0].mxu0 %v7064
    %v7191 = vpop.f32.mrb[0].mxu0
    %v7192 = vadd.f32 %v7040, %v7191
    %v7193 = vpop.f32.mrb[0].mxu0
    %7194 = vmatprep.mubr.f32.mxu0 0.0
    %7195 = vmatmul.mubr.f32.gmra.mrb[0].mxu0 %v7067
    %v7196 = vpop.f32.mrb[0].mxu0
    %v7197 = vadd.f32 %v7040, %v7196
    %v7198 = vpop.f32.mrb[0].mxu0
    %7199 = vmatprep.mubr.f32.mxu0 0.0
    %7200 = vmatmul.mubr.f32.gmra.mrb[0].mxu0 %v7070
    %v7201 = vpop.f32.mrb[0].mxu0
    %v7202 = vadd.f32 %v7040, %v7201
    %v7203 = vpop.f32.mrb[0].mxu0
    %7204 = vmatprep.mubr.f32.mxu0 0.0
    %7205 = vmatmul.mubr.f32.gmra.mrb[0].mxu0 %v7073
    %v7206 = vpop.f32.mrb[0].mxu0
    %v7207 = vadd.f32 %v7040, %v7206
    %v7208 = vpop.f32.mrb[0].mxu0
    %7209 = vmatprep.mubr.f32.mxu0 0.0
    %7210 = vmatmul.mubr.f32.gmra.mrb[0].mxu0 %v7076
    %v7211 = vpop.f32.mrb[0].mxu0
    %v7212 = vadd.f32 %v7040, %v7211
    %v7213 = vpop.f32.mrb[0].mxu0
    %7214 = vmatprep.mubr.f32.mxu0 0.0
    %7215 = vmatmul.mubr.f32.gmra.mrb[0].mxu0 %v7079
    %v7216 = vpop.f32.mrb[0].mxu0
    %v7217 = vadd.f32 %v7040, %v7216
    %v7218 = vpop.f32.mrb[0].mxu0
    %7219 = vmatprep.mubr.f32.mxu0 0.0
    %7220 = vmatmul.mubr.f32.gmra.mrb[0].mxu0 %v7082
    %v7221 = vpop.f32.mrb[0].mxu0
    %v7222 = vadd.f32 %v7040, %v7221
    %v7223 = vpop.f32.mrb[0].mxu0
    %7224 = vmatprep.mubr.f32.mxu0 0.0
    %7225 = vmatmul.mubr.f32.gmra.mrb[0].mxu0 %v7085
    %v7226 = vpop.f32.mrb[0].mxu0
    %v7227 = vadd.f32 %v7040, %v7226
    %v7228 = vpop.f32.mrb[0].mxu0
    %7229 = vmatprep.mubr.f32.mxu0 0.0
    %7230 = vmatmul.mubr.f32.gmra.mrb[0].mxu0 %v7088
    %v7231 = vpop.f32.mrb[0].mxu0
    %v7232 = vadd.f32 %v7040, %v7231
    %v7233 = vpop.f32.mrb[0].mxu0
    %7234 = vdwg.mxu0
    %v7235 = vmul.f32 %v7157, 0.5
    %v7236 = vmul.f32 %v7162, 0.5
    %v7237 = vmul.f32 %v7167, 0.5
    %v7238 = vmul.f32 %v7172, 0.5
    %v7239 = vmul.f32 %v7177, 0.5
    %v7240 = vmul.f32 %v7182, 0.5
    %v7241 = vmul.f32 %v7187, 0.5
    %v7242 = vmul.f32 %v7192, 0.5
    %v7243 = vmul.f32 %v7197, 0.5
    %v7244 = vmul.f32 %v7202, 0.5
    %v7245 = vmul.f32 %v7207, 0.5
    %v7246 = vmul.f32 %v7212, 0.5
    %v7247 = vmul.f32 %v7217, 0.5
    %v7248 = vmul.f32 %v7222, 0.5
    %v7249 = vmul.f32 %v7227, 0.5
    %v7250 = vmul.f32 %v7232, 0.5
    %v7251 = vmul.f32 %v7157, 0.044715
    %v7252 = vmul.f32 %v7162, 0.044715
    %v7253 = vmul.f32 %v7167, 0.044715
    %v7254 = vmul.f32 %v7172, 0.044715
    %v7255 = vmul.f32 %v7177, 0.044715
    %v7256 = vmul.f32 %v7182, 0.044715
    %v7257 = vmul.f32 %v7187, 0.044715
    %v7258 = vmul.f32 %v7192, 0.044715
    %v7259 = vmul.f32 %v7197, 0.044715
    %v7260 = vmul.f32 %v7202, 0.044715
    %v7261 = vmul.f32 %v7207, 0.044715
    %v7262 = vmul.f32 %v7212, 0.044715
    %v7263 = vmul.f32 %v7217, 0.044715
    %v7264 = vmul.f32 %v7222, 0.044715
    %v7265 = vmul.f32 %v7227, 0.044715
    %v7266 = vmul.f32 %v7232, 0.044715
    %v7267 = vmul.f32 %v7251, %v7157
    %v7268 = vmul.f32 %v7252, %v7162
    %v7269 = vmul.f32 %v7253, %v7167
    %v7270 = vmul.f32 %v7254, %v7172
    %v7271 = vmul.f32 %v7255, %v7177
    %v7272 = vmul.f32 %v7256, %v7182
    %v7273 = vmul.f32 %v7257, %v7187
    %v7274 = vmul.f32 %v7258, %v7192
    %v7275 = vmul.f32 %v7259, %v7197
    %v7276 = vmul.f32 %v7260, %v7202
    %v7277 = vmul.f32 %v7261, %v7207
    %v7278 = vmul.f32 %v7262, %v7212
    %v7279 = vmul.f32 %v7263, %v7217
    %v7280 = vmul.f32 %v7264, %v7222
    %v7281 = vmul.f32 %v7265, %v7227
    %v7282 = vmul.f32 %v7266, %v7232
    %v7283 = vmul.f32 %v7267, %v7157
    %v7284 = vmul.f32 %v7268, %v7162
    %v7285 = vmul.f32 %v7269, %v7167
    %v7286 = vmul.f32 %v7270, %v7172
    %v7287 = vmul.f32 %v7271, %v7177
    %v7288 = vmul.f32 %v7272, %v7182
    %v7289 = vmul.f32 %v7273, %v7187
    %v7290 = vmul.f32 %v7274, %v7192
    %v7291 = vmul.f32 %v7275, %v7197
    %v7292 = vmul.f32 %v7276, %v7202
    %v7293 = vmul.f32 %v7277, %v7207
    %v7294 = vmul.f32 %v7278, %v7212
    %v7295 = vmul.f32 %v7279, %v7217
    %v7296 = vmul.f32 %v7280, %v7222
    %v7297 = vmul.f32 %v7281, %v7227
    %v7298 = vmul.f32 %v7282, %v7232
    %v7299 = vadd.f32 %v7157, %v7283
    %v7300 = vadd.f32 %v7162, %v7284
    %v7301 = vadd.f32 %v7167, %v7285
    %v7302 = vadd.f32 %v7172, %v7286
    %v7303 = vadd.f32 %v7177, %v7287
    %v7304 = vadd.f32 %v7182, %v7288
    %v7305 = vadd.f32 %v7187, %v7289
    %v7306 = vadd.f32 %v7192, %v7290
    %v7307 = vadd.f32 %v7197, %v7291
    %v7308 = vadd.f32 %v7202, %v7292
    %v7309 = vadd.f32 %v7207, %v7293
    %v7310 = vadd.f32 %v7212, %v7294
    %v7311 = vadd.f32 %v7217, %v7295
    %v7312 = vadd.f32 %v7222, %v7296
    %v7313 = vadd.f32 %v7227, %v7297
    %v7314 = vadd.f32 %v7232, %v7298
    %v7315 = vmul.f32 %v7299, 0.7978846
    %v7316 = vmul.f32 %v7300, 0.7978846
    %v7317 = vmul.f32 %v7301, 0.7978846
    %v7318 = vmul.f32 %v7302, 0.7978846
    %v7319 = vmul.f32 %v7303, 0.7978846
    %v7320 = vmul.f32 %v7304, 0.7978846
    %v7321 = vmul.f32 %v7305, 0.7978846
    %v7322 = vmul.f32 %v7306, 0.7978846
    %v7323 = vmul.f32 %v7307, 0.7978846
    %v7324 = vmul.f32 %v7308, 0.7978846
    %v7325 = vmul.f32 %v7309, 0.7978846
    %v7326 = vmul.f32 %v7310, 0.7978846
    %v7327 = vmul.f32 %v7311, 0.7978846
    %v7328 = vmul.f32 %v7312, 0.7978846
    %v7329 = vmul.f32 %v7313, 0.7978846
    %v7330 = vmul.f32 %v7314, 0.7978846
    %v7331 = vtanh.pop %v7315
    %v7332 = vtanh.pop %v7316
    %v7333 = vtanh.pop %v7317
    %v7334 = vtanh.pop %v7318
    %v7335 = vtanh.pop %v7319
    %v7336 = vtanh.pop %v7320
    %v7337 = vtanh.pop %v7321
    %v7338 = vtanh.pop %v7322
    %v7339 = vtanh.pop %v7323
    %v7340 = vtanh.pop %v7324
    %v7341 = vtanh.pop %v7325
    %v7342 = vtanh.pop %v7326
    %v7343 = vtanh.pop %v7327
    %v7344 = vtanh.pop %v7328
    %v7345 = vtanh.pop %v7329
    %v7346 = vtanh.pop %v7330
    %v7347 = vadd.f32 %v7331, 1.0
    %v7348 = vadd.f32 %v7332, 1.0
    %v7349 = vadd.f32 %v7333, 1.0
    %v7350 = vadd.f32 %v7334, 1.0
    %v7351 = vadd.f32 %v7335, 1.0
    %v7352 = vadd.f32 %v7336, 1.0
    %v7353 = vadd.f32 %v7337, 1.0
    %v7354 = vadd.f32 %v7338, 1.0
    %v7355 = vadd.f32 %v7339, 1.0
    %v7356 = vadd.f32 %v7340, 1.0
    %v7357 = vadd.f32 %v7341, 1.0
    %v7358 = vadd.f32 %v7342, 1.0
    %v7359 = vadd.f32 %v7343, 1.0
    %v7360 = vadd.f32 %v7344, 1.0
    %v7361 = vadd.f32 %v7345, 1.0
    %v7362 = vadd.f32 %v7346, 1.0
    %v7363 = vmul.f32 %v7235, %v7347
    %v7364 = vmul.f32 %v7236, %v7348
    %v7365 = vmul.f32 %v7237, %v7349
    %v7366 = vmul.f32 %v7238, %v7350
    %v7367 = vmul.f32 %v7239, %v7351
    %v7368 = vmul.f32 %v7240, %v7352
    %v7369 = vmul.f32 %v7241, %v7353
    %v7370 = vmul.f32 %v7242, %v7354
    %v7371 = vmul.f32 %v7243, %v7355
    %v7372 = vmul.f32 %v7244, %v7356
    %v7373 = vmul.f32 %v7245, %v7357
    %v7374 = vmul.f32 %v7246, %v7358
    %v7375 = vmul.f32 %v7247, %v7359
    %v7376 = vmul.f32 %v7248, %v7360
    %v7377 = vmul.f32 %v7249, %v7361
    %v7378 = vmul.f32 %v7250, %v7362
    %s7379 = scalar_lea.vmem %s8, 128
    %v7380 = vld [vmem:[%s7379] sm:$0xff]
    %v7381 = vld [vmem:[%s7379 + $0x8] sm:$0xff]
    %v7382 = vld [vmem:[%s7379 + $0x10] sm:$0xff]
    %v7383 = vld [vmem:[%s7379 + $0x18] sm:$0xff]
    %v7384 = vld [vmem:[%s7379 + $0x20] sm:$0xff]
    %v7385 = vld [vmem:[%s7379 + $0x28] sm:$0xff]
    %v7386 = vld [vmem:[%s7379 + $0x30] sm:$0xff]
    %v7387 = vld [vmem:[%s7379 + $0x38] sm:$0xff]
    %v7388 = vld [vmem:[%s7379 + $0x40] sm:$0xff]
    %v7389 = vld [vmem:[%s7379 + $0x48] sm:$0xff]
    %v7390 = vld [vmem:[%s7379 + $0x50] sm:$0xff]
    %v7391 = vld [vmem:[%s7379 + $0x58] sm:$0xff]
    %v7392 = vld [vmem:[%s7379 + $0x60] sm:$0xff]
    %v7393 = vld [vmem:[%s7379 + $0x68] sm:$0xff]
    %v7394 = vld [vmem:[%s7379 + $0x70] sm:$0xff]
    %v7395 = vld [vmem:[%s7379 + $0x78] sm:$0xff]
    %s7396 = scalar_lea.vmem %s9, 11
    %v7397 = vld [vmem:[%s7396] sm:$0x1]
    %v7399 = vlaneseq
    %v7400 = vshrl.u32 %v7399, 7
    %v7401 = vsub.s32 0, %v7400
    %v7402 = vrot.slane %v7397, %v7401
    %7404 = vmatprep.subr.mxu0 0.0
    %7405 = vmatpush1.msra.mxu0 %v7380
    %7406 = vmatprep.subr.mxu0 0.0
    %7407 = vmatpush1.msra.mxu0 %v7381
    %7408 = vmatprep.subr.mxu0 0.0
    %7409 = vmatpush1.msra.mxu0 %v7382
    %7410 = vmatprep.subr.mxu0 0.0
    %7411 = vmatpush1.msra.mxu0 %v7383
    %7412 = vmatprep.subr.mxu0 0.0
    %7413 = vmatpush1.msra.mxu0 %v7384
    %7414 = vmatprep.subr.mxu0 0.0
    %7415 = vmatpush1.msra.mxu0 %v7385
    %7416 = vmatprep.subr.mxu0 0.0
    %7417 = vmatpush1.msra.mxu0 %v7386
    %7418 = vmatprep.subr.mxu0 0.0
    %7419 = vmatpush1.msra.mxu0 %v7387
    %7420 = vmatprep.subr.mxu0 0.0
    %7421 = vmatpush1.msra.mxu0 %v7388
    %7422 = vmatprep.subr.mxu0 0.0
    %7423 = vmatpush1.msra.mxu0 %v7389
    %7424 = vmatprep.subr.mxu0 0.0
    %7425 = vmatpush1.msra.mxu0 %v7390
    %7426 = vmatprep.subr.mxu0 0.0
    %7427 = vmatpush1.msra.mxu0 %v7391
    %7428 = vmatprep.subr.mxu0 0.0
    %7429 = vmatpush1.msra.mxu0 %v7392
    %7430 = vmatprep.subr.mxu0 0.0
    %7431 = vmatpush1.msra.mxu0 %v7393
    %7432 = vmatprep.subr.mxu0 0.0
    %7433 = vmatpush1.msra.mxu0 %v7394
    %7434 = vmatprep.subr.mxu0 0.0
    %7435 = vmatpush1.msra.mxu0 %v7395
    %7436 = vmatprep.subr.mxu0 0.0
    %7437 = vmatpush1.msra.mxu0 0.0
    %7438 = vmatprep.subr.mxu0 0.0
    %7439 = vmatpush1.msra.mxu0 0.0
    %7440 = vmatprep.subr.mxu0 0.0
    %7441 = vmatpush1.msra.mxu0 0.0
    %7442 = vmatprep.subr.mxu0 0.0
    %7443 = vmatpush1.msra.mxu0 0.0
    %7444 = vmatprep.subr.mxu0 0.0
    %7445 = vmatpush1.msra.mxu0 0.0
    %7446 = vmatprep.subr.mxu0 0.0
    %7447 = vmatpush1.msra.mxu0 0.0
    %7448 = vmatprep.subr.mxu0 0.0
    %7449 = vmatpush1.msra.mxu0 0.0
    %7450 = vmatprep.subr.mxu0 0.0
    %7451 = vmatpush1.msra.mxu0 0.0
    %7452 = vmatprep.subr.mxu0 0.0
    %7453 = vmatpush1.msra.mxu0 0.0
    %7454 = vmatprep.subr.mxu0 0.0
    %7455 = vmatpush1.msra.mxu0 0.0
    %7456 = vmatprep.subr.mxu0 0.0
    %7457 = vmatpush1.msra.mxu0 0.0
    %7458 = vmatprep.subr.mxu0 0.0
    %7459 = vmatpush1.msra.mxu0 0.0
    %7460 = vmatprep.subr.mxu0 0.0
    %7461 = vmatpush1.msra.mxu0 0.0
    %7462 = vmatprep.subr.mxu0 0.0
    %7463 = vmatpush1.msra.mxu0 0.0
    %7464 = vmatprep.subr.mxu0 0.0
    %7465 = vmatpush1.msra.mxu0 0.0
    %7466 = vmatprep.subr.mxu0 0.0
    %7467 = vmatpush1.msra.mxu0 0.0
    %7468 = vmatprep.mubr.f32.mxu0 0.0
    %7469 = vmatmul.mubr.f32.gmra.mrb[0].mxu0 %v7363
    %v7470 = vpop.f32.mrb[0].mxu0
    %v7471 = vadd.f32 %v7402, %v7470
    %v7472 = vpop.f32.mrb[0].mxu0
    %7473 = vmatprep.mubr.f32.mxu0 0.0
    %7474 = vmatmul.mubr.f32.gmra.mrb[0].mxu0 %v7364
    %v7475 = vpop.f32.mrb[0].mxu0
    %v7476 = vadd.f32 %v7402, %v7475
    %v7477 = vpop.f32.mrb[0].mxu0
    %7478 = vmatprep.mubr.f32.mxu0 0.0
    %7479 = vmatmul.mubr.f32.gmra.mrb[0].mxu0 %v7365
    %v7480 = vpop.f32.mrb[0].mxu0
    %v7481 = vadd.f32 %v7402, %v7480
    %v7482 = vpop.f32.mrb[0].mxu0
    %7483 = vmatprep.mubr.f32.mxu0 0.0
    %7484 = vmatmul.mubr.f32.gmra.mrb[0].mxu0 %v7366
    %v7485 = vpop.f32.mrb[0].mxu0
    %v7486 = vadd.f32 %v7402, %v7485
    %v7487 = vpop.f32.mrb[0].mxu0
    %7488 = vmatprep.mubr.f32.mxu0 0.0
    %7489 = vmatmul.mubr.f32.gmra.mrb[0].mxu0 %v7367
    %v7490 = vpop.f32.mrb[0].mxu0
    %v7491 = vadd.f32 %v7402, %v7490
    %v7492 = vpop.f32.mrb[0].mxu0
    %7493 = vmatprep.mubr.f32.mxu0 0.0
    %7494 = vmatmul.mubr.f32.gmra.mrb[0].mxu0 %v7368
    %v7495 = vpop.f32.mrb[0].mxu0
    %v7496 = vadd.f32 %v7402, %v7495
    %v7497 = vpop.f32.mrb[0].mxu0
    %7498 = vmatprep.mubr.f32.mxu0 0.0
    %7499 = vmatmul.mubr.f32.gmra.mrb[0].mxu0 %v7369
    %v7500 = vpop.f32.mrb[0].mxu0
    %v7501 = vadd.f32 %v7402, %v7500
    %v7502 = vpop.f32.mrb[0].mxu0
    %7503 = vmatprep.mubr.f32.mxu0 0.0
    %7504 = vmatmul.mubr.f32.gmra.mrb[0].mxu0 %v7370
    %v7505 = vpop.f32.mrb[0].mxu0
    %v7506 = vadd.f32 %v7402, %v7505
    %v7507 = vpop.f32.mrb[0].mxu0
    %7508 = vmatprep.mubr.f32.mxu0 0.0
    %7509 = vmatmul.mubr.f32.gmra.mrb[0].mxu0 %v7371
    %v7510 = vpop.f32.mrb[0].mxu0
    %v7511 = vadd.f32 %v7402, %v7510
    %v7512 = vpop.f32.mrb[0].mxu0
    %7513 = vmatprep.mubr.f32.mxu0 0.0
    %7514 = vmatmul.mubr.f32.gmra.mrb[0].mxu0 %v7372
    %v7515 = vpop.f32.mrb[0].mxu0
    %v7516 = vadd.f32 %v7402, %v7515
    %v7517 = vpop.f32.mrb[0].mxu0
    %7518 = vmatprep.mubr.f32.mxu0 0.0
    %7519 = vmatmul.mubr.f32.gmra.mrb[0].mxu0 %v7373
    %v7520 = vpop.f32.mrb[0].mxu0
    %v7521 = vadd.f32 %v7402, %v7520
    %v7522 = vpop.f32.mrb[0].mxu0
    %7523 = vmatprep.mubr.f32.mxu0 0.0
    %7524 = vmatmul.mubr.f32.gmra.mrb[0].mxu0 %v7374
    %v7525 = vpop.f32.mrb[0].mxu0
    %v7526 = vadd.f32 %v7402, %v7525
    %v7527 = vpop.f32.mrb[0].mxu0
    %7528 = vmatprep.mubr.f32.mxu0 0.0
    %7529 = vmatmul.mubr.f32.gmra.mrb[0].mxu0 %v7375
    %v7530 = vpop.f32.mrb[0].mxu0
    %v7531 = vadd.f32 %v7402, %v7530
    %v7532 = vpop.f32.mrb[0].mxu0
    %7533 = vmatprep.mubr.f32.mxu0 0.0
    %7534 = vmatmul.mubr.f32.gmra.mrb[0].mxu0 %v7376
    %v7535 = vpop.f32.mrb[0].mxu0
    %v7536 = vadd.f32 %v7402, %v7535
    %v7537 = vpop.f32.mrb[0].mxu0
    %7538 = vmatprep.mubr.f32.mxu0 0.0
    %7539 = vmatmul.mubr.f32.gmra.mrb[0].mxu0 %v7377
    %v7540 = vpop.f32.mrb[0].mxu0
    %v7541 = vadd.f32 %v7402, %v7540
    %v7542 = vpop.f32.mrb[0].mxu0
    %7543 = vmatprep.mubr.f32.mxu0 0.0
    %7544 = vmatmul.mubr.f32.gmra.mrb[0].mxu0 %v7378
    %v7545 = vpop.f32.mrb[0].mxu0
    %v7546 = vadd.f32 %v7402, %v7545
    %v7547 = vpop.f32.mrb[0].mxu0
    %7548 = vdwg.mxu0
    %v7549 = vadd.f32 %v6757, %v7471
    %v7550 = vadd.f32 %v6758, %v7476
    %v7551 = vadd.f32 %v6759, %v7481
    %v7552 = vadd.f32 %v6760, %v7486
    %v7553 = vadd.f32 %v6761, %v7491
    %v7554 = vadd.f32 %v6762, %v7496
    %v7555 = vadd.f32 %v6763, %v7501
    %v7556 = vadd.f32 %v6764, %v7506
    %v7557 = vadd.f32 %v6765, %v7511
    %v7558 = vadd.f32 %v6766, %v7516
    %v7559 = vadd.f32 %v6767, %v7521
    %v7560 = vadd.f32 %v6768, %v7526
    %v7561 = vadd.f32 %v6769, %v7531
    %v7562 = vadd.f32 %v6770, %v7536
    %v7563 = vadd.f32 %v6771, %v7541
    %v7564 = vadd.f32 %v6772, %v7546
    %s7565 = scalar_lea.vmem %s1, 256
    %v7566 = vld [vmem:[%s7565] sm:$0xff]
    %v7567 = vld [vmem:[%s7565 + $0x8] sm:$0xff]
    %v7568 = vld [vmem:[%s7565 + $0x10] sm:$0xff]
    %v7569 = vld [vmem:[%s7565 + $0x18] sm:$0xff]
    %v7570 = vld [vmem:[%s7565 + $0x20] sm:$0xff]
    %v7571 = vld [vmem:[%s7565 + $0x28] sm:$0xff]
    %v7572 = vld [vmem:[%s7565 + $0x30] sm:$0xff]
    %v7573 = vld [vmem:[%s7565 + $0x38] sm:$0xff]
    %v7574 = vld [vmem:[%s7565 + $0x40] sm:$0xff]
    %v7575 = vld [vmem:[%s7565 + $0x48] sm:$0xff]
    %v7576 = vld [vmem:[%s7565 + $0x50] sm:$0xff]
    %v7577 = vld [vmem:[%s7565 + $0x58] sm:$0xff]
    %v7578 = vld [vmem:[%s7565 + $0x60] sm:$0xff]
    %v7579 = vld [vmem:[%s7565 + $0x68] sm:$0xff]
    %v7580 = vld [vmem:[%s7565 + $0x70] sm:$0xff]
    %v7581 = vld [vmem:[%s7565 + $0x78] sm:$0xff]
    %7582 = vmatprep.subr.mxu0 0.0
    %7583 = vmatpush1.msra.mxu0 %v7549
    %7584 = vmatprep.subr.mxu0 0.0
    %7585 = vmatpush1.msra.mxu0 %v7550
    %7586 = vmatprep.subr.mxu0 0.0
    %7587 = vmatpush1.msra.mxu0 %v7551
    %7588 = vmatprep.subr.mxu0 0.0
    %7589 = vmatpush1.msra.mxu0 %v7552
    %7590 = vmatprep.subr.mxu0 0.0
    %7591 = vmatpush1.msra.mxu0 %v7553
    %7592 = vmatprep.subr.mxu0 0.0
    %7593 = vmatpush1.msra.mxu0 %v7554
    %7594 = vmatprep.subr.mxu0 0.0
    %7595 = vmatpush1.msra.mxu0 %v7555
    %7596 = vmatprep.subr.mxu0 0.0
    %7597 = vmatpush1.msra.mxu0 %v7556
    %7598 = vmatprep.subr.mxu0 0.0
    %7599 = vmatpush1.msra.mxu0 %v7557
    %7600 = vmatprep.subr.mxu0 0.0
    %7601 = vmatpush1.msra.mxu0 %v7558
    %7602 = vmatprep.subr.mxu0 0.0
    %7603 = vmatpush1.msra.mxu0 %v7559
    %7604 = vmatprep.subr.mxu0 0.0
    %7605 = vmatpush1.msra.mxu0 %v7560
    %7606 = vmatprep.subr.mxu0 0.0
    %7607 = vmatpush1.msra.mxu0 %v7561
    %7608 = vmatprep.subr.mxu0 0.0
    %7609 = vmatpush1.msra.mxu0 %v7562
    %7610 = vmatprep.subr.mxu0 0.0
    %7611 = vmatpush1.msra.mxu0 %v7563
    %7612 = vmatprep.subr.mxu0 0.0
    %7613 = vmatpush1.msra.mxu0 %v7564
    %7614 = vmatprep.subr.mxu0 0.0
    %7615 = vmatpush1.msra.mxu0 0.0
    %7616 = vmatprep.subr.mxu0 0.0
    %7617 = vmatpush1.msra.mxu0 0.0
    %7618 = vmatprep.subr.mxu0 0.0
    %7619 = vmatpush1.msra.mxu0 0.0
    %7620 = vmatprep.subr.mxu0 0.0
    %7621 = vmatpush1.msra.mxu0 0.0
    %7622 = vmatprep.subr.mxu0 0.0
    %7623 = vmatpush1.msra.mxu0 0.0
    %7624 = vmatprep.subr.mxu0 0.0
    %7625 = vmatpush1.msra.mxu0 0.0
    %7626 = vmatprep.subr.mxu0 0.0
    %7627 = vmatpush1.msra.mxu0 0.0
    %7628 = vmatprep.subr.mxu0 0.0
    %7629 = vmatpush1.msra.mxu0 0.0
    %7630 = vmatprep.subr.mxu0 0.0
    %7631 = vmatpush1.msra.mxu0 0.0
    %7632 = vmatprep.subr.mxu0 0.0
    %7633 = vmatpush1.msra.mxu0 0.0
    %7634 = vmatprep.subr.mxu0 0.0
    %7635 = vmatpush1.msra.mxu0 0.0
    %7636 = vmatprep.subr.mxu0 0.0
    %7637 = vmatpush1.msra.mxu0 0.0
    %7638 = vmatprep.subr.mxu0 0.0
    %7639 = vmatpush1.msra.mxu0 0.0
    %7640 = vmatprep.subr.mxu0 0.0
    %7641 = vmatpush1.msra.mxu0 0.0
    %7642 = vmatprep.subr.mxu0 0.0
    %7643 = vmatpush1.msra.mxu0 0.0
    %7644 = vmatprep.subr.mxu0 0.0
    %7645 = vmatpush1.msra.mxu0 0.0
    %7646 = vmatprep.mubr.f32.mxu0 0.0
    %7647 = vmatmul.mubr.f32.gmra.mrb[0].mxu0 %v7566
    %v7648 = vpop.f32.mrb[0].mxu0
    %v7649 = vadd.f32 0.0, %v7648
    %v7650 = vpop.f32.mrb[0].mxu0
    %7651 = vmatprep.mubr.f32.mxu0 0.0
    %7652 = vmatmul.mubr.f32.gmra.mrb[0].mxu0 %v7567
    %v7653 = vpop.f32.mrb[0].mxu0
    %v7654 = vadd.f32 0.0, %v7653
    %v7655 = vpop.f32.mrb[0].mxu0
    %7656 = vmatprep.mubr.f32.mxu0 0.0
    %7657 = vmatmul.mubr.f32.gmra.mrb[0].mxu0 %v7568
    %v7658 = vpop.f32.mrb[0].mxu0
    %v7659 = vadd.f32 0.0, %v7658
    %v7660 = vpop.f32.mrb[0].mxu0
    %7661 = vmatprep.mubr.f32.mxu0 0.0
    %7662 = vmatmul.mubr.f32.gmra.mrb[0].mxu0 %v7569
    %v7663 = vpop.f32.mrb[0].mxu0
    %v7664 = vadd.f32 0.0, %v7663
    %v7665 = vpop.f32.mrb[0].mxu0
    %7666 = vmatprep.mubr.f32.mxu0 0.0
    %7667 = vmatmul.mubr.f32.gmra.mrb[0].mxu0 %v7570
    %v7668 = vpop.f32.mrb[0].mxu0
    %v7669 = vadd.f32 0.0, %v7668
    %v7670 = vpop.f32.mrb[0].mxu0
    %7671 = vmatprep.mubr.f32.mxu0 0.0
    %7672 = vmatmul.mubr.f32.gmra.mrb[0].mxu0 %v7571
    %v7673 = vpop.f32.mrb[0].mxu0
    %v7674 = vadd.f32 0.0, %v7673
    %v7675 = vpop.f32.mrb[0].mxu0
    %7676 = vmatprep.mubr.f32.mxu0 0.0
    %7677 = vmatmul.mubr.f32.gmra.mrb[0].mxu0 %v7572
    %v7678 = vpop.f32.mrb[0].mxu0
    %v7679 = vadd.f32 0.0, %v7678
    %v7680 = vpop.f32.mrb[0].mxu0
    %7681 = vmatprep.mubr.f32.mxu0 0.0
    %7682 = vmatmul.mubr.f32.gmra.mrb[0].mxu0 %v7573
    %v7683 = vpop.f32.mrb[0].mxu0
    %v7684 = vadd.f32 0.0, %v7683
    %v7685 = vpop.f32.mrb[0].mxu0
    %7686 = vmatprep.mubr.f32.mxu0 0.0
    %7687 = vmatmul.mubr.f32.gmra.mrb[0].mxu0 %v7574
    %v7688 = vpop.f32.mrb[0].mxu0
    %v7689 = vadd.f32 0.0, %v7688
    %v7690 = vpop.f32.mrb[0].mxu0
    %7691 = vmatprep.mubr.f32.mxu0 0.0
    %7692 = vmatmul.mubr.f32.gmra.mrb[0].mxu0 %v7575
    %v7693 = vpop.f32.mrb[0].mxu0
    %v7694 = vadd.f32 0.0, %v7693
    %v7695 = vpop.f32.mrb[0].mxu0
    %7696 = vmatprep.mubr.f32.mxu0 0.0
    %7697 = vmatmul.mubr.f32.gmra.mrb[0].mxu0 %v7576
    %v7698 = vpop.f32.mrb[0].mxu0
    %v7699 = vadd.f32 0.0, %v7698
    %v7700 = vpop.f32.mrb[0].mxu0
    %7701 = vmatprep.mubr.f32.mxu0 0.0
    %7702 = vmatmul.mubr.f32.gmra.mrb[0].mxu0 %v7577
    %v7703 = vpop.f32.mrb[0].mxu0
    %v7704 = vadd.f32 0.0, %v7703
    %v7705 = vpop.f32.mrb[0].mxu0
    %7706 = vmatprep.mubr.f32.mxu0 0.0
    %7707 = vmatmul.mubr.f32.gmra.mrb[0].mxu0 %v7578
    %v7708 = vpop.f32.mrb[0].mxu0
    %v7709 = vadd.f32 0.0, %v7708
    %v7710 = vpop.f32.mrb[0].mxu0
    %7711 = vmatprep.mubr.f32.mxu0 0.0
    %7712 = vmatmul.mubr.f32.gmra.mrb[0].mxu0 %v7579
    %v7713 = vpop.f32.mrb[0].mxu0
    %v7714 = vadd.f32 0.0, %v7713
    %v7715 = vpop.f32.mrb[0].mxu0
    %7716 = vmatprep.mubr.f32.mxu0 0.0
    %7717 = vmatmul.mubr.f32.gmra.mrb[0].mxu0 %v7580
    %v7718 = vpop.f32.mrb[0].mxu0
    %v7719 = vadd.f32 0.0, %v7718
    %v7720 = vpop.f32.mrb[0].mxu0
    %7721 = vmatprep.mubr.f32.mxu0 0.0
    %7722 = vmatmul.mubr.f32.gmra.mrb[0].mxu0 %v7581
    %v7723 = vpop.f32.mrb[0].mxu0
    %v7724 = vadd.f32 0.0, %v7723
    %v7725 = vpop.f32.mrb[0].mxu0
    %7726 = vdwg.mxu0
    %7727 = vst.msk [vmem:[#allocation10] sm:$0xff] %vm271, %v7649
    %7728 = vst.msk [vmem:[#allocation10 + $0x8] sm:$0xff] %vm271, %v7654
    %7729 = vst.msk [vmem:[#allocation10 + $0x10] sm:$0xff] %vm271, %v7659
    %7730 = vst.msk [vmem:[#allocation10 + $0x18] sm:$0xff] %vm271, %v7664
    %7731 = vst.msk [vmem:[#allocation10 + $0x20] sm:$0xff] %vm271, %v7669
    %7732 = vst.msk [vmem:[#allocation10 + $0x28] sm:$0xff] %vm271, %v7674
    %7733 = vst.msk [vmem:[#allocation10 + $0x30] sm:$0xff] %vm271, %v7679
    %7734 = vst.msk [vmem:[#allocation10 + $0x38] sm:$0xff] %vm271, %v7684
    %7735 = vst.msk [vmem:[#allocation10 + $0x40] sm:$0xff] %vm271, %v7689
    %7736 = vst.msk [vmem:[#allocation10 + $0x48] sm:$0xff] %vm271, %v7694
    %7737 = vst.msk [vmem:[#allocation10 + $0x50] sm:$0xff] %vm271, %v7699
    %7738 = vst.msk [vmem:[#allocation10 + $0x58] sm:$0xff] %vm271, %v7704
    %7739 = vst.msk [vmem:[#allocation10 + $0x60] sm:$0xff] %vm271, %v7709
    %7740 = vst.msk [vmem:[#allocation10 + $0x68] sm:$0xff] %vm271, %v7714
    %7741 = vst.msk [vmem:[#allocation10 + $0x70] sm:$0xff] %vm271, %v7719
    %7742 = vst.msk [vmem:[#allocation10 + $0x78] sm:$0xff] %vm271, %v7724
    // Predicated region
    $region58: #{swin_block_forward.1} parent=1 // pred_check
      _
    $region59: #{swin_block_forward.1} parent=1 // pred_check_branch
      %7744 = sbr.rel (0) target = $region61
    $region60: #{swin_block_forward.1} parent=1 // pred_region
      %s7746 = ssub.s32 2048, 2048
      %7747 = vsyncadd [#allocation4], %s7746
      %s7748 = sshll.u32 [#allocation10], 4
      %s7749 = int_to_ptr.vmem [resolvable:$true] %s7748
      %7754 = dma.vmem_to_hbm [thread:$0]  %s7749, 2048, %s10, [#allocation4], 128, 128, 8
    $region61: #{swin_block_forward.1} parent=1 // pred_fallthru
      _
    // Predicated region
    $region62: #{swin_block_forward.1} parent=1 // pred_check
      _
    $region63: #{swin_block_forward.1} parent=1 // pred_check_branch
      %7756 = sbr.rel (0) target = $region65
    $region64: #{swin_block_forward.1} parent=1 // pred_region
      %7757 = dma.done [#allocation4], 2048
    $region65: #{swin_block_forward.1} parent=1 // pred_fallthru
      _
    %7758 = vsyncpa [#allocation3], 1
    %7759 = vsyncpa [#allocation6], 1
    %7760 = vsyncpa [#allocation9], 1
    %7761 = vsyncpa [#allocation4], 1

</llo_original>
